<compile_context>
chip_gen: v6e
topology: v6e:2x2x1
jax: 0.10.0
libtpu: 0.0.40
codegen_flags: <defaults>
</compile_context>

<pallas_src>
import functools

import jax
import jax.numpy as jnp
from jax import lax
from jax.experimental import pallas as pl
from jax.experimental.pallas import tpu as pltpu


def _encoder_rnn_kernel(idx_ref, emb_ref, wih_ref, whh_ref, b_ref,
                        out_ref, hn_ref, cn_ref, *scratch,
                        hidden_pad, seq_len, table_in_vmem):
    Hp = hidden_pad
    seq = seq_len
    if table_in_vmem:
        x_scr, gx_scr = scratch
    else:
        x_scr, gx_scr, gather_sem = scratch

    wdtype = wih_ref.dtype

    # ---- 1) Embedding gather -------------------------------------------------------------
    if table_in_vmem:
        # Table already bulk-DMA'd into VMEM by pallas_call; select rows in-VMEM.
        for t in range(seq):                              # seq is static & small
            row = idx_ref[t]                              # scalar read from SMEM
            x_scr[pl.ds(t, 1), :] = emb_ref[pl.ds(row, 1), :]
    else:
        # Large table: per-row DMA gather from HBM, one semaphore slot per copy,
        # issue fully unrolled, then wait on the exact descriptors issued.
        copies = []
        for t in range(seq):
            row = idx_ref[t]
            cp = pltpu.make_async_copy(emb_ref.at[pl.ds(row, 1), :],
                                       x_scr.at[pl.ds(t, 1), :],
                                       gather_sem.at[t])
            cp.start()
            copies.append(cp)
        for cp in copies:
            cp.wait()

    # ---- 2) Fused input-gate precompute (single MXU matmul for both directions) -----------
    # gx layout per row: [i_f f_f g_f o_f | i_b f_b g_b o_b], each block Hp lanes.
    x = x_scr[...]                                        # (seq, Hp) f32
    gx_scr[...] = (jnp.dot(x.astype(wdtype), wih_ref[...],
                           preferred_element_type=jnp.float32) + b_ref[...])

    def cell(gates, c):
        # gates: (1, 4Hp); every slice is a static, 128-lane-aligned full vreg.
        i = jax.nn.sigmoid(gates[:, 0 * Hp:1 * Hp])
        f = jax.nn.sigmoid(gates[:, 1 * Hp:2 * Hp])
        g = jnp.tanh(gates[:, 2 * Hp:3 * Hp])
        o = jax.nn.sigmoid(gates[:, 3 * Hp:4 * Hp])
        c_new = f * c + i * g
        h_new = o * jnp.tanh(c_new)
        return h_new, c_new

    zeros = jnp.zeros((1, Hp), dtype=jnp.float32)

    # ---- 3) Fused bidirectional recurrence -------------------------------------------------
    # One (1, 2Hp) @ block-diag(2Hp, 8Hp) matmul per step serves both directions.
    def step(t, carry):
        h_f, c_f, h_b, c_b = carry
        tb = seq - 1 - t
        h_cat = jnp.concatenate([h_f, h_b], axis=1).astype(wdtype)       # (1, 2Hp)
        ghh = jnp.dot(h_cat, whh_ref[...],
                      preferred_element_type=jnp.float32)                # (1, 8Hp)
        gf = gx_scr[pl.ds(t, 1), 0:4 * Hp] + ghh[:, 0:4 * Hp]
        gb = gx_scr[pl.ds(tb, 1), 4 * Hp:8 * Hp] + ghh[:, 4 * Hp:8 * Hp]
        h_f, c_f = cell(gf, c_f)
        h_b, c_b = cell(gb, c_b)
        out_ref[pl.ds(t, 1), 0:Hp] = h_f                  # lane-aligned full-vreg stores
        out_ref[pl.ds(tb, 1), Hp:2 * Hp] = h_b
        return (h_f, c_f, h_b, c_b)

    unroll = seq if seq <= 16 else 8
    h_f, c_f, h_b, c_b = lax.fori_loop(
        0, seq, step, (zeros, zeros, zeros, zeros), unroll=unroll)

    # ---- 4) Final states, PyTorch order [forward, backward] --------------------------------
    hn_ref[0:1, :] = h_f
    hn_ref[1:2, :] = h_b
    cn_ref[0:1, :] = c_f
    cn_ref[1:2, :] = c_b


def _round_up(x, m):
    return ((x + m - 1) // m) * m


def prepare_encoder_params(params, weight_dtype=jnp.bfloat16):
    """Pad / fuse / cast weights ONCE (outside the per-call forward)."""
    H = params["hidden_size"]
    Hp = max(_round_up(H, 128), 128)                 # hidden padded to full 128-lane vregs

    def pad_w(w):                                    # (H, 4H) -> (Hp, 4Hp), per gate block
        if Hp == H:
            return w
        w4 = w.reshape(H, 4, H)
        w4 = jnp.pad(w4, ((0, Hp - H), (0, 0), (0, Hp - H)))
        return w4.reshape(Hp, 4 * Hp)

    def pad_b(b):                                    # (1, 4H) -> (1, 4Hp)
        if Hp == H:
            return b
        b4 = b.reshape(1, 4, H)
        b4 = jnp.pad(b4, ((0, 0), (0, 0), (0, Hp - H)))
        return b4.reshape(1, 4 * Hp)

    # Fused input projection: (Hp, 8Hp) = [W_ih_f | W_ih_b] in bf16.
    wih = jnp.concatenate([pad_w(params["w_ih_f"]), pad_w(params["w_ih_b"])],
                          axis=1).astype(weight_dtype)
    # Block-diagonal recurrent weight (2Hp, 8Hp): [W_hh_f ⊕ W_hh_b].
    whh = jnp.zeros((2 * Hp, 8 * Hp), weight_dtype)
    whh = whh.at[:Hp, :4 * Hp].set(pad_w(params["w_hh_f"]).astype(weight_dtype))
    whh = whh.at[Hp:, 4 * Hp:].set(pad_w(params["w_hh_b"]).astype(weight_dtype))
    # Fused bias stays f32 (exact add into the f32 gate accumulators).
    bias = jnp.concatenate([pad_b(params["b_f"]), pad_b(params["b_b"])],
                           axis=1).astype(jnp.float32)

    emb = params["embedding"].astype(jnp.float32)
    vocab = emb.shape[0]
    vocab_p = _round_up(vocab, 8)
    emb_p = jnp.pad(emb, ((0, vocab_p - vocab), (0, Hp - H)))

    # Bulk-copy the whole table into VMEM when it is small; otherwise leave it in HBM
    # and DMA-gather rows inside the kernel.
    table_in_vmem = (vocab_p * Hp * 4) <= (4 << 20)

    return {
        "hidden_size": H,
        "hidden_pad": Hp,
        "wih": wih,
        "whh": whh,
        "bias": bias,
        "embedding": emb_p,
        "table_in_vmem": table_in_vmem,
    }


def encoder_rnn_forward(indices, prep):
    """Mirrors EncoderRNN.forward: returns (output, (h_n, c_n)) with PyTorch shapes."""
    H = prep["hidden_size"]
    Hp = prep["hidden_pad"]
    idx = indices.reshape(-1).astype(jnp.int32)
    seq = int(idx.shape[0])
    table_in_vmem = bool(prep["table_in_vmem"])
    wbytes = jnp.dtype(prep["wih"].dtype).itemsize

    vmem = pl.BlockSpec(memory_space=pltpu.MemorySpace.VMEM)
    smem = pl.BlockSpec(memory_space=pltpu.MemorySpace.SMEM)
    emb_spec = vmem if table_in_vmem else pl.BlockSpec(memory_space=pl.ANY)

    scratch = [
        pltpu.VMEM((seq, Hp), jnp.float32),          # gathered embeddings
        pltpu.VMEM((seq, 8 * Hp), jnp.float32),      # fused input-gate slab (fwd | bwd)
    ]
    if not table_in_vmem:
        scratch.append(pltpu.SemaphoreType.DMA((seq,)))   # one slot per gather copy

    # Explicit VMEM budget (weights + bias + scratch + outputs [+ table]), 2x headroom.
    vmem_bytes = (prep["wih"].size + prep["whh"].size) * wbytes
    vmem_bytes += prep["bias"].size * 4
    vmem_bytes += (seq * Hp + seq * 8 * Hp + seq * 2 * Hp + 4 * Hp) * 4
    if table_in_vmem:
        vmem_bytes += prep["embedding"].size * 4
    vmem_limit = int(min(max(2 * vmem_bytes + (8 << 20), 16 << 20), 112 << 20))

    out, hn, cn = pl.pallas_call(
        functools.partial(_encoder_rnn_kernel, hidden_pad=Hp, seq_len=seq,
                          table_in_vmem=table_in_vmem),
        out_shape=(
            jax.ShapeDtypeStruct((seq, 2 * Hp), jnp.float32),   # [fwd | bwd] hidden states
            jax.ShapeDtypeStruct((2, Hp), jnp.float32),         # h_n
            jax.ShapeDtypeStruct((2, Hp), jnp.float32),         # c_n
        ),
        in_specs=[smem, emb_spec, vmem, vmem, vmem],
        out_specs=(vmem, vmem, vmem),
        scratch_shapes=scratch,
        compiler_params=pltpu.CompilerParams(vmem_limit_bytes=vmem_limit),
    )(idx, prep["embedding"], prep["wih"], prep["whh"], prep["bias"])

    # PyTorch shapes: output (seq, 1, 2H); h_n, c_n (2, 1, H)
    if Hp == H:
        output = out[:, :2 * H]
    else:
        output = jnp.concatenate([out[:, :H], out[:, Hp:Hp + H]], axis=-1)
    output = output.reshape(seq, 1, 2 * H)
    h_n = hn[:, :H].reshape(2, 1, H)
    c_n = cn[:, :H].reshape(2, 1, H)
    return output, (h_n, c_n)


def encoder_rnn_reference(indices, params):
    """Pure-JAX f32 reference (mirrors PyTorch nn.LSTM bidirectional, batch=1)."""
    H = params["hidden_size"]
    emb = params["embedding"][indices]               # (seq, H)

    def run(x_seq, wih, whh, b):
        def cell(carry, x_t):
            h, c = carry
            gates = x_t @ wih + h @ whh + b[0]
            i = jax.nn.sigmoid(gates[0 * H:1 * H])
            f = jax.nn.sigmoid(gates[1 * H:2 * H])
            g = jnp.tanh(gates[2 * H:3 * H])
            o = jax.nn.sigmoid(gates[3 * H:4 * H])
            c = f * c + i * g
            h = o * jnp.tanh(c)
            return (h, c), h
        (h, c), hs = lax.scan(cell, (jnp.zeros(H), jnp.zeros(H)), x_seq)
        return hs, h, c

    hs_f, hf, cf = run(emb, params["w_ih_f"], params["w_hh_f"], params["b_f"])
    hs_b_rev, hb, cb = run(emb[::-1], params["w_ih_b"], params["w_hh_b"], params["b_b"])
    hs_b = hs_b_rev[::-1]
    output = jnp.concatenate([hs_f, hs_b], axis=-1).reshape(-1, 1, 2 * H)
    h_n = jnp.stack([hf, hb]).reshape(2, 1, H)
    c_n = jnp.stack([cf, cb]).reshape(2, 1, H)
    return output, (h_n, c_n)


def init_params(key, vocab_size, hidden_size):
    H = hidden_size
    keys = jax.random.split(key, 9)
    bound = 1.0 / jnp.sqrt(jnp.float32(H))  # PyTorch LSTM init: U(-1/sqrt(H), 1/sqrt(H))

    def u(k, shape):
        return jax.random.uniform(k, shape, jnp.float32, -bound, bound)

    # "pretrained" embedding (nn.Embedding.from_pretrained) -- synthetic deterministic table.
    embedding = jax.random.normal(keys[0], (vocab_size, H), jnp.float32)

    return {
        "hidden_size": H,
        "embedding": embedding,
        # stored transposed (H, 4H) for x @ W; gate order [i, f, g, o]
        "w_ih_f": u(keys[1], (H, 4 * H)),
        "w_hh_f": u(keys[2], (H, 4 * H)),
        "b_f": (u(keys[3], (1, 4 * H)) + u(keys[4], (1, 4 * H))),  # b_ih + b_hh
        "w_ih_b": u(keys[5], (H, 4 * H)),
        "w_hh_b": u(keys[6], (H, 4 * H)),
        "b_b": (u(keys[7], (1, 4 * H)) + u(keys[8], (1, 4 * H))),
    }


if __name__ == "__main__":
    key = jax.random.PRNGKey(0)
    k_param, k_idx = jax.random.split(key)

    vocab_size = 64
    hidden_size = 32
    seq_len = 8

    params = init_params(k_param, vocab_size, hidden_size)
    indices = jax.random.randint(k_idx, (seq_len,), 0, vocab_size, dtype=jnp.int32)

    prep = prepare_encoder_params(params, weight_dtype=jnp.bfloat16)
    output, (h_n, c_n) = encoder_rnn_forward(indices, prep)
    jax.block_until_ready((output, h_n, c_n))

    assert output.shape == (seq_len, 1, 2 * hidden_size)
    assert h_n.shape == (2, 1, hidden_size)
    assert c_n.shape == (2, 1, hidden_size)

    ref_out, (ref_h, ref_c) = encoder_rnn_reference(indices, params)
    # Tolerances account for bf16 weight storage (gates accumulate in f32).
    assert bool(jnp.allclose(output, ref_out, atol=4e-2, rtol=2e-2)), "output mismatch"
    assert bool(jnp.allclose(h_n, ref_h, atol=4e-2, rtol=2e-2)), "h_n mismatch"
    assert bool(jnp.allclose(c_n, ref_c, atol=4e-2, rtol=2e-2)), "c_n mismatch"

    print("KERNEL_OK")
</pallas_src>

<mosaic_0001>
module attributes {stable_mosaic.version = 11 : i64} {
  func.func @_encoder_rnn_kernel(%arg0: memref<8xi32, #tpu.memory_space<smem>>, %arg1: memref<64x128xf32, #tpu.memory_space<vmem>>, %arg2: memref<128x1024xbf16, #tpu.memory_space<vmem>>, %arg3: memref<256x1024xbf16, #tpu.memory_space<vmem>>, %arg4: memref<1x1024xf32, #tpu.memory_space<vmem>>, %arg5: memref<8x256xf32, #tpu.memory_space<vmem>>, %arg6: memref<2x128xf32, #tpu.memory_space<vmem>>, %arg7: memref<2x128xf32, #tpu.memory_space<vmem>>, %arg8: memref<8x128xf32, #tpu.memory_space<vmem>>, %arg9: memref<8x1024xf32, #tpu.memory_space<vmem>>) attributes {dimension_semantics = [], scalar_prefetch = 0 : i64, scratch_operands = 2 : i64, tpu.core_type = #tpu.core_type<tc>} {
    %c0 = arith.constant 0 : index
    %0 = memref.load %arg0[%c0] : memref<8xi32, #tpu.memory_space<smem>>
    %1 = arith.index_cast %0 : i32 to index
    %c0_0 = arith.constant 0 : index
    %2 = vector.load %arg1[%1, %c0_0] : memref<64x128xf32, #tpu.memory_space<vmem>>, vector<1x128xf32>
    %c0_1 = arith.constant 0 : index
    %c0_2 = arith.constant 0 : index
    %3 = vector.load %arg8[%c0_1, %c0_2] : memref<8x128xf32, #tpu.memory_space<vmem>>, vector<1x128xf32>
    tpu.vector_store %arg8[%c0_1, %c0_2], %2 {strides = array<i32>} : memref<8x128xf32, #tpu.memory_space<vmem>>, vector<1x128xf32>,
    %c1 = arith.constant 1 : index
    %4 = memref.load %arg0[%c1] : memref<8xi32, #tpu.memory_space<smem>>
    %5 = arith.index_cast %4 : i32 to index
    %c0_3 = arith.constant 0 : index
    %6 = vector.load %arg1[%5, %c0_3] : memref<64x128xf32, #tpu.memory_space<vmem>>, vector<1x128xf32>
    %c1_4 = arith.constant 1 : index
    %c0_5 = arith.constant 0 : index
    %7 = vector.load %arg8[%c1_4, %c0_5] : memref<8x128xf32, #tpu.memory_space<vmem>>, vector<1x128xf32>
    tpu.vector_store %arg8[%c1_4, %c0_5], %6 {strides = array<i32>} : memref<8x128xf32, #tpu.memory_space<vmem>>, vector<1x128xf32>,
    %c2 = arith.constant 2 : index
    %8 = memref.load %arg0[%c2] : memref<8xi32, #tpu.memory_space<smem>>
    %9 = arith.index_cast %8 : i32 to index
    %c0_6 = arith.constant 0 : index
    %10 = vector.load %arg1[%9, %c0_6] : memref<64x128xf32, #tpu.memory_space<vmem>>, vector<1x128xf32>
    %c2_7 = arith.constant 2 : index
    %c0_8 = arith.constant 0 : index
    %11 = vector.load %arg8[%c2_7, %c0_8] : memref<8x128xf32, #tpu.memory_space<vmem>>, vector<1x128xf32>
    tpu.vector_store %arg8[%c2_7, %c0_8], %10 {strides = array<i32>} : memref<8x128xf32, #tpu.memory_space<vmem>>, vector<1x128xf32>,
    %c3 = arith.constant 3 : index
    %12 = memref.load %arg0[%c3] : memref<8xi32, #tpu.memory_space<smem>>
    %13 = arith.index_cast %12 : i32 to index
    %c0_9 = arith.constant 0 : index
    %14 = vector.load %arg1[%13, %c0_9] : memref<64x128xf32, #tpu.memory_space<vmem>>, vector<1x128xf32>
    %c3_10 = arith.constant 3 : index
    %c0_11 = arith.constant 0 : index
    %15 = vector.load %arg8[%c3_10, %c0_11] : memref<8x128xf32, #tpu.memory_space<vmem>>, vector<1x128xf32>
    tpu.vector_store %arg8[%c3_10, %c0_11], %14 {strides = array<i32>} : memref<8x128xf32, #tpu.memory_space<vmem>>, vector<1x128xf32>,
    %c4 = arith.constant 4 : index
    %16 = memref.load %arg0[%c4] : memref<8xi32, #tpu.memory_space<smem>>
    %17 = arith.index_cast %16 : i32 to index
    %c0_12 = arith.constant 0 : index
    %18 = vector.load %arg1[%17, %c0_12] : memref<64x128xf32, #tpu.memory_space<vmem>>, vector<1x128xf32>
    %c4_13 = arith.constant 4 : index
    %c0_14 = arith.constant 0 : index
    %19 = vector.load %arg8[%c4_13, %c0_14] : memref<8x128xf32, #tpu.memory_space<vmem>>, vector<1x128xf32>
    tpu.vector_store %arg8[%c4_13, %c0_14], %18 {strides = array<i32>} : memref<8x128xf32, #tpu.memory_space<vmem>>, vector<1x128xf32>,
    %c5 = arith.constant 5 : index
    %20 = memref.load %arg0[%c5] : memref<8xi32, #tpu.memory_space<smem>>
    %21 = arith.index_cast %20 : i32 to index
    %c0_15 = arith.constant 0 : index
    %22 = vector.load %arg1[%21, %c0_15] : memref<64x128xf32, #tpu.memory_space<vmem>>, vector<1x128xf32>
    %c5_16 = arith.constant 5 : index
    %c0_17 = arith.constant 0 : index
    %23 = vector.load %arg8[%c5_16, %c0_17] : memref<8x128xf32, #tpu.memory_space<vmem>>, vector<1x128xf32>
    tpu.vector_store %arg8[%c5_16, %c0_17], %22 {strides = array<i32>} : memref<8x128xf32, #tpu.memory_space<vmem>>, vector<1x128xf32>,
    %c6 = arith.constant 6 : index
    %24 = memref.load %arg0[%c6] : memref<8xi32, #tpu.memory_space<smem>>
    %25 = arith.index_cast %24 : i32 to index
    %c0_18 = arith.constant 0 : index
    %26 = vector.load %arg1[%25, %c0_18] : memref<64x128xf32, #tpu.memory_space<vmem>>, vector<1x128xf32>
    %c6_19 = arith.constant 6 : index
    %c0_20 = arith.constant 0 : index
    %27 = vector.load %arg8[%c6_19, %c0_20] : memref<8x128xf32, #tpu.memory_space<vmem>>, vector<1x128xf32>
    tpu.vector_store %arg8[%c6_19, %c0_20], %26 {strides = array<i32>} : memref<8x128xf32, #tpu.memory_space<vmem>>, vector<1x128xf32>,
    %c7 = arith.constant 7 : index
    %28 = memref.load %arg0[%c7] : memref<8xi32, #tpu.memory_space<smem>>
    %29 = arith.index_cast %28 : i32 to index
    %c0_21 = arith.constant 0 : index
    %30 = vector.load %arg1[%29, %c0_21] : memref<64x128xf32, #tpu.memory_space<vmem>>, vector<1x128xf32>
    %c7_22 = arith.constant 7 : index
    %c0_23 = arith.constant 0 : index
    %31 = vector.load %arg8[%c7_22, %c0_23] : memref<8x128xf32, #tpu.memory_space<vmem>>, vector<1x128xf32>
    tpu.vector_store %arg8[%c7_22, %c0_23], %30 {strides = array<i32>} : memref<8x128xf32, #tpu.memory_space<vmem>>, vector<1x128xf32>,
    %c0_24 = arith.constant 0 : index
    %c0_25 = arith.constant 0 : index
    %32 = vector.load %arg8[%c0_24, %c0_25] : memref<8x128xf32, #tpu.memory_space<vmem>>, vector<8x128xf32>
    %33 = arith.truncf %32 : vector<8x128xf32> to vector<8x128xbf16>
    %c0_26 = arith.constant 0 : index
    %c0_27 = arith.constant 0 : index
    %34 = vector.load %arg2[%c0_26, %c0_27] : memref<128x1024xbf16, #tpu.memory_space<vmem>>, vector<128x1024xbf16>
    %cst = arith.constant dense<0.000000e+00> : vector<8x1024xf32>
    %35 = tpu.matmul %33, %34, %cst {dimension_numbers = #tpu.dot_dimension_numbers<[1], [0], [0], [1], [0, 0, 1, 1], [], []>} : vector<8x128xbf16>, vector<128x1024xbf16>, vector<8x1024xf32> -> vector<8x1024xf32>
    %c0_28 = arith.constant 0 : index
    %c0_29 = arith.constant 0 : index
    %36 = vector.load %arg4[%c0_28, %c0_29] : memref<1x1024xf32, #tpu.memory_space<vmem>>, vector<1x1024xf32>
    %37 = vector.broadcast %36 : vector<1x1024xf32> to vector<8x1024xf32>
    %38 = arith.addf %35, %37 : vector<8x1024xf32>
    %c0_30 = arith.constant 0 : index
    %c0_31 = arith.constant 0 : index
    %39 = vector.load %arg9[%c0_30, %c0_31] : memref<8x1024xf32, #tpu.memory_space<vmem>>, vector<8x1024xf32>
    tpu.vector_store %arg9[%c0_30, %c0_31], %38 {strides = array<i32>} : memref<8x1024xf32, #tpu.memory_space<vmem>>, vector<8x1024xf32>,
    %cst_32 = arith.constant 0.000000e+00 : f32
    %40 = vector.broadcast %cst_32 : f32 to vector<1x128xf32>
    %c0_i32 = arith.constant 0 : i32
    %c7_i32 = arith.constant 7 : i32
    %41 = arith.subi %c7_i32, %c0_i32 : i32
    %42 = tpu.concatenate %40, %40 in 1 : vector<1x128xf32>, vector<1x128xf32> -> vector<1x256xf32>
    %43 = arith.truncf %42 : vector<1x256xf32> to vector<1x256xbf16>
    %c0_33 = arith.constant 0 : index
    %c0_34 = arith.constant 0 : index
    %44 = vector.load %arg3[%c0_33, %c0_34] : memref<256x1024xbf16, #tpu.memory_space<vmem>>, vector<256x1024xbf16>
    %cst_35 = arith.constant dense<0.000000e+00> : vector<1x1024xf32>
    %45 = tpu.matmul %43, %44, %cst_35 {dimension_numbers = #tpu.dot_dimension_numbers<[1], [0], [0], [1], [0, 0, 1, 1], [], []>} : vector<1x256xbf16>, vector<256x1024xbf16>, vector<1x1024xf32> -> vector<1x1024xf32>
    %46 = arith.index_cast %c0_i32 : i32 to index
    %c0_36 = arith.constant 0 : index
    %47 = vector.load %arg9[%46, %c0_36] : memref<8x1024xf32, #tpu.memory_space<vmem>>, vector<1x512xf32>
    %48 = vector.extract_strided_slice %45 {offsets = [0, 0], sizes = [1, 512], strides = [1, 1]} : vector<1x1024xf32> to vector<1x512xf32>
    %49 = arith.addf %47, %48 : vector<1x512xf32>
    %50 = arith.index_cast %41 : i32 to index
    %c512 = arith.constant 512 : index
    %51 = vector.load %arg9[%50, %c512] : memref<8x1024xf32, #tpu.memory_space<vmem>>, vector<1x512xf32>
    %52 = vector.extract_strided_slice %45 {offsets = [0, 512], sizes = [1, 512], strides = [1, 1]} : vector<1x1024xf32> to vector<1x512xf32>
    %53 = arith.addf %51, %52 : vector<1x512xf32>
    %54 = vector.extract_strided_slice %49 {offsets = [0, 0], sizes = [1, 128], strides = [1, 1]} : vector<1x512xf32> to vector<1x128xf32>
    %55 = arith.negf %54 : vector<1x128xf32>
    %56 = math.exp %55 : vector<1x128xf32>
    %cst_37 = arith.constant 1.000000e+00 : f32
    %57 = vector.broadcast %cst_37 : f32 to vector<1x128xf32>
    %58 = arith.addf %57, %56 : vector<1x128xf32>
    %59 = arith.divf %57, %58 : vector<1x128xf32>
    %60 = vector.extract_strided_slice %49 {offsets = [0, 128], sizes = [1, 128], strides = [1, 1]} : vector<1x512xf32> to vector<1x128xf32>
    %61 = arith.negf %60 : vector<1x128xf32>
    %62 = math.exp %61 : vector<1x128xf32>
    %cst_38 = arith.constant 1.000000e+00 : f32
    %63 = vector.broadcast %cst_38 : f32 to vector<1x128xf32>
    %64 = arith.addf %63, %62 : vector<1x128xf32>
    %65 = arith.divf %63, %64 : vector<1x128xf32>
    %66 = vector.extract_strided_slice %49 {offsets = [0, 256], sizes = [1, 128], strides = [1, 1]} : vector<1x512xf32> to vector<1x128xf32>
    %67 = math.tanh %66 : vector<1x128xf32>
    %68 = vector.extract_strided_slice %49 {offsets = [0, 384], sizes = [1, 128], strides = [1, 1]} : vector<1x512xf32> to vector<1x128xf32>
    %69 = arith.negf %68 : vector<1x128xf32>
    %70 = math.exp %69 : vector<1x128xf32>
    %cst_39 = arith.constant 1.000000e+00 : f32
    %71 = vector.broadcast %cst_39 : f32 to vector<1x128xf32>
    %72 = arith.addf %71, %70 : vector<1x128xf32>
    %73 = arith.divf %71, %72 : vector<1x128xf32>
    %74 = arith.mulf %65, %40 : vector<1x128xf32>
    %75 = arith.mulf %59, %67 : vector<1x128xf32>
    %76 = arith.addf %74, %75 : vector<1x128xf32>
    %77 = math.tanh %76 : vector<1x128xf32>
    %78 = arith.mulf %73, %77 : vector<1x128xf32>
    %79 = vector.extract_strided_slice %53 {offsets = [0, 0], sizes = [1, 128], strides = [1, 1]} : vector<1x512xf32> to vector<1x128xf32>
    %80 = arith.negf %79 : vector<1x128xf32>
    %81 = math.exp %80 : vector<1x128xf32>
    %cst_40 = arith.constant 1.000000e+00 : f32
    %82 = vector.broadcast %cst_40 : f32 to vector<1x128xf32>
    %83 = arith.addf %82, %81 : vector<1x128xf32>
    %84 = arith.divf %82, %83 : vector<1x128xf32>
    %85 = vector.extract_strided_slice %53 {offsets = [0, 128], sizes = [1, 128], strides = [1, 1]} : vector<1x512xf32> to vector<1x128xf32>
    %86 = arith.negf %85 : vector<1x128xf32>
    %87 = math.exp %86 : vector<1x128xf32>
    %cst_41 = arith.constant 1.000000e+00 : f32
    %88 = vector.broadcast %cst_41 : f32 to vector<1x128xf32>
    %89 = arith.addf %88, %87 : vector<1x128xf32>
    %90 = arith.divf %88, %89 : vector<1x128xf32>
    %91 = vector.extract_strided_slice %53 {offsets = [0, 256], sizes = [1, 128], strides = [1, 1]} : vector<1x512xf32> to vector<1x128xf32>
    %92 = math.tanh %91 : vector<1x128xf32>
    %93 = vector.extract_strided_slice %53 {offsets = [0, 384], sizes = [1, 128], strides = [1, 1]} : vector<1x512xf32> to vector<1x128xf32>
    %94 = arith.negf %93 : vector<1x128xf32>
    %95 = math.exp %94 : vector<1x128xf32>
    %cst_42 = arith.constant 1.000000e+00 : f32
    %96 = vector.broadcast %cst_42 : f32 to vector<1x128xf32>
    %97 = arith.addf %96, %95 : vector<1x128xf32>
    %98 = arith.divf %96, %97 : vector<1x128xf32>
    %99 = arith.mulf %90, %40 : vector<1x128xf32>
    %100 = arith.mulf %84, %92 : vector<1x128xf32>
    %101 = arith.addf %99, %100 : vector<1x128xf32>
    %102 = math.tanh %101 : vector<1x128xf32>
    %103 = arith.mulf %98, %102 : vector<1x128xf32>
    %104 = arith.index_cast %c0_i32 : i32 to index
    %c0_43 = arith.constant 0 : index
    %105 = vector.load %arg5[%104, %c0_43] : memref<8x256xf32, #tpu.memory_space<vmem>>, vector<1x128xf32>
    tpu.vector_store %arg5[%104, %c0_43], %78 {strides = array<i32>} : memref<8x256xf32, #tpu.memory_space<vmem>>, vector<1x128xf32>,
    %106 = arith.index_cast %41 : i32 to index
    %c128 = arith.constant 128 : index
    %107 = vector.load %arg5[%106, %c128] : memref<8x256xf32, #tpu.memory_space<vmem>>, vector<1x128xf32>
    tpu.vector_store %arg5[%106, %c128], %103 {strides = array<i32>} : memref<8x256xf32, #tpu.memory_space<vmem>>, vector<1x128xf32>,
    %c1_i32 = arith.constant 1 : i32
    %c7_i32_44 = arith.constant 7 : i32
    %108 = arith.subi %c7_i32_44, %c1_i32 : i32
    %109 = tpu.concatenate %78, %103 in 1 : vector<1x128xf32>, vector<1x128xf32> -> vector<1x256xf32>
    %110 = arith.truncf %109 : vector<1x256xf32> to vector<1x256xbf16>
    %c0_45 = arith.constant 0 : index
    %c0_46 = arith.constant 0 : index
    %111 = vector.load %arg3[%c0_45, %c0_46] : memref<256x1024xbf16, #tpu.memory_space<vmem>>, vector<256x1024xbf16>
    %cst_47 = arith.constant dense<0.000000e+00> : vector<1x1024xf32>
    %112 = tpu.matmul %110, %111, %cst_47 {dimension_numbers = #tpu.dot_dimension_numbers<[1], [0], [0], [1], [0, 0, 1, 1], [], []>} : vector<1x256xbf16>, vector<256x1024xbf16>, vector<1x1024xf32> -> vector<1x1024xf32>
    %113 = arith.index_cast %c1_i32 : i32 to index
    %c0_48 = arith.constant 0 : index
    %114 = vector.load %arg9[%113, %c0_48] : memref<8x1024xf32, #tpu.memory_space<vmem>>, vector<1x512xf32>
    %115 = vector.extract_strided_slice %112 {offsets = [0, 0], sizes = [1, 512], strides = [1, 1]} : vector<1x1024xf32> to vector<1x512xf32>
    %116 = arith.addf %114, %115 : vector<1x512xf32>
    %117 = arith.index_cast %108 : i32 to index
    %c512_49 = arith.constant 512 : index
    %118 = vector.load %arg9[%117, %c512_49] : memref<8x1024xf32, #tpu.memory_space<vmem>>, vector<1x512xf32>
    %119 = vector.extract_strided_slice %112 {offsets = [0, 512], sizes = [1, 512], strides = [1, 1]} : vector<1x1024xf32> to vector<1x512xf32>
    %120 = arith.addf %118, %119 : vector<1x512xf32>
    %121 = vector.extract_strided_slice %116 {offsets = [0, 0], sizes = [1, 128], strides = [1, 1]} : vector<1x512xf32> to vector<1x128xf32>
    %122 = arith.negf %121 : vector<1x128xf32>
    %123 = math.exp %122 : vector<1x128xf32>
    %cst_50 = arith.constant 1.000000e+00 : f32
    %124 = vector.broadcast %cst_50 : f32 to vector<1x128xf32>
    %125 = arith.addf %124, %123 : vector<1x128xf32>
    %126 = arith.divf %124, %125 : vector<1x128xf32>
    %127 = vector.extract_strided_slice %116 {offsets = [0, 128], sizes = [1, 128], strides = [1, 1]} : vector<1x512xf32> to vector<1x128xf32>
    %128 = arith.negf %127 : vector<1x128xf32>
    %129 = math.exp %128 : vector<1x128xf32>
    %cst_51 = arith.constant 1.000000e+00 : f32
    %130 = vector.broadcast %cst_51 : f32 to vector<1x128xf32>
    %131 = arith.addf %130, %129 : vector<1x128xf32>
    %132 = arith.divf %130, %131 : vector<1x128xf32>
    %133 = vector.extract_strided_slice %116 {offsets = [0, 256], sizes = [1, 128], strides = [1, 1]} : vector<1x512xf32> to vector<1x128xf32>
    %134 = math.tanh %133 : vector<1x128xf32>
    %135 = vector.extract_strided_slice %116 {offsets = [0, 384], sizes = [1, 128], strides = [1, 1]} : vector<1x512xf32> to vector<1x128xf32>
    %136 = arith.negf %135 : vector<1x128xf32>
    %137 = math.exp %136 : vector<1x128xf32>
    %cst_52 = arith.constant 1.000000e+00 : f32
    %138 = vector.broadcast %cst_52 : f32 to vector<1x128xf32>
    %139 = arith.addf %138, %137 : vector<1x128xf32>
    %140 = arith.divf %138, %139 : vector<1x128xf32>
    %141 = arith.mulf %132, %76 : vector<1x128xf32>
    %142 = arith.mulf %126, %134 : vector<1x128xf32>
    %143 = arith.addf %141, %142 : vector<1x128xf32>
    %144 = math.tanh %143 : vector<1x128xf32>
    %145 = arith.mulf %140, %144 : vector<1x128xf32>
    %146 = vector.extract_strided_slice %120 {offsets = [0, 0], sizes = [1, 128], strides = [1, 1]} : vector<1x512xf32> to vector<1x128xf32>
    %147 = arith.negf %146 : vector<1x128xf32>
    %148 = math.exp %147 : vector<1x128xf32>
    %cst_53 = arith.constant 1.000000e+00 : f32
    %149 = vector.broadcast %cst_53 : f32 to vector<1x128xf32>
    %150 = arith.addf %149, %148 : vector<1x128xf32>
    %151 = arith.divf %149, %150 : vector<1x128xf32>
    %152 = vector.extract_strided_slice %120 {offsets = [0, 128], sizes = [1, 128], strides = [1, 1]} : vector<1x512xf32> to vector<1x128xf32>
    %153 = arith.negf %152 : vector<1x128xf32>
    %154 = math.exp %153 : vector<1x128xf32>
    %cst_54 = arith.constant 1.000000e+00 : f32
    %155 = vector.broadcast %cst_54 : f32 to vector<1x128xf32>
    %156 = arith.addf %155, %154 : vector<1x128xf32>
    %157 = arith.divf %155, %156 : vector<1x128xf32>
    %158 = vector.extract_strided_slice %120 {offsets = [0, 256], sizes = [1, 128], strides = [1, 1]} : vector<1x512xf32> to vector<1x128xf32>
    %159 = math.tanh %158 : vector<1x128xf32>
    %160 = vector.extract_strided_slice %120 {offsets = [0, 384], sizes = [1, 128], strides = [1, 1]} : vector<1x512xf32> to vector<1x128xf32>
    %161 = arith.negf %160 : vector<1x128xf32>
    %162 = math.exp %161 : vector<1x128xf32>
    %cst_55 = arith.constant 1.000000e+00 : f32
    %163 = vector.broadcast %cst_55 : f32 to vector<1x128xf32>
    %164 = arith.addf %163, %162 : vector<1x128xf32>
    %165 = arith.divf %163, %164 : vector<1x128xf32>
    %166 = arith.mulf %157, %101 : vector<1x128xf32>
    %167 = arith.mulf %151, %159 : vector<1x128xf32>
    %168 = arith.addf %166, %167 : vector<1x128xf32>
    %169 = math.tanh %168 : vector<1x128xf32>
    %170 = arith.mulf %165, %169 : vector<1x128xf32>
    %171 = arith.index_cast %c1_i32 : i32 to index
    %c0_56 = arith.constant 0 : index
    %172 = vector.load %arg5[%171, %c0_56] : memref<8x256xf32, #tpu.memory_space<vmem>>, vector<1x128xf32>
    tpu.vector_store %arg5[%171, %c0_56], %145 {strides = array<i32>} : memref<8x256xf32, #tpu.memory_space<vmem>>, vector<1x128xf32>,
    %173 = arith.index_cast %108 : i32 to index
    %c128_57 = arith.constant 128 : index
    %174 = vector.load %arg5[%173, %c128_57] : memref<8x256xf32, #tpu.memory_space<vmem>>, vector<1x128xf32>
    tpu.vector_store %arg5[%173, %c128_57], %170 {strides = array<i32>} : memref<8x256xf32, #tpu.memory_space<vmem>>, vector<1x128xf32>,
    %c2_i32 = arith.constant 2 : i32
    %c7_i32_58 = arith.constant 7 : i32
    %175 = arith.subi %c7_i32_58, %c2_i32 : i32
    %176 = tpu.concatenate %145, %170 in 1 : vector<1x128xf32>, vector<1x128xf32> -> vector<1x256xf32>
    %177 = arith.truncf %176 : vector<1x256xf32> to vector<1x256xbf16>
    %c0_59 = arith.constant 0 : index
    %c0_60 = arith.constant 0 : index
    %178 = vector.load %arg3[%c0_59, %c0_60] : memref<256x1024xbf16, #tpu.memory_space<vmem>>, vector<256x1024xbf16>
    %cst_61 = arith.constant dense<0.000000e+00> : vector<1x1024xf32>
    %179 = tpu.matmul %177, %178, %cst_61 {dimension_numbers = #tpu.dot_dimension_numbers<[1], [0], [0], [1], [0, 0, 1, 1], [], []>} : vector<1x256xbf16>, vector<256x1024xbf16>, vector<1x1024xf32> -> vector<1x1024xf32>
    %180 = arith.index_cast %c2_i32 : i32 to index
    %c0_62 = arith.constant 0 : index
    %181 = vector.load %arg9[%180, %c0_62] : memref<8x1024xf32, #tpu.memory_space<vmem>>, vector<1x512xf32>
    %182 = vector.extract_strided_slice %179 {offsets = [0, 0], sizes = [1, 512], strides = [1, 1]} : vector<1x1024xf32> to vector<1x512xf32>
    %183 = arith.addf %181, %182 : vector<1x512xf32>
    %184 = arith.index_cast %175 : i32 to index
    %c512_63 = arith.constant 512 : index
    %185 = vector.load %arg9[%184, %c512_63] : memref<8x1024xf32, #tpu.memory_space<vmem>>, vector<1x512xf32>
    %186 = vector.extract_strided_slice %179 {offsets = [0, 512], sizes = [1, 512], strides = [1, 1]} : vector<1x1024xf32> to vector<1x512xf32>
    %187 = arith.addf %185, %186 : vector<1x512xf32>
    %188 = vector.extract_strided_slice %183 {offsets = [0, 0], sizes = [1, 128], strides = [1, 1]} : vector<1x512xf32> to vector<1x128xf32>
    %189 = arith.negf %188 : vector<1x128xf32>
    %190 = math.exp %189 : vector<1x128xf32>
    %cst_64 = arith.constant 1.000000e+00 : f32
    %191 = vector.broadcast %cst_64 : f32 to vector<1x128xf32>
    %192 = arith.addf %191, %190 : vector<1x128xf32>
    %193 = arith.divf %191, %192 : vector<1x128xf32>
    %194 = vector.extract_strided_slice %183 {offsets = [0, 128], sizes = [1, 128], strides = [1, 1]} : vector<1x512xf32> to vector<1x128xf32>
    %195 = arith.negf %194 : vector<1x128xf32>
    %196 = math.exp %195 : vector<1x128xf32>
    %cst_65 = arith.constant 1.000000e+00 : f32
    %197 = vector.broadcast %cst_65 : f32 to vector<1x128xf32>
    %198 = arith.addf %197, %196 : vector<1x128xf32>
    %199 = arith.divf %197, %198 : vector<1x128xf32>
    %200 = vector.extract_strided_slice %183 {offsets = [0, 256], sizes = [1, 128], strides = [1, 1]} : vector<1x512xf32> to vector<1x128xf32>
    %201 = math.tanh %200 : vector<1x128xf32>
    %202 = vector.extract_strided_slice %183 {offsets = [0, 384], sizes = [1, 128], strides = [1, 1]} : vector<1x512xf32> to vector<1x128xf32>
    %203 = arith.negf %202 : vector<1x128xf32>
    %204 = math.exp %203 : vector<1x128xf32>
    %cst_66 = arith.constant 1.000000e+00 : f32
    %205 = vector.broadcast %cst_66 : f32 to vector<1x128xf32>
    %206 = arith.addf %205, %204 : vector<1x128xf32>
    %207 = arith.divf %205, %206 : vector<1x128xf32>
    %208 = arith.mulf %199, %143 : vector<1x128xf32>
    %209 = arith.mulf %193, %201 : vector<1x128xf32>
    %210 = arith.addf %208, %209 : vector<1x128xf32>
    %211 = math.tanh %210 : vector<1x128xf32>
    %212 = arith.mulf %207, %211 : vector<1x128xf32>
    %213 = vector.extract_strided_slice %187 {offsets = [0, 0], sizes = [1, 128], strides = [1, 1]} : vector<1x512xf32> to vector<1x128xf32>
    %214 = arith.negf %213 : vector<1x128xf32>
    %215 = math.exp %214 : vector<1x128xf32>
    %cst_67 = arith.constant 1.000000e+00 : f32
    %216 = vector.broadcast %cst_67 : f32 to vector<1x128xf32>
    %217 = arith.addf %216, %215 : vector<1x128xf32>
    %218 = arith.divf %216, %217 : vector<1x128xf32>
    %219 = vector.extract_strided_slice %187 {offsets = [0, 128], sizes = [1, 128], strides = [1, 1]} : vector<1x512xf32> to vector<1x128xf32>
    %220 = arith.negf %219 : vector<1x128xf32>
    %221 = math.exp %220 : vector<1x128xf32>
    %cst_68 = arith.constant 1.000000e+00 : f32
    %222 = vector.broadcast %cst_68 : f32 to vector<1x128xf32>
    %223 = arith.addf %222, %221 : vector<1x128xf32>
    %224 = arith.divf %222, %223 : vector<1x128xf32>
    %225 = vector.extract_strided_slice %187 {offsets = [0, 256], sizes = [1, 128], strides = [1, 1]} : vector<1x512xf32> to vector<1x128xf32>
    %226 = math.tanh %225 : vector<1x128xf32>
    %227 = vector.extract_strided_slice %187 {offsets = [0, 384], sizes = [1, 128], strides = [1, 1]} : vector<1x512xf32> to vector<1x128xf32>
    %228 = arith.negf %227 : vector<1x128xf32>
    %229 = math.exp %228 : vector<1x128xf32>
    %cst_69 = arith.constant 1.000000e+00 : f32
    %230 = vector.broadcast %cst_69 : f32 to vector<1x128xf32>
    %231 = arith.addf %230, %229 : vector<1x128xf32>
    %232 = arith.divf %230, %231 : vector<1x128xf32>
    %233 = arith.mulf %224, %168 : vector<1x128xf32>
    %234 = arith.mulf %218, %226 : vector<1x128xf32>
    %235 = arith.addf %233, %234 : vector<1x128xf32>
    %236 = math.tanh %235 : vector<1x128xf32>
    %237 = arith.mulf %232, %236 : vector<1x128xf32>
    %238 = arith.index_cast %c2_i32 : i32 to index
    %c0_70 = arith.constant 0 : index
    %239 = vector.load %arg5[%238, %c0_70] : memref<8x256xf32, #tpu.memory_space<vmem>>, vector<1x128xf32>
    tpu.vector_store %arg5[%238, %c0_70], %212 {strides = array<i32>} : memref<8x256xf32, #tpu.memory_space<vmem>>, vector<1x128xf32>,
    %240 = arith.index_cast %175 : i32 to index
    %c128_71 = arith.constant 128 : index
    %241 = vector.load %arg5[%240, %c128_71] : memref<8x256xf32, #tpu.memory_space<vmem>>, vector<1x128xf32>
    tpu.vector_store %arg5[%240, %c128_71], %237 {strides = array<i32>} : memref<8x256xf32, #tpu.memory_space<vmem>>, vector<1x128xf32>,
    %c3_i32 = arith.constant 3 : i32
    %c7_i32_72 = arith.constant 7 : i32
    %242 = arith.subi %c7_i32_72, %c3_i32 : i32
    %243 = tpu.concatenate %212, %237 in 1 : vector<1x128xf32>, vector<1x128xf32> -> vector<1x256xf32>
    %244 = arith.truncf %243 : vector<1x256xf32> to vector<1x256xbf16>
    %c0_73 = arith.constant 0 : index
    %c0_74 = arith.constant 0 : index
    %245 = vector.load %arg3[%c0_73, %c0_74] : memref<256x1024xbf16, #tpu.memory_space<vmem>>, vector<256x1024xbf16>
    %cst_75 = arith.constant dense<0.000000e+00> : vector<1x1024xf32>
    %246 = tpu.matmul %244, %245, %cst_75 {dimension_numbers = #tpu.dot_dimension_numbers<[1], [0], [0], [1], [0, 0, 1, 1], [], []>} : vector<1x256xbf16>, vector<256x1024xbf16>, vector<1x1024xf32> -> vector<1x1024xf32>
    %247 = arith.index_cast %c3_i32 : i32 to index
    %c0_76 = arith.constant 0 : index
    %248 = vector.load %arg9[%247, %c0_76] : memref<8x1024xf32, #tpu.memory_space<vmem>>, vector<1x512xf32>
    %249 = vector.extract_strided_slice %246 {offsets = [0, 0], sizes = [1, 512], strides = [1, 1]} : vector<1x1024xf32> to vector<1x512xf32>
    %250 = arith.addf %248, %249 : vector<1x512xf32>
    %251 = arith.index_cast %242 : i32 to index
    %c512_77 = arith.constant 512 : index
    %252 = vector.load %arg9[%251, %c512_77] : memref<8x1024xf32, #tpu.memory_space<vmem>>, vector<1x512xf32>
    %253 = vector.extract_strided_slice %246 {offsets = [0, 512], sizes = [1, 512], strides = [1, 1]} : vector<1x1024xf32> to vector<1x512xf32>
    %254 = arith.addf %252, %253 : vector<1x512xf32>
    %255 = vector.extract_strided_slice %250 {offsets = [0, 0], sizes = [1, 128], strides = [1, 1]} : vector<1x512xf32> to vector<1x128xf32>
    %256 = arith.negf %255 : vector<1x128xf32>
    %257 = math.exp %256 : vector<1x128xf32>
    %cst_78 = arith.constant 1.000000e+00 : f32
    %258 = vector.broadcast %cst_78 : f32 to vector<1x128xf32>
    %259 = arith.addf %258, %257 : vector<1x128xf32>
    %260 = arith.divf %258, %259 : vector<1x128xf32>
    %261 = vector.extract_strided_slice %250 {offsets = [0, 128], sizes = [1, 128], strides = [1, 1]} : vector<1x512xf32> to vector<1x128xf32>
    %262 = arith.negf %261 : vector<1x128xf32>
    %263 = math.exp %262 : vector<1x128xf32>
    %cst_79 = arith.constant 1.000000e+00 : f32
    %264 = vector.broadcast %cst_79 : f32 to vector<1x128xf32>
    %265 = arith.addf %264, %263 : vector<1x128xf32>
    %266 = arith.divf %264, %265 : vector<1x128xf32>
    %267 = vector.extract_strided_slice %250 {offsets = [0, 256], sizes = [1, 128], strides = [1, 1]} : vector<1x512xf32> to vector<1x128xf32>
    %268 = math.tanh %267 : vector<1x128xf32>
    %269 = vector.extract_strided_slice %250 {offsets = [0, 384], sizes = [1, 128], strides = [1, 1]} : vector<1x512xf32> to vector<1x128xf32>
    %270 = arith.negf %269 : vector<1x128xf32>
    %271 = math.exp %270 : vector<1x128xf32>
    %cst_80 = arith.constant 1.000000e+00 : f32
    %272 = vector.broadcast %cst_80 : f32 to vector<1x128xf32>
    %273 = arith.addf %272, %271 : vector<1x128xf32>
    %274 = arith.divf %272, %273 : vector<1x128xf32>
    %275 = arith.mulf %266, %210 : vector<1x128xf32>
    %276 = arith.mulf %260, %268 : vector<1x128xf32>
    %277 = arith.addf %275, %276 : vector<1x128xf32>
    %278 = math.tanh %277 : vector<1x128xf32>
    %279 = arith.mulf %274, %278 : vector<1x128xf32>
    %280 = vector.extract_strided_slice %254 {offsets = [0, 0], sizes = [1, 128], strides = [1, 1]} : vector<1x512xf32> to vector<1x128xf32>
    %281 = arith.negf %280 : vector<1x128xf32>
    %282 = math.exp %281 : vector<1x128xf32>
    %cst_81 = arith.constant 1.000000e+00 : f32
    %283 = vector.broadcast %cst_81 : f32 to vector<1x128xf32>
    %284 = arith.addf %283, %282 : vector<1x128xf32>
    %285 = arith.divf %283, %284 : vector<1x128xf32>
    %286 = vector.extract_strided_slice %254 {offsets = [0, 128], sizes = [1, 128], strides = [1, 1]} : vector<1x512xf32> to vector<1x128xf32>
    %287 = arith.negf %286 : vector<1x128xf32>
    %288 = math.exp %287 : vector<1x128xf32>
    %cst_82 = arith.constant 1.000000e+00 : f32
    %289 = vector.broadcast %cst_82 : f32 to vector<1x128xf32>
    %290 = arith.addf %289, %288 : vector<1x128xf32>
    %291 = arith.divf %289, %290 : vector<1x128xf32>
    %292 = vector.extract_strided_slice %254 {offsets = [0, 256], sizes = [1, 128], strides = [1, 1]} : vector<1x512xf32> to vector<1x128xf32>
    %293 = math.tanh %292 : vector<1x128xf32>
    %294 = vector.extract_strided_slice %254 {offsets = [0, 384], sizes = [1, 128], strides = [1, 1]} : vector<1x512xf32> to vector<1x128xf32>
    %295 = arith.negf %294 : vector<1x128xf32>
    %296 = math.exp %295 : vector<1x128xf32>
    %cst_83 = arith.constant 1.000000e+00 : f32
    %297 = vector.broadcast %cst_83 : f32 to vector<1x128xf32>
    %298 = arith.addf %297, %296 : vector<1x128xf32>
    %299 = arith.divf %297, %298 : vector<1x128xf32>
    %300 = arith.mulf %291, %235 : vector<1x128xf32>
    %301 = arith.mulf %285, %293 : vector<1x128xf32>
    %302 = arith.addf %300, %301 : vector<1x128xf32>
    %303 = math.tanh %302 : vector<1x128xf32>
    %304 = arith.mulf %299, %303 : vector<1x128xf32>
    %305 = arith.index_cast %c3_i32 : i32 to index
    %c0_84 = arith.constant 0 : index
    %306 = vector.load %arg5[%305, %c0_84] : memref<8x256xf32, #tpu.memory_space<vmem>>, vector<1x128xf32>
    tpu.vector_store %arg5[%305, %c0_84], %279 {strides = array<i32>} : memref<8x256xf32, #tpu.memory_space<vmem>>, vector<1x128xf32>,
    %307 = arith.index_cast %242 : i32 to index
    %c128_85 = arith.constant 128 : index
    %308 = vector.load %arg5[%307, %c128_85] : memref<8x256xf32, #tpu.memory_space<vmem>>, vector<1x128xf32>
    tpu.vector_store %arg5[%307, %c128_85], %304 {strides = array<i32>} : memref<8x256xf32, #tpu.memory_space<vmem>>, vector<1x128xf32>,
    %c4_i32 = arith.constant 4 : i32
    %c7_i32_86 = arith.constant 7 : i32
    %309 = arith.subi %c7_i32_86, %c4_i32 : i32
    %310 = tpu.concatenate %279, %304 in 1 : vector<1x128xf32>, vector<1x128xf32> -> vector<1x256xf32>
    %311 = arith.truncf %310 : vector<1x256xf32> to vector<1x256xbf16>
    %c0_87 = arith.constant 0 : index
    %c0_88 = arith.constant 0 : index
    %312 = vector.load %arg3[%c0_87, %c0_88] : memref<256x1024xbf16, #tpu.memory_space<vmem>>, vector<256x1024xbf16>
    %cst_89 = arith.constant dense<0.000000e+00> : vector<1x1024xf32>
    %313 = tpu.matmul %311, %312, %cst_89 {dimension_numbers = #tpu.dot_dimension_numbers<[1], [0], [0], [1], [0, 0, 1, 1], [], []>} : vector<1x256xbf16>, vector<256x1024xbf16>, vector<1x1024xf32> -> vector<1x1024xf32>
    %314 = arith.index_cast %c4_i32 : i32 to index
    %c0_90 = arith.constant 0 : index
    %315 = vector.load %arg9[%314, %c0_90] : memref<8x1024xf32, #tpu.memory_space<vmem>>, vector<1x512xf32>
    %316 = vector.extract_strided_slice %313 {offsets = [0, 0], sizes = [1, 512], strides = [1, 1]} : vector<1x1024xf32> to vector<1x512xf32>
    %317 = arith.addf %315, %316 : vector<1x512xf32>
    %318 = arith.index_cast %309 : i32 to index
    %c512_91 = arith.constant 512 : index
    %319 = vector.load %arg9[%318, %c512_91] : memref<8x1024xf32, #tpu.memory_space<vmem>>, vector<1x512xf32>
    %320 = vector.extract_strided_slice %313 {offsets = [0, 512], sizes = [1, 512], strides = [1, 1]} : vector<1x1024xf32> to vector<1x512xf32>
    %321 = arith.addf %319, %320 : vector<1x512xf32>
    %322 = vector.extract_strided_slice %317 {offsets = [0, 0], sizes = [1, 128], strides = [1, 1]} : vector<1x512xf32> to vector<1x128xf32>
    %323 = arith.negf %322 : vector<1x128xf32>
    %324 = math.exp %323 : vector<1x128xf32>
    %cst_92 = arith.constant 1.000000e+00 : f32
    %325 = vector.broadcast %cst_92 : f32 to vector<1x128xf32>
    %326 = arith.addf %325, %324 : vector<1x128xf32>
    %327 = arith.divf %325, %326 : vector<1x128xf32>
    %328 = vector.extract_strided_slice %317 {offsets = [0, 128], sizes = [1, 128], strides = [1, 1]} : vector<1x512xf32> to vector<1x128xf32>
    %329 = arith.negf %328 : vector<1x128xf32>
    %330 = math.exp %329 : vector<1x128xf32>
    %cst_93 = arith.constant 1.000000e+00 : f32
    %331 = vector.broadcast %cst_93 : f32 to vector<1x128xf32>
    %332 = arith.addf %331, %330 : vector<1x128xf32>
    %333 = arith.divf %331, %332 : vector<1x128xf32>
    %334 = vector.extract_strided_slice %317 {offsets = [0, 256], sizes = [1, 128], strides = [1, 1]} : vector<1x512xf32> to vector<1x128xf32>
    %335 = math.tanh %334 : vector<1x128xf32>
    %336 = vector.extract_strided_slice %317 {offsets = [0, 384], sizes = [1, 128], strides = [1, 1]} : vector<1x512xf32> to vector<1x128xf32>
    %337 = arith.negf %336 : vector<1x128xf32>
    %338 = math.exp %337 : vector<1x128xf32>
    %cst_94 = arith.constant 1.000000e+00 : f32
    %339 = vector.broadcast %cst_94 : f32 to vector<1x128xf32>
    %340 = arith.addf %339, %338 : vector<1x128xf32>
    %341 = arith.divf %339, %340 : vector<1x128xf32>
    %342 = arith.mulf %333, %277 : vector<1x128xf32>
    %343 = arith.mulf %327, %335 : vector<1x128xf32>
    %344 = arith.addf %342, %343 : vector<1x128xf32>
    %345 = math.tanh %344 : vector<1x128xf32>
    %346 = arith.mulf %341, %345 : vector<1x128xf32>
    %347 = vector.extract_strided_slice %321 {offsets = [0, 0], sizes = [1, 128], strides = [1, 1]} : vector<1x512xf32> to vector<1x128xf32>
    %348 = arith.negf %347 : vector<1x128xf32>
    %349 = math.exp %348 : vector<1x128xf32>
    %cst_95 = arith.constant 1.000000e+00 : f32
    %350 = vector.broadcast %cst_95 : f32 to vector<1x128xf32>
    %351 = arith.addf %350, %349 : vector<1x128xf32>
    %352 = arith.divf %350, %351 : vector<1x128xf32>
    %353 = vector.extract_strided_slice %321 {offsets = [0, 128], sizes = [1, 128], strides = [1, 1]} : vector<1x512xf32> to vector<1x128xf32>
    %354 = arith.negf %353 : vector<1x128xf32>
    %355 = math.exp %354 : vector<1x128xf32>
    %cst_96 = arith.constant 1.000000e+00 : f32
    %356 = vector.broadcast %cst_96 : f32 to vector<1x128xf32>
    %357 = arith.addf %356, %355 : vector<1x128xf32>
    %358 = arith.divf %356, %357 : vector<1x128xf32>
    %359 = vector.extract_strided_slice %321 {offsets = [0, 256], sizes = [1, 128], strides = [1, 1]} : vector<1x512xf32> to vector<1x128xf32>
    %360 = math.tanh %359 : vector<1x128xf32>
    %361 = vector.extract_strided_slice %321 {offsets = [0, 384], sizes = [1, 128], strides = [1, 1]} : vector<1x512xf32> to vector<1x128xf32>
    %362 = arith.negf %361 : vector<1x128xf32>
    %363 = math.exp %362 : vector<1x128xf32>
    %cst_97 = arith.constant 1.000000e+00 : f32
    %364 = vector.broadcast %cst_97 : f32 to vector<1x128xf32>
    %365 = arith.addf %364, %363 : vector<1x128xf32>
    %366 = arith.divf %364, %365 : vector<1x128xf32>
    %367 = arith.mulf %358, %302 : vector<1x128xf32>
    %368 = arith.mulf %352, %360 : vector<1x128xf32>
    %369 = arith.addf %367, %368 : vector<1x128xf32>
    %370 = math.tanh %369 : vector<1x128xf32>
    %371 = arith.mulf %366, %370 : vector<1x128xf32>
    %372 = arith.index_cast %c4_i32 : i32 to index
    %c0_98 = arith.constant 0 : index
    %373 = vector.load %arg5[%372, %c0_98] : memref<8x256xf32, #tpu.memory_space<vmem>>, vector<1x128xf32>
    tpu.vector_store %arg5[%372, %c0_98], %346 {strides = array<i32>} : memref<8x256xf32, #tpu.memory_space<vmem>>, vector<1x128xf32>,
    %374 = arith.index_cast %309 : i32 to index
    %c128_99 = arith.constant 128 : index
    %375 = vector.load %arg5[%374, %c128_99] : memref<8x256xf32, #tpu.memory_space<vmem>>, vector<1x128xf32>
    tpu.vector_store %arg5[%374, %c128_99], %371 {strides = array<i32>} : memref<8x256xf32, #tpu.memory_space<vmem>>, vector<1x128xf32>,
    %c5_i32 = arith.constant 5 : i32
    %c7_i32_100 = arith.constant 7 : i32
    %376 = arith.subi %c7_i32_100, %c5_i32 : i32
    %377 = tpu.concatenate %346, %371 in 1 : vector<1x128xf32>, vector<1x128xf32> -> vector<1x256xf32>
    %378 = arith.truncf %377 : vector<1x256xf32> to vector<1x256xbf16>
    %c0_101 = arith.constant 0 : index
    %c0_102 = arith.constant 0 : index
    %379 = vector.load %arg3[%c0_101, %c0_102] : memref<256x1024xbf16, #tpu.memory_space<vmem>>, vector<256x1024xbf16>
    %cst_103 = arith.constant dense<0.000000e+00> : vector<1x1024xf32>
    %380 = tpu.matmul %378, %379, %cst_103 {dimension_numbers = #tpu.dot_dimension_numbers<[1], [0], [0], [1], [0, 0, 1, 1], [], []>} : vector<1x256xbf16>, vector<256x1024xbf16>, vector<1x1024xf32> -> vector<1x1024xf32>
    %381 = arith.index_cast %c5_i32 : i32 to index
    %c0_104 = arith.constant 0 : index
    %382 = vector.load %arg9[%381, %c0_104] : memref<8x1024xf32, #tpu.memory_space<vmem>>, vector<1x512xf32>
    %383 = vector.extract_strided_slice %380 {offsets = [0, 0], sizes = [1, 512], strides = [1, 1]} : vector<1x1024xf32> to vector<1x512xf32>
    %384 = arith.addf %382, %383 : vector<1x512xf32>
    %385 = arith.index_cast %376 : i32 to index
    %c512_105 = arith.constant 512 : index
    %386 = vector.load %arg9[%385, %c512_105] : memref<8x1024xf32, #tpu.memory_space<vmem>>, vector<1x512xf32>
    %387 = vector.extract_strided_slice %380 {offsets = [0, 512], sizes = [1, 512], strides = [1, 1]} : vector<1x1024xf32> to vector<1x512xf32>
    %388 = arith.addf %386, %387 : vector<1x512xf32>
    %389 = vector.extract_strided_slice %384 {offsets = [0, 0], sizes = [1, 128], strides = [1, 1]} : vector<1x512xf32> to vector<1x128xf32>
    %390 = arith.negf %389 : vector<1x128xf32>
    %391 = math.exp %390 : vector<1x128xf32>
    %cst_106 = arith.constant 1.000000e+00 : f32
    %392 = vector.broadcast %cst_106 : f32 to vector<1x128xf32>
    %393 = arith.addf %392, %391 : vector<1x128xf32>
    %394 = arith.divf %392, %393 : vector<1x128xf32>
    %395 = vector.extract_strided_slice %384 {offsets = [0, 128], sizes = [1, 128], strides = [1, 1]} : vector<1x512xf32> to vector<1x128xf32>
    %396 = arith.negf %395 : vector<1x128xf32>
    %397 = math.exp %396 : vector<1x128xf32>
    %cst_107 = arith.constant 1.000000e+00 : f32
    %398 = vector.broadcast %cst_107 : f32 to vector<1x128xf32>
    %399 = arith.addf %398, %397 : vector<1x128xf32>
    %400 = arith.divf %398, %399 : vector<1x128xf32>
    %401 = vector.extract_strided_slice %384 {offsets = [0, 256], sizes = [1, 128], strides = [1, 1]} : vector<1x512xf32> to vector<1x128xf32>
    %402 = math.tanh %401 : vector<1x128xf32>
    %403 = vector.extract_strided_slice %384 {offsets = [0, 384], sizes = [1, 128], strides = [1, 1]} : vector<1x512xf32> to vector<1x128xf32>
    %404 = arith.negf %403 : vector<1x128xf32>
    %405 = math.exp %404 : vector<1x128xf32>
    %cst_108 = arith.constant 1.000000e+00 : f32
    %406 = vector.broadcast %cst_108 : f32 to vector<1x128xf32>
    %407 = arith.addf %406, %405 : vector<1x128xf32>
    %408 = arith.divf %406, %407 : vector<1x128xf32>
    %409 = arith.mulf %400, %344 : vector<1x128xf32>
    %410 = arith.mulf %394, %402 : vector<1x128xf32>
    %411 = arith.addf %409, %410 : vector<1x128xf32>
    %412 = math.tanh %411 : vector<1x128xf32>
    %413 = arith.mulf %408, %412 : vector<1x128xf32>
    %414 = vector.extract_strided_slice %388 {offsets = [0, 0], sizes = [1, 128], strides = [1, 1]} : vector<1x512xf32> to vector<1x128xf32>
    %415 = arith.negf %414 : vector<1x128xf32>
    %416 = math.exp %415 : vector<1x128xf32>
    %cst_109 = arith.constant 1.000000e+00 : f32
    %417 = vector.broadcast %cst_109 : f32 to vector<1x128xf32>
    %418 = arith.addf %417, %416 : vector<1x128xf32>
    %419 = arith.divf %417, %418 : vector<1x128xf32>
    %420 = vector.extract_strided_slice %388 {offsets = [0, 128], sizes = [1, 128], strides = [1, 1]} : vector<1x512xf32> to vector<1x128xf32>
    %421 = arith.negf %420 : vector<1x128xf32>
    %422 = math.exp %421 : vector<1x128xf32>
    %cst_110 = arith.constant 1.000000e+00 : f32
    %423 = vector.broadcast %cst_110 : f32 to vector<1x128xf32>
    %424 = arith.addf %423, %422 : vector<1x128xf32>
    %425 = arith.divf %423, %424 : vector<1x128xf32>
    %426 = vector.extract_strided_slice %388 {offsets = [0, 256], sizes = [1, 128], strides = [1, 1]} : vector<1x512xf32> to vector<1x128xf32>
    %427 = math.tanh %426 : vector<1x128xf32>
    %428 = vector.extract_strided_slice %388 {offsets = [0, 384], sizes = [1, 128], strides = [1, 1]} : vector<1x512xf32> to vector<1x128xf32>
    %429 = arith.negf %428 : vector<1x128xf32>
    %430 = math.exp %429 : vector<1x128xf32>
    %cst_111 = arith.constant 1.000000e+00 : f32
    %431 = vector.broadcast %cst_111 : f32 to vector<1x128xf32>
    %432 = arith.addf %431, %430 : vector<1x128xf32>
    %433 = arith.divf %431, %432 : vector<1x128xf32>
    %434 = arith.mulf %425, %369 : vector<1x128xf32>
    %435 = arith.mulf %419, %427 : vector<1x128xf32>
    %436 = arith.addf %434, %435 : vector<1x128xf32>
    %437 = math.tanh %436 : vector<1x128xf32>
    %438 = arith.mulf %433, %437 : vector<1x128xf32>
    %439 = arith.index_cast %c5_i32 : i32 to index
    %c0_112 = arith.constant 0 : index
    %440 = vector.load %arg5[%439, %c0_112] : memref<8x256xf32, #tpu.memory_space<vmem>>, vector<1x128xf32>
    tpu.vector_store %arg5[%439, %c0_112], %413 {strides = array<i32>} : memref<8x256xf32, #tpu.memory_space<vmem>>, vector<1x128xf32>,
    %441 = arith.index_cast %376 : i32 to index
    %c128_113 = arith.constant 128 : index
    %442 = vector.load %arg5[%441, %c128_113] : memref<8x256xf32, #tpu.memory_space<vmem>>, vector<1x128xf32>
    tpu.vector_store %arg5[%441, %c128_113], %438 {strides = array<i32>} : memref<8x256xf32, #tpu.memory_space<vmem>>, vector<1x128xf32>,
    %c6_i32 = arith.constant 6 : i32
    %c7_i32_114 = arith.constant 7 : i32
    %443 = arith.subi %c7_i32_114, %c6_i32 : i32
    %444 = tpu.concatenate %413, %438 in 1 : vector<1x128xf32>, vector<1x128xf32> -> vector<1x256xf32>
    %445 = arith.truncf %444 : vector<1x256xf32> to vector<1x256xbf16>
    %c0_115 = arith.constant 0 : index
    %c0_116 = arith.constant 0 : index
    %446 = vector.load %arg3[%c0_115, %c0_116] : memref<256x1024xbf16, #tpu.memory_space<vmem>>, vector<256x1024xbf16>
    %cst_117 = arith.constant dense<0.000000e+00> : vector<1x1024xf32>
    %447 = tpu.matmul %445, %446, %cst_117 {dimension_numbers = #tpu.dot_dimension_numbers<[1], [0], [0], [1], [0, 0, 1, 1], [], []>} : vector<1x256xbf16>, vector<256x1024xbf16>, vector<1x1024xf32> -> vector<1x1024xf32>
    %448 = arith.index_cast %c6_i32 : i32 to index
    %c0_118 = arith.constant 0 : index
    %449 = vector.load %arg9[%448, %c0_118] : memref<8x1024xf32, #tpu.memory_space<vmem>>, vector<1x512xf32>
    %450 = vector.extract_strided_slice %447 {offsets = [0, 0], sizes = [1, 512], strides = [1, 1]} : vector<1x1024xf32> to vector<1x512xf32>
    %451 = arith.addf %449, %450 : vector<1x512xf32>
    %452 = arith.index_cast %443 : i32 to index
    %c512_119 = arith.constant 512 : index
    %453 = vector.load %arg9[%452, %c512_119] : memref<8x1024xf32, #tpu.memory_space<vmem>>, vector<1x512xf32>
    %454 = vector.extract_strided_slice %447 {offsets = [0, 512], sizes = [1, 512], strides = [1, 1]} : vector<1x1024xf32> to vector<1x512xf32>
    %455 = arith.addf %453, %454 : vector<1x512xf32>
    %456 = vector.extract_strided_slice %451 {offsets = [0, 0], sizes = [1, 128], strides = [1, 1]} : vector<1x512xf32> to vector<1x128xf32>
    %457 = arith.negf %456 : vector<1x128xf32>
    %458 = math.exp %457 : vector<1x128xf32>
    %cst_120 = arith.constant 1.000000e+00 : f32
    %459 = vector.broadcast %cst_120 : f32 to vector<1x128xf32>
    %460 = arith.addf %459, %458 : vector<1x128xf32>
    %461 = arith.divf %459, %460 : vector<1x128xf32>
    %462 = vector.extract_strided_slice %451 {offsets = [0, 128], sizes = [1, 128], strides = [1, 1]} : vector<1x512xf32> to vector<1x128xf32>
    %463 = arith.negf %462 : vector<1x128xf32>
    %464 = math.exp %463 : vector<1x128xf32>
    %cst_121 = arith.constant 1.000000e+00 : f32
    %465 = vector.broadcast %cst_121 : f32 to vector<1x128xf32>
    %466 = arith.addf %465, %464 : vector<1x128xf32>
    %467 = arith.divf %465, %466 : vector<1x128xf32>
    %468 = vector.extract_strided_slice %451 {offsets = [0, 256], sizes = [1, 128], strides = [1, 1]} : vector<1x512xf32> to vector<1x128xf32>
    %469 = math.tanh %468 : vector<1x128xf32>
    %470 = vector.extract_strided_slice %451 {offsets = [0, 384], sizes = [1, 128], strides = [1, 1]} : vector<1x512xf32> to vector<1x128xf32>
    %471 = arith.negf %470 : vector<1x128xf32>
    %472 = math.exp %471 : vector<1x128xf32>
    %cst_122 = arith.constant 1.000000e+00 : f32
    %473 = vector.broadcast %cst_122 : f32 to vector<1x128xf32>
    %474 = arith.addf %473, %472 : vector<1x128xf32>
    %475 = arith.divf %473, %474 : vector<1x128xf32>
    %476 = arith.mulf %467, %411 : vector<1x128xf32>
    %477 = arith.mulf %461, %469 : vector<1x128xf32>
    %478 = arith.addf %476, %477 : vector<1x128xf32>
    %479 = math.tanh %478 : vector<1x128xf32>
    %480 = arith.mulf %475, %479 : vector<1x128xf32>
    %481 = vector.extract_strided_slice %455 {offsets = [0, 0], sizes = [1, 128], strides = [1, 1]} : vector<1x512xf32> to vector<1x128xf32>
    %482 = arith.negf %481 : vector<1x128xf32>
    %483 = math.exp %482 : vector<1x128xf32>
    %cst_123 = arith.constant 1.000000e+00 : f32
    %484 = vector.broadcast %cst_123 : f32 to vector<1x128xf32>
    %485 = arith.addf %484, %483 : vector<1x128xf32>
    %486 = arith.divf %484, %485 : vector<1x128xf32>
    %487 = vector.extract_strided_slice %455 {offsets = [0, 128], sizes = [1, 128], strides = [1, 1]} : vector<1x512xf32> to vector<1x128xf32>
    %488 = arith.negf %487 : vector<1x128xf32>
    %489 = math.exp %488 : vector<1x128xf32>
    %cst_124 = arith.constant 1.000000e+00 : f32
    %490 = vector.broadcast %cst_124 : f32 to vector<1x128xf32>
    %491 = arith.addf %490, %489 : vector<1x128xf32>
    %492 = arith.divf %490, %491 : vector<1x128xf32>
    %493 = vector.extract_strided_slice %455 {offsets = [0, 256], sizes = [1, 128], strides = [1, 1]} : vector<1x512xf32> to vector<1x128xf32>
    %494 = math.tanh %493 : vector<1x128xf32>
    %495 = vector.extract_strided_slice %455 {offsets = [0, 384], sizes = [1, 128], strides = [1, 1]} : vector<1x512xf32> to vector<1x128xf32>
    %496 = arith.negf %495 : vector<1x128xf32>
    %497 = math.exp %496 : vector<1x128xf32>
    %cst_125 = arith.constant 1.000000e+00 : f32
    %498 = vector.broadcast %cst_125 : f32 to vector<1x128xf32>
    %499 = arith.addf %498, %497 : vector<1x128xf32>
    %500 = arith.divf %498, %499 : vector<1x128xf32>
    %501 = arith.mulf %492, %436 : vector<1x128xf32>
    %502 = arith.mulf %486, %494 : vector<1x128xf32>
    %503 = arith.addf %501, %502 : vector<1x128xf32>
    %504 = math.tanh %503 : vector<1x128xf32>
    %505 = arith.mulf %500, %504 : vector<1x128xf32>
    %506 = arith.index_cast %c6_i32 : i32 to index
    %c0_126 = arith.constant 0 : index
    %507 = vector.load %arg5[%506, %c0_126] : memref<8x256xf32, #tpu.memory_space<vmem>>, vector<1x128xf32>
    tpu.vector_store %arg5[%506, %c0_126], %480 {strides = array<i32>} : memref<8x256xf32, #tpu.memory_space<vmem>>, vector<1x128xf32>,
    %508 = arith.index_cast %443 : i32 to index
    %c128_127 = arith.constant 128 : index
    %509 = vector.load %arg5[%508, %c128_127] : memref<8x256xf32, #tpu.memory_space<vmem>>, vector<1x128xf32>
    tpu.vector_store %arg5[%508, %c128_127], %505 {strides = array<i32>} : memref<8x256xf32, #tpu.memory_space<vmem>>, vector<1x128xf32>,
    %c7_i32_128 = arith.constant 7 : i32
    %c7_i32_129 = arith.constant 7 : i32
    %510 = arith.subi %c7_i32_129, %c7_i32_128 : i32
    %511 = tpu.concatenate %480, %505 in 1 : vector<1x128xf32>, vector<1x128xf32> -> vector<1x256xf32>
    %512 = arith.truncf %511 : vector<1x256xf32> to vector<1x256xbf16>
    %c0_130 = arith.constant 0 : index
    %c0_131 = arith.constant 0 : index
    %513 = vector.load %arg3[%c0_130, %c0_131] : memref<256x1024xbf16, #tpu.memory_space<vmem>>, vector<256x1024xbf16>
    %cst_132 = arith.constant dense<0.000000e+00> : vector<1x1024xf32>
    %514 = tpu.matmul %512, %513, %cst_132 {dimension_numbers = #tpu.dot_dimension_numbers<[1], [0], [0], [1], [0, 0, 1, 1], [], []>} : vector<1x256xbf16>, vector<256x1024xbf16>, vector<1x1024xf32> -> vector<1x1024xf32>
    %515 = arith.index_cast %c7_i32_128 : i32 to index
    %c0_133 = arith.constant 0 : index
    %516 = vector.load %arg9[%515, %c0_133] : memref<8x1024xf32, #tpu.memory_space<vmem>>, vector<1x512xf32>
    %517 = vector.extract_strided_slice %514 {offsets = [0, 0], sizes = [1, 512], strides = [1, 1]} : vector<1x1024xf32> to vector<1x512xf32>
    %518 = arith.addf %516, %517 : vector<1x512xf32>
    %519 = arith.index_cast %510 : i32 to index
    %c512_134 = arith.constant 512 : index
    %520 = vector.load %arg9[%519, %c512_134] : memref<8x1024xf32, #tpu.memory_space<vmem>>, vector<1x512xf32>
    %521 = vector.extract_strided_slice %514 {offsets = [0, 512], sizes = [1, 512], strides = [1, 1]} : vector<1x1024xf32> to vector<1x512xf32>
    %522 = arith.addf %520, %521 : vector<1x512xf32>
    %523 = vector.extract_strided_slice %518 {offsets = [0, 0], sizes = [1, 128], strides = [1, 1]} : vector<1x512xf32> to vector<1x128xf32>
    %524 = arith.negf %523 : vector<1x128xf32>
    %525 = math.exp %524 : vector<1x128xf32>
    %cst_135 = arith.constant 1.000000e+00 : f32
    %526 = vector.broadcast %cst_135 : f32 to vector<1x128xf32>
    %527 = arith.addf %526, %525 : vector<1x128xf32>
    %528 = arith.divf %526, %527 : vector<1x128xf32>
    %529 = vector.extract_strided_slice %518 {offsets = [0, 128], sizes = [1, 128], strides = [1, 1]} : vector<1x512xf32> to vector<1x128xf32>
    %530 = arith.negf %529 : vector<1x128xf32>
    %531 = math.exp %530 : vector<1x128xf32>
    %cst_136 = arith.constant 1.000000e+00 : f32
    %532 = vector.broadcast %cst_136 : f32 to vector<1x128xf32>
    %533 = arith.addf %532, %531 : vector<1x128xf32>
    %534 = arith.divf %532, %533 : vector<1x128xf32>
    %535 = vector.extract_strided_slice %518 {offsets = [0, 256], sizes = [1, 128], strides = [1, 1]} : vector<1x512xf32> to vector<1x128xf32>
    %536 = math.tanh %535 : vector<1x128xf32>
    %537 = vector.extract_strided_slice %518 {offsets = [0, 384], sizes = [1, 128], strides = [1, 1]} : vector<1x512xf32> to vector<1x128xf32>
    %538 = arith.negf %537 : vector<1x128xf32>
    %539 = math.exp %538 : vector<1x128xf32>
    %cst_137 = arith.constant 1.000000e+00 : f32
    %540 = vector.broadcast %cst_137 : f32 to vector<1x128xf32>
    %541 = arith.addf %540, %539 : vector<1x128xf32>
    %542 = arith.divf %540, %541 : vector<1x128xf32>
    %543 = arith.mulf %534, %478 : vector<1x128xf32>
    %544 = arith.mulf %528, %536 : vector<1x128xf32>
    %545 = arith.addf %543, %544 : vector<1x128xf32>
    %546 = math.tanh %545 : vector<1x128xf32>
    %547 = arith.mulf %542, %546 : vector<1x128xf32>
    %548 = vector.extract_strided_slice %522 {offsets = [0, 0], sizes = [1, 128], strides = [1, 1]} : vector<1x512xf32> to vector<1x128xf32>
    %549 = arith.negf %548 : vector<1x128xf32>
    %550 = math.exp %549 : vector<1x128xf32>
    %cst_138 = arith.constant 1.000000e+00 : f32
    %551 = vector.broadcast %cst_138 : f32 to vector<1x128xf32>
    %552 = arith.addf %551, %550 : vector<1x128xf32>
    %553 = arith.divf %551, %552 : vector<1x128xf32>
    %554 = vector.extract_strided_slice %522 {offsets = [0, 128], sizes = [1, 128], strides = [1, 1]} : vector<1x512xf32> to vector<1x128xf32>
    %555 = arith.negf %554 : vector<1x128xf32>
    %556 = math.exp %555 : vector<1x128xf32>
    %cst_139 = arith.constant 1.000000e+00 : f32
    %557 = vector.broadcast %cst_139 : f32 to vector<1x128xf32>
    %558 = arith.addf %557, %556 : vector<1x128xf32>
    %559 = arith.divf %557, %558 : vector<1x128xf32>
    %560 = vector.extract_strided_slice %522 {offsets = [0, 256], sizes = [1, 128], strides = [1, 1]} : vector<1x512xf32> to vector<1x128xf32>
    %561 = math.tanh %560 : vector<1x128xf32>
    %562 = vector.extract_strided_slice %522 {offsets = [0, 384], sizes = [1, 128], strides = [1, 1]} : vector<1x512xf32> to vector<1x128xf32>
    %563 = arith.negf %562 : vector<1x128xf32>
    %564 = math.exp %563 : vector<1x128xf32>
    %cst_140 = arith.constant 1.000000e+00 : f32
    %565 = vector.broadcast %cst_140 : f32 to vector<1x128xf32>
    %566 = arith.addf %565, %564 : vector<1x128xf32>
    %567 = arith.divf %565, %566 : vector<1x128xf32>
    %568 = arith.mulf %559, %503 : vector<1x128xf32>
    %569 = arith.mulf %553, %561 : vector<1x128xf32>
    %570 = arith.addf %568, %569 : vector<1x128xf32>
    %571 = math.tanh %570 : vector<1x128xf32>
    %572 = arith.mulf %567, %571 : vector<1x128xf32>
    %573 = arith.index_cast %c7_i32_128 : i32 to index
    %c0_141 = arith.constant 0 : index
    %574 = vector.load %arg5[%573, %c0_141] : memref<8x256xf32, #tpu.memory_space<vmem>>, vector<1x128xf32>
    tpu.vector_store %arg5[%573, %c0_141], %547 {strides = array<i32>} : memref<8x256xf32, #tpu.memory_space<vmem>>, vector<1x128xf32>,
    %575 = arith.index_cast %510 : i32 to index
    %c128_142 = arith.constant 128 : index
    %576 = vector.load %arg5[%575, %c128_142] : memref<8x256xf32, #tpu.memory_space<vmem>>, vector<1x128xf32>
    tpu.vector_store %arg5[%575, %c128_142], %572 {strides = array<i32>} : memref<8x256xf32, #tpu.memory_space<vmem>>, vector<1x128xf32>,
    %c8_i32 = arith.constant 8 : i32
    %c0_143 = arith.constant 0 : index
    %c0_144 = arith.constant 0 : index
    %577 = vector.load %arg6[%c0_143, %c0_144] : memref<2x128xf32, #tpu.memory_space<vmem>>, vector<1x128xf32>
    tpu.vector_store %arg6[%c0_143, %c0_144], %547 {strides = array<i32>} : memref<2x128xf32, #tpu.memory_space<vmem>>, vector<1x128xf32>,
    %c1_145 = arith.constant 1 : index
    %c0_146 = arith.constant 0 : index
    %578 = vector.load %arg6[%c1_145, %c0_146] : memref<2x128xf32, #tpu.memory_space<vmem>>, vector<1x128xf32>
    tpu.vector_store %arg6[%c1_145, %c0_146], %572 {strides = array<i32>} : memref<2x128xf32, #tpu.memory_space<vmem>>, vector<1x128xf32>,
    %c0_147 = arith.constant 0 : index
    %c0_148 = arith.constant 0 : index
    %579 = vector.load %arg7[%c0_147, %c0_148] : memref<2x128xf32, #tpu.memory_space<vmem>>, vector<1x128xf32>
    tpu.vector_store %arg7[%c0_147, %c0_148], %545 {strides = array<i32>} : memref<2x128xf32, #tpu.memory_space<vmem>>, vector<1x128xf32>,
    %c1_149 = arith.constant 1 : index
    %c0_150 = arith.constant 0 : index
    %580 = vector.load %arg7[%c1_149, %c0_150] : memref<2x128xf32, #tpu.memory_space<vmem>>, vector<1x128xf32>
    tpu.vector_store %arg7[%c1_149, %c0_150], %570 {strides = array<i32>} : memref<2x128xf32, #tpu.memory_space<vmem>>, vector<1x128xf32>,
    return
  }
}

</mosaic_0001>

<llo_original>
// kernel: tpu_custom_call.1
$region0: #{tpu_custom_call.1}
  #allocation0 [shape = 'u32[]', space=smem, size = 0x4, offset = 0x4, fixed_abs, tag = 'smem constant byte address 0x4 - core index']
  #allocation1 [shape = 'u32[144,128]{1,0:T(1,128)}', space=vmem, size = 0x12000, scoped, tag = 'internal scratch']
  #allocation2 [shape = 'f32[8,128]{1,0:T(8,128)}', space=vmem, size = 0x1000, scoped, tag = 'scratch operand']
  #allocation3 [shape = 'f32[8,1024]{1,0:T(8,128)}', space=vmem, size = 0x8000, scoped, tag = 'scratch operand']
  %s0 = inlined_call_operand.hbm [shape: s32[8], index: 0, kind: input, shape index: {}]
  %s1 = inlined_call_operand.hbm [shape: f32[64,128], index: 1, kind: input, shape index: {}]
  %s2 = inlined_call_operand.hbm [shape: bf16[128,1024], index: 2, kind: input, shape index: {}]
  %s3 = inlined_call_operand.hbm [shape: bf16[256,1024], index: 3, kind: input, shape index: {}]
  %s4 = inlined_call_operand.hbm [shape: f32[1,1024], index: 4, kind: input, shape index: {}]
  %s5 = inlined_call_operand.hbm [shape: f32[8,256], index: 5, kind: output, shape index: {0}]
  %s6 = inlined_call_operand.hbm [shape: f32[2,128], index: 6, kind: output, shape index: {1}]
  %s7 = inlined_call_operand.hbm [shape: f32[2,128], index: 7, kind: output, shape index: {2}]
  %8 = xla_tuple %s5, %s6, %s7
  %s9 = sld [smem:[#allocation0]]
  $region66: #{tpu_custom_call.1} parent=0
    _
  %s11 = ssub.s32 1, %s9
  %s12 = scalar_select 0, %s11, %s9
  $region1: #{tpu_custom_call.1} parent=0
    #allocation4 [shape = 'u8[512]{0}', space=smem, size = 0x200, scoped, tag = 'input window, operand 0, single buffered']
    #allocation5 [shape = 's32[1]{0}', space=sflag, size = 0x4, scoped, tag = 'scoped memory for tpu_custom_call.1']
    #allocation6 [shape = 's32[1]{0}', space=sflag, size = 0x4, scoped, tag = 'scoped memory for tpu_custom_call.1']
    #allocation7 [shape = 's32[1]{0}', space=sflag, size = 0x4, scoped, tag = 'scoped memory for tpu_custom_call.1']
    #allocation8 [shape = 'u8[32768]{0}', space=vmem, size = 0x8000, scoped, tag = 'input window, operand 1, single buffered']
    #allocation9 [shape = 'u8[262144]{0}', space=vmem, size = 0x40000, scoped, tag = 'input window, operand 2, single buffered']
    #allocation10 [shape = 's32[1]{0}', space=sflag, size = 0x4, scoped, tag = 'scoped memory for tpu_custom_call.1']
    #allocation11 [shape = 'u8[524288]{0}', space=vmem, size = 0x80000, scoped, tag = 'input window, operand 3, single buffered']
    #allocation12 [shape = 'u8[4096]{0}', space=vmem, size = 0x1000, scoped, tag = 'input window, operand 4, single buffered']
    #allocation13 [shape = 's32[1]{0}', space=sflag, size = 0x4, scoped, tag = 'scoped memory for tpu_custom_call.1']
    #allocation14 [shape = 'u8[8192]{0}', space=vmem, size = 0x2000, scoped, tag = 'output window, operand 0, single buffered']
    #allocation15 [shape = 'u8[1024]{0}', space=vmem, size = 0x400, scoped, tag = 'output window, operand 1, single buffered']
    #allocation16 [shape = 's32[1]{0}', space=sflag, size = 0x4, scoped, tag = 'scoped memory for tpu_custom_call.1']
    #allocation17 [shape = 'u8[1024]{0}', space=vmem, size = 0x400, scoped, tag = 'output window, operand 2, single buffered']
    %13 = vsyncpa [#allocation7], 0
    %14 = vsyncpa [#allocation5], 0
    %15 = vsyncpa [#allocation10], 0
    %16 = vsyncpa [#allocation13], 0
    %17 = vsyncpa [#allocation6], 0
    %18 = vsyncpa [#allocation16], 0
    // Predicated region
    $region2: #{tpu_custom_call.1} parent=1 // pred_check
      _
    $region3: #{tpu_custom_call.1} parent=1 // pred_check_branch
      %20 = sbr.rel (0) target = $region5
    $region4: #{tpu_custom_call.1} parent=1 // pred_region
      %s22 = ssub.s32 16, 16
      %23 = vsyncadd [#allocation7], %s22
      %26 = dma.hbm_to_smem %s0, 16, [#allocation4], [#allocation7]
    $region5: #{tpu_custom_call.1} parent=1 // pred_fallthru
      _
    // Predicated region
    $region6: #{tpu_custom_call.1} parent=1 // pred_check
      _
    $region7: #{tpu_custom_call.1} parent=1 // pred_check_branch
      %28 = sbr.rel (0) target = $region9
    $region8: #{tpu_custom_call.1} parent=1 // pred_region
      %s30 = ssub.s32 1024, 1024
      %31 = vsyncadd [#allocation5], %s30
      %s32 = sshll.u32 [#allocation8], 4
      %s33 = int_to_ptr.vmem [resolvable:$true] %s32
      %38 = dma.hbm_to_vmem [thread:$0]  %s1, 1024, %s33, [#allocation5], 128, 128, 8
    $region9: #{tpu_custom_call.1} parent=1 // pred_fallthru
      _
    // Predicated region
    $region10: #{tpu_custom_call.1} parent=1 // pred_check
      _
    $region11: #{tpu_custom_call.1} parent=1 // pred_check_branch
      %40 = sbr.rel (0) target = $region13
    $region12: #{tpu_custom_call.1} parent=1 // pred_region
      %s42 = ssub.s32 8192, 8192
      %43 = vsyncadd [#allocation10], %s42
      %s44 = sshll.u32 [#allocation9], 4
      %s45 = int_to_ptr.vmem [resolvable:$true] %s44
      %50 = dma.hbm_to_vmem [thread:$0]  %s2, 8192, %s45, [#allocation10], 512, 512, 32
    $region13: #{tpu_custom_call.1} parent=1 // pred_fallthru
      _
    // Predicated region
    $region14: #{tpu_custom_call.1} parent=1 // pred_check
      _
    $region15: #{tpu_custom_call.1} parent=1 // pred_check_branch
      %52 = sbr.rel (0) target = $region17
    $region16: #{tpu_custom_call.1} parent=1 // pred_region
      %s54 = ssub.s32 16384, 16384
      %55 = vsyncadd [#allocation10], %s54
      %s56 = sshll.u32 [#allocation11], 4
      %s57 = int_to_ptr.vmem [resolvable:$true] %s56
      %62 = dma.hbm_to_vmem [thread:$0]  %s3, 16384, %s57, [#allocation10], 512, 512, 32
    $region17: #{tpu_custom_call.1} parent=1 // pred_fallthru
      _
    // Predicated region
    $region18: #{tpu_custom_call.1} parent=1 // pred_check
      _
    $region19: #{tpu_custom_call.1} parent=1 // pred_check_branch
      %64 = sbr.rel (0) target = $region21
    $region20: #{tpu_custom_call.1} parent=1 // pred_region
      %s66 = ssub.s32 128, 128
      %67 = vsyncadd [#allocation13], %s66
      %s69 = sshll.u32 [#allocation12], 4
      %s70 = int_to_ptr.vmem [resolvable:$true] %s69
      %72 = dma.hbm_to_vmem [thread:$0]  %s4, 128, %s70, [#allocation13]
    $region21: #{tpu_custom_call.1} parent=1 // pred_fallthru
      _
    // Predicated region
    $region22: #{tpu_custom_call.1} parent=1 // pred_check
      _
    $region23: #{tpu_custom_call.1} parent=1 // pred_check_branch
      %74 = sbr.rel (0) target = $region25
    $region24: #{tpu_custom_call.1} parent=1 // pred_region
      %75 = dma.done [#allocation7], 16
    $region25: #{tpu_custom_call.1} parent=1 // pred_fallthru
      _
    // Predicated region
    $region26: #{tpu_custom_call.1} parent=1 // pred_check
      _
    $region27: #{tpu_custom_call.1} parent=1 // pred_check_branch
      %77 = sbr.rel (0) target = $region29
    $region28: #{tpu_custom_call.1} parent=1 // pred_region
      %78 = dma.done [#allocation5], 1024
    $region29: #{tpu_custom_call.1} parent=1 // pred_fallthru
      _
    // Predicated region
    $region30: #{tpu_custom_call.1} parent=1 // pred_check
      _
    $region31: #{tpu_custom_call.1} parent=1 // pred_check_branch
      %80 = sbr.rel (0) target = $region33
    $region32: #{tpu_custom_call.1} parent=1 // pred_region
      %81 = dma.done [#allocation10], 8192
    $region33: #{tpu_custom_call.1} parent=1 // pred_fallthru
      _
    // Predicated region
    $region34: #{tpu_custom_call.1} parent=1 // pred_check
      _
    $region35: #{tpu_custom_call.1} parent=1 // pred_check_branch
      %83 = sbr.rel (0) target = $region37
    $region36: #{tpu_custom_call.1} parent=1 // pred_region
      %84 = dma.done [#allocation10], 16384
    $region37: #{tpu_custom_call.1} parent=1 // pred_fallthru
      _
    // Predicated region
    $region38: #{tpu_custom_call.1} parent=1 // pred_check
      _
    $region39: #{tpu_custom_call.1} parent=1 // pred_check_branch
      %86 = sbr.rel (0) target = $region41
    $region40: #{tpu_custom_call.1} parent=1 // pred_region
      %87 = dma.done [#allocation13], 128
    $region41: #{tpu_custom_call.1} parent=1 // pred_fallthru
      _
    %88 = sfence
    %s90 = sld [smem:[#allocation4]]
    %s91 = scalar_lea.vmem [#allocation8], %s90
    %v92 = vld [vmem:[%s91] sm:$0x1]
    %93 = vst [vmem:[#allocation2] sm:$0x1] %v92
    %s94 = sld [smem:[#allocation4 + $0x1]]
    %s95 = scalar_lea.vmem [#allocation8], %s94
    %v96 = vld [vmem:[%s95] sm:$0x1]
    %97 = vst [vmem:[#allocation2 + $0x1] sm:$0x1] %v96
    %s98 = sld [smem:[#allocation4 + $0x2]]
    %s99 = scalar_lea.vmem [#allocation8], %s98
    %v100 = vld [vmem:[%s99] sm:$0x1]
    %101 = vst [vmem:[#allocation2 + $0x2] sm:$0x1] %v100
    %s102 = sld [smem:[#allocation4 + $0x3]]
    %s103 = scalar_lea.vmem [#allocation8], %s102
    %v104 = vld [vmem:[%s103] sm:$0x1]
    %105 = vst [vmem:[#allocation2 + $0x3] sm:$0x1] %v104
    %s106 = sld [smem:[#allocation4 + $0x4]]
    %s107 = scalar_lea.vmem [#allocation8], %s106
    %v108 = vld [vmem:[%s107] sm:$0x1]
    %109 = vst [vmem:[#allocation2 + $0x4] sm:$0x1] %v108
    %s110 = sld [smem:[#allocation4 + $0x5]]
    %s111 = scalar_lea.vmem [#allocation8], %s110
    %v112 = vld [vmem:[%s111] sm:$0x1]
    %113 = vst [vmem:[#allocation2 + $0x5] sm:$0x1] %v112
    %s114 = sld [smem:[#allocation4 + $0x6]]
    %s115 = scalar_lea.vmem [#allocation8], %s114
    %v116 = vld [vmem:[%s115] sm:$0x1]
    %117 = vst [vmem:[#allocation2 + $0x6] sm:$0x1] %v116
    %s118 = sld [smem:[#allocation4 + $0x7]]
    %s119 = scalar_lea.vmem [#allocation8], %s118
    %v120 = vld [vmem:[%s119] sm:$0x1]
    %121 = vst [vmem:[#allocation2 + $0x7] sm:$0x1] %v120
    %v122 = vld [vmem:[#allocation2] sm:$0xff]
    %v123 = vpack.c.bf16 %v122, %v122
    %v124 = vld [vmem:[#allocation9] sm:$0xff]
    %v125 = vld [vmem:[#allocation9 + $0x8] sm:$0xff]
    %v126 = vld [vmem:[#allocation9 + $0x10] sm:$0xff]
    %v127 = vld [vmem:[#allocation9 + $0x18] sm:$0xff]
    %v128 = vld [vmem:[#allocation9 + $0x20] sm:$0xff]
    %v129 = vld [vmem:[#allocation9 + $0x28] sm:$0xff]
    %v130 = vld [vmem:[#allocation9 + $0x30] sm:$0xff]
    %v131 = vld [vmem:[#allocation9 + $0x38] sm:$0xff]
    %v132 = vld [vmem:[#allocation9 + $0x40] sm:$0xff]
    %v133 = vld [vmem:[#allocation9 + $0x48] sm:$0xff]
    %v134 = vld [vmem:[#allocation9 + $0x50] sm:$0xff]
    %v135 = vld [vmem:[#allocation9 + $0x58] sm:$0xff]
    %v136 = vld [vmem:[#allocation9 + $0x60] sm:$0xff]
    %v137 = vld [vmem:[#allocation9 + $0x68] sm:$0xff]
    %v138 = vld [vmem:[#allocation9 + $0x70] sm:$0xff]
    %v139 = vld [vmem:[#allocation9 + $0x78] sm:$0xff]
    %v140 = vld [vmem:[#allocation9 + $0x80] sm:$0xff]
    %v141 = vld [vmem:[#allocation9 + $0x88] sm:$0xff]
    %v142 = vld [vmem:[#allocation9 + $0x90] sm:$0xff]
    %v143 = vld [vmem:[#allocation9 + $0x98] sm:$0xff]
    %v144 = vld [vmem:[#allocation9 + $0xa0] sm:$0xff]
    %v145 = vld [vmem:[#allocation9 + $0xa8] sm:$0xff]
    %v146 = vld [vmem:[#allocation9 + $0xb0] sm:$0xff]
    %v147 = vld [vmem:[#allocation9 + $0xb8] sm:$0xff]
    %v148 = vld [vmem:[#allocation9 + $0xc0] sm:$0xff]
    %v149 = vld [vmem:[#allocation9 + $0xc8] sm:$0xff]
    %v150 = vld [vmem:[#allocation9 + $0xd0] sm:$0xff]
    %v151 = vld [vmem:[#allocation9 + $0xd8] sm:$0xff]
    %v152 = vld [vmem:[#allocation9 + $0xe0] sm:$0xff]
    %v153 = vld [vmem:[#allocation9 + $0xe8] sm:$0xff]
    %v154 = vld [vmem:[#allocation9 + $0xf0] sm:$0xff]
    %v155 = vld [vmem:[#allocation9 + $0xf8] sm:$0xff]
    %v156 = vld [vmem:[#allocation9 + $0x100] sm:$0xff]
    %v157 = vld [vmem:[#allocation9 + $0x108] sm:$0xff]
    %v158 = vld [vmem:[#allocation9 + $0x110] sm:$0xff]
    %v159 = vld [vmem:[#allocation9 + $0x118] sm:$0xff]
    %v160 = vld [vmem:[#allocation9 + $0x120] sm:$0xff]
    %v161 = vld [vmem:[#allocation9 + $0x128] sm:$0xff]
    %v162 = vld [vmem:[#allocation9 + $0x130] sm:$0xff]
    %v163 = vld [vmem:[#allocation9 + $0x138] sm:$0xff]
    %v164 = vld [vmem:[#allocation9 + $0x140] sm:$0xff]
    %v165 = vld [vmem:[#allocation9 + $0x148] sm:$0xff]
    %v166 = vld [vmem:[#allocation9 + $0x150] sm:$0xff]
    %v167 = vld [vmem:[#allocation9 + $0x158] sm:$0xff]
    %v168 = vld [vmem:[#allocation9 + $0x160] sm:$0xff]
    %v169 = vld [vmem:[#allocation9 + $0x168] sm:$0xff]
    %v170 = vld [vmem:[#allocation9 + $0x170] sm:$0xff]
    %v171 = vld [vmem:[#allocation9 + $0x178] sm:$0xff]
    %v172 = vld [vmem:[#allocation9 + $0x180] sm:$0xff]
    %v173 = vld [vmem:[#allocation9 + $0x188] sm:$0xff]
    %v174 = vld [vmem:[#allocation9 + $0x190] sm:$0xff]
    %v175 = vld [vmem:[#allocation9 + $0x198] sm:$0xff]
    %v176 = vld [vmem:[#allocation9 + $0x1a0] sm:$0xff]
    %v177 = vld [vmem:[#allocation9 + $0x1a8] sm:$0xff]
    %v178 = vld [vmem:[#allocation9 + $0x1b0] sm:$0xff]
    %v179 = vld [vmem:[#allocation9 + $0x1b8] sm:$0xff]
    %v180 = vld [vmem:[#allocation9 + $0x1c0] sm:$0xff]
    %v181 = vld [vmem:[#allocation9 + $0x1c8] sm:$0xff]
    %v182 = vld [vmem:[#allocation9 + $0x1d0] sm:$0xff]
    %v183 = vld [vmem:[#allocation9 + $0x1d8] sm:$0xff]
    %v184 = vld [vmem:[#allocation9 + $0x1e0] sm:$0xff]
    %v185 = vld [vmem:[#allocation9 + $0x1e8] sm:$0xff]
    %v186 = vld [vmem:[#allocation9 + $0x1f0] sm:$0xff]
    %v187 = vld [vmem:[#allocation9 + $0x1f8] sm:$0xff]
    %v188 = vld [vmem:[#allocation12] sm:$0xff]
    %v190 = vlaneseq
    %v191 = vshrl.u32 %v190, 7
    %v192 = vsub.s32 0, %v191
    %v193 = vrot.slane %v188, %v192
    %v194 = vlaneseq
    %v195 = vshrl.u32 %v194, 7
    %v196 = vsub.s32 1, %v195
    %v197 = vrot.slane %v188, %v196
    %v198 = vlaneseq
    %v199 = vshrl.u32 %v198, 7
    %v200 = vsub.s32 2, %v199
    %v201 = vrot.slane %v188, %v200
    %v202 = vlaneseq
    %v203 = vshrl.u32 %v202, 7
    %v204 = vsub.s32 3, %v203
    %v205 = vrot.slane %v188, %v204
    %v206 = vlaneseq
    %v207 = vshrl.u32 %v206, 7
    %v208 = vsub.s32 4, %v207
    %v209 = vrot.slane %v188, %v208
    %v210 = vlaneseq
    %v211 = vshrl.u32 %v210, 7
    %v212 = vsub.s32 5, %v211
    %v213 = vrot.slane %v188, %v212
    %v214 = vlaneseq
    %v215 = vshrl.u32 %v214, 7
    %v216 = vsub.s32 6, %v215
    %v217 = vrot.slane %v188, %v216
    %v218 = vlaneseq
    %v219 = vshrl.u32 %v218, 7
    %v220 = vsub.s32 7, %v219
    %v221 = vrot.slane %v188, %v220
    %v294 = vunpack.c.l.b16 %v124
    %v295 = vunpack.c.h.b16 %v124
    %v296 = vunpack.c.l.b16 %v125
    %v297 = vunpack.c.h.b16 %v125
    %v298 = vunpack.c.l.b16 %v126
    %v299 = vunpack.c.h.b16 %v126
    %v300 = vunpack.c.l.b16 %v127
    %v301 = vunpack.c.h.b16 %v127
    %v302 = vunpack.c.l.b16 %v128
    %v303 = vunpack.c.h.b16 %v128
    %v304 = vunpack.c.l.b16 %v129
    %v305 = vunpack.c.h.b16 %v129
    %v306 = vunpack.c.l.b16 %v130
    %v307 = vunpack.c.h.b16 %v130
    %v308 = vunpack.c.l.b16 %v131
    %v309 = vunpack.c.h.b16 %v131
    %v310 = vunpack.c.l.b16 %v132
    %v311 = vunpack.c.h.b16 %v132
    %v312 = vunpack.c.l.b16 %v133
    %v313 = vunpack.c.h.b16 %v133
    %v314 = vunpack.c.l.b16 %v134
    %v315 = vunpack.c.h.b16 %v134
    %v316 = vunpack.c.l.b16 %v135
    %v317 = vunpack.c.h.b16 %v135
    %v318 = vunpack.c.l.b16 %v136
    %v319 = vunpack.c.h.b16 %v136
    %v320 = vunpack.c.l.b16 %v137
    %v321 = vunpack.c.h.b16 %v137
    %v322 = vunpack.c.l.b16 %v138
    %v323 = vunpack.c.h.b16 %v138
    %v324 = vunpack.c.l.b16 %v139
    %v325 = vunpack.c.h.b16 %v139
    %v326 = vunpack.c.l.b16 %v140
    %v327 = vunpack.c.h.b16 %v140
    %v328 = vunpack.c.l.b16 %v141
    %v329 = vunpack.c.h.b16 %v141
    %v330 = vunpack.c.l.b16 %v142
    %v331 = vunpack.c.h.b16 %v142
    %v332 = vunpack.c.l.b16 %v143
    %v333 = vunpack.c.h.b16 %v143
    %v334 = vunpack.c.l.b16 %v144
    %v335 = vunpack.c.h.b16 %v144
    %v336 = vunpack.c.l.b16 %v145
    %v337 = vunpack.c.h.b16 %v145
    %v338 = vunpack.c.l.b16 %v146
    %v339 = vunpack.c.h.b16 %v146
    %v340 = vunpack.c.l.b16 %v147
    %v341 = vunpack.c.h.b16 %v147
    %v342 = vunpack.c.l.b16 %v148
    %v343 = vunpack.c.h.b16 %v148
    %v344 = vunpack.c.l.b16 %v149
    %v345 = vunpack.c.h.b16 %v149
    %v346 = vunpack.c.l.b16 %v150
    %v347 = vunpack.c.h.b16 %v150
    %v348 = vunpack.c.l.b16 %v151
    %v349 = vunpack.c.h.b16 %v151
    %v350 = vunpack.c.l.b16 %v152
    %v351 = vunpack.c.h.b16 %v152
    %v352 = vunpack.c.l.b16 %v153
    %v353 = vunpack.c.h.b16 %v153
    %v354 = vunpack.c.l.b16 %v154
    %v355 = vunpack.c.h.b16 %v154
    %v356 = vunpack.c.l.b16 %v155
    %v357 = vunpack.c.h.b16 %v155
    %v358 = vunpack.c.l.b16 %v156
    %v359 = vunpack.c.h.b16 %v156
    %v360 = vunpack.c.l.b16 %v157
    %v361 = vunpack.c.h.b16 %v157
    %v362 = vunpack.c.l.b16 %v158
    %v363 = vunpack.c.h.b16 %v158
    %v364 = vunpack.c.l.b16 %v159
    %v365 = vunpack.c.h.b16 %v159
    %v366 = vunpack.c.l.b16 %v160
    %v367 = vunpack.c.h.b16 %v160
    %v368 = vunpack.c.l.b16 %v161
    %v369 = vunpack.c.h.b16 %v161
    %v370 = vunpack.c.l.b16 %v162
    %v371 = vunpack.c.h.b16 %v162
    %v372 = vunpack.c.l.b16 %v163
    %v373 = vunpack.c.h.b16 %v163
    %v374 = vunpack.c.l.b16 %v164
    %v375 = vunpack.c.h.b16 %v164
    %v376 = vunpack.c.l.b16 %v165
    %v377 = vunpack.c.h.b16 %v165
    %v378 = vunpack.c.l.b16 %v166
    %v379 = vunpack.c.h.b16 %v166
    %v380 = vunpack.c.l.b16 %v167
    %v381 = vunpack.c.h.b16 %v167
    %v382 = vunpack.c.l.b16 %v168
    %v383 = vunpack.c.h.b16 %v168
    %v384 = vunpack.c.l.b16 %v169
    %v385 = vunpack.c.h.b16 %v169
    %v386 = vunpack.c.l.b16 %v170
    %v387 = vunpack.c.h.b16 %v170
    %v388 = vunpack.c.l.b16 %v171
    %v389 = vunpack.c.h.b16 %v171
    %v390 = vunpack.c.l.b16 %v172
    %v391 = vunpack.c.h.b16 %v172
    %v392 = vunpack.c.l.b16 %v173
    %v393 = vunpack.c.h.b16 %v173
    %v394 = vunpack.c.l.b16 %v174
    %v395 = vunpack.c.h.b16 %v174
    %v396 = vunpack.c.l.b16 %v175
    %v397 = vunpack.c.h.b16 %v175
    %v398 = vunpack.c.l.b16 %v176
    %v399 = vunpack.c.h.b16 %v176
    %v400 = vunpack.c.l.b16 %v177
    %v401 = vunpack.c.h.b16 %v177
    %v402 = vunpack.c.l.b16 %v178
    %v403 = vunpack.c.h.b16 %v178
    %v404 = vunpack.c.l.b16 %v179
    %v405 = vunpack.c.h.b16 %v179
    %v406 = vunpack.c.l.b16 %v180
    %v407 = vunpack.c.h.b16 %v180
    %v408 = vunpack.c.l.b16 %v181
    %v409 = vunpack.c.h.b16 %v181
    %v410 = vunpack.c.l.b16 %v182
    %v411 = vunpack.c.h.b16 %v182
    %v412 = vunpack.c.l.b16 %v183
    %v413 = vunpack.c.h.b16 %v183
    %v414 = vunpack.c.l.b16 %v184
    %v415 = vunpack.c.h.b16 %v184
    %v416 = vunpack.c.l.b16 %v185
    %v417 = vunpack.c.h.b16 %v185
    %v418 = vunpack.c.l.b16 %v186
    %v419 = vunpack.c.h.b16 %v186
    %v420 = vunpack.c.l.b16 %v187
    %v421 = vunpack.c.h.b16 %v187
    %v422 = vpack.c.b16 %v302, %v294
    %v423 = vpack.c.b16 %v303, %v295
    %v424 = vpack.c.b16 %v304, %v296
    %v425 = vpack.c.b16 %v305, %v297
    %v426 = vpack.c.b16 %v306, %v298
    %v427 = vpack.c.b16 %v307, %v299
    %v428 = vpack.c.b16 %v308, %v300
    %v429 = vpack.c.b16 %v309, %v301
    %v430 = vpack.c.b16 %v318, %v310
    %v431 = vpack.c.b16 %v319, %v311
    %v432 = vpack.c.b16 %v320, %v312
    %v433 = vpack.c.b16 %v321, %v313
    %v434 = vpack.c.b16 %v322, %v314
    %v435 = vpack.c.b16 %v323, %v315
    %v436 = vpack.c.b16 %v324, %v316
    %v437 = vpack.c.b16 %v325, %v317
    %v438 = vpack.c.b16 %v334, %v326
    %v439 = vpack.c.b16 %v335, %v327
    %v440 = vpack.c.b16 %v336, %v328
    %v441 = vpack.c.b16 %v337, %v329
    %v442 = vpack.c.b16 %v338, %v330
    %v443 = vpack.c.b16 %v339, %v331
    %v444 = vpack.c.b16 %v340, %v332
    %v445 = vpack.c.b16 %v341, %v333
    %v446 = vpack.c.b16 %v350, %v342
    %v447 = vpack.c.b16 %v351, %v343
    %v448 = vpack.c.b16 %v352, %v344
    %v449 = vpack.c.b16 %v353, %v345
    %v450 = vpack.c.b16 %v354, %v346
    %v451 = vpack.c.b16 %v355, %v347
    %v452 = vpack.c.b16 %v356, %v348
    %v453 = vpack.c.b16 %v357, %v349
    %v454 = vpack.c.b16 %v366, %v358
    %v455 = vpack.c.b16 %v367, %v359
    %v456 = vpack.c.b16 %v368, %v360
    %v457 = vpack.c.b16 %v369, %v361
    %v458 = vpack.c.b16 %v370, %v362
    %v459 = vpack.c.b16 %v371, %v363
    %v460 = vpack.c.b16 %v372, %v364
    %v461 = vpack.c.b16 %v373, %v365
    %v462 = vpack.c.b16 %v382, %v374
    %v463 = vpack.c.b16 %v383, %v375
    %v464 = vpack.c.b16 %v384, %v376
    %v465 = vpack.c.b16 %v385, %v377
    %v466 = vpack.c.b16 %v386, %v378
    %v467 = vpack.c.b16 %v387, %v379
    %v468 = vpack.c.b16 %v388, %v380
    %v469 = vpack.c.b16 %v389, %v381
    %v470 = vpack.c.b16 %v398, %v390
    %v471 = vpack.c.b16 %v399, %v391
    %v472 = vpack.c.b16 %v400, %v392
    %v473 = vpack.c.b16 %v401, %v393
    %v474 = vpack.c.b16 %v402, %v394
    %v475 = vpack.c.b16 %v403, %v395
    %v476 = vpack.c.b16 %v404, %v396
    %v477 = vpack.c.b16 %v405, %v397
    %v478 = vpack.c.b16 %v414, %v406
    %v479 = vpack.c.b16 %v415, %v407
    %v480 = vpack.c.b16 %v416, %v408
    %v481 = vpack.c.b16 %v417, %v409
    %v482 = vpack.c.b16 %v418, %v410
    %v483 = vpack.c.b16 %v419, %v411
    %v484 = vpack.c.b16 %v420, %v412
    %v485 = vpack.c.b16 %v421, %v413
    %550 = vmatprep.subr.bf16.mxu0 %v479
    %551 = vmatpush1.bf16.msra.mxu0 %v478
    %552 = vmatprep.subr.bf16.mxu0 %v471
    %553 = vmatpush1.bf16.msra.mxu0 %v470
    %554 = vmatprep.subr.bf16.mxu0 %v463
    %555 = vmatpush1.bf16.msra.mxu0 %v462
    %556 = vmatprep.subr.bf16.mxu0 %v455
    %557 = vmatpush1.bf16.msra.mxu0 %v454
    %558 = vmatprep.subr.bf16.mxu0 %v447
    %559 = vmatpush1.bf16.msra.mxu0 %v446
    %560 = vmatprep.subr.bf16.mxu0 %v439
    %561 = vmatpush1.bf16.msra.mxu0 %v438
    %562 = vmatprep.subr.bf16.mxu0 %v431
    %563 = vmatpush1.bf16.msra.mxu0 %v430
    %564 = vmatprep.subr.bf16.mxu0 %v423
    %565 = vmatpush1.bf16.msra.mxu0 %v422
    %566 = vmatprep.subr.bf16.mxu0 0
    %567 = vmatpush2.bf16.msra.mxu0 0
    %568 = vmatprep.subr.bf16.mxu0 0
    %569 = vmatpush2.bf16.msra.mxu0 0
    %570 = vmatprep.subr.bf16.mxu0 0
    %571 = vmatpush2.bf16.msra.mxu0 0
    %572 = vmatprep.subr.bf16.mxu0 0
    %573 = vmatpush2.bf16.msra.mxu0 0
    %574 = vmatprep.subr.bf16.mxu0 0
    %575 = vmatpush2.bf16.msra.mxu0 0
    %576 = vmatprep.subr.bf16.mxu0 0
    %577 = vmatpush2.bf16.msra.mxu0 0
    %578 = vmatprep.subr.bf16.mxu0 0
    %579 = vmatpush2.bf16.msra.mxu0 0
    %580 = vmatprep.subr.bf16.mxu0 0
    %581 = vmatpush2.bf16.msra.mxu0 0
    %582 = vmatprep.mubr.bf16.mxu0 0
    %583 = vmatmul.mubr.bf16.gmra.mxu0 %v123
    %v584 = vpop.f32.mrf.mxu0
    %v585 = vadd.f32 %v193, %v584
    %v586 = vpop.f32.mrf.mxu0
    %v587 = vadd.f32 %v197, %v586
    %v588 = vpop.f32.mrf.mxu0
    %v589 = vpop.f32.mrf.mxu0
    %590 = vdwg.mxu0
    %591 = vmatprep.subr.bf16.mxu0 %v481
    %592 = vmatpush1.bf16.msra.mxu0 %v480
    %593 = vmatprep.subr.bf16.mxu0 %v473
    %594 = vmatpush1.bf16.msra.mxu0 %v472
    %595 = vmatprep.subr.bf16.mxu0 %v465
    %596 = vmatpush1.bf16.msra.mxu0 %v464
    %597 = vmatprep.subr.bf16.mxu0 %v457
    %598 = vmatpush1.bf16.msra.mxu0 %v456
    %599 = vmatprep.subr.bf16.mxu0 %v449
    %600 = vmatpush1.bf16.msra.mxu0 %v448
    %601 = vmatprep.subr.bf16.mxu0 %v441
    %602 = vmatpush1.bf16.msra.mxu0 %v440
    %603 = vmatprep.subr.bf16.mxu0 %v433
    %604 = vmatpush1.bf16.msra.mxu0 %v432
    %605 = vmatprep.subr.bf16.mxu0 %v425
    %606 = vmatpush1.bf16.msra.mxu0 %v424
    %607 = vmatprep.subr.bf16.mxu0 0
    %608 = vmatpush2.bf16.msra.mxu0 0
    %609 = vmatprep.subr.bf16.mxu0 0
    %610 = vmatpush2.bf16.msra.mxu0 0
    %611 = vmatprep.subr.bf16.mxu0 0
    %612 = vmatpush2.bf16.msra.mxu0 0
    %613 = vmatprep.subr.bf16.mxu0 0
    %614 = vmatpush2.bf16.msra.mxu0 0
    %615 = vmatprep.subr.bf16.mxu0 0
    %616 = vmatpush2.bf16.msra.mxu0 0
    %617 = vmatprep.subr.bf16.mxu0 0
    %618 = vmatpush2.bf16.msra.mxu0 0
    %619 = vmatprep.subr.bf16.mxu0 0
    %620 = vmatpush2.bf16.msra.mxu0 0
    %621 = vmatprep.subr.bf16.mxu0 0
    %622 = vmatpush2.bf16.msra.mxu0 0
    %623 = vmatprep.mubr.bf16.mxu0 0
    %624 = vmatmul.mubr.bf16.gmra.mxu0 %v123
    %v625 = vpop.f32.mrf.mxu0
    %v626 = vadd.f32 %v201, %v625
    %v627 = vpop.f32.mrf.mxu0
    %v628 = vadd.f32 %v205, %v627
    %v629 = vpop.f32.mrf.mxu0
    %v630 = vpop.f32.mrf.mxu0
    %631 = vdwg.mxu0
    %632 = vmatprep.subr.bf16.mxu0 %v483
    %633 = vmatpush1.bf16.msra.mxu0 %v482
    %634 = vmatprep.subr.bf16.mxu0 %v475
    %635 = vmatpush1.bf16.msra.mxu0 %v474
    %636 = vmatprep.subr.bf16.mxu0 %v467
    %637 = vmatpush1.bf16.msra.mxu0 %v466
    %638 = vmatprep.subr.bf16.mxu0 %v459
    %639 = vmatpush1.bf16.msra.mxu0 %v458
    %640 = vmatprep.subr.bf16.mxu0 %v451
    %641 = vmatpush1.bf16.msra.mxu0 %v450
    %642 = vmatprep.subr.bf16.mxu0 %v443
    %643 = vmatpush1.bf16.msra.mxu0 %v442
    %644 = vmatprep.subr.bf16.mxu0 %v435
    %645 = vmatpush1.bf16.msra.mxu0 %v434
    %646 = vmatprep.subr.bf16.mxu0 %v427
    %647 = vmatpush1.bf16.msra.mxu0 %v426
    %648 = vmatprep.subr.bf16.mxu0 0
    %649 = vmatpush2.bf16.msra.mxu0 0
    %650 = vmatprep.subr.bf16.mxu0 0
    %651 = vmatpush2.bf16.msra.mxu0 0
    %652 = vmatprep.subr.bf16.mxu0 0
    %653 = vmatpush2.bf16.msra.mxu0 0
    %654 = vmatprep.subr.bf16.mxu0 0
    %655 = vmatpush2.bf16.msra.mxu0 0
    %656 = vmatprep.subr.bf16.mxu0 0
    %657 = vmatpush2.bf16.msra.mxu0 0
    %658 = vmatprep.subr.bf16.mxu0 0
    %659 = vmatpush2.bf16.msra.mxu0 0
    %660 = vmatprep.subr.bf16.mxu0 0
    %661 = vmatpush2.bf16.msra.mxu0 0
    %662 = vmatprep.subr.bf16.mxu0 0
    %663 = vmatpush2.bf16.msra.mxu0 0
    %664 = vmatprep.mubr.bf16.mxu0 0
    %665 = vmatmul.mubr.bf16.gmra.mxu0 %v123
    %v666 = vpop.f32.mrf.mxu0
    %v667 = vadd.f32 %v209, %v666
    %v668 = vpop.f32.mrf.mxu0
    %v669 = vadd.f32 %v213, %v668
    %v670 = vpop.f32.mrf.mxu0
    %v671 = vpop.f32.mrf.mxu0
    %672 = vdwg.mxu0
    %673 = vmatprep.subr.bf16.mxu0 %v485
    %674 = vmatpush1.bf16.msra.mxu0 %v484
    %675 = vmatprep.subr.bf16.mxu0 %v477
    %676 = vmatpush1.bf16.msra.mxu0 %v476
    %677 = vmatprep.subr.bf16.mxu0 %v469
    %678 = vmatpush1.bf16.msra.mxu0 %v468
    %679 = vmatprep.subr.bf16.mxu0 %v461
    %680 = vmatpush1.bf16.msra.mxu0 %v460
    %681 = vmatprep.subr.bf16.mxu0 %v453
    %682 = vmatpush1.bf16.msra.mxu0 %v452
    %683 = vmatprep.subr.bf16.mxu0 %v445
    %684 = vmatpush1.bf16.msra.mxu0 %v444
    %685 = vmatprep.subr.bf16.mxu0 %v437
    %686 = vmatpush1.bf16.msra.mxu0 %v436
    %687 = vmatprep.subr.bf16.mxu0 %v429
    %688 = vmatpush1.bf16.msra.mxu0 %v428
    %689 = vmatprep.subr.bf16.mxu0 0
    %690 = vmatpush2.bf16.msra.mxu0 0
    %691 = vmatprep.subr.bf16.mxu0 0
    %692 = vmatpush2.bf16.msra.mxu0 0
    %693 = vmatprep.subr.bf16.mxu0 0
    %694 = vmatpush2.bf16.msra.mxu0 0
    %695 = vmatprep.subr.bf16.mxu0 0
    %696 = vmatpush2.bf16.msra.mxu0 0
    %697 = vmatprep.subr.bf16.mxu0 0
    %698 = vmatpush2.bf16.msra.mxu0 0
    %699 = vmatprep.subr.bf16.mxu0 0
    %700 = vmatpush2.bf16.msra.mxu0 0
    %701 = vmatprep.subr.bf16.mxu0 0
    %702 = vmatpush2.bf16.msra.mxu0 0
    %703 = vmatprep.subr.bf16.mxu0 0
    %704 = vmatpush2.bf16.msra.mxu0 0
    %705 = vmatprep.mubr.bf16.mxu0 0
    %706 = vmatmul.mubr.bf16.gmra.mxu0 %v123
    %v707 = vpop.f32.mrf.mxu0
    %v708 = vadd.f32 %v217, %v707
    %v709 = vpop.f32.mrf.mxu0
    %v710 = vadd.f32 %v221, %v709
    %v711 = vpop.f32.mrf.mxu0
    %v712 = vpop.f32.mrf.mxu0
    %713 = vdwg.mxu0
    %714 = vst [vmem:[#allocation3] sm:$0xff] %v585
    %715 = vst [vmem:[#allocation3 + $0x8] sm:$0xff] %v587
    %716 = vst [vmem:[#allocation3 + $0x10] sm:$0xff] %v626
    %717 = vst [vmem:[#allocation3 + $0x18] sm:$0xff] %v628
    %718 = vst [vmem:[#allocation3 + $0x20] sm:$0xff] %v667
    %719 = vst [vmem:[#allocation3 + $0x28] sm:$0xff] %v669
    %720 = vst [vmem:[#allocation3 + $0x30] sm:$0xff] %v708
    %721 = vst [vmem:[#allocation3 + $0x38] sm:$0xff] %v710
    %v722 = vpack.c.bf16 0.0, 0.0
    %v723 = vld [vmem:[#allocation11] sm:$0xff]
    %v724 = vld [vmem:[#allocation11 + $0x8] sm:$0xff]
    %v725 = vld [vmem:[#allocation11 + $0x10] sm:$0xff]
    %v726 = vld [vmem:[#allocation11 + $0x18] sm:$0xff]
    %v727 = vld [vmem:[#allocation11 + $0x20] sm:$0xff]
    %v728 = vld [vmem:[#allocation11 + $0x28] sm:$0xff]
    %v729 = vld [vmem:[#allocation11 + $0x30] sm:$0xff]
    %v730 = vld [vmem:[#allocation11 + $0x38] sm:$0xff]
    %v731 = vld [vmem:[#allocation11 + $0x40] sm:$0xff]
    %v732 = vld [vmem:[#allocation11 + $0x48] sm:$0xff]
    %v733 = vld [vmem:[#allocation11 + $0x50] sm:$0xff]
    %v734 = vld [vmem:[#allocation11 + $0x58] sm:$0xff]
    %v735 = vld [vmem:[#allocation11 + $0x60] sm:$0xff]
    %v736 = vld [vmem:[#allocation11 + $0x68] sm:$0xff]
    %v737 = vld [vmem:[#allocation11 + $0x70] sm:$0xff]
    %v738 = vld [vmem:[#allocation11 + $0x78] sm:$0xff]
    %v739 = vld [vmem:[#allocation11 + $0x80] sm:$0xff]
    %v740 = vld [vmem:[#allocation11 + $0x88] sm:$0xff]
    %v741 = vld [vmem:[#allocation11 + $0x90] sm:$0xff]
    %v742 = vld [vmem:[#allocation11 + $0x98] sm:$0xff]
    %v743 = vld [vmem:[#allocation11 + $0xa0] sm:$0xff]
    %v744 = vld [vmem:[#allocation11 + $0xa8] sm:$0xff]
    %v745 = vld [vmem:[#allocation11 + $0xb0] sm:$0xff]
    %v746 = vld [vmem:[#allocation11 + $0xb8] sm:$0xff]
    %v747 = vld [vmem:[#allocation11 + $0xc0] sm:$0xff]
    %v748 = vld [vmem:[#allocation11 + $0xc8] sm:$0xff]
    %v749 = vld [vmem:[#allocation11 + $0xd0] sm:$0xff]
    %v750 = vld [vmem:[#allocation11 + $0xd8] sm:$0xff]
    %v751 = vld [vmem:[#allocation11 + $0xe0] sm:$0xff]
    %v752 = vld [vmem:[#allocation11 + $0xe8] sm:$0xff]
    %v753 = vld [vmem:[#allocation11 + $0xf0] sm:$0xff]
    %v754 = vld [vmem:[#allocation11 + $0xf8] sm:$0xff]
    %v755 = vld [vmem:[#allocation11 + $0x100] sm:$0xff]
    %v756 = vld [vmem:[#allocation11 + $0x108] sm:$0xff]
    %v757 = vld [vmem:[#allocation11 + $0x110] sm:$0xff]
    %v758 = vld [vmem:[#allocation11 + $0x118] sm:$0xff]
    %v759 = vld [vmem:[#allocation11 + $0x120] sm:$0xff]
    %v760 = vld [vmem:[#allocation11 + $0x128] sm:$0xff]
    %v761 = vld [vmem:[#allocation11 + $0x130] sm:$0xff]
    %v762 = vld [vmem:[#allocation11 + $0x138] sm:$0xff]
    %v763 = vld [vmem:[#allocation11 + $0x140] sm:$0xff]
    %v764 = vld [vmem:[#allocation11 + $0x148] sm:$0xff]
    %v765 = vld [vmem:[#allocation11 + $0x150] sm:$0xff]
    %v766 = vld [vmem:[#allocation11 + $0x158] sm:$0xff]
    %v767 = vld [vmem:[#allocation11 + $0x160] sm:$0xff]
    %v768 = vld [vmem:[#allocation11 + $0x168] sm:$0xff]
    %v769 = vld [vmem:[#allocation11 + $0x170] sm:$0xff]
    %v770 = vld [vmem:[#allocation11 + $0x178] sm:$0xff]
    %v771 = vld [vmem:[#allocation11 + $0x180] sm:$0xff]
    %v772 = vld [vmem:[#allocation11 + $0x188] sm:$0xff]
    %v773 = vld [vmem:[#allocation11 + $0x190] sm:$0xff]
    %v774 = vld [vmem:[#allocation11 + $0x198] sm:$0xff]
    %v775 = vld [vmem:[#allocation11 + $0x1a0] sm:$0xff]
    %v776 = vld [vmem:[#allocation11 + $0x1a8] sm:$0xff]
    %v777 = vld [vmem:[#allocation11 + $0x1b0] sm:$0xff]
    %v778 = vld [vmem:[#allocation11 + $0x1b8] sm:$0xff]
    %v779 = vld [vmem:[#allocation11 + $0x1c0] sm:$0xff]
    %v780 = vld [vmem:[#allocation11 + $0x1c8] sm:$0xff]
    %v781 = vld [vmem:[#allocation11 + $0x1d0] sm:$0xff]
    %v782 = vld [vmem:[#allocation11 + $0x1d8] sm:$0xff]
    %v783 = vld [vmem:[#allocation11 + $0x1e0] sm:$0xff]
    %v784 = vld [vmem:[#allocation11 + $0x1e8] sm:$0xff]
    %v785 = vld [vmem:[#allocation11 + $0x1f0] sm:$0xff]
    %v786 = vld [vmem:[#allocation11 + $0x1f8] sm:$0xff]
    %v787 = vld [vmem:[#allocation11 + $0x200] sm:$0xff]
    %v788 = vld [vmem:[#allocation11 + $0x208] sm:$0xff]
    %v789 = vld [vmem:[#allocation11 + $0x210] sm:$0xff]
    %v790 = vld [vmem:[#allocation11 + $0x218] sm:$0xff]
    %v791 = vld [vmem:[#allocation11 + $0x220] sm:$0xff]
    %v792 = vld [vmem:[#allocation11 + $0x228] sm:$0xff]
    %v793 = vld [vmem:[#allocation11 + $0x230] sm:$0xff]
    %v794 = vld [vmem:[#allocation11 + $0x238] sm:$0xff]
    %v795 = vld [vmem:[#allocation11 + $0x240] sm:$0xff]
    %v796 = vld [vmem:[#allocation11 + $0x248] sm:$0xff]
    %v797 = vld [vmem:[#allocation11 + $0x250] sm:$0xff]
    %v798 = vld [vmem:[#allocation11 + $0x258] sm:$0xff]
    %v799 = vld [vmem:[#allocation11 + $0x260] sm:$0xff]
    %v800 = vld [vmem:[#allocation11 + $0x268] sm:$0xff]
    %v801 = vld [vmem:[#allocation11 + $0x270] sm:$0xff]
    %v802 = vld [vmem:[#allocation11 + $0x278] sm:$0xff]
    %v803 = vld [vmem:[#allocation11 + $0x280] sm:$0xff]
    %v804 = vld [vmem:[#allocation11 + $0x288] sm:$0xff]
    %v805 = vld [vmem:[#allocation11 + $0x290] sm:$0xff]
    %v806 = vld [vmem:[#allocation11 + $0x298] sm:$0xff]
    %v807 = vld [vmem:[#allocation11 + $0x2a0] sm:$0xff]
    %v808 = vld [vmem:[#allocation11 + $0x2a8] sm:$0xff]
    %v809 = vld [vmem:[#allocation11 + $0x2b0] sm:$0xff]
    %v810 = vld [vmem:[#allocation11 + $0x2b8] sm:$0xff]
    %v811 = vld [vmem:[#allocation11 + $0x2c0] sm:$0xff]
    %v812 = vld [vmem:[#allocation11 + $0x2c8] sm:$0xff]
    %v813 = vld [vmem:[#allocation11 + $0x2d0] sm:$0xff]
    %v814 = vld [vmem:[#allocation11 + $0x2d8] sm:$0xff]
    %v815 = vld [vmem:[#allocation11 + $0x2e0] sm:$0xff]
    %v816 = vld [vmem:[#allocation11 + $0x2e8] sm:$0xff]
    %v817 = vld [vmem:[#allocation11 + $0x2f0] sm:$0xff]
    %v818 = vld [vmem:[#allocation11 + $0x2f8] sm:$0xff]
    %v819 = vld [vmem:[#allocation11 + $0x300] sm:$0xff]
    %v820 = vld [vmem:[#allocation11 + $0x308] sm:$0xff]
    %v821 = vld [vmem:[#allocation11 + $0x310] sm:$0xff]
    %v822 = vld [vmem:[#allocation11 + $0x318] sm:$0xff]
    %v823 = vld [vmem:[#allocation11 + $0x320] sm:$0xff]
    %v824 = vld [vmem:[#allocation11 + $0x328] sm:$0xff]
    %v825 = vld [vmem:[#allocation11 + $0x330] sm:$0xff]
    %v826 = vld [vmem:[#allocation11 + $0x338] sm:$0xff]
    %v827 = vld [vmem:[#allocation11 + $0x340] sm:$0xff]
    %v828 = vld [vmem:[#allocation11 + $0x348] sm:$0xff]
    %v829 = vld [vmem:[#allocation11 + $0x350] sm:$0xff]
    %v830 = vld [vmem:[#allocation11 + $0x358] sm:$0xff]
    %v831 = vld [vmem:[#allocation11 + $0x360] sm:$0xff]
    %v832 = vld [vmem:[#allocation11 + $0x368] sm:$0xff]
    %v833 = vld [vmem:[#allocation11 + $0x370] sm:$0xff]
    %v834 = vld [vmem:[#allocation11 + $0x378] sm:$0xff]
    %v835 = vld [vmem:[#allocation11 + $0x380] sm:$0xff]
    %v836 = vld [vmem:[#allocation11 + $0x388] sm:$0xff]
    %v837 = vld [vmem:[#allocation11 + $0x390] sm:$0xff]
    %v838 = vld [vmem:[#allocation11 + $0x398] sm:$0xff]
    %v839 = vld [vmem:[#allocation11 + $0x3a0] sm:$0xff]
    %v840 = vld [vmem:[#allocation11 + $0x3a8] sm:$0xff]
    %v841 = vld [vmem:[#allocation11 + $0x3b0] sm:$0xff]
    %v842 = vld [vmem:[#allocation11 + $0x3b8] sm:$0xff]
    %v843 = vld [vmem:[#allocation11 + $0x3c0] sm:$0xff]
    %v844 = vld [vmem:[#allocation11 + $0x3c8] sm:$0xff]
    %v845 = vld [vmem:[#allocation11 + $0x3d0] sm:$0xff]
    %v846 = vld [vmem:[#allocation11 + $0x3d8] sm:$0xff]
    %v847 = vld [vmem:[#allocation11 + $0x3e0] sm:$0xff]
    %v848 = vld [vmem:[#allocation11 + $0x3e8] sm:$0xff]
    %v849 = vld [vmem:[#allocation11 + $0x3f0] sm:$0xff]
    %v850 = vld [vmem:[#allocation11 + $0x3f8] sm:$0xff]
    %v979 = vunpack.c.l.b16 %v723
    %v980 = vunpack.c.h.b16 %v723
    %v981 = vunpack.c.l.b16 %v724
    %v982 = vunpack.c.h.b16 %v724
    %v983 = vunpack.c.l.b16 %v725
    %v984 = vunpack.c.h.b16 %v725
    %v985 = vunpack.c.l.b16 %v726
    %v986 = vunpack.c.h.b16 %v726
    %v987 = vunpack.c.l.b16 %v727
    %v988 = vunpack.c.h.b16 %v727
    %v989 = vunpack.c.l.b16 %v728
    %v990 = vunpack.c.h.b16 %v728
    %v991 = vunpack.c.l.b16 %v729
    %v992 = vunpack.c.h.b16 %v729
    %v993 = vunpack.c.l.b16 %v730
    %v994 = vunpack.c.h.b16 %v730
    %v995 = vunpack.c.l.b16 %v731
    %v996 = vunpack.c.h.b16 %v731
    %v997 = vunpack.c.l.b16 %v732
    %v998 = vunpack.c.h.b16 %v732
    %v999 = vunpack.c.l.b16 %v733
    %v1000 = vunpack.c.h.b16 %v733
    %v1001 = vunpack.c.l.b16 %v734
    %v1002 = vunpack.c.h.b16 %v734
    %v1003 = vunpack.c.l.b16 %v735
    %v1004 = vunpack.c.h.b16 %v735
    %v1005 = vunpack.c.l.b16 %v736
    %v1006 = vunpack.c.h.b16 %v736
    %v1007 = vunpack.c.l.b16 %v737
    %v1008 = vunpack.c.h.b16 %v737
    %v1009 = vunpack.c.l.b16 %v738
    %v1010 = vunpack.c.h.b16 %v738
    %v1011 = vunpack.c.l.b16 %v739
    %v1012 = vunpack.c.h.b16 %v739
    %v1013 = vunpack.c.l.b16 %v740
    %v1014 = vunpack.c.h.b16 %v740
    %v1015 = vunpack.c.l.b16 %v741
    %v1016 = vunpack.c.h.b16 %v741
    %v1017 = vunpack.c.l.b16 %v742
    %v1018 = vunpack.c.h.b16 %v742
    %v1019 = vunpack.c.l.b16 %v743
    %v1020 = vunpack.c.h.b16 %v743
    %v1021 = vunpack.c.l.b16 %v744
    %v1022 = vunpack.c.h.b16 %v744
    %v1023 = vunpack.c.l.b16 %v745
    %v1024 = vunpack.c.h.b16 %v745
    %v1025 = vunpack.c.l.b16 %v746
    %v1026 = vunpack.c.h.b16 %v746
    %v1027 = vunpack.c.l.b16 %v747
    %v1028 = vunpack.c.h.b16 %v747
    %v1029 = vunpack.c.l.b16 %v748
    %v1030 = vunpack.c.h.b16 %v748
    %v1031 = vunpack.c.l.b16 %v749
    %v1032 = vunpack.c.h.b16 %v749
    %v1033 = vunpack.c.l.b16 %v750
    %v1034 = vunpack.c.h.b16 %v750
    %v1035 = vunpack.c.l.b16 %v751
    %v1036 = vunpack.c.h.b16 %v751
    %v1037 = vunpack.c.l.b16 %v752
    %v1038 = vunpack.c.h.b16 %v752
    %v1039 = vunpack.c.l.b16 %v753
    %v1040 = vunpack.c.h.b16 %v753
    %v1041 = vunpack.c.l.b16 %v754
    %v1042 = vunpack.c.h.b16 %v754
    %v1043 = vunpack.c.l.b16 %v755
    %v1044 = vunpack.c.h.b16 %v755
    %v1045 = vunpack.c.l.b16 %v756
    %v1046 = vunpack.c.h.b16 %v756
    %v1047 = vunpack.c.l.b16 %v757
    %v1048 = vunpack.c.h.b16 %v757
    %v1049 = vunpack.c.l.b16 %v758
    %v1050 = vunpack.c.h.b16 %v758
    %v1051 = vunpack.c.l.b16 %v759
    %v1052 = vunpack.c.h.b16 %v759
    %v1053 = vunpack.c.l.b16 %v760
    %v1054 = vunpack.c.h.b16 %v760
    %v1055 = vunpack.c.l.b16 %v761
    %v1056 = vunpack.c.h.b16 %v761
    %v1057 = vunpack.c.l.b16 %v762
    %v1058 = vunpack.c.h.b16 %v762
    %v1059 = vunpack.c.l.b16 %v763
    %v1060 = vunpack.c.h.b16 %v763
    %v1061 = vunpack.c.l.b16 %v764
    %v1062 = vunpack.c.h.b16 %v764
    %v1063 = vunpack.c.l.b16 %v765
    %v1064 = vunpack.c.h.b16 %v765
    %v1065 = vunpack.c.l.b16 %v766
    %v1066 = vunpack.c.h.b16 %v766
    %v1067 = vunpack.c.l.b16 %v767
    %v1068 = vunpack.c.h.b16 %v767
    %v1069 = vunpack.c.l.b16 %v768
    %v1070 = vunpack.c.h.b16 %v768
    %v1071 = vunpack.c.l.b16 %v769
    %v1072 = vunpack.c.h.b16 %v769
    %v1073 = vunpack.c.l.b16 %v770
    %v1074 = vunpack.c.h.b16 %v770
    %v1075 = vunpack.c.l.b16 %v771
    %v1076 = vunpack.c.h.b16 %v771
    %v1077 = vunpack.c.l.b16 %v772
    %v1078 = vunpack.c.h.b16 %v772
    %v1079 = vunpack.c.l.b16 %v773
    %v1080 = vunpack.c.h.b16 %v773
    %v1081 = vunpack.c.l.b16 %v774
    %v1082 = vunpack.c.h.b16 %v774
    %v1083 = vunpack.c.l.b16 %v775
    %v1084 = vunpack.c.h.b16 %v775
    %v1085 = vunpack.c.l.b16 %v776
    %v1086 = vunpack.c.h.b16 %v776
    %v1087 = vunpack.c.l.b16 %v777
    %v1088 = vunpack.c.h.b16 %v777
    %v1089 = vunpack.c.l.b16 %v778
    %v1090 = vunpack.c.h.b16 %v778
    %v1091 = vunpack.c.l.b16 %v779
    %v1092 = vunpack.c.h.b16 %v779
    %v1093 = vunpack.c.l.b16 %v780
    %v1094 = vunpack.c.h.b16 %v780
    %v1095 = vunpack.c.l.b16 %v781
    %v1096 = vunpack.c.h.b16 %v781
    %v1097 = vunpack.c.l.b16 %v782
    %v1098 = vunpack.c.h.b16 %v782
    %v1099 = vunpack.c.l.b16 %v783
    %v1100 = vunpack.c.h.b16 %v783
    %v1101 = vunpack.c.l.b16 %v784
    %v1102 = vunpack.c.h.b16 %v784
    %v1103 = vunpack.c.l.b16 %v785
    %v1104 = vunpack.c.h.b16 %v785
    %v1105 = vunpack.c.l.b16 %v786
    %v1106 = vunpack.c.h.b16 %v786
    %v1107 = vunpack.c.l.b16 %v787
    %v1108 = vunpack.c.h.b16 %v787
    %v1109 = vunpack.c.l.b16 %v788
    %v1110 = vunpack.c.h.b16 %v788
    %v1111 = vunpack.c.l.b16 %v789
    %v1112 = vunpack.c.h.b16 %v789
    %v1113 = vunpack.c.l.b16 %v790
    %v1114 = vunpack.c.h.b16 %v790
    %v1115 = vunpack.c.l.b16 %v791
    %v1116 = vunpack.c.h.b16 %v791
    %v1117 = vunpack.c.l.b16 %v792
    %v1118 = vunpack.c.h.b16 %v792
    %v1119 = vunpack.c.l.b16 %v793
    %v1120 = vunpack.c.h.b16 %v793
    %v1121 = vunpack.c.l.b16 %v794
    %v1122 = vunpack.c.h.b16 %v794
    %v1123 = vunpack.c.l.b16 %v795
    %v1124 = vunpack.c.h.b16 %v795
    %v1125 = vunpack.c.l.b16 %v796
    %v1126 = vunpack.c.h.b16 %v796
    %v1127 = vunpack.c.l.b16 %v797
    %v1128 = vunpack.c.h.b16 %v797
    %v1129 = vunpack.c.l.b16 %v798
    %v1130 = vunpack.c.h.b16 %v798
    %v1131 = vunpack.c.l.b16 %v799
    %v1132 = vunpack.c.h.b16 %v799
    %v1133 = vunpack.c.l.b16 %v800
    %v1134 = vunpack.c.h.b16 %v800
    %v1135 = vunpack.c.l.b16 %v801
    %v1136 = vunpack.c.h.b16 %v801
    %v1137 = vunpack.c.l.b16 %v802
    %v1138 = vunpack.c.h.b16 %v802
    %v1139 = vunpack.c.l.b16 %v803
    %v1140 = vunpack.c.h.b16 %v803
    %v1141 = vunpack.c.l.b16 %v804
    %v1142 = vunpack.c.h.b16 %v804
    %v1143 = vunpack.c.l.b16 %v805
    %v1144 = vunpack.c.h.b16 %v805
    %v1145 = vunpack.c.l.b16 %v806
    %v1146 = vunpack.c.h.b16 %v806
    %v1147 = vunpack.c.l.b16 %v807
    %v1148 = vunpack.c.h.b16 %v807
    %v1149 = vunpack.c.l.b16 %v808
    %v1150 = vunpack.c.h.b16 %v808
    %v1151 = vunpack.c.l.b16 %v809
    %v1152 = vunpack.c.h.b16 %v809
    %v1153 = vunpack.c.l.b16 %v810
    %v1154 = vunpack.c.h.b16 %v810
    %v1155 = vunpack.c.l.b16 %v811
    %v1156 = vunpack.c.h.b16 %v811
    %v1157 = vunpack.c.l.b16 %v812
    %v1158 = vunpack.c.h.b16 %v812
    %v1159 = vunpack.c.l.b16 %v813
    %v1160 = vunpack.c.h.b16 %v813
    %v1161 = vunpack.c.l.b16 %v814
    %v1162 = vunpack.c.h.b16 %v814
    %v1163 = vunpack.c.l.b16 %v815
    %v1164 = vunpack.c.h.b16 %v815
    %v1165 = vunpack.c.l.b16 %v816
    %v1166 = vunpack.c.h.b16 %v816
    %v1167 = vunpack.c.l.b16 %v817
    %v1168 = vunpack.c.h.b16 %v817
    %v1169 = vunpack.c.l.b16 %v818
    %v1170 = vunpack.c.h.b16 %v818
    %v1171 = vunpack.c.l.b16 %v819
    %v1172 = vunpack.c.h.b16 %v819
    %v1173 = vunpack.c.l.b16 %v820
    %v1174 = vunpack.c.h.b16 %v820
    %v1175 = vunpack.c.l.b16 %v821
    %v1176 = vunpack.c.h.b16 %v821
    %v1177 = vunpack.c.l.b16 %v822
    %v1178 = vunpack.c.h.b16 %v822
    %v1179 = vunpack.c.l.b16 %v823
    %v1180 = vunpack.c.h.b16 %v823
    %v1181 = vunpack.c.l.b16 %v824
    %v1182 = vunpack.c.h.b16 %v824
    %v1183 = vunpack.c.l.b16 %v825
    %v1184 = vunpack.c.h.b16 %v825
    %v1185 = vunpack.c.l.b16 %v826
    %v1186 = vunpack.c.h.b16 %v826
    %v1187 = vunpack.c.l.b16 %v827
    %v1188 = vunpack.c.h.b16 %v827
    %v1189 = vunpack.c.l.b16 %v828
    %v1190 = vunpack.c.h.b16 %v828
    %v1191 = vunpack.c.l.b16 %v829
    %v1192 = vunpack.c.h.b16 %v829
    %v1193 = vunpack.c.l.b16 %v830
    %v1194 = vunpack.c.h.b16 %v830
    %v1195 = vunpack.c.l.b16 %v831
    %v1196 = vunpack.c.h.b16 %v831
    %v1197 = vunpack.c.l.b16 %v832
    %v1198 = vunpack.c.h.b16 %v832
    %v1199 = vunpack.c.l.b16 %v833
    %v1200 = vunpack.c.h.b16 %v833
    %v1201 = vunpack.c.l.b16 %v834
    %v1202 = vunpack.c.h.b16 %v834
    %v1203 = vunpack.c.l.b16 %v835
    %v1204 = vunpack.c.h.b16 %v835
    %v1205 = vunpack.c.l.b16 %v836
    %v1206 = vunpack.c.h.b16 %v836
    %v1207 = vunpack.c.l.b16 %v837
    %v1208 = vunpack.c.h.b16 %v837
    %v1209 = vunpack.c.l.b16 %v838
    %v1210 = vunpack.c.h.b16 %v838
    %v1211 = vunpack.c.l.b16 %v839
    %v1212 = vunpack.c.h.b16 %v839
    %v1213 = vunpack.c.l.b16 %v840
    %v1214 = vunpack.c.h.b16 %v840
    %v1215 = vunpack.c.l.b16 %v841
    %v1216 = vunpack.c.h.b16 %v841
    %v1217 = vunpack.c.l.b16 %v842
    %v1218 = vunpack.c.h.b16 %v842
    %v1219 = vunpack.c.l.b16 %v843
    %v1220 = vunpack.c.h.b16 %v843
    %v1221 = vunpack.c.l.b16 %v844
    %v1222 = vunpack.c.h.b16 %v844
    %v1223 = vunpack.c.l.b16 %v845
    %v1224 = vunpack.c.h.b16 %v845
    %v1225 = vunpack.c.l.b16 %v846
    %v1226 = vunpack.c.h.b16 %v846
    %v1227 = vunpack.c.l.b16 %v847
    %v1228 = vunpack.c.h.b16 %v847
    %v1229 = vunpack.c.l.b16 %v848
    %v1230 = vunpack.c.h.b16 %v848
    %v1231 = vunpack.c.l.b16 %v849
    %v1232 = vunpack.c.h.b16 %v849
    %v1233 = vunpack.c.l.b16 %v850
    %v1234 = vunpack.c.h.b16 %v850
    %v1235 = vpack.c.b16 %v987, %v979
    %v1236 = vpack.c.b16 %v988, %v980
    %v1237 = vpack.c.b16 %v989, %v981
    %v1238 = vpack.c.b16 %v990, %v982
    %v1239 = vpack.c.b16 %v991, %v983
    %v1240 = vpack.c.b16 %v992, %v984
    %v1241 = vpack.c.b16 %v993, %v985
    %v1242 = vpack.c.b16 %v994, %v986
    %v1243 = vpack.c.b16 %v1003, %v995
    %v1244 = vpack.c.b16 %v1004, %v996
    %v1245 = vpack.c.b16 %v1005, %v997
    %v1246 = vpack.c.b16 %v1006, %v998
    %v1247 = vpack.c.b16 %v1007, %v999
    %v1248 = vpack.c.b16 %v1008, %v1000
    %v1249 = vpack.c.b16 %v1009, %v1001
    %v1250 = vpack.c.b16 %v1010, %v1002
    %v1251 = vpack.c.b16 %v1019, %v1011
    %v1252 = vpack.c.b16 %v1020, %v1012
    %v1253 = vpack.c.b16 %v1021, %v1013
    %v1254 = vpack.c.b16 %v1022, %v1014
    %v1255 = vpack.c.b16 %v1023, %v1015
    %v1256 = vpack.c.b16 %v1024, %v1016
    %v1257 = vpack.c.b16 %v1025, %v1017
    %v1258 = vpack.c.b16 %v1026, %v1018
    %v1259 = vpack.c.b16 %v1035, %v1027
    %v1260 = vpack.c.b16 %v1036, %v1028
    %v1261 = vpack.c.b16 %v1037, %v1029
    %v1262 = vpack.c.b16 %v1038, %v1030
    %v1263 = vpack.c.b16 %v1039, %v1031
    %v1264 = vpack.c.b16 %v1040, %v1032
    %v1265 = vpack.c.b16 %v1041, %v1033
    %v1266 = vpack.c.b16 %v1042, %v1034
    %v1267 = vpack.c.b16 %v1051, %v1043
    %v1268 = vpack.c.b16 %v1052, %v1044
    %v1269 = vpack.c.b16 %v1053, %v1045
    %v1270 = vpack.c.b16 %v1054, %v1046
    %v1271 = vpack.c.b16 %v1055, %v1047
    %v1272 = vpack.c.b16 %v1056, %v1048
    %v1273 = vpack.c.b16 %v1057, %v1049
    %v1274 = vpack.c.b16 %v1058, %v1050
    %v1275 = vpack.c.b16 %v1067, %v1059
    %v1276 = vpack.c.b16 %v1068, %v1060
    %v1277 = vpack.c.b16 %v1069, %v1061
    %v1278 = vpack.c.b16 %v1070, %v1062
    %v1279 = vpack.c.b16 %v1071, %v1063
    %v1280 = vpack.c.b16 %v1072, %v1064
    %v1281 = vpack.c.b16 %v1073, %v1065
    %v1282 = vpack.c.b16 %v1074, %v1066
    %v1283 = vpack.c.b16 %v1083, %v1075
    %v1284 = vpack.c.b16 %v1084, %v1076
    %v1285 = vpack.c.b16 %v1085, %v1077
    %v1286 = vpack.c.b16 %v1086, %v1078
    %v1287 = vpack.c.b16 %v1087, %v1079
    %v1288 = vpack.c.b16 %v1088, %v1080
    %v1289 = vpack.c.b16 %v1089, %v1081
    %v1290 = vpack.c.b16 %v1090, %v1082
    %v1291 = vpack.c.b16 %v1099, %v1091
    %v1292 = vpack.c.b16 %v1100, %v1092
    %v1293 = vpack.c.b16 %v1101, %v1093
    %v1294 = vpack.c.b16 %v1102, %v1094
    %v1295 = vpack.c.b16 %v1103, %v1095
    %v1296 = vpack.c.b16 %v1104, %v1096
    %v1297 = vpack.c.b16 %v1105, %v1097
    %v1298 = vpack.c.b16 %v1106, %v1098
    %v1299 = vpack.c.b16 %v1115, %v1107
    %v1300 = vpack.c.b16 %v1116, %v1108
    %v1301 = vpack.c.b16 %v1117, %v1109
    %v1302 = vpack.c.b16 %v1118, %v1110
    %v1303 = vpack.c.b16 %v1119, %v1111
    %v1304 = vpack.c.b16 %v1120, %v1112
    %v1305 = vpack.c.b16 %v1121, %v1113
    %v1306 = vpack.c.b16 %v1122, %v1114
    %v1307 = vpack.c.b16 %v1131, %v1123
    %v1308 = vpack.c.b16 %v1132, %v1124
    %v1309 = vpack.c.b16 %v1133, %v1125
    %v1310 = vpack.c.b16 %v1134, %v1126
    %v1311 = vpack.c.b16 %v1135, %v1127
    %v1312 = vpack.c.b16 %v1136, %v1128
    %v1313 = vpack.c.b16 %v1137, %v1129
    %v1314 = vpack.c.b16 %v1138, %v1130
    %v1315 = vpack.c.b16 %v1147, %v1139
    %v1316 = vpack.c.b16 %v1148, %v1140
    %v1317 = vpack.c.b16 %v1149, %v1141
    %v1318 = vpack.c.b16 %v1150, %v1142
    %v1319 = vpack.c.b16 %v1151, %v1143
    %v1320 = vpack.c.b16 %v1152, %v1144
    %v1321 = vpack.c.b16 %v1153, %v1145
    %v1322 = vpack.c.b16 %v1154, %v1146
    %v1323 = vpack.c.b16 %v1163, %v1155
    %v1324 = vpack.c.b16 %v1164, %v1156
    %v1325 = vpack.c.b16 %v1165, %v1157
    %v1326 = vpack.c.b16 %v1166, %v1158
    %v1327 = vpack.c.b16 %v1167, %v1159
    %v1328 = vpack.c.b16 %v1168, %v1160
    %v1329 = vpack.c.b16 %v1169, %v1161
    %v1330 = vpack.c.b16 %v1170, %v1162
    %v1331 = vpack.c.b16 %v1179, %v1171
    %v1332 = vpack.c.b16 %v1180, %v1172
    %v1333 = vpack.c.b16 %v1181, %v1173
    %v1334 = vpack.c.b16 %v1182, %v1174
    %v1335 = vpack.c.b16 %v1183, %v1175
    %v1336 = vpack.c.b16 %v1184, %v1176
    %v1337 = vpack.c.b16 %v1185, %v1177
    %v1338 = vpack.c.b16 %v1186, %v1178
    %v1339 = vpack.c.b16 %v1195, %v1187
    %v1340 = vpack.c.b16 %v1196, %v1188
    %v1341 = vpack.c.b16 %v1197, %v1189
    %v1342 = vpack.c.b16 %v1198, %v1190
    %v1343 = vpack.c.b16 %v1199, %v1191
    %v1344 = vpack.c.b16 %v1200, %v1192
    %v1345 = vpack.c.b16 %v1201, %v1193
    %v1346 = vpack.c.b16 %v1202, %v1194
    %v1347 = vpack.c.b16 %v1211, %v1203
    %v1348 = vpack.c.b16 %v1212, %v1204
    %v1349 = vpack.c.b16 %v1213, %v1205
    %v1350 = vpack.c.b16 %v1214, %v1206
    %v1351 = vpack.c.b16 %v1215, %v1207
    %v1352 = vpack.c.b16 %v1216, %v1208
    %v1353 = vpack.c.b16 %v1217, %v1209
    %v1354 = vpack.c.b16 %v1218, %v1210
    %v1355 = vpack.c.b16 %v1227, %v1219
    %v1356 = vpack.c.b16 %v1228, %v1220
    %v1357 = vpack.c.b16 %v1229, %v1221
    %v1358 = vpack.c.b16 %v1230, %v1222
    %v1359 = vpack.c.b16 %v1231, %v1223
    %v1360 = vpack.c.b16 %v1232, %v1224
    %v1361 = vpack.c.b16 %v1233, %v1225
    %v1362 = vpack.c.b16 %v1234, %v1226
    %1491 = vmatprep.subr.bf16.mxu0 %v1292
    %1492 = vmatpush1.bf16.msra.mxu0 %v1291
    %1493 = vmatprep.subr.bf16.mxu0 %v1284
    %1494 = vmatpush1.bf16.msra.mxu0 %v1283
    %1495 = vmatprep.subr.bf16.mxu0 %v1276
    %1496 = vmatpush1.bf16.msra.mxu0 %v1275
    %1497 = vmatprep.subr.bf16.mxu0 %v1268
    %1498 = vmatpush1.bf16.msra.mxu0 %v1267
    %1499 = vmatprep.subr.bf16.mxu0 %v1260
    %1500 = vmatpush1.bf16.msra.mxu0 %v1259
    %1501 = vmatprep.subr.bf16.mxu0 %v1252
    %1502 = vmatpush1.bf16.msra.mxu0 %v1251
    %1503 = vmatprep.subr.bf16.mxu0 %v1244
    %1504 = vmatpush1.bf16.msra.mxu0 %v1243
    %1505 = vmatprep.subr.bf16.mxu0 %v1236
    %1506 = vmatpush1.bf16.msra.mxu0 %v1235
    %1507 = vmatprep.subr.bf16.mxu0 %v1356
    %1508 = vmatpush2.bf16.msra.mxu0 %v1355
    %1509 = vmatprep.subr.bf16.mxu0 %v1348
    %1510 = vmatpush2.bf16.msra.mxu0 %v1347
    %1511 = vmatprep.subr.bf16.mxu0 %v1340
    %1512 = vmatpush2.bf16.msra.mxu0 %v1339
    %1513 = vmatprep.subr.bf16.mxu0 %v1332
    %1514 = vmatpush2.bf16.msra.mxu0 %v1331
    %1515 = vmatprep.subr.bf16.mxu0 %v1324
    %1516 = vmatpush2.bf16.msra.mxu0 %v1323
    %1517 = vmatprep.subr.bf16.mxu0 %v1316
    %1518 = vmatpush2.bf16.msra.mxu0 %v1315
    %1519 = vmatprep.subr.bf16.mxu0 %v1308
    %1520 = vmatpush2.bf16.msra.mxu0 %v1307
    %1521 = vmatprep.subr.bf16.mxu0 %v1300
    %1522 = vmatpush2.bf16.msra.mxu0 %v1299
    %1523 = vmatprep.mubr.bf16.mxu0 %v722
    %1524 = vmatmul.mubr.bf16.gmra.mxu0 %v722
    %v1525 = vpop.f32.mrf.mxu0
    %v1526 = vadd.f32 0.0, %v1525
    %v1527 = vpop.f32.mrf.mxu0
    %v1528 = vadd.f32 0.0, %v1527
    %v1529 = vpop.f32.mrf.mxu0
    %v1530 = vpop.f32.mrf.mxu0
    %1531 = vdwg.mxu0
    %1532 = vmatprep.subr.bf16.mxu0 %v1294
    %1533 = vmatpush1.bf16.msra.mxu0 %v1293
    %1534 = vmatprep.subr.bf16.mxu0 %v1286
    %1535 = vmatpush1.bf16.msra.mxu0 %v1285
    %1536 = vmatprep.subr.bf16.mxu0 %v1278
    %1537 = vmatpush1.bf16.msra.mxu0 %v1277
    %1538 = vmatprep.subr.bf16.mxu0 %v1270
    %1539 = vmatpush1.bf16.msra.mxu0 %v1269
    %1540 = vmatprep.subr.bf16.mxu0 %v1262
    %1541 = vmatpush1.bf16.msra.mxu0 %v1261
    %1542 = vmatprep.subr.bf16.mxu0 %v1254
    %1543 = vmatpush1.bf16.msra.mxu0 %v1253
    %1544 = vmatprep.subr.bf16.mxu0 %v1246
    %1545 = vmatpush1.bf16.msra.mxu0 %v1245
    %1546 = vmatprep.subr.bf16.mxu0 %v1238
    %1547 = vmatpush1.bf16.msra.mxu0 %v1237
    %1548 = vmatprep.subr.bf16.mxu0 %v1358
    %1549 = vmatpush2.bf16.msra.mxu0 %v1357
    %1550 = vmatprep.subr.bf16.mxu0 %v1350
    %1551 = vmatpush2.bf16.msra.mxu0 %v1349
    %1552 = vmatprep.subr.bf16.mxu0 %v1342
    %1553 = vmatpush2.bf16.msra.mxu0 %v1341
    %1554 = vmatprep.subr.bf16.mxu0 %v1334
    %1555 = vmatpush2.bf16.msra.mxu0 %v1333
    %1556 = vmatprep.subr.bf16.mxu0 %v1326
    %1557 = vmatpush2.bf16.msra.mxu0 %v1325
    %1558 = vmatprep.subr.bf16.mxu0 %v1318
    %1559 = vmatpush2.bf16.msra.mxu0 %v1317
    %1560 = vmatprep.subr.bf16.mxu0 %v1310
    %1561 = vmatpush2.bf16.msra.mxu0 %v1309
    %1562 = vmatprep.subr.bf16.mxu0 %v1302
    %1563 = vmatpush2.bf16.msra.mxu0 %v1301
    %1564 = vmatprep.mubr.bf16.mxu0 %v722
    %1565 = vmatmul.mubr.bf16.gmra.mxu0 %v722
    %v1566 = vpop.f32.mrf.mxu0
    %v1567 = vadd.f32 0.0, %v1566
    %v1568 = vpop.f32.mrf.mxu0
    %v1569 = vadd.f32 0.0, %v1568
    %v1570 = vpop.f32.mrf.mxu0
    %v1571 = vpop.f32.mrf.mxu0
    %1572 = vdwg.mxu0
    %1573 = vmatprep.subr.bf16.mxu0 %v1296
    %1574 = vmatpush1.bf16.msra.mxu0 %v1295
    %1575 = vmatprep.subr.bf16.mxu0 %v1288
    %1576 = vmatpush1.bf16.msra.mxu0 %v1287
    %1577 = vmatprep.subr.bf16.mxu0 %v1280
    %1578 = vmatpush1.bf16.msra.mxu0 %v1279
    %1579 = vmatprep.subr.bf16.mxu0 %v1272
    %1580 = vmatpush1.bf16.msra.mxu0 %v1271
    %1581 = vmatprep.subr.bf16.mxu0 %v1264
    %1582 = vmatpush1.bf16.msra.mxu0 %v1263
    %1583 = vmatprep.subr.bf16.mxu0 %v1256
    %1584 = vmatpush1.bf16.msra.mxu0 %v1255
    %1585 = vmatprep.subr.bf16.mxu0 %v1248
    %1586 = vmatpush1.bf16.msra.mxu0 %v1247
    %1587 = vmatprep.subr.bf16.mxu0 %v1240
    %1588 = vmatpush1.bf16.msra.mxu0 %v1239
    %1589 = vmatprep.subr.bf16.mxu0 %v1360
    %1590 = vmatpush2.bf16.msra.mxu0 %v1359
    %1591 = vmatprep.subr.bf16.mxu0 %v1352
    %1592 = vmatpush2.bf16.msra.mxu0 %v1351
    %1593 = vmatprep.subr.bf16.mxu0 %v1344
    %1594 = vmatpush2.bf16.msra.mxu0 %v1343
    %1595 = vmatprep.subr.bf16.mxu0 %v1336
    %1596 = vmatpush2.bf16.msra.mxu0 %v1335
    %1597 = vmatprep.subr.bf16.mxu0 %v1328
    %1598 = vmatpush2.bf16.msra.mxu0 %v1327
    %1599 = vmatprep.subr.bf16.mxu0 %v1320
    %1600 = vmatpush2.bf16.msra.mxu0 %v1319
    %1601 = vmatprep.subr.bf16.mxu0 %v1312
    %1602 = vmatpush2.bf16.msra.mxu0 %v1311
    %1603 = vmatprep.subr.bf16.mxu0 %v1304
    %1604 = vmatpush2.bf16.msra.mxu0 %v1303
    %1605 = vmatprep.mubr.bf16.mxu0 %v722
    %1606 = vmatmul.mubr.bf16.gmra.mxu0 %v722
    %v1607 = vpop.f32.mrf.mxu0
    %v1608 = vadd.f32 0.0, %v1607
    %v1609 = vpop.f32.mrf.mxu0
    %v1610 = vadd.f32 0.0, %v1609
    %v1611 = vpop.f32.mrf.mxu0
    %v1612 = vpop.f32.mrf.mxu0
    %1613 = vdwg.mxu0
    %1614 = vmatprep.subr.bf16.mxu0 %v1298
    %1615 = vmatpush1.bf16.msra.mxu0 %v1297
    %1616 = vmatprep.subr.bf16.mxu0 %v1290
    %1617 = vmatpush1.bf16.msra.mxu0 %v1289
    %1618 = vmatprep.subr.bf16.mxu0 %v1282
    %1619 = vmatpush1.bf16.msra.mxu0 %v1281
    %1620 = vmatprep.subr.bf16.mxu0 %v1274
    %1621 = vmatpush1.bf16.msra.mxu0 %v1273
    %1622 = vmatprep.subr.bf16.mxu0 %v1266
    %1623 = vmatpush1.bf16.msra.mxu0 %v1265
    %1624 = vmatprep.subr.bf16.mxu0 %v1258
    %1625 = vmatpush1.bf16.msra.mxu0 %v1257
    %1626 = vmatprep.subr.bf16.mxu0 %v1250
    %1627 = vmatpush1.bf16.msra.mxu0 %v1249
    %1628 = vmatprep.subr.bf16.mxu0 %v1242
    %1629 = vmatpush1.bf16.msra.mxu0 %v1241
    %1630 = vmatprep.subr.bf16.mxu0 %v1362
    %1631 = vmatpush2.bf16.msra.mxu0 %v1361
    %1632 = vmatprep.subr.bf16.mxu0 %v1354
    %1633 = vmatpush2.bf16.msra.mxu0 %v1353
    %1634 = vmatprep.subr.bf16.mxu0 %v1346
    %1635 = vmatpush2.bf16.msra.mxu0 %v1345
    %1636 = vmatprep.subr.bf16.mxu0 %v1338
    %1637 = vmatpush2.bf16.msra.mxu0 %v1337
    %1638 = vmatprep.subr.bf16.mxu0 %v1330
    %1639 = vmatpush2.bf16.msra.mxu0 %v1329
    %1640 = vmatprep.subr.bf16.mxu0 %v1322
    %1641 = vmatpush2.bf16.msra.mxu0 %v1321
    %1642 = vmatprep.subr.bf16.mxu0 %v1314
    %1643 = vmatpush2.bf16.msra.mxu0 %v1313
    %1644 = vmatprep.subr.bf16.mxu0 %v1306
    %1645 = vmatpush2.bf16.msra.mxu0 %v1305
    %1646 = vmatprep.mubr.bf16.mxu0 %v722
    %1647 = vmatmul.mubr.bf16.gmra.mxu0 %v722
    %v1648 = vpop.f32.mrf.mxu0
    %v1649 = vadd.f32 0.0, %v1648
    %v1650 = vpop.f32.mrf.mxu0
    %v1651 = vadd.f32 0.0, %v1650
    %v1652 = vpop.f32.mrf.mxu0
    %v1653 = vpop.f32.mrf.mxu0
    %1654 = vdwg.mxu0
    %v1655 = vld [vmem:[#allocation3] ss:$8 sm:$0xf]
    %v1660 = vcombine.low %v1526, %v1528
    %v1661 = vcombine.low %v1567, %v1569
    %v1663 = vunpack.c.l.s4 1966171168
    %v1664 = vunpack.c.0.s8 %v1663
    %v1665 = vlaneseq
    %v1666 = vshrl.u32 %v1665, 7
    %v1667 = vsub.s32 %v1664, %v1666
    %v1668 = vrot.slane %v1660, %v1667
    %v1670 = vunpack.c.l.s4 1966171168
    %v1671 = vunpack.c.0.s8 %v1670
    %v1672 = vlaneseq
    %v1673 = vshrl.u32 %v1672, 7
    %v1674 = vsub.s32 %v1671, %v1673
    %v1675 = vrot.slane %v1661, %v1674
    %v1676 = vcombine.low %v1668, %v1675
    %v1678 = vunpack.c.l.s4 1966171168
    %v1679 = vunpack.c.0.s8 %v1678
    %v1680 = vlaneseq
    %v1681 = vshrl.u32 %v1680, 7
    %v1682 = vsub.s32 %v1679, %v1681
    %v1683 = vrot.slane %v1676, %v1682
    %v1685 = vadd.f32 %v1655, %v1683
    %s1686 = scalar_lea.vmem [#allocation3], 39
    %v1687 = vld [vmem:[%s1686] ss:$8 sm:$0xf]
    %v1692 = vcombine.low %v1608, %v1610
    %v1693 = vcombine.low %v1649, %v1651
    %v1695 = vunpack.c.l.s4 1966171168
    %v1696 = vunpack.c.0.s8 %v1695
    %v1697 = vlaneseq
    %v1698 = vshrl.u32 %v1697, 7
    %v1699 = vsub.s32 %v1696, %v1698
    %v1700 = vrot.slane %v1692, %v1699
    %v1702 = vunpack.c.l.s4 1966171168
    %v1703 = vunpack.c.0.s8 %v1702
    %v1704 = vlaneseq
    %v1705 = vshrl.u32 %v1704, 7
    %v1706 = vsub.s32 %v1703, %v1705
    %v1707 = vrot.slane %v1693, %v1706
    %v1708 = vcombine.low %v1700, %v1707
    %v1710 = vunpack.c.l.s4 1966171168
    %v1711 = vunpack.c.0.s8 %v1710
    %v1712 = vlaneseq
    %v1713 = vshrl.u32 %v1712, 7
    %v1714 = vsub.s32 %v1711, %v1713
    %v1715 = vrot.slane %v1708, %v1714
    %v1717 = vadd.f32 %v1687, %v1715
    %v1718 = vxor.u32 %v1685, 2147483648
    %v1719 = vmul.f32 %v1718, 1.442695
    %v1720 = vpow.pop %v1719
    %v1721 = vadd.f32 %v1720, 1.0
    %v1722 = vrcp.pop %v1721
    %v1723 = vmul.f32 1.0, %v1722
    %v1725 = vrot.slane %v1685, 1
    %v1727 = vxor.u32 %v1725, 2147483648
    %v1728 = vmul.f32 %v1727, 1.442695
    %v1729 = vpow.pop %v1728
    %v1730 = vadd.f32 %v1729, 1.0
    %v1731 = vrcp.pop %v1730
    %v1732 = vmul.f32 1.0, %v1731
    %v1733 = vrot.slane %v1685, 2
    %v1735 = vtanh.pop %v1733
    %v1736 = vrot.slane %v1685, 3
    %v1738 = vxor.u32 %v1736, 2147483648
    %v1739 = vmul.f32 %v1738, 1.442695
    %v1740 = vpow.pop %v1739
    %v1741 = vadd.f32 %v1740, 1.0
    %v1742 = vrcp.pop %v1741
    %v1743 = vmul.f32 1.0, %v1742
    %v1744 = vmul.f32 %v1732, 0.0
    %v1745 = vmul.f32 %v1723, %v1735
    %v1746 = vadd.f32 %v1744, %v1745
    %v1747 = vtanh.pop %v1746
    %v1748 = vmul.f32 %v1743, %v1747
    %v1749 = vxor.u32 %v1717, 2147483648
    %v1750 = vmul.f32 %v1749, 1.442695
    %v1751 = vpow.pop %v1750
    %v1752 = vadd.f32 %v1751, 1.0
    %v1753 = vrcp.pop %v1752
    %v1754 = vmul.f32 1.0, %v1753
    %v1756 = vrot.slane %v1717, 1
    %v1758 = vxor.u32 %v1756, 2147483648
    %v1759 = vmul.f32 %v1758, 1.442695
    %v1760 = vpow.pop %v1759
    %v1761 = vadd.f32 %v1760, 1.0
    %v1762 = vrcp.pop %v1761
    %v1763 = vmul.f32 1.0, %v1762
    %v1764 = vrot.slane %v1717, 2
    %v1766 = vtanh.pop %v1764
    %v1767 = vrot.slane %v1717, 3
    %v1769 = vxor.u32 %v1767, 2147483648
    %v1770 = vmul.f32 %v1769, 1.442695
    %v1771 = vpow.pop %v1770
    %v1772 = vadd.f32 %v1771, 1.0
    %v1773 = vrcp.pop %v1772
    %v1774 = vmul.f32 1.0, %v1773
    %v1775 = vmul.f32 %v1763, 0.0
    %v1776 = vmul.f32 %v1754, %v1766
    %v1777 = vadd.f32 %v1775, %v1776
    %v1778 = vtanh.pop %v1777
    %v1779 = vmul.f32 %v1774, %v1778
    %1780 = vst [vmem:[#allocation14] sm:$0x1] %v1748
    %1781 = vst [vmem:[#allocation14 + $0xf] sm:$0x1] %v1779
    %v1782 = vpack.c.bf16 %v1748, %v1748
    %v1783 = vpack.c.bf16 %v1779, %v1779
    %v1784 = vld [vmem:[#allocation11] sm:$0xff]
    %v1785 = vld [vmem:[#allocation11 + $0x8] sm:$0xff]
    %v1786 = vld [vmem:[#allocation11 + $0x10] sm:$0xff]
    %v1787 = vld [vmem:[#allocation11 + $0x18] sm:$0xff]
    %v1788 = vld [vmem:[#allocation11 + $0x20] sm:$0xff]
    %v1789 = vld [vmem:[#allocation11 + $0x28] sm:$0xff]
    %v1790 = vld [vmem:[#allocation11 + $0x30] sm:$0xff]
    %v1791 = vld [vmem:[#allocation11 + $0x38] sm:$0xff]
    %v1792 = vld [vmem:[#allocation11 + $0x40] sm:$0xff]
    %v1793 = vld [vmem:[#allocation11 + $0x48] sm:$0xff]
    %v1794 = vld [vmem:[#allocation11 + $0x50] sm:$0xff]
    %v1795 = vld [vmem:[#allocation11 + $0x58] sm:$0xff]
    %v1796 = vld [vmem:[#allocation11 + $0x60] sm:$0xff]
    %v1797 = vld [vmem:[#allocation11 + $0x68] sm:$0xff]
    %v1798 = vld [vmem:[#allocation11 + $0x70] sm:$0xff]
    %v1799 = vld [vmem:[#allocation11 + $0x78] sm:$0xff]
    %v1800 = vld [vmem:[#allocation11 + $0x80] sm:$0xff]
    %v1801 = vld [vmem:[#allocation11 + $0x88] sm:$0xff]
    %v1802 = vld [vmem:[#allocation11 + $0x90] sm:$0xff]
    %v1803 = vld [vmem:[#allocation11 + $0x98] sm:$0xff]
    %v1804 = vld [vmem:[#allocation11 + $0xa0] sm:$0xff]
    %v1805 = vld [vmem:[#allocation11 + $0xa8] sm:$0xff]
    %v1806 = vld [vmem:[#allocation11 + $0xb0] sm:$0xff]
    %v1807 = vld [vmem:[#allocation11 + $0xb8] sm:$0xff]
    %v1808 = vld [vmem:[#allocation11 + $0xc0] sm:$0xff]
    %v1809 = vld [vmem:[#allocation11 + $0xc8] sm:$0xff]
    %v1810 = vld [vmem:[#allocation11 + $0xd0] sm:$0xff]
    %v1811 = vld [vmem:[#allocation11 + $0xd8] sm:$0xff]
    %v1812 = vld [vmem:[#allocation11 + $0xe0] sm:$0xff]
    %v1813 = vld [vmem:[#allocation11 + $0xe8] sm:$0xff]
    %v1814 = vld [vmem:[#allocation11 + $0xf0] sm:$0xff]
    %v1815 = vld [vmem:[#allocation11 + $0xf8] sm:$0xff]
    %v1816 = vld [vmem:[#allocation11 + $0x100] sm:$0xff]
    %v1817 = vld [vmem:[#allocation11 + $0x108] sm:$0xff]
    %v1818 = vld [vmem:[#allocation11 + $0x110] sm:$0xff]
    %v1819 = vld [vmem:[#allocation11 + $0x118] sm:$0xff]
    %v1820 = vld [vmem:[#allocation11 + $0x120] sm:$0xff]
    %v1821 = vld [vmem:[#allocation11 + $0x128] sm:$0xff]
    %v1822 = vld [vmem:[#allocation11 + $0x130] sm:$0xff]
    %v1823 = vld [vmem:[#allocation11 + $0x138] sm:$0xff]
    %v1824 = vld [vmem:[#allocation11 + $0x140] sm:$0xff]
    %v1825 = vld [vmem:[#allocation11 + $0x148] sm:$0xff]
    %v1826 = vld [vmem:[#allocation11 + $0x150] sm:$0xff]
    %v1827 = vld [vmem:[#allocation11 + $0x158] sm:$0xff]
    %v1828 = vld [vmem:[#allocation11 + $0x160] sm:$0xff]
    %v1829 = vld [vmem:[#allocation11 + $0x168] sm:$0xff]
    %v1830 = vld [vmem:[#allocation11 + $0x170] sm:$0xff]
    %v1831 = vld [vmem:[#allocation11 + $0x178] sm:$0xff]
    %v1832 = vld [vmem:[#allocation11 + $0x180] sm:$0xff]
    %v1833 = vld [vmem:[#allocation11 + $0x188] sm:$0xff]
    %v1834 = vld [vmem:[#allocation11 + $0x190] sm:$0xff]
    %v1835 = vld [vmem:[#allocation11 + $0x198] sm:$0xff]
    %v1836 = vld [vmem:[#allocation11 + $0x1a0] sm:$0xff]
    %v1837 = vld [vmem:[#allocation11 + $0x1a8] sm:$0xff]
    %v1838 = vld [vmem:[#allocation11 + $0x1b0] sm:$0xff]
    %v1839 = vld [vmem:[#allocation11 + $0x1b8] sm:$0xff]
    %v1840 = vld [vmem:[#allocation11 + $0x1c0] sm:$0xff]
    %v1841 = vld [vmem:[#allocation11 + $0x1c8] sm:$0xff]
    %v1842 = vld [vmem:[#allocation11 + $0x1d0] sm:$0xff]
    %v1843 = vld [vmem:[#allocation11 + $0x1d8] sm:$0xff]
    %v1844 = vld [vmem:[#allocation11 + $0x1e0] sm:$0xff]
    %v1845 = vld [vmem:[#allocation11 + $0x1e8] sm:$0xff]
    %v1846 = vld [vmem:[#allocation11 + $0x1f0] sm:$0xff]
    %v1847 = vld [vmem:[#allocation11 + $0x1f8] sm:$0xff]
    %v1848 = vld [vmem:[#allocation11 + $0x200] sm:$0xff]
    %v1849 = vld [vmem:[#allocation11 + $0x208] sm:$0xff]
    %v1850 = vld [vmem:[#allocation11 + $0x210] sm:$0xff]
    %v1851 = vld [vmem:[#allocation11 + $0x218] sm:$0xff]
    %v1852 = vld [vmem:[#allocation11 + $0x220] sm:$0xff]
    %v1853 = vld [vmem:[#allocation11 + $0x228] sm:$0xff]
    %v1854 = vld [vmem:[#allocation11 + $0x230] sm:$0xff]
    %v1855 = vld [vmem:[#allocation11 + $0x238] sm:$0xff]
    %v1856 = vld [vmem:[#allocation11 + $0x240] sm:$0xff]
    %v1857 = vld [vmem:[#allocation11 + $0x248] sm:$0xff]
    %v1858 = vld [vmem:[#allocation11 + $0x250] sm:$0xff]
    %v1859 = vld [vmem:[#allocation11 + $0x258] sm:$0xff]
    %v1860 = vld [vmem:[#allocation11 + $0x260] sm:$0xff]
    %v1861 = vld [vmem:[#allocation11 + $0x268] sm:$0xff]
    %v1862 = vld [vmem:[#allocation11 + $0x270] sm:$0xff]
    %v1863 = vld [vmem:[#allocation11 + $0x278] sm:$0xff]
    %v1864 = vld [vmem:[#allocation11 + $0x280] sm:$0xff]
    %v1865 = vld [vmem:[#allocation11 + $0x288] sm:$0xff]
    %v1866 = vld [vmem:[#allocation11 + $0x290] sm:$0xff]
    %v1867 = vld [vmem:[#allocation11 + $0x298] sm:$0xff]
    %v1868 = vld [vmem:[#allocation11 + $0x2a0] sm:$0xff]
    %v1869 = vld [vmem:[#allocation11 + $0x2a8] sm:$0xff]
    %v1870 = vld [vmem:[#allocation11 + $0x2b0] sm:$0xff]
    %v1871 = vld [vmem:[#allocation11 + $0x2b8] sm:$0xff]
    %v1872 = vld [vmem:[#allocation11 + $0x2c0] sm:$0xff]
    %v1873 = vld [vmem:[#allocation11 + $0x2c8] sm:$0xff]
    %v1874 = vld [vmem:[#allocation11 + $0x2d0] sm:$0xff]
    %v1875 = vld [vmem:[#allocation11 + $0x2d8] sm:$0xff]
    %v1876 = vld [vmem:[#allocation11 + $0x2e0] sm:$0xff]
    %v1877 = vld [vmem:[#allocation11 + $0x2e8] sm:$0xff]
    %v1878 = vld [vmem:[#allocation11 + $0x2f0] sm:$0xff]
    %v1879 = vld [vmem:[#allocation11 + $0x2f8] sm:$0xff]
    %v1880 = vld [vmem:[#allocation11 + $0x300] sm:$0xff]
    %v1881 = vld [vmem:[#allocation11 + $0x308] sm:$0xff]
    %v1882 = vld [vmem:[#allocation11 + $0x310] sm:$0xff]
    %v1883 = vld [vmem:[#allocation11 + $0x318] sm:$0xff]
    %v1884 = vld [vmem:[#allocation11 + $0x320] sm:$0xff]
    %v1885 = vld [vmem:[#allocation11 + $0x328] sm:$0xff]
    %v1886 = vld [vmem:[#allocation11 + $0x330] sm:$0xff]
    %v1887 = vld [vmem:[#allocation11 + $0x338] sm:$0xff]
    %v1888 = vld [vmem:[#allocation11 + $0x340] sm:$0xff]
    %v1889 = vld [vmem:[#allocation11 + $0x348] sm:$0xff]
    %v1890 = vld [vmem:[#allocation11 + $0x350] sm:$0xff]
    %v1891 = vld [vmem:[#allocation11 + $0x358] sm:$0xff]
    %v1892 = vld [vmem:[#allocation11 + $0x360] sm:$0xff]
    %v1893 = vld [vmem:[#allocation11 + $0x368] sm:$0xff]
    %v1894 = vld [vmem:[#allocation11 + $0x370] sm:$0xff]
    %v1895 = vld [vmem:[#allocation11 + $0x378] sm:$0xff]
    %v1896 = vld [vmem:[#allocation11 + $0x380] sm:$0xff]
    %v1897 = vld [vmem:[#allocation11 + $0x388] sm:$0xff]
    %v1898 = vld [vmem:[#allocation11 + $0x390] sm:$0xff]
    %v1899 = vld [vmem:[#allocation11 + $0x398] sm:$0xff]
    %v1900 = vld [vmem:[#allocation11 + $0x3a0] sm:$0xff]
    %v1901 = vld [vmem:[#allocation11 + $0x3a8] sm:$0xff]
    %v1902 = vld [vmem:[#allocation11 + $0x3b0] sm:$0xff]
    %v1903 = vld [vmem:[#allocation11 + $0x3b8] sm:$0xff]
    %v1904 = vld [vmem:[#allocation11 + $0x3c0] sm:$0xff]
    %v1905 = vld [vmem:[#allocation11 + $0x3c8] sm:$0xff]
    %v1906 = vld [vmem:[#allocation11 + $0x3d0] sm:$0xff]
    %v1907 = vld [vmem:[#allocation11 + $0x3d8] sm:$0xff]
    %v1908 = vld [vmem:[#allocation11 + $0x3e0] sm:$0xff]
    %v1909 = vld [vmem:[#allocation11 + $0x3e8] sm:$0xff]
    %v1910 = vld [vmem:[#allocation11 + $0x3f0] sm:$0xff]
    %v1911 = vld [vmem:[#allocation11 + $0x3f8] sm:$0xff]
    %v2040 = vunpack.c.l.b16 %v1784
    %v2041 = vunpack.c.h.b16 %v1784
    %v2042 = vunpack.c.l.b16 %v1785
    %v2043 = vunpack.c.h.b16 %v1785
    %v2044 = vunpack.c.l.b16 %v1786
    %v2045 = vunpack.c.h.b16 %v1786
    %v2046 = vunpack.c.l.b16 %v1787
    %v2047 = vunpack.c.h.b16 %v1787
    %v2048 = vunpack.c.l.b16 %v1788
    %v2049 = vunpack.c.h.b16 %v1788
    %v2050 = vunpack.c.l.b16 %v1789
    %v2051 = vunpack.c.h.b16 %v1789
    %v2052 = vunpack.c.l.b16 %v1790
    %v2053 = vunpack.c.h.b16 %v1790
    %v2054 = vunpack.c.l.b16 %v1791
    %v2055 = vunpack.c.h.b16 %v1791
    %v2056 = vunpack.c.l.b16 %v1792
    %v2057 = vunpack.c.h.b16 %v1792
    %v2058 = vunpack.c.l.b16 %v1793
    %v2059 = vunpack.c.h.b16 %v1793
    %v2060 = vunpack.c.l.b16 %v1794
    %v2061 = vunpack.c.h.b16 %v1794
    %v2062 = vunpack.c.l.b16 %v1795
    %v2063 = vunpack.c.h.b16 %v1795
    %v2064 = vunpack.c.l.b16 %v1796
    %v2065 = vunpack.c.h.b16 %v1796
    %v2066 = vunpack.c.l.b16 %v1797
    %v2067 = vunpack.c.h.b16 %v1797
    %v2068 = vunpack.c.l.b16 %v1798
    %v2069 = vunpack.c.h.b16 %v1798
    %v2070 = vunpack.c.l.b16 %v1799
    %v2071 = vunpack.c.h.b16 %v1799
    %v2072 = vunpack.c.l.b16 %v1800
    %v2073 = vunpack.c.h.b16 %v1800
    %v2074 = vunpack.c.l.b16 %v1801
    %v2075 = vunpack.c.h.b16 %v1801
    %v2076 = vunpack.c.l.b16 %v1802
    %v2077 = vunpack.c.h.b16 %v1802
    %v2078 = vunpack.c.l.b16 %v1803
    %v2079 = vunpack.c.h.b16 %v1803
    %v2080 = vunpack.c.l.b16 %v1804
    %v2081 = vunpack.c.h.b16 %v1804
    %v2082 = vunpack.c.l.b16 %v1805
    %v2083 = vunpack.c.h.b16 %v1805
    %v2084 = vunpack.c.l.b16 %v1806
    %v2085 = vunpack.c.h.b16 %v1806
    %v2086 = vunpack.c.l.b16 %v1807
    %v2087 = vunpack.c.h.b16 %v1807
    %v2088 = vunpack.c.l.b16 %v1808
    %v2089 = vunpack.c.h.b16 %v1808
    %v2090 = vunpack.c.l.b16 %v1809
    %v2091 = vunpack.c.h.b16 %v1809
    %v2092 = vunpack.c.l.b16 %v1810
    %v2093 = vunpack.c.h.b16 %v1810
    %v2094 = vunpack.c.l.b16 %v1811
    %v2095 = vunpack.c.h.b16 %v1811
    %v2096 = vunpack.c.l.b16 %v1812
    %v2097 = vunpack.c.h.b16 %v1812
    %v2098 = vunpack.c.l.b16 %v1813
    %v2099 = vunpack.c.h.b16 %v1813
    %v2100 = vunpack.c.l.b16 %v1814
    %v2101 = vunpack.c.h.b16 %v1814
    %v2102 = vunpack.c.l.b16 %v1815
    %v2103 = vunpack.c.h.b16 %v1815
    %v2104 = vunpack.c.l.b16 %v1816
    %v2105 = vunpack.c.h.b16 %v1816
    %v2106 = vunpack.c.l.b16 %v1817
    %v2107 = vunpack.c.h.b16 %v1817
    %v2108 = vunpack.c.l.b16 %v1818
    %v2109 = vunpack.c.h.b16 %v1818
    %v2110 = vunpack.c.l.b16 %v1819
    %v2111 = vunpack.c.h.b16 %v1819
    %v2112 = vunpack.c.l.b16 %v1820
    %v2113 = vunpack.c.h.b16 %v1820
    %v2114 = vunpack.c.l.b16 %v1821
    %v2115 = vunpack.c.h.b16 %v1821
    %v2116 = vunpack.c.l.b16 %v1822
    %v2117 = vunpack.c.h.b16 %v1822
    %v2118 = vunpack.c.l.b16 %v1823
    %v2119 = vunpack.c.h.b16 %v1823
    %v2120 = vunpack.c.l.b16 %v1824
    %v2121 = vunpack.c.h.b16 %v1824
    %v2122 = vunpack.c.l.b16 %v1825
    %v2123 = vunpack.c.h.b16 %v1825
    %v2124 = vunpack.c.l.b16 %v1826
    %v2125 = vunpack.c.h.b16 %v1826
    %v2126 = vunpack.c.l.b16 %v1827
    %v2127 = vunpack.c.h.b16 %v1827
    %v2128 = vunpack.c.l.b16 %v1828
    %v2129 = vunpack.c.h.b16 %v1828
    %v2130 = vunpack.c.l.b16 %v1829
    %v2131 = vunpack.c.h.b16 %v1829
    %v2132 = vunpack.c.l.b16 %v1830
    %v2133 = vunpack.c.h.b16 %v1830
    %v2134 = vunpack.c.l.b16 %v1831
    %v2135 = vunpack.c.h.b16 %v1831
    %v2136 = vunpack.c.l.b16 %v1832
    %v2137 = vunpack.c.h.b16 %v1832
    %v2138 = vunpack.c.l.b16 %v1833
    %v2139 = vunpack.c.h.b16 %v1833
    %v2140 = vunpack.c.l.b16 %v1834
    %v2141 = vunpack.c.h.b16 %v1834
    %v2142 = vunpack.c.l.b16 %v1835
    %v2143 = vunpack.c.h.b16 %v1835
    %v2144 = vunpack.c.l.b16 %v1836
    %v2145 = vunpack.c.h.b16 %v1836
    %v2146 = vunpack.c.l.b16 %v1837
    %v2147 = vunpack.c.h.b16 %v1837
    %v2148 = vunpack.c.l.b16 %v1838
    %v2149 = vunpack.c.h.b16 %v1838
    %v2150 = vunpack.c.l.b16 %v1839
    %v2151 = vunpack.c.h.b16 %v1839
    %v2152 = vunpack.c.l.b16 %v1840
    %v2153 = vunpack.c.h.b16 %v1840
    %v2154 = vunpack.c.l.b16 %v1841
    %v2155 = vunpack.c.h.b16 %v1841
    %v2156 = vunpack.c.l.b16 %v1842
    %v2157 = vunpack.c.h.b16 %v1842
    %v2158 = vunpack.c.l.b16 %v1843
    %v2159 = vunpack.c.h.b16 %v1843
    %v2160 = vunpack.c.l.b16 %v1844
    %v2161 = vunpack.c.h.b16 %v1844
    %v2162 = vunpack.c.l.b16 %v1845
    %v2163 = vunpack.c.h.b16 %v1845
    %v2164 = vunpack.c.l.b16 %v1846
    %v2165 = vunpack.c.h.b16 %v1846
    %v2166 = vunpack.c.l.b16 %v1847
    %v2167 = vunpack.c.h.b16 %v1847
    %v2168 = vunpack.c.l.b16 %v1848
    %v2169 = vunpack.c.h.b16 %v1848
    %v2170 = vunpack.c.l.b16 %v1849
    %v2171 = vunpack.c.h.b16 %v1849
    %v2172 = vunpack.c.l.b16 %v1850
    %v2173 = vunpack.c.h.b16 %v1850
    %v2174 = vunpack.c.l.b16 %v1851
    %v2175 = vunpack.c.h.b16 %v1851
    %v2176 = vunpack.c.l.b16 %v1852
    %v2177 = vunpack.c.h.b16 %v1852
    %v2178 = vunpack.c.l.b16 %v1853
    %v2179 = vunpack.c.h.b16 %v1853
    %v2180 = vunpack.c.l.b16 %v1854
    %v2181 = vunpack.c.h.b16 %v1854
    %v2182 = vunpack.c.l.b16 %v1855
    %v2183 = vunpack.c.h.b16 %v1855
    %v2184 = vunpack.c.l.b16 %v1856
    %v2185 = vunpack.c.h.b16 %v1856
    %v2186 = vunpack.c.l.b16 %v1857
    %v2187 = vunpack.c.h.b16 %v1857
    %v2188 = vunpack.c.l.b16 %v1858
    %v2189 = vunpack.c.h.b16 %v1858
    %v2190 = vunpack.c.l.b16 %v1859
    %v2191 = vunpack.c.h.b16 %v1859
    %v2192 = vunpack.c.l.b16 %v1860
    %v2193 = vunpack.c.h.b16 %v1860
    %v2194 = vunpack.c.l.b16 %v1861
    %v2195 = vunpack.c.h.b16 %v1861
    %v2196 = vunpack.c.l.b16 %v1862
    %v2197 = vunpack.c.h.b16 %v1862
    %v2198 = vunpack.c.l.b16 %v1863
    %v2199 = vunpack.c.h.b16 %v1863
    %v2200 = vunpack.c.l.b16 %v1864
    %v2201 = vunpack.c.h.b16 %v1864
    %v2202 = vunpack.c.l.b16 %v1865
    %v2203 = vunpack.c.h.b16 %v1865
    %v2204 = vunpack.c.l.b16 %v1866
    %v2205 = vunpack.c.h.b16 %v1866
    %v2206 = vunpack.c.l.b16 %v1867
    %v2207 = vunpack.c.h.b16 %v1867
    %v2208 = vunpack.c.l.b16 %v1868
    %v2209 = vunpack.c.h.b16 %v1868
    %v2210 = vunpack.c.l.b16 %v1869
    %v2211 = vunpack.c.h.b16 %v1869
    %v2212 = vunpack.c.l.b16 %v1870
    %v2213 = vunpack.c.h.b16 %v1870
    %v2214 = vunpack.c.l.b16 %v1871
    %v2215 = vunpack.c.h.b16 %v1871
    %v2216 = vunpack.c.l.b16 %v1872
    %v2217 = vunpack.c.h.b16 %v1872
    %v2218 = vunpack.c.l.b16 %v1873
    %v2219 = vunpack.c.h.b16 %v1873
    %v2220 = vunpack.c.l.b16 %v1874
    %v2221 = vunpack.c.h.b16 %v1874
    %v2222 = vunpack.c.l.b16 %v1875
    %v2223 = vunpack.c.h.b16 %v1875
    %v2224 = vunpack.c.l.b16 %v1876
    %v2225 = vunpack.c.h.b16 %v1876
    %v2226 = vunpack.c.l.b16 %v1877
    %v2227 = vunpack.c.h.b16 %v1877
    %v2228 = vunpack.c.l.b16 %v1878
    %v2229 = vunpack.c.h.b16 %v1878
    %v2230 = vunpack.c.l.b16 %v1879
    %v2231 = vunpack.c.h.b16 %v1879
    %v2232 = vunpack.c.l.b16 %v1880
    %v2233 = vunpack.c.h.b16 %v1880
    %v2234 = vunpack.c.l.b16 %v1881
    %v2235 = vunpack.c.h.b16 %v1881
    %v2236 = vunpack.c.l.b16 %v1882
    %v2237 = vunpack.c.h.b16 %v1882
    %v2238 = vunpack.c.l.b16 %v1883
    %v2239 = vunpack.c.h.b16 %v1883
    %v2240 = vunpack.c.l.b16 %v1884
    %v2241 = vunpack.c.h.b16 %v1884
    %v2242 = vunpack.c.l.b16 %v1885
    %v2243 = vunpack.c.h.b16 %v1885
    %v2244 = vunpack.c.l.b16 %v1886
    %v2245 = vunpack.c.h.b16 %v1886
    %v2246 = vunpack.c.l.b16 %v1887
    %v2247 = vunpack.c.h.b16 %v1887
    %v2248 = vunpack.c.l.b16 %v1888
    %v2249 = vunpack.c.h.b16 %v1888
    %v2250 = vunpack.c.l.b16 %v1889
    %v2251 = vunpack.c.h.b16 %v1889
    %v2252 = vunpack.c.l.b16 %v1890
    %v2253 = vunpack.c.h.b16 %v1890
    %v2254 = vunpack.c.l.b16 %v1891
    %v2255 = vunpack.c.h.b16 %v1891
    %v2256 = vunpack.c.l.b16 %v1892
    %v2257 = vunpack.c.h.b16 %v1892
    %v2258 = vunpack.c.l.b16 %v1893
    %v2259 = vunpack.c.h.b16 %v1893
    %v2260 = vunpack.c.l.b16 %v1894
    %v2261 = vunpack.c.h.b16 %v1894
    %v2262 = vunpack.c.l.b16 %v1895
    %v2263 = vunpack.c.h.b16 %v1895
    %v2264 = vunpack.c.l.b16 %v1896
    %v2265 = vunpack.c.h.b16 %v1896
    %v2266 = vunpack.c.l.b16 %v1897
    %v2267 = vunpack.c.h.b16 %v1897
    %v2268 = vunpack.c.l.b16 %v1898
    %v2269 = vunpack.c.h.b16 %v1898
    %v2270 = vunpack.c.l.b16 %v1899
    %v2271 = vunpack.c.h.b16 %v1899
    %v2272 = vunpack.c.l.b16 %v1900
    %v2273 = vunpack.c.h.b16 %v1900
    %v2274 = vunpack.c.l.b16 %v1901
    %v2275 = vunpack.c.h.b16 %v1901
    %v2276 = vunpack.c.l.b16 %v1902
    %v2277 = vunpack.c.h.b16 %v1902
    %v2278 = vunpack.c.l.b16 %v1903
    %v2279 = vunpack.c.h.b16 %v1903
    %v2280 = vunpack.c.l.b16 %v1904
    %v2281 = vunpack.c.h.b16 %v1904
    %v2282 = vunpack.c.l.b16 %v1905
    %v2283 = vunpack.c.h.b16 %v1905
    %v2284 = vunpack.c.l.b16 %v1906
    %v2285 = vunpack.c.h.b16 %v1906
    %v2286 = vunpack.c.l.b16 %v1907
    %v2287 = vunpack.c.h.b16 %v1907
    %v2288 = vunpack.c.l.b16 %v1908
    %v2289 = vunpack.c.h.b16 %v1908
    %v2290 = vunpack.c.l.b16 %v1909
    %v2291 = vunpack.c.h.b16 %v1909
    %v2292 = vunpack.c.l.b16 %v1910
    %v2293 = vunpack.c.h.b16 %v1910
    %v2294 = vunpack.c.l.b16 %v1911
    %v2295 = vunpack.c.h.b16 %v1911
    %v2296 = vpack.c.b16 %v2048, %v2040
    %v2297 = vpack.c.b16 %v2049, %v2041
    %v2298 = vpack.c.b16 %v2050, %v2042
    %v2299 = vpack.c.b16 %v2051, %v2043
    %v2300 = vpack.c.b16 %v2052, %v2044
    %v2301 = vpack.c.b16 %v2053, %v2045
    %v2302 = vpack.c.b16 %v2054, %v2046
    %v2303 = vpack.c.b16 %v2055, %v2047
    %v2304 = vpack.c.b16 %v2064, %v2056
    %v2305 = vpack.c.b16 %v2065, %v2057
    %v2306 = vpack.c.b16 %v2066, %v2058
    %v2307 = vpack.c.b16 %v2067, %v2059
    %v2308 = vpack.c.b16 %v2068, %v2060
    %v2309 = vpack.c.b16 %v2069, %v2061
    %v2310 = vpack.c.b16 %v2070, %v2062
    %v2311 = vpack.c.b16 %v2071, %v2063
    %v2312 = vpack.c.b16 %v2080, %v2072
    %v2313 = vpack.c.b16 %v2081, %v2073
    %v2314 = vpack.c.b16 %v2082, %v2074
    %v2315 = vpack.c.b16 %v2083, %v2075
    %v2316 = vpack.c.b16 %v2084, %v2076
    %v2317 = vpack.c.b16 %v2085, %v2077
    %v2318 = vpack.c.b16 %v2086, %v2078
    %v2319 = vpack.c.b16 %v2087, %v2079
    %v2320 = vpack.c.b16 %v2096, %v2088
    %v2321 = vpack.c.b16 %v2097, %v2089
    %v2322 = vpack.c.b16 %v2098, %v2090
    %v2323 = vpack.c.b16 %v2099, %v2091
    %v2324 = vpack.c.b16 %v2100, %v2092
    %v2325 = vpack.c.b16 %v2101, %v2093
    %v2326 = vpack.c.b16 %v2102, %v2094
    %v2327 = vpack.c.b16 %v2103, %v2095
    %v2328 = vpack.c.b16 %v2112, %v2104
    %v2329 = vpack.c.b16 %v2113, %v2105
    %v2330 = vpack.c.b16 %v2114, %v2106
    %v2331 = vpack.c.b16 %v2115, %v2107
    %v2332 = vpack.c.b16 %v2116, %v2108
    %v2333 = vpack.c.b16 %v2117, %v2109
    %v2334 = vpack.c.b16 %v2118, %v2110
    %v2335 = vpack.c.b16 %v2119, %v2111
    %v2336 = vpack.c.b16 %v2128, %v2120
    %v2337 = vpack.c.b16 %v2129, %v2121
    %v2338 = vpack.c.b16 %v2130, %v2122
    %v2339 = vpack.c.b16 %v2131, %v2123
    %v2340 = vpack.c.b16 %v2132, %v2124
    %v2341 = vpack.c.b16 %v2133, %v2125
    %v2342 = vpack.c.b16 %v2134, %v2126
    %v2343 = vpack.c.b16 %v2135, %v2127
    %v2344 = vpack.c.b16 %v2144, %v2136
    %v2345 = vpack.c.b16 %v2145, %v2137
    %v2346 = vpack.c.b16 %v2146, %v2138
    %v2347 = vpack.c.b16 %v2147, %v2139
    %v2348 = vpack.c.b16 %v2148, %v2140
    %v2349 = vpack.c.b16 %v2149, %v2141
    %v2350 = vpack.c.b16 %v2150, %v2142
    %v2351 = vpack.c.b16 %v2151, %v2143
    %v2352 = vpack.c.b16 %v2160, %v2152
    %v2353 = vpack.c.b16 %v2161, %v2153
    %v2354 = vpack.c.b16 %v2162, %v2154
    %v2355 = vpack.c.b16 %v2163, %v2155
    %v2356 = vpack.c.b16 %v2164, %v2156
    %v2357 = vpack.c.b16 %v2165, %v2157
    %v2358 = vpack.c.b16 %v2166, %v2158
    %v2359 = vpack.c.b16 %v2167, %v2159
    %v2360 = vpack.c.b16 %v2176, %v2168
    %v2361 = vpack.c.b16 %v2177, %v2169
    %v2362 = vpack.c.b16 %v2178, %v2170
    %v2363 = vpack.c.b16 %v2179, %v2171
    %v2364 = vpack.c.b16 %v2180, %v2172
    %v2365 = vpack.c.b16 %v2181, %v2173
    %v2366 = vpack.c.b16 %v2182, %v2174
    %v2367 = vpack.c.b16 %v2183, %v2175
    %v2368 = vpack.c.b16 %v2192, %v2184
    %v2369 = vpack.c.b16 %v2193, %v2185
    %v2370 = vpack.c.b16 %v2194, %v2186
    %v2371 = vpack.c.b16 %v2195, %v2187
    %v2372 = vpack.c.b16 %v2196, %v2188
    %v2373 = vpack.c.b16 %v2197, %v2189
    %v2374 = vpack.c.b16 %v2198, %v2190
    %v2375 = vpack.c.b16 %v2199, %v2191
    %v2376 = vpack.c.b16 %v2208, %v2200
    %v2377 = vpack.c.b16 %v2209, %v2201
    %v2378 = vpack.c.b16 %v2210, %v2202
    %v2379 = vpack.c.b16 %v2211, %v2203
    %v2380 = vpack.c.b16 %v2212, %v2204
    %v2381 = vpack.c.b16 %v2213, %v2205
    %v2382 = vpack.c.b16 %v2214, %v2206
    %v2383 = vpack.c.b16 %v2215, %v2207
    %v2384 = vpack.c.b16 %v2224, %v2216
    %v2385 = vpack.c.b16 %v2225, %v2217
    %v2386 = vpack.c.b16 %v2226, %v2218
    %v2387 = vpack.c.b16 %v2227, %v2219
    %v2388 = vpack.c.b16 %v2228, %v2220
    %v2389 = vpack.c.b16 %v2229, %v2221
    %v2390 = vpack.c.b16 %v2230, %v2222
    %v2391 = vpack.c.b16 %v2231, %v2223
    %v2392 = vpack.c.b16 %v2240, %v2232
    %v2393 = vpack.c.b16 %v2241, %v2233
    %v2394 = vpack.c.b16 %v2242, %v2234
    %v2395 = vpack.c.b16 %v2243, %v2235
    %v2396 = vpack.c.b16 %v2244, %v2236
    %v2397 = vpack.c.b16 %v2245, %v2237
    %v2398 = vpack.c.b16 %v2246, %v2238
    %v2399 = vpack.c.b16 %v2247, %v2239
    %v2400 = vpack.c.b16 %v2256, %v2248
    %v2401 = vpack.c.b16 %v2257, %v2249
    %v2402 = vpack.c.b16 %v2258, %v2250
    %v2403 = vpack.c.b16 %v2259, %v2251
    %v2404 = vpack.c.b16 %v2260, %v2252
    %v2405 = vpack.c.b16 %v2261, %v2253
    %v2406 = vpack.c.b16 %v2262, %v2254
    %v2407 = vpack.c.b16 %v2263, %v2255
    %v2408 = vpack.c.b16 %v2272, %v2264
    %v2409 = vpack.c.b16 %v2273, %v2265
    %v2410 = vpack.c.b16 %v2274, %v2266
    %v2411 = vpack.c.b16 %v2275, %v2267
    %v2412 = vpack.c.b16 %v2276, %v2268
    %v2413 = vpack.c.b16 %v2277, %v2269
    %v2414 = vpack.c.b16 %v2278, %v2270
    %v2415 = vpack.c.b16 %v2279, %v2271
    %v2416 = vpack.c.b16 %v2288, %v2280
    %v2417 = vpack.c.b16 %v2289, %v2281
    %v2418 = vpack.c.b16 %v2290, %v2282
    %v2419 = vpack.c.b16 %v2291, %v2283
    %v2420 = vpack.c.b16 %v2292, %v2284
    %v2421 = vpack.c.b16 %v2293, %v2285
    %v2422 = vpack.c.b16 %v2294, %v2286
    %v2423 = vpack.c.b16 %v2295, %v2287
    %2552 = vmatprep.subr.bf16.mxu0 %v2353
    %2553 = vmatpush1.bf16.msra.mxu0 %v2352
    %2554 = vmatprep.subr.bf16.mxu0 %v2345
    %2555 = vmatpush1.bf16.msra.mxu0 %v2344
    %2556 = vmatprep.subr.bf16.mxu0 %v2337
    %2557 = vmatpush1.bf16.msra.mxu0 %v2336
    %2558 = vmatprep.subr.bf16.mxu0 %v2329
    %2559 = vmatpush1.bf16.msra.mxu0 %v2328
    %2560 = vmatprep.subr.bf16.mxu0 %v2321
    %2561 = vmatpush1.bf16.msra.mxu0 %v2320
    %2562 = vmatprep.subr.bf16.mxu0 %v2313
    %2563 = vmatpush1.bf16.msra.mxu0 %v2312
    %2564 = vmatprep.subr.bf16.mxu0 %v2305
    %2565 = vmatpush1.bf16.msra.mxu0 %v2304
    %2566 = vmatprep.subr.bf16.mxu0 %v2297
    %2567 = vmatpush1.bf16.msra.mxu0 %v2296
    %2568 = vmatprep.subr.bf16.mxu0 %v2417
    %2569 = vmatpush2.bf16.msra.mxu0 %v2416
    %2570 = vmatprep.subr.bf16.mxu0 %v2409
    %2571 = vmatpush2.bf16.msra.mxu0 %v2408
    %2572 = vmatprep.subr.bf16.mxu0 %v2401
    %2573 = vmatpush2.bf16.msra.mxu0 %v2400
    %2574 = vmatprep.subr.bf16.mxu0 %v2393
    %2575 = vmatpush2.bf16.msra.mxu0 %v2392
    %2576 = vmatprep.subr.bf16.mxu0 %v2385
    %2577 = vmatpush2.bf16.msra.mxu0 %v2384
    %2578 = vmatprep.subr.bf16.mxu0 %v2377
    %2579 = vmatpush2.bf16.msra.mxu0 %v2376
    %2580 = vmatprep.subr.bf16.mxu0 %v2369
    %2581 = vmatpush2.bf16.msra.mxu0 %v2368
    %2582 = vmatprep.subr.bf16.mxu0 %v2361
    %2583 = vmatpush2.bf16.msra.mxu0 %v2360
    %2584 = vmatprep.mubr.bf16.mxu0 %v1783
    %2585 = vmatmul.mubr.bf16.gmra.mxu0 %v1782
    %v2586 = vpop.f32.mrf.mxu0
    %v2587 = vadd.f32 0.0, %v2586
    %v2588 = vpop.f32.mrf.mxu0
    %v2589 = vadd.f32 0.0, %v2588
    %v2590 = vpop.f32.mrf.mxu0
    %v2591 = vpop.f32.mrf.mxu0
    %2592 = vdwg.mxu0
    %2593 = vmatprep.subr.bf16.mxu0 %v2355
    %2594 = vmatpush1.bf16.msra.mxu0 %v2354
    %2595 = vmatprep.subr.bf16.mxu0 %v2347
    %2596 = vmatpush1.bf16.msra.mxu0 %v2346
    %2597 = vmatprep.subr.bf16.mxu0 %v2339
    %2598 = vmatpush1.bf16.msra.mxu0 %v2338
    %2599 = vmatprep.subr.bf16.mxu0 %v2331
    %2600 = vmatpush1.bf16.msra.mxu0 %v2330
    %2601 = vmatprep.subr.bf16.mxu0 %v2323
    %2602 = vmatpush1.bf16.msra.mxu0 %v2322
    %2603 = vmatprep.subr.bf16.mxu0 %v2315
    %2604 = vmatpush1.bf16.msra.mxu0 %v2314
    %2605 = vmatprep.subr.bf16.mxu0 %v2307
    %2606 = vmatpush1.bf16.msra.mxu0 %v2306
    %2607 = vmatprep.subr.bf16.mxu0 %v2299
    %2608 = vmatpush1.bf16.msra.mxu0 %v2298
    %2609 = vmatprep.subr.bf16.mxu0 %v2419
    %2610 = vmatpush2.bf16.msra.mxu0 %v2418
    %2611 = vmatprep.subr.bf16.mxu0 %v2411
    %2612 = vmatpush2.bf16.msra.mxu0 %v2410
    %2613 = vmatprep.subr.bf16.mxu0 %v2403
    %2614 = vmatpush2.bf16.msra.mxu0 %v2402
    %2615 = vmatprep.subr.bf16.mxu0 %v2395
    %2616 = vmatpush2.bf16.msra.mxu0 %v2394
    %2617 = vmatprep.subr.bf16.mxu0 %v2387
    %2618 = vmatpush2.bf16.msra.mxu0 %v2386
    %2619 = vmatprep.subr.bf16.mxu0 %v2379
    %2620 = vmatpush2.bf16.msra.mxu0 %v2378
    %2621 = vmatprep.subr.bf16.mxu0 %v2371
    %2622 = vmatpush2.bf16.msra.mxu0 %v2370
    %2623 = vmatprep.subr.bf16.mxu0 %v2363
    %2624 = vmatpush2.bf16.msra.mxu0 %v2362
    %2625 = vmatprep.mubr.bf16.mxu0 %v1783
    %2626 = vmatmul.mubr.bf16.gmra.mxu0 %v1782
    %v2627 = vpop.f32.mrf.mxu0
    %v2628 = vadd.f32 0.0, %v2627
    %v2629 = vpop.f32.mrf.mxu0
    %v2630 = vadd.f32 0.0, %v2629
    %v2631 = vpop.f32.mrf.mxu0
    %v2632 = vpop.f32.mrf.mxu0
    %2633 = vdwg.mxu0
    %2634 = vmatprep.subr.bf16.mxu0 %v2357
    %2635 = vmatpush1.bf16.msra.mxu0 %v2356
    %2636 = vmatprep.subr.bf16.mxu0 %v2349
    %2637 = vmatpush1.bf16.msra.mxu0 %v2348
    %2638 = vmatprep.subr.bf16.mxu0 %v2341
    %2639 = vmatpush1.bf16.msra.mxu0 %v2340
    %2640 = vmatprep.subr.bf16.mxu0 %v2333
    %2641 = vmatpush1.bf16.msra.mxu0 %v2332
    %2642 = vmatprep.subr.bf16.mxu0 %v2325
    %2643 = vmatpush1.bf16.msra.mxu0 %v2324
    %2644 = vmatprep.subr.bf16.mxu0 %v2317
    %2645 = vmatpush1.bf16.msra.mxu0 %v2316
    %2646 = vmatprep.subr.bf16.mxu0 %v2309
    %2647 = vmatpush1.bf16.msra.mxu0 %v2308
    %2648 = vmatprep.subr.bf16.mxu0 %v2301
    %2649 = vmatpush1.bf16.msra.mxu0 %v2300
    %2650 = vmatprep.subr.bf16.mxu0 %v2421
    %2651 = vmatpush2.bf16.msra.mxu0 %v2420
    %2652 = vmatprep.subr.bf16.mxu0 %v2413
    %2653 = vmatpush2.bf16.msra.mxu0 %v2412
    %2654 = vmatprep.subr.bf16.mxu0 %v2405
    %2655 = vmatpush2.bf16.msra.mxu0 %v2404
    %2656 = vmatprep.subr.bf16.mxu0 %v2397
    %2657 = vmatpush2.bf16.msra.mxu0 %v2396
    %2658 = vmatprep.subr.bf16.mxu0 %v2389
    %2659 = vmatpush2.bf16.msra.mxu0 %v2388
    %2660 = vmatprep.subr.bf16.mxu0 %v2381
    %2661 = vmatpush2.bf16.msra.mxu0 %v2380
    %2662 = vmatprep.subr.bf16.mxu0 %v2373
    %2663 = vmatpush2.bf16.msra.mxu0 %v2372
    %2664 = vmatprep.subr.bf16.mxu0 %v2365
    %2665 = vmatpush2.bf16.msra.mxu0 %v2364
    %2666 = vmatprep.mubr.bf16.mxu0 %v1783
    %2667 = vmatmul.mubr.bf16.gmra.mxu0 %v1782
    %v2668 = vpop.f32.mrf.mxu0
    %v2669 = vadd.f32 0.0, %v2668
    %v2670 = vpop.f32.mrf.mxu0
    %v2671 = vadd.f32 0.0, %v2670
    %v2672 = vpop.f32.mrf.mxu0
    %v2673 = vpop.f32.mrf.mxu0
    %2674 = vdwg.mxu0
    %2675 = vmatprep.subr.bf16.mxu0 %v2359
    %2676 = vmatpush1.bf16.msra.mxu0 %v2358
    %2677 = vmatprep.subr.bf16.mxu0 %v2351
    %2678 = vmatpush1.bf16.msra.mxu0 %v2350
    %2679 = vmatprep.subr.bf16.mxu0 %v2343
    %2680 = vmatpush1.bf16.msra.mxu0 %v2342
    %2681 = vmatprep.subr.bf16.mxu0 %v2335
    %2682 = vmatpush1.bf16.msra.mxu0 %v2334
    %2683 = vmatprep.subr.bf16.mxu0 %v2327
    %2684 = vmatpush1.bf16.msra.mxu0 %v2326
    %2685 = vmatprep.subr.bf16.mxu0 %v2319
    %2686 = vmatpush1.bf16.msra.mxu0 %v2318
    %2687 = vmatprep.subr.bf16.mxu0 %v2311
    %2688 = vmatpush1.bf16.msra.mxu0 %v2310
    %2689 = vmatprep.subr.bf16.mxu0 %v2303
    %2690 = vmatpush1.bf16.msra.mxu0 %v2302
    %2691 = vmatprep.subr.bf16.mxu0 %v2423
    %2692 = vmatpush2.bf16.msra.mxu0 %v2422
    %2693 = vmatprep.subr.bf16.mxu0 %v2415
    %2694 = vmatpush2.bf16.msra.mxu0 %v2414
    %2695 = vmatprep.subr.bf16.mxu0 %v2407
    %2696 = vmatpush2.bf16.msra.mxu0 %v2406
    %2697 = vmatprep.subr.bf16.mxu0 %v2399
    %2698 = vmatpush2.bf16.msra.mxu0 %v2398
    %2699 = vmatprep.subr.bf16.mxu0 %v2391
    %2700 = vmatpush2.bf16.msra.mxu0 %v2390
    %2701 = vmatprep.subr.bf16.mxu0 %v2383
    %2702 = vmatpush2.bf16.msra.mxu0 %v2382
    %2703 = vmatprep.subr.bf16.mxu0 %v2375
    %2704 = vmatpush2.bf16.msra.mxu0 %v2374
    %2705 = vmatprep.subr.bf16.mxu0 %v2367
    %2706 = vmatpush2.bf16.msra.mxu0 %v2366
    %2707 = vmatprep.mubr.bf16.mxu0 %v1783
    %2708 = vmatmul.mubr.bf16.gmra.mxu0 %v1782
    %v2709 = vpop.f32.mrf.mxu0
    %v2710 = vadd.f32 0.0, %v2709
    %v2711 = vpop.f32.mrf.mxu0
    %v2712 = vadd.f32 0.0, %v2711
    %v2713 = vpop.f32.mrf.mxu0
    %v2714 = vpop.f32.mrf.mxu0
    %2715 = vdwg.mxu0
    %s2716 = scalar_lea.vmem [#allocation3], 1
    %v2717 = vld [vmem:[%s2716] ss:$8 sm:$0xf]
    %v2722 = vcombine.low %v2587, %v2589
    %v2723 = vcombine.low %v2628, %v2630
    %v2725 = vunpack.c.l.s4 1966171168
    %v2726 = vunpack.c.0.s8 %v2725
    %v2727 = vlaneseq
    %v2728 = vshrl.u32 %v2727, 7
    %v2729 = vsub.s32 %v2726, %v2728
    %v2730 = vrot.slane %v2722, %v2729
    %v2732 = vunpack.c.l.s4 1966171168
    %v2733 = vunpack.c.0.s8 %v2732
    %v2734 = vlaneseq
    %v2735 = vshrl.u32 %v2734, 7
    %v2736 = vsub.s32 %v2733, %v2735
    %v2737 = vrot.slane %v2723, %v2736
    %v2738 = vcombine.low %v2730, %v2737
    %v2740 = vunpack.c.l.s4 1966171168
    %v2741 = vunpack.c.0.s8 %v2740
    %v2742 = vlaneseq
    %v2743 = vshrl.u32 %v2742, 7
    %v2744 = vsub.s32 %v2741, %v2743
    %v2745 = vrot.slane %v2738, %v2744
    %v2747 = vadd.f32 %v2717, %v2745
    %s2748 = scalar_lea.vmem [#allocation3], 38
    %v2749 = vld [vmem:[%s2748] ss:$8 sm:$0xf]
    %v2754 = vcombine.low %v2669, %v2671
    %v2755 = vcombine.low %v2710, %v2712
    %v2757 = vunpack.c.l.s4 1966171168
    %v2758 = vunpack.c.0.s8 %v2757
    %v2759 = vlaneseq
    %v2760 = vshrl.u32 %v2759, 7
    %v2761 = vsub.s32 %v2758, %v2760
    %v2762 = vrot.slane %v2754, %v2761
    %v2764 = vunpack.c.l.s4 1966171168
    %v2765 = vunpack.c.0.s8 %v2764
    %v2766 = vlaneseq
    %v2767 = vshrl.u32 %v2766, 7
    %v2768 = vsub.s32 %v2765, %v2767
    %v2769 = vrot.slane %v2755, %v2768
    %v2770 = vcombine.low %v2762, %v2769
    %v2772 = vunpack.c.l.s4 1966171168
    %v2773 = vunpack.c.0.s8 %v2772
    %v2774 = vlaneseq
    %v2775 = vshrl.u32 %v2774, 7
    %v2776 = vsub.s32 %v2773, %v2775
    %v2777 = vrot.slane %v2770, %v2776
    %v2779 = vadd.f32 %v2749, %v2777
    %v2780 = vxor.u32 %v2747, 2147483648
    %v2781 = vmul.f32 %v2780, 1.442695
    %v2782 = vpow.pop %v2781
    %v2783 = vadd.f32 %v2782, 1.0
    %v2784 = vrcp.pop %v2783
    %v2785 = vmul.f32 1.0, %v2784
    %v2787 = vrot.slane %v2747, 1
    %v2789 = vxor.u32 %v2787, 2147483648
    %v2790 = vmul.f32 %v2789, 1.442695
    %v2791 = vpow.pop %v2790
    %v2792 = vadd.f32 %v2791, 1.0
    %v2793 = vrcp.pop %v2792
    %v2794 = vmul.f32 1.0, %v2793
    %v2795 = vrot.slane %v2747, 2
    %v2797 = vtanh.pop %v2795
    %v2798 = vrot.slane %v2747, 3
    %v2800 = vxor.u32 %v2798, 2147483648
    %v2801 = vmul.f32 %v2800, 1.442695
    %v2802 = vpow.pop %v2801
    %v2803 = vadd.f32 %v2802, 1.0
    %v2804 = vrcp.pop %v2803
    %v2805 = vmul.f32 1.0, %v2804
    %v2806 = vmul.f32 %v2794, %v1746
    %v2807 = vmul.f32 %v2785, %v2797
    %v2808 = vadd.f32 %v2806, %v2807
    %v2809 = vtanh.pop %v2808
    %v2810 = vmul.f32 %v2805, %v2809
    %v2811 = vxor.u32 %v2779, 2147483648
    %v2812 = vmul.f32 %v2811, 1.442695
    %v2813 = vpow.pop %v2812
    %v2814 = vadd.f32 %v2813, 1.0
    %v2815 = vrcp.pop %v2814
    %v2816 = vmul.f32 1.0, %v2815
    %v2818 = vrot.slane %v2779, 1
    %v2820 = vxor.u32 %v2818, 2147483648
    %v2821 = vmul.f32 %v2820, 1.442695
    %v2822 = vpow.pop %v2821
    %v2823 = vadd.f32 %v2822, 1.0
    %v2824 = vrcp.pop %v2823
    %v2825 = vmul.f32 1.0, %v2824
    %v2826 = vrot.slane %v2779, 2
    %v2828 = vtanh.pop %v2826
    %v2829 = vrot.slane %v2779, 3
    %v2831 = vxor.u32 %v2829, 2147483648
    %v2832 = vmul.f32 %v2831, 1.442695
    %v2833 = vpow.pop %v2832
    %v2834 = vadd.f32 %v2833, 1.0
    %v2835 = vrcp.pop %v2834
    %v2836 = vmul.f32 1.0, %v2835
    %v2837 = vmul.f32 %v2825, %v1777
    %v2838 = vmul.f32 %v2816, %v2828
    %v2839 = vadd.f32 %v2837, %v2838
    %v2840 = vtanh.pop %v2839
    %v2841 = vmul.f32 %v2836, %v2840
    %2842 = vst [vmem:[#allocation14 + $0x1] sm:$0x1] %v2810
    %2843 = vst [vmem:[#allocation14 + $0xe] sm:$0x1] %v2841
    %v2844 = vpack.c.bf16 %v2810, %v2810
    %v2845 = vpack.c.bf16 %v2841, %v2841
    %v2846 = vld [vmem:[#allocation11] sm:$0xff]
    %v2847 = vld [vmem:[#allocation11 + $0x8] sm:$0xff]
    %v2848 = vld [vmem:[#allocation11 + $0x10] sm:$0xff]
    %v2849 = vld [vmem:[#allocation11 + $0x18] sm:$0xff]
    %v2850 = vld [vmem:[#allocation11 + $0x20] sm:$0xff]
    %v2851 = vld [vmem:[#allocation11 + $0x28] sm:$0xff]
    %v2852 = vld [vmem:[#allocation11 + $0x30] sm:$0xff]
    %v2853 = vld [vmem:[#allocation11 + $0x38] sm:$0xff]
    %v2854 = vld [vmem:[#allocation11 + $0x40] sm:$0xff]
    %v2855 = vld [vmem:[#allocation11 + $0x48] sm:$0xff]
    %v2856 = vld [vmem:[#allocation11 + $0x50] sm:$0xff]
    %v2857 = vld [vmem:[#allocation11 + $0x58] sm:$0xff]
    %v2858 = vld [vmem:[#allocation11 + $0x60] sm:$0xff]
    %v2859 = vld [vmem:[#allocation11 + $0x68] sm:$0xff]
    %v2860 = vld [vmem:[#allocation11 + $0x70] sm:$0xff]
    %v2861 = vld [vmem:[#allocation11 + $0x78] sm:$0xff]
    %v2862 = vld [vmem:[#allocation11 + $0x80] sm:$0xff]
    %v2863 = vld [vmem:[#allocation11 + $0x88] sm:$0xff]
    %v2864 = vld [vmem:[#allocation11 + $0x90] sm:$0xff]
    %v2865 = vld [vmem:[#allocation11 + $0x98] sm:$0xff]
    %v2866 = vld [vmem:[#allocation11 + $0xa0] sm:$0xff]
    %v2867 = vld [vmem:[#allocation11 + $0xa8] sm:$0xff]
    %v2868 = vld [vmem:[#allocation11 + $0xb0] sm:$0xff]
    %v2869 = vld [vmem:[#allocation11 + $0xb8] sm:$0xff]
    %v2870 = vld [vmem:[#allocation11 + $0xc0] sm:$0xff]
    %v2871 = vld [vmem:[#allocation11 + $0xc8] sm:$0xff]
    %v2872 = vld [vmem:[#allocation11 + $0xd0] sm:$0xff]
    %v2873 = vld [vmem:[#allocation11 + $0xd8] sm:$0xff]
    %v2874 = vld [vmem:[#allocation11 + $0xe0] sm:$0xff]
    %v2875 = vld [vmem:[#allocation11 + $0xe8] sm:$0xff]
    %v2876 = vld [vmem:[#allocation11 + $0xf0] sm:$0xff]
    %v2877 = vld [vmem:[#allocation11 + $0xf8] sm:$0xff]
    %v2878 = vld [vmem:[#allocation11 + $0x100] sm:$0xff]
    %v2879 = vld [vmem:[#allocation11 + $0x108] sm:$0xff]
    %v2880 = vld [vmem:[#allocation11 + $0x110] sm:$0xff]
    %v2881 = vld [vmem:[#allocation11 + $0x118] sm:$0xff]
    %v2882 = vld [vmem:[#allocation11 + $0x120] sm:$0xff]
    %v2883 = vld [vmem:[#allocation11 + $0x128] sm:$0xff]
    %v2884 = vld [vmem:[#allocation11 + $0x130] sm:$0xff]
    %v2885 = vld [vmem:[#allocation11 + $0x138] sm:$0xff]
    %v2886 = vld [vmem:[#allocation11 + $0x140] sm:$0xff]
    %v2887 = vld [vmem:[#allocation11 + $0x148] sm:$0xff]
    %v2888 = vld [vmem:[#allocation11 + $0x150] sm:$0xff]
    %v2889 = vld [vmem:[#allocation11 + $0x158] sm:$0xff]
    %v2890 = vld [vmem:[#allocation11 + $0x160] sm:$0xff]
    %v2891 = vld [vmem:[#allocation11 + $0x168] sm:$0xff]
    %v2892 = vld [vmem:[#allocation11 + $0x170] sm:$0xff]
    %v2893 = vld [vmem:[#allocation11 + $0x178] sm:$0xff]
    %v2894 = vld [vmem:[#allocation11 + $0x180] sm:$0xff]
    %v2895 = vld [vmem:[#allocation11 + $0x188] sm:$0xff]
    %v2896 = vld [vmem:[#allocation11 + $0x190] sm:$0xff]
    %v2897 = vld [vmem:[#allocation11 + $0x198] sm:$0xff]
    %v2898 = vld [vmem:[#allocation11 + $0x1a0] sm:$0xff]
    %v2899 = vld [vmem:[#allocation11 + $0x1a8] sm:$0xff]
    %v2900 = vld [vmem:[#allocation11 + $0x1b0] sm:$0xff]
    %v2901 = vld [vmem:[#allocation11 + $0x1b8] sm:$0xff]
    %v2902 = vld [vmem:[#allocation11 + $0x1c0] sm:$0xff]
    %v2903 = vld [vmem:[#allocation11 + $0x1c8] sm:$0xff]
    %v2904 = vld [vmem:[#allocation11 + $0x1d0] sm:$0xff]
    %v2905 = vld [vmem:[#allocation11 + $0x1d8] sm:$0xff]
    %v2906 = vld [vmem:[#allocation11 + $0x1e0] sm:$0xff]
    %v2907 = vld [vmem:[#allocation11 + $0x1e8] sm:$0xff]
    %v2908 = vld [vmem:[#allocation11 + $0x1f0] sm:$0xff]
    %v2909 = vld [vmem:[#allocation11 + $0x1f8] sm:$0xff]
    %v2910 = vld [vmem:[#allocation11 + $0x200] sm:$0xff]
    %v2911 = vld [vmem:[#allocation11 + $0x208] sm:$0xff]
    %v2912 = vld [vmem:[#allocation11 + $0x210] sm:$0xff]
    %v2913 = vld [vmem:[#allocation11 + $0x218] sm:$0xff]
    %v2914 = vld [vmem:[#allocation11 + $0x220] sm:$0xff]
    %v2915 = vld [vmem:[#allocation11 + $0x228] sm:$0xff]
    %v2916 = vld [vmem:[#allocation11 + $0x230] sm:$0xff]
    %v2917 = vld [vmem:[#allocation11 + $0x238] sm:$0xff]
    %v2918 = vld [vmem:[#allocation11 + $0x240] sm:$0xff]
    %v2919 = vld [vmem:[#allocation11 + $0x248] sm:$0xff]
    %v2920 = vld [vmem:[#allocation11 + $0x250] sm:$0xff]
    %v2921 = vld [vmem:[#allocation11 + $0x258] sm:$0xff]
    %v2922 = vld [vmem:[#allocation11 + $0x260] sm:$0xff]
    %v2923 = vld [vmem:[#allocation11 + $0x268] sm:$0xff]
    %v2924 = vld [vmem:[#allocation11 + $0x270] sm:$0xff]
    %v2925 = vld [vmem:[#allocation11 + $0x278] sm:$0xff]
    %v2926 = vld [vmem:[#allocation11 + $0x280] sm:$0xff]
    %v2927 = vld [vmem:[#allocation11 + $0x288] sm:$0xff]
    %v2928 = vld [vmem:[#allocation11 + $0x290] sm:$0xff]
    %v2929 = vld [vmem:[#allocation11 + $0x298] sm:$0xff]
    %v2930 = vld [vmem:[#allocation11 + $0x2a0] sm:$0xff]
    %v2931 = vld [vmem:[#allocation11 + $0x2a8] sm:$0xff]
    %v2932 = vld [vmem:[#allocation11 + $0x2b0] sm:$0xff]
    %v2933 = vld [vmem:[#allocation11 + $0x2b8] sm:$0xff]
    %v2934 = vld [vmem:[#allocation11 + $0x2c0] sm:$0xff]
    %v2935 = vld [vmem:[#allocation11 + $0x2c8] sm:$0xff]
    %v2936 = vld [vmem:[#allocation11 + $0x2d0] sm:$0xff]
    %v2937 = vld [vmem:[#allocation11 + $0x2d8] sm:$0xff]
    %v2938 = vld [vmem:[#allocation11 + $0x2e0] sm:$0xff]
    %v2939 = vld [vmem:[#allocation11 + $0x2e8] sm:$0xff]
    %v2940 = vld [vmem:[#allocation11 + $0x2f0] sm:$0xff]
    %v2941 = vld [vmem:[#allocation11 + $0x2f8] sm:$0xff]
    %v2942 = vld [vmem:[#allocation11 + $0x300] sm:$0xff]
    %v2943 = vld [vmem:[#allocation11 + $0x308] sm:$0xff]
    %v2944 = vld [vmem:[#allocation11 + $0x310] sm:$0xff]
    %v2945 = vld [vmem:[#allocation11 + $0x318] sm:$0xff]
    %v2946 = vld [vmem:[#allocation11 + $0x320] sm:$0xff]
    %v2947 = vld [vmem:[#allocation11 + $0x328] sm:$0xff]
    %v2948 = vld [vmem:[#allocation11 + $0x330] sm:$0xff]
    %v2949 = vld [vmem:[#allocation11 + $0x338] sm:$0xff]
    %v2950 = vld [vmem:[#allocation11 + $0x340] sm:$0xff]
    %v2951 = vld [vmem:[#allocation11 + $0x348] sm:$0xff]
    %v2952 = vld [vmem:[#allocation11 + $0x350] sm:$0xff]
    %v2953 = vld [vmem:[#allocation11 + $0x358] sm:$0xff]
    %v2954 = vld [vmem:[#allocation11 + $0x360] sm:$0xff]
    %v2955 = vld [vmem:[#allocation11 + $0x368] sm:$0xff]
    %v2956 = vld [vmem:[#allocation11 + $0x370] sm:$0xff]
    %v2957 = vld [vmem:[#allocation11 + $0x378] sm:$0xff]
    %v2958 = vld [vmem:[#allocation11 + $0x380] sm:$0xff]
    %v2959 = vld [vmem:[#allocation11 + $0x388] sm:$0xff]
    %v2960 = vld [vmem:[#allocation11 + $0x390] sm:$0xff]
    %v2961 = vld [vmem:[#allocation11 + $0x398] sm:$0xff]
    %v2962 = vld [vmem:[#allocation11 + $0x3a0] sm:$0xff]
    %v2963 = vld [vmem:[#allocation11 + $0x3a8] sm:$0xff]
    %v2964 = vld [vmem:[#allocation11 + $0x3b0] sm:$0xff]
    %v2965 = vld [vmem:[#allocation11 + $0x3b8] sm:$0xff]
    %v2966 = vld [vmem:[#allocation11 + $0x3c0] sm:$0xff]
    %v2967 = vld [vmem:[#allocation11 + $0x3c8] sm:$0xff]
    %v2968 = vld [vmem:[#allocation11 + $0x3d0] sm:$0xff]
    %v2969 = vld [vmem:[#allocation11 + $0x3d8] sm:$0xff]
    %v2970 = vld [vmem:[#allocation11 + $0x3e0] sm:$0xff]
    %v2971 = vld [vmem:[#allocation11 + $0x3e8] sm:$0xff]
    %v2972 = vld [vmem:[#allocation11 + $0x3f0] sm:$0xff]
    %v2973 = vld [vmem:[#allocation11 + $0x3f8] sm:$0xff]
    %v3102 = vunpack.c.l.b16 %v2846
    %v3103 = vunpack.c.h.b16 %v2846
    %v3104 = vunpack.c.l.b16 %v2847
    %v3105 = vunpack.c.h.b16 %v2847
    %v3106 = vunpack.c.l.b16 %v2848
    %v3107 = vunpack.c.h.b16 %v2848
    %v3108 = vunpack.c.l.b16 %v2849
    %v3109 = vunpack.c.h.b16 %v2849
    %v3110 = vunpack.c.l.b16 %v2850
    %v3111 = vunpack.c.h.b16 %v2850
    %v3112 = vunpack.c.l.b16 %v2851
    %v3113 = vunpack.c.h.b16 %v2851
    %v3114 = vunpack.c.l.b16 %v2852
    %v3115 = vunpack.c.h.b16 %v2852
    %v3116 = vunpack.c.l.b16 %v2853
    %v3117 = vunpack.c.h.b16 %v2853
    %v3118 = vunpack.c.l.b16 %v2854
    %v3119 = vunpack.c.h.b16 %v2854
    %v3120 = vunpack.c.l.b16 %v2855
    %v3121 = vunpack.c.h.b16 %v2855
    %v3122 = vunpack.c.l.b16 %v2856
    %v3123 = vunpack.c.h.b16 %v2856
    %v3124 = vunpack.c.l.b16 %v2857
    %v3125 = vunpack.c.h.b16 %v2857
    %v3126 = vunpack.c.l.b16 %v2858
    %v3127 = vunpack.c.h.b16 %v2858
    %v3128 = vunpack.c.l.b16 %v2859
    %v3129 = vunpack.c.h.b16 %v2859
    %v3130 = vunpack.c.l.b16 %v2860
    %v3131 = vunpack.c.h.b16 %v2860
    %v3132 = vunpack.c.l.b16 %v2861
    %v3133 = vunpack.c.h.b16 %v2861
    %v3134 = vunpack.c.l.b16 %v2862
    %v3135 = vunpack.c.h.b16 %v2862
    %v3136 = vunpack.c.l.b16 %v2863
    %v3137 = vunpack.c.h.b16 %v2863
    %v3138 = vunpack.c.l.b16 %v2864
    %v3139 = vunpack.c.h.b16 %v2864
    %v3140 = vunpack.c.l.b16 %v2865
    %v3141 = vunpack.c.h.b16 %v2865
    %v3142 = vunpack.c.l.b16 %v2866
    %v3143 = vunpack.c.h.b16 %v2866
    %v3144 = vunpack.c.l.b16 %v2867
    %v3145 = vunpack.c.h.b16 %v2867
    %v3146 = vunpack.c.l.b16 %v2868
    %v3147 = vunpack.c.h.b16 %v2868
    %v3148 = vunpack.c.l.b16 %v2869
    %v3149 = vunpack.c.h.b16 %v2869
    %v3150 = vunpack.c.l.b16 %v2870
    %v3151 = vunpack.c.h.b16 %v2870
    %v3152 = vunpack.c.l.b16 %v2871
    %v3153 = vunpack.c.h.b16 %v2871
    %v3154 = vunpack.c.l.b16 %v2872
    %v3155 = vunpack.c.h.b16 %v2872
    %v3156 = vunpack.c.l.b16 %v2873
    %v3157 = vunpack.c.h.b16 %v2873
    %v3158 = vunpack.c.l.b16 %v2874
    %v3159 = vunpack.c.h.b16 %v2874
    %v3160 = vunpack.c.l.b16 %v2875
    %v3161 = vunpack.c.h.b16 %v2875
    %v3162 = vunpack.c.l.b16 %v2876
    %v3163 = vunpack.c.h.b16 %v2876
    %v3164 = vunpack.c.l.b16 %v2877
    %v3165 = vunpack.c.h.b16 %v2877
    %v3166 = vunpack.c.l.b16 %v2878
    %v3167 = vunpack.c.h.b16 %v2878
    %v3168 = vunpack.c.l.b16 %v2879
    %v3169 = vunpack.c.h.b16 %v2879
    %v3170 = vunpack.c.l.b16 %v2880
    %v3171 = vunpack.c.h.b16 %v2880
    %v3172 = vunpack.c.l.b16 %v2881
    %v3173 = vunpack.c.h.b16 %v2881
    %v3174 = vunpack.c.l.b16 %v2882
    %v3175 = vunpack.c.h.b16 %v2882
    %v3176 = vunpack.c.l.b16 %v2883
    %v3177 = vunpack.c.h.b16 %v2883
    %v3178 = vunpack.c.l.b16 %v2884
    %v3179 = vunpack.c.h.b16 %v2884
    %v3180 = vunpack.c.l.b16 %v2885
    %v3181 = vunpack.c.h.b16 %v2885
    %v3182 = vunpack.c.l.b16 %v2886
    %v3183 = vunpack.c.h.b16 %v2886
    %v3184 = vunpack.c.l.b16 %v2887
    %v3185 = vunpack.c.h.b16 %v2887
    %v3186 = vunpack.c.l.b16 %v2888
    %v3187 = vunpack.c.h.b16 %v2888
    %v3188 = vunpack.c.l.b16 %v2889
    %v3189 = vunpack.c.h.b16 %v2889
    %v3190 = vunpack.c.l.b16 %v2890
    %v3191 = vunpack.c.h.b16 %v2890
    %v3192 = vunpack.c.l.b16 %v2891
    %v3193 = vunpack.c.h.b16 %v2891
    %v3194 = vunpack.c.l.b16 %v2892
    %v3195 = vunpack.c.h.b16 %v2892
    %v3196 = vunpack.c.l.b16 %v2893
    %v3197 = vunpack.c.h.b16 %v2893
    %v3198 = vunpack.c.l.b16 %v2894
    %v3199 = vunpack.c.h.b16 %v2894
    %v3200 = vunpack.c.l.b16 %v2895
    %v3201 = vunpack.c.h.b16 %v2895
    %v3202 = vunpack.c.l.b16 %v2896
    %v3203 = vunpack.c.h.b16 %v2896
    %v3204 = vunpack.c.l.b16 %v2897
    %v3205 = vunpack.c.h.b16 %v2897
    %v3206 = vunpack.c.l.b16 %v2898
    %v3207 = vunpack.c.h.b16 %v2898
    %v3208 = vunpack.c.l.b16 %v2899
    %v3209 = vunpack.c.h.b16 %v2899
    %v3210 = vunpack.c.l.b16 %v2900
    %v3211 = vunpack.c.h.b16 %v2900
    %v3212 = vunpack.c.l.b16 %v2901
    %v3213 = vunpack.c.h.b16 %v2901
    %v3214 = vunpack.c.l.b16 %v2902
    %v3215 = vunpack.c.h.b16 %v2902
    %v3216 = vunpack.c.l.b16 %v2903
    %v3217 = vunpack.c.h.b16 %v2903
    %v3218 = vunpack.c.l.b16 %v2904
    %v3219 = vunpack.c.h.b16 %v2904
    %v3220 = vunpack.c.l.b16 %v2905
    %v3221 = vunpack.c.h.b16 %v2905
    %v3222 = vunpack.c.l.b16 %v2906
    %v3223 = vunpack.c.h.b16 %v2906
    %v3224 = vunpack.c.l.b16 %v2907
    %v3225 = vunpack.c.h.b16 %v2907
    %v3226 = vunpack.c.l.b16 %v2908
    %v3227 = vunpack.c.h.b16 %v2908
    %v3228 = vunpack.c.l.b16 %v2909
    %v3229 = vunpack.c.h.b16 %v2909
    %v3230 = vunpack.c.l.b16 %v2910
    %v3231 = vunpack.c.h.b16 %v2910
    %v3232 = vunpack.c.l.b16 %v2911
    %v3233 = vunpack.c.h.b16 %v2911
    %v3234 = vunpack.c.l.b16 %v2912
    %v3235 = vunpack.c.h.b16 %v2912
    %v3236 = vunpack.c.l.b16 %v2913
    %v3237 = vunpack.c.h.b16 %v2913
    %v3238 = vunpack.c.l.b16 %v2914
    %v3239 = vunpack.c.h.b16 %v2914
    %v3240 = vunpack.c.l.b16 %v2915
    %v3241 = vunpack.c.h.b16 %v2915
    %v3242 = vunpack.c.l.b16 %v2916
    %v3243 = vunpack.c.h.b16 %v2916
    %v3244 = vunpack.c.l.b16 %v2917
    %v3245 = vunpack.c.h.b16 %v2917
    %v3246 = vunpack.c.l.b16 %v2918
    %v3247 = vunpack.c.h.b16 %v2918
    %v3248 = vunpack.c.l.b16 %v2919
    %v3249 = vunpack.c.h.b16 %v2919
    %v3250 = vunpack.c.l.b16 %v2920
    %v3251 = vunpack.c.h.b16 %v2920
    %v3252 = vunpack.c.l.b16 %v2921
    %v3253 = vunpack.c.h.b16 %v2921
    %v3254 = vunpack.c.l.b16 %v2922
    %v3255 = vunpack.c.h.b16 %v2922
    %v3256 = vunpack.c.l.b16 %v2923
    %v3257 = vunpack.c.h.b16 %v2923
    %v3258 = vunpack.c.l.b16 %v2924
    %v3259 = vunpack.c.h.b16 %v2924
    %v3260 = vunpack.c.l.b16 %v2925
    %v3261 = vunpack.c.h.b16 %v2925
    %v3262 = vunpack.c.l.b16 %v2926
    %v3263 = vunpack.c.h.b16 %v2926
    %v3264 = vunpack.c.l.b16 %v2927
    %v3265 = vunpack.c.h.b16 %v2927
    %v3266 = vunpack.c.l.b16 %v2928
    %v3267 = vunpack.c.h.b16 %v2928
    %v3268 = vunpack.c.l.b16 %v2929
    %v3269 = vunpack.c.h.b16 %v2929
    %v3270 = vunpack.c.l.b16 %v2930
    %v3271 = vunpack.c.h.b16 %v2930
    %v3272 = vunpack.c.l.b16 %v2931
    %v3273 = vunpack.c.h.b16 %v2931
    %v3274 = vunpack.c.l.b16 %v2932
    %v3275 = vunpack.c.h.b16 %v2932
    %v3276 = vunpack.c.l.b16 %v2933
    %v3277 = vunpack.c.h.b16 %v2933
    %v3278 = vunpack.c.l.b16 %v2934
    %v3279 = vunpack.c.h.b16 %v2934
    %v3280 = vunpack.c.l.b16 %v2935
    %v3281 = vunpack.c.h.b16 %v2935
    %v3282 = vunpack.c.l.b16 %v2936
    %v3283 = vunpack.c.h.b16 %v2936
    %v3284 = vunpack.c.l.b16 %v2937
    %v3285 = vunpack.c.h.b16 %v2937
    %v3286 = vunpack.c.l.b16 %v2938
    %v3287 = vunpack.c.h.b16 %v2938
    %v3288 = vunpack.c.l.b16 %v2939
    %v3289 = vunpack.c.h.b16 %v2939
    %v3290 = vunpack.c.l.b16 %v2940
    %v3291 = vunpack.c.h.b16 %v2940
    %v3292 = vunpack.c.l.b16 %v2941
    %v3293 = vunpack.c.h.b16 %v2941
    %v3294 = vunpack.c.l.b16 %v2942
    %v3295 = vunpack.c.h.b16 %v2942
    %v3296 = vunpack.c.l.b16 %v2943
    %v3297 = vunpack.c.h.b16 %v2943
    %v3298 = vunpack.c.l.b16 %v2944
    %v3299 = vunpack.c.h.b16 %v2944
    %v3300 = vunpack.c.l.b16 %v2945
    %v3301 = vunpack.c.h.b16 %v2945
    %v3302 = vunpack.c.l.b16 %v2946
    %v3303 = vunpack.c.h.b16 %v2946
    %v3304 = vunpack.c.l.b16 %v2947
    %v3305 = vunpack.c.h.b16 %v2947
    %v3306 = vunpack.c.l.b16 %v2948
    %v3307 = vunpack.c.h.b16 %v2948
    %v3308 = vunpack.c.l.b16 %v2949
    %v3309 = vunpack.c.h.b16 %v2949
    %v3310 = vunpack.c.l.b16 %v2950
    %v3311 = vunpack.c.h.b16 %v2950
    %v3312 = vunpack.c.l.b16 %v2951
    %v3313 = vunpack.c.h.b16 %v2951
    %v3314 = vunpack.c.l.b16 %v2952
    %v3315 = vunpack.c.h.b16 %v2952
    %v3316 = vunpack.c.l.b16 %v2953
    %v3317 = vunpack.c.h.b16 %v2953
    %v3318 = vunpack.c.l.b16 %v2954
    %v3319 = vunpack.c.h.b16 %v2954
    %v3320 = vunpack.c.l.b16 %v2955
    %v3321 = vunpack.c.h.b16 %v2955
    %v3322 = vunpack.c.l.b16 %v2956
    %v3323 = vunpack.c.h.b16 %v2956
    %v3324 = vunpack.c.l.b16 %v2957
    %v3325 = vunpack.c.h.b16 %v2957
    %v3326 = vunpack.c.l.b16 %v2958
    %v3327 = vunpack.c.h.b16 %v2958
    %v3328 = vunpack.c.l.b16 %v2959
    %v3329 = vunpack.c.h.b16 %v2959
    %v3330 = vunpack.c.l.b16 %v2960
    %v3331 = vunpack.c.h.b16 %v2960
    %v3332 = vunpack.c.l.b16 %v2961
    %v3333 = vunpack.c.h.b16 %v2961
    %v3334 = vunpack.c.l.b16 %v2962
    %v3335 = vunpack.c.h.b16 %v2962
    %v3336 = vunpack.c.l.b16 %v2963
    %v3337 = vunpack.c.h.b16 %v2963
    %v3338 = vunpack.c.l.b16 %v2964
    %v3339 = vunpack.c.h.b16 %v2964
    %v3340 = vunpack.c.l.b16 %v2965
    %v3341 = vunpack.c.h.b16 %v2965
    %v3342 = vunpack.c.l.b16 %v2966
    %v3343 = vunpack.c.h.b16 %v2966
    %v3344 = vunpack.c.l.b16 %v2967
    %v3345 = vunpack.c.h.b16 %v2967
    %v3346 = vunpack.c.l.b16 %v2968
    %v3347 = vunpack.c.h.b16 %v2968
    %v3348 = vunpack.c.l.b16 %v2969
    %v3349 = vunpack.c.h.b16 %v2969
    %v3350 = vunpack.c.l.b16 %v2970
    %v3351 = vunpack.c.h.b16 %v2970
    %v3352 = vunpack.c.l.b16 %v2971
    %v3353 = vunpack.c.h.b16 %v2971
    %v3354 = vunpack.c.l.b16 %v2972
    %v3355 = vunpack.c.h.b16 %v2972
    %v3356 = vunpack.c.l.b16 %v2973
    %v3357 = vunpack.c.h.b16 %v2973
    %v3358 = vpack.c.b16 %v3110, %v3102
    %v3359 = vpack.c.b16 %v3111, %v3103
    %v3360 = vpack.c.b16 %v3112, %v3104
    %v3361 = vpack.c.b16 %v3113, %v3105
    %v3362 = vpack.c.b16 %v3114, %v3106
    %v3363 = vpack.c.b16 %v3115, %v3107
    %v3364 = vpack.c.b16 %v3116, %v3108
    %v3365 = vpack.c.b16 %v3117, %v3109
    %v3366 = vpack.c.b16 %v3126, %v3118
    %v3367 = vpack.c.b16 %v3127, %v3119
    %v3368 = vpack.c.b16 %v3128, %v3120
    %v3369 = vpack.c.b16 %v3129, %v3121
    %v3370 = vpack.c.b16 %v3130, %v3122
    %v3371 = vpack.c.b16 %v3131, %v3123
    %v3372 = vpack.c.b16 %v3132, %v3124
    %v3373 = vpack.c.b16 %v3133, %v3125
    %v3374 = vpack.c.b16 %v3142, %v3134
    %v3375 = vpack.c.b16 %v3143, %v3135
    %v3376 = vpack.c.b16 %v3144, %v3136
    %v3377 = vpack.c.b16 %v3145, %v3137
    %v3378 = vpack.c.b16 %v3146, %v3138
    %v3379 = vpack.c.b16 %v3147, %v3139
    %v3380 = vpack.c.b16 %v3148, %v3140
    %v3381 = vpack.c.b16 %v3149, %v3141
    %v3382 = vpack.c.b16 %v3158, %v3150
    %v3383 = vpack.c.b16 %v3159, %v3151
    %v3384 = vpack.c.b16 %v3160, %v3152
    %v3385 = vpack.c.b16 %v3161, %v3153
    %v3386 = vpack.c.b16 %v3162, %v3154
    %v3387 = vpack.c.b16 %v3163, %v3155
    %v3388 = vpack.c.b16 %v3164, %v3156
    %v3389 = vpack.c.b16 %v3165, %v3157
    %v3390 = vpack.c.b16 %v3174, %v3166
    %v3391 = vpack.c.b16 %v3175, %v3167
    %v3392 = vpack.c.b16 %v3176, %v3168
    %v3393 = vpack.c.b16 %v3177, %v3169
    %v3394 = vpack.c.b16 %v3178, %v3170
    %v3395 = vpack.c.b16 %v3179, %v3171
    %v3396 = vpack.c.b16 %v3180, %v3172
    %v3397 = vpack.c.b16 %v3181, %v3173
    %v3398 = vpack.c.b16 %v3190, %v3182
    %v3399 = vpack.c.b16 %v3191, %v3183
    %v3400 = vpack.c.b16 %v3192, %v3184
    %v3401 = vpack.c.b16 %v3193, %v3185
    %v3402 = vpack.c.b16 %v3194, %v3186
    %v3403 = vpack.c.b16 %v3195, %v3187
    %v3404 = vpack.c.b16 %v3196, %v3188
    %v3405 = vpack.c.b16 %v3197, %v3189
    %v3406 = vpack.c.b16 %v3206, %v3198
    %v3407 = vpack.c.b16 %v3207, %v3199
    %v3408 = vpack.c.b16 %v3208, %v3200
    %v3409 = vpack.c.b16 %v3209, %v3201
    %v3410 = vpack.c.b16 %v3210, %v3202
    %v3411 = vpack.c.b16 %v3211, %v3203
    %v3412 = vpack.c.b16 %v3212, %v3204
    %v3413 = vpack.c.b16 %v3213, %v3205
    %v3414 = vpack.c.b16 %v3222, %v3214
    %v3415 = vpack.c.b16 %v3223, %v3215
    %v3416 = vpack.c.b16 %v3224, %v3216
    %v3417 = vpack.c.b16 %v3225, %v3217
    %v3418 = vpack.c.b16 %v3226, %v3218
    %v3419 = vpack.c.b16 %v3227, %v3219
    %v3420 = vpack.c.b16 %v3228, %v3220
    %v3421 = vpack.c.b16 %v3229, %v3221
    %v3422 = vpack.c.b16 %v3238, %v3230
    %v3423 = vpack.c.b16 %v3239, %v3231
    %v3424 = vpack.c.b16 %v3240, %v3232
    %v3425 = vpack.c.b16 %v3241, %v3233
    %v3426 = vpack.c.b16 %v3242, %v3234
    %v3427 = vpack.c.b16 %v3243, %v3235
    %v3428 = vpack.c.b16 %v3244, %v3236
    %v3429 = vpack.c.b16 %v3245, %v3237
    %v3430 = vpack.c.b16 %v3254, %v3246
    %v3431 = vpack.c.b16 %v3255, %v3247
    %v3432 = vpack.c.b16 %v3256, %v3248
    %v3433 = vpack.c.b16 %v3257, %v3249
    %v3434 = vpack.c.b16 %v3258, %v3250
    %v3435 = vpack.c.b16 %v3259, %v3251
    %v3436 = vpack.c.b16 %v3260, %v3252
    %v3437 = vpack.c.b16 %v3261, %v3253
    %v3438 = vpack.c.b16 %v3270, %v3262
    %v3439 = vpack.c.b16 %v3271, %v3263
    %v3440 = vpack.c.b16 %v3272, %v3264
    %v3441 = vpack.c.b16 %v3273, %v3265
    %v3442 = vpack.c.b16 %v3274, %v3266
    %v3443 = vpack.c.b16 %v3275, %v3267
    %v3444 = vpack.c.b16 %v3276, %v3268
    %v3445 = vpack.c.b16 %v3277, %v3269
    %v3446 = vpack.c.b16 %v3286, %v3278
    %v3447 = vpack.c.b16 %v3287, %v3279
    %v3448 = vpack.c.b16 %v3288, %v3280
    %v3449 = vpack.c.b16 %v3289, %v3281
    %v3450 = vpack.c.b16 %v3290, %v3282
    %v3451 = vpack.c.b16 %v3291, %v3283
    %v3452 = vpack.c.b16 %v3292, %v3284
    %v3453 = vpack.c.b16 %v3293, %v3285
    %v3454 = vpack.c.b16 %v3302, %v3294
    %v3455 = vpack.c.b16 %v3303, %v3295
    %v3456 = vpack.c.b16 %v3304, %v3296
    %v3457 = vpack.c.b16 %v3305, %v3297
    %v3458 = vpack.c.b16 %v3306, %v3298
    %v3459 = vpack.c.b16 %v3307, %v3299
    %v3460 = vpack.c.b16 %v3308, %v3300
    %v3461 = vpack.c.b16 %v3309, %v3301
    %v3462 = vpack.c.b16 %v3318, %v3310
    %v3463 = vpack.c.b16 %v3319, %v3311
    %v3464 = vpack.c.b16 %v3320, %v3312
    %v3465 = vpack.c.b16 %v3321, %v3313
    %v3466 = vpack.c.b16 %v3322, %v3314
    %v3467 = vpack.c.b16 %v3323, %v3315
    %v3468 = vpack.c.b16 %v3324, %v3316
    %v3469 = vpack.c.b16 %v3325, %v3317
    %v3470 = vpack.c.b16 %v3334, %v3326
    %v3471 = vpack.c.b16 %v3335, %v3327
    %v3472 = vpack.c.b16 %v3336, %v3328
    %v3473 = vpack.c.b16 %v3337, %v3329
    %v3474 = vpack.c.b16 %v3338, %v3330
    %v3475 = vpack.c.b16 %v3339, %v3331
    %v3476 = vpack.c.b16 %v3340, %v3332
    %v3477 = vpack.c.b16 %v3341, %v3333
    %v3478 = vpack.c.b16 %v3350, %v3342
    %v3479 = vpack.c.b16 %v3351, %v3343
    %v3480 = vpack.c.b16 %v3352, %v3344
    %v3481 = vpack.c.b16 %v3353, %v3345
    %v3482 = vpack.c.b16 %v3354, %v3346
    %v3483 = vpack.c.b16 %v3355, %v3347
    %v3484 = vpack.c.b16 %v3356, %v3348
    %v3485 = vpack.c.b16 %v3357, %v3349
    %3614 = vmatprep.subr.bf16.mxu0 %v3415
    %3615 = vmatpush1.bf16.msra.mxu0 %v3414
    %3616 = vmatprep.subr.bf16.mxu0 %v3407
    %3617 = vmatpush1.bf16.msra.mxu0 %v3406
    %3618 = vmatprep.subr.bf16.mxu0 %v3399
    %3619 = vmatpush1.bf16.msra.mxu0 %v3398
    %3620 = vmatprep.subr.bf16.mxu0 %v3391
    %3621 = vmatpush1.bf16.msra.mxu0 %v3390
    %3622 = vmatprep.subr.bf16.mxu0 %v3383
    %3623 = vmatpush1.bf16.msra.mxu0 %v3382
    %3624 = vmatprep.subr.bf16.mxu0 %v3375
    %3625 = vmatpush1.bf16.msra.mxu0 %v3374
    %3626 = vmatprep.subr.bf16.mxu0 %v3367
    %3627 = vmatpush1.bf16.msra.mxu0 %v3366
    %3628 = vmatprep.subr.bf16.mxu0 %v3359
    %3629 = vmatpush1.bf16.msra.mxu0 %v3358
    %3630 = vmatprep.subr.bf16.mxu0 %v3479
    %3631 = vmatpush2.bf16.msra.mxu0 %v3478
    %3632 = vmatprep.subr.bf16.mxu0 %v3471
    %3633 = vmatpush2.bf16.msra.mxu0 %v3470
    %3634 = vmatprep.subr.bf16.mxu0 %v3463
    %3635 = vmatpush2.bf16.msra.mxu0 %v3462
    %3636 = vmatprep.subr.bf16.mxu0 %v3455
    %3637 = vmatpush2.bf16.msra.mxu0 %v3454
    %3638 = vmatprep.subr.bf16.mxu0 %v3447
    %3639 = vmatpush2.bf16.msra.mxu0 %v3446
    %3640 = vmatprep.subr.bf16.mxu0 %v3439
    %3641 = vmatpush2.bf16.msra.mxu0 %v3438
    %3642 = vmatprep.subr.bf16.mxu0 %v3431
    %3643 = vmatpush2.bf16.msra.mxu0 %v3430
    %3644 = vmatprep.subr.bf16.mxu0 %v3423
    %3645 = vmatpush2.bf16.msra.mxu0 %v3422
    %3646 = vmatprep.mubr.bf16.mxu0 %v2845
    %3647 = vmatmul.mubr.bf16.gmra.mxu0 %v2844
    %v3648 = vpop.f32.mrf.mxu0
    %v3649 = vadd.f32 0.0, %v3648
    %v3650 = vpop.f32.mrf.mxu0
    %v3651 = vadd.f32 0.0, %v3650
    %v3652 = vpop.f32.mrf.mxu0
    %v3653 = vpop.f32.mrf.mxu0
    %3654 = vdwg.mxu0
    %3655 = vmatprep.subr.bf16.mxu0 %v3417
    %3656 = vmatpush1.bf16.msra.mxu0 %v3416
    %3657 = vmatprep.subr.bf16.mxu0 %v3409
    %3658 = vmatpush1.bf16.msra.mxu0 %v3408
    %3659 = vmatprep.subr.bf16.mxu0 %v3401
    %3660 = vmatpush1.bf16.msra.mxu0 %v3400
    %3661 = vmatprep.subr.bf16.mxu0 %v3393
    %3662 = vmatpush1.bf16.msra.mxu0 %v3392
    %3663 = vmatprep.subr.bf16.mxu0 %v3385
    %3664 = vmatpush1.bf16.msra.mxu0 %v3384
    %3665 = vmatprep.subr.bf16.mxu0 %v3377
    %3666 = vmatpush1.bf16.msra.mxu0 %v3376
    %3667 = vmatprep.subr.bf16.mxu0 %v3369
    %3668 = vmatpush1.bf16.msra.mxu0 %v3368
    %3669 = vmatprep.subr.bf16.mxu0 %v3361
    %3670 = vmatpush1.bf16.msra.mxu0 %v3360
    %3671 = vmatprep.subr.bf16.mxu0 %v3481
    %3672 = vmatpush2.bf16.msra.mxu0 %v3480
    %3673 = vmatprep.subr.bf16.mxu0 %v3473
    %3674 = vmatpush2.bf16.msra.mxu0 %v3472
    %3675 = vmatprep.subr.bf16.mxu0 %v3465
    %3676 = vmatpush2.bf16.msra.mxu0 %v3464
    %3677 = vmatprep.subr.bf16.mxu0 %v3457
    %3678 = vmatpush2.bf16.msra.mxu0 %v3456
    %3679 = vmatprep.subr.bf16.mxu0 %v3449
    %3680 = vmatpush2.bf16.msra.mxu0 %v3448
    %3681 = vmatprep.subr.bf16.mxu0 %v3441
    %3682 = vmatpush2.bf16.msra.mxu0 %v3440
    %3683 = vmatprep.subr.bf16.mxu0 %v3433
    %3684 = vmatpush2.bf16.msra.mxu0 %v3432
    %3685 = vmatprep.subr.bf16.mxu0 %v3425
    %3686 = vmatpush2.bf16.msra.mxu0 %v3424
    %3687 = vmatprep.mubr.bf16.mxu0 %v2845
    %3688 = vmatmul.mubr.bf16.gmra.mxu0 %v2844
    %v3689 = vpop.f32.mrf.mxu0
    %v3690 = vadd.f32 0.0, %v3689
    %v3691 = vpop.f32.mrf.mxu0
    %v3692 = vadd.f32 0.0, %v3691
    %v3693 = vpop.f32.mrf.mxu0
    %v3694 = vpop.f32.mrf.mxu0
    %3695 = vdwg.mxu0
    %3696 = vmatprep.subr.bf16.mxu0 %v3419
    %3697 = vmatpush1.bf16.msra.mxu0 %v3418
    %3698 = vmatprep.subr.bf16.mxu0 %v3411
    %3699 = vmatpush1.bf16.msra.mxu0 %v3410
    %3700 = vmatprep.subr.bf16.mxu0 %v3403
    %3701 = vmatpush1.bf16.msra.mxu0 %v3402
    %3702 = vmatprep.subr.bf16.mxu0 %v3395
    %3703 = vmatpush1.bf16.msra.mxu0 %v3394
    %3704 = vmatprep.subr.bf16.mxu0 %v3387
    %3705 = vmatpush1.bf16.msra.mxu0 %v3386
    %3706 = vmatprep.subr.bf16.mxu0 %v3379
    %3707 = vmatpush1.bf16.msra.mxu0 %v3378
    %3708 = vmatprep.subr.bf16.mxu0 %v3371
    %3709 = vmatpush1.bf16.msra.mxu0 %v3370
    %3710 = vmatprep.subr.bf16.mxu0 %v3363
    %3711 = vmatpush1.bf16.msra.mxu0 %v3362
    %3712 = vmatprep.subr.bf16.mxu0 %v3483
    %3713 = vmatpush2.bf16.msra.mxu0 %v3482
    %3714 = vmatprep.subr.bf16.mxu0 %v3475
    %3715 = vmatpush2.bf16.msra.mxu0 %v3474
    %3716 = vmatprep.subr.bf16.mxu0 %v3467
    %3717 = vmatpush2.bf16.msra.mxu0 %v3466
    %3718 = vmatprep.subr.bf16.mxu0 %v3459
    %3719 = vmatpush2.bf16.msra.mxu0 %v3458
    %3720 = vmatprep.subr.bf16.mxu0 %v3451
    %3721 = vmatpush2.bf16.msra.mxu0 %v3450
    %3722 = vmatprep.subr.bf16.mxu0 %v3443
    %3723 = vmatpush2.bf16.msra.mxu0 %v3442
    %3724 = vmatprep.subr.bf16.mxu0 %v3435
    %3725 = vmatpush2.bf16.msra.mxu0 %v3434
    %3726 = vmatprep.subr.bf16.mxu0 %v3427
    %3727 = vmatpush2.bf16.msra.mxu0 %v3426
    %3728 = vmatprep.mubr.bf16.mxu0 %v2845
    %3729 = vmatmul.mubr.bf16.gmra.mxu0 %v2844
    %v3730 = vpop.f32.mrf.mxu0
    %v3731 = vadd.f32 0.0, %v3730
    %v3732 = vpop.f32.mrf.mxu0
    %v3733 = vadd.f32 0.0, %v3732
    %v3734 = vpop.f32.mrf.mxu0
    %v3735 = vpop.f32.mrf.mxu0
    %3736 = vdwg.mxu0
    %3737 = vmatprep.subr.bf16.mxu0 %v3421
    %3738 = vmatpush1.bf16.msra.mxu0 %v3420
    %3739 = vmatprep.subr.bf16.mxu0 %v3413
    %3740 = vmatpush1.bf16.msra.mxu0 %v3412
    %3741 = vmatprep.subr.bf16.mxu0 %v3405
    %3742 = vmatpush1.bf16.msra.mxu0 %v3404
    %3743 = vmatprep.subr.bf16.mxu0 %v3397
    %3744 = vmatpush1.bf16.msra.mxu0 %v3396
    %3745 = vmatprep.subr.bf16.mxu0 %v3389
    %3746 = vmatpush1.bf16.msra.mxu0 %v3388
    %3747 = vmatprep.subr.bf16.mxu0 %v3381
    %3748 = vmatpush1.bf16.msra.mxu0 %v3380
    %3749 = vmatprep.subr.bf16.mxu0 %v3373
    %3750 = vmatpush1.bf16.msra.mxu0 %v3372
    %3751 = vmatprep.subr.bf16.mxu0 %v3365
    %3752 = vmatpush1.bf16.msra.mxu0 %v3364
    %3753 = vmatprep.subr.bf16.mxu0 %v3485
    %3754 = vmatpush2.bf16.msra.mxu0 %v3484
    %3755 = vmatprep.subr.bf16.mxu0 %v3477
    %3756 = vmatpush2.bf16.msra.mxu0 %v3476
    %3757 = vmatprep.subr.bf16.mxu0 %v3469
    %3758 = vmatpush2.bf16.msra.mxu0 %v3468
    %3759 = vmatprep.subr.bf16.mxu0 %v3461
    %3760 = vmatpush2.bf16.msra.mxu0 %v3460
    %3761 = vmatprep.subr.bf16.mxu0 %v3453
    %3762 = vmatpush2.bf16.msra.mxu0 %v3452
    %3763 = vmatprep.subr.bf16.mxu0 %v3445
    %3764 = vmatpush2.bf16.msra.mxu0 %v3444
    %3765 = vmatprep.subr.bf16.mxu0 %v3437
    %3766 = vmatpush2.bf16.msra.mxu0 %v3436
    %3767 = vmatprep.subr.bf16.mxu0 %v3429
    %3768 = vmatpush2.bf16.msra.mxu0 %v3428
    %3769 = vmatprep.mubr.bf16.mxu0 %v2845
    %3770 = vmatmul.mubr.bf16.gmra.mxu0 %v2844
    %v3771 = vpop.f32.mrf.mxu0
    %v3772 = vadd.f32 0.0, %v3771
    %v3773 = vpop.f32.mrf.mxu0
    %v3774 = vadd.f32 0.0, %v3773
    %v3775 = vpop.f32.mrf.mxu0
    %v3776 = vpop.f32.mrf.mxu0
    %3777 = vdwg.mxu0
    %s3778 = scalar_lea.vmem [#allocation3], 2
    %v3779 = vld [vmem:[%s3778] ss:$8 sm:$0xf]
    %v3784 = vcombine.low %v3649, %v3651
    %v3785 = vcombine.low %v3690, %v3692
    %v3787 = vunpack.c.l.s4 1966171168
    %v3788 = vunpack.c.0.s8 %v3787
    %v3789 = vlaneseq
    %v3790 = vshrl.u32 %v3789, 7
    %v3791 = vsub.s32 %v3788, %v3790
    %v3792 = vrot.slane %v3784, %v3791
    %v3794 = vunpack.c.l.s4 1966171168
    %v3795 = vunpack.c.0.s8 %v3794
    %v3796 = vlaneseq
    %v3797 = vshrl.u32 %v3796, 7
    %v3798 = vsub.s32 %v3795, %v3797
    %v3799 = vrot.slane %v3785, %v3798
    %v3800 = vcombine.low %v3792, %v3799
    %v3802 = vunpack.c.l.s4 1966171168
    %v3803 = vunpack.c.0.s8 %v3802
    %v3804 = vlaneseq
    %v3805 = vshrl.u32 %v3804, 7
    %v3806 = vsub.s32 %v3803, %v3805
    %v3807 = vrot.slane %v3800, %v3806
    %v3809 = vadd.f32 %v3779, %v3807
    %s3810 = scalar_lea.vmem [#allocation3], 37
    %v3811 = vld [vmem:[%s3810] ss:$8 sm:$0xf]
    %v3816 = vcombine.low %v3731, %v3733
    %v3817 = vcombine.low %v3772, %v3774
    %v3819 = vunpack.c.l.s4 1966171168
    %v3820 = vunpack.c.0.s8 %v3819
    %v3821 = vlaneseq
    %v3822 = vshrl.u32 %v3821, 7
    %v3823 = vsub.s32 %v3820, %v3822
    %v3824 = vrot.slane %v3816, %v3823
    %v3826 = vunpack.c.l.s4 1966171168
    %v3827 = vunpack.c.0.s8 %v3826
    %v3828 = vlaneseq
    %v3829 = vshrl.u32 %v3828, 7
    %v3830 = vsub.s32 %v3827, %v3829
    %v3831 = vrot.slane %v3817, %v3830
    %v3832 = vcombine.low %v3824, %v3831
    %v3834 = vunpack.c.l.s4 1966171168
    %v3835 = vunpack.c.0.s8 %v3834
    %v3836 = vlaneseq
    %v3837 = vshrl.u32 %v3836, 7
    %v3838 = vsub.s32 %v3835, %v3837
    %v3839 = vrot.slane %v3832, %v3838
    %v3841 = vadd.f32 %v3811, %v3839
    %v3842 = vxor.u32 %v3809, 2147483648
    %v3843 = vmul.f32 %v3842, 1.442695
    %v3844 = vpow.pop %v3843
    %v3845 = vadd.f32 %v3844, 1.0
    %v3846 = vrcp.pop %v3845
    %v3847 = vmul.f32 1.0, %v3846
    %v3849 = vrot.slane %v3809, 1
    %v3851 = vxor.u32 %v3849, 2147483648
    %v3852 = vmul.f32 %v3851, 1.442695
    %v3853 = vpow.pop %v3852
    %v3854 = vadd.f32 %v3853, 1.0
    %v3855 = vrcp.pop %v3854
    %v3856 = vmul.f32 1.0, %v3855
    %v3857 = vrot.slane %v3809, 2
    %v3859 = vtanh.pop %v3857
    %v3860 = vrot.slane %v3809, 3
    %v3862 = vxor.u32 %v3860, 2147483648
    %v3863 = vmul.f32 %v3862, 1.442695
    %v3864 = vpow.pop %v3863
    %v3865 = vadd.f32 %v3864, 1.0
    %v3866 = vrcp.pop %v3865
    %v3867 = vmul.f32 1.0, %v3866
    %v3868 = vmul.f32 %v3856, %v2808
    %v3869 = vmul.f32 %v3847, %v3859
    %v3870 = vadd.f32 %v3868, %v3869
    %v3871 = vtanh.pop %v3870
    %v3872 = vmul.f32 %v3867, %v3871
    %v3873 = vxor.u32 %v3841, 2147483648
    %v3874 = vmul.f32 %v3873, 1.442695
    %v3875 = vpow.pop %v3874
    %v3876 = vadd.f32 %v3875, 1.0
    %v3877 = vrcp.pop %v3876
    %v3878 = vmul.f32 1.0, %v3877
    %v3880 = vrot.slane %v3841, 1
    %v3882 = vxor.u32 %v3880, 2147483648
    %v3883 = vmul.f32 %v3882, 1.442695
    %v3884 = vpow.pop %v3883
    %v3885 = vadd.f32 %v3884, 1.0
    %v3886 = vrcp.pop %v3885
    %v3887 = vmul.f32 1.0, %v3886
    %v3888 = vrot.slane %v3841, 2
    %v3890 = vtanh.pop %v3888
    %v3891 = vrot.slane %v3841, 3
    %v3893 = vxor.u32 %v3891, 2147483648
    %v3894 = vmul.f32 %v3893, 1.442695
    %v3895 = vpow.pop %v3894
    %v3896 = vadd.f32 %v3895, 1.0
    %v3897 = vrcp.pop %v3896
    %v3898 = vmul.f32 1.0, %v3897
    %v3899 = vmul.f32 %v3887, %v2839
    %v3900 = vmul.f32 %v3878, %v3890
    %v3901 = vadd.f32 %v3899, %v3900
    %v3902 = vtanh.pop %v3901
    %v3903 = vmul.f32 %v3898, %v3902
    %3904 = vst [vmem:[#allocation14 + $0x2] sm:$0x1] %v3872
    %3905 = vst [vmem:[#allocation14 + $0xd] sm:$0x1] %v3903
    %v3906 = vpack.c.bf16 %v3872, %v3872
    %v3907 = vpack.c.bf16 %v3903, %v3903
    %v3908 = vld [vmem:[#allocation11] sm:$0xff]
    %v3909 = vld [vmem:[#allocation11 + $0x8] sm:$0xff]
    %v3910 = vld [vmem:[#allocation11 + $0x10] sm:$0xff]
    %v3911 = vld [vmem:[#allocation11 + $0x18] sm:$0xff]
    %v3912 = vld [vmem:[#allocation11 + $0x20] sm:$0xff]
    %v3913 = vld [vmem:[#allocation11 + $0x28] sm:$0xff]
    %v3914 = vld [vmem:[#allocation11 + $0x30] sm:$0xff]
    %v3915 = vld [vmem:[#allocation11 + $0x38] sm:$0xff]
    %v3916 = vld [vmem:[#allocation11 + $0x40] sm:$0xff]
    %v3917 = vld [vmem:[#allocation11 + $0x48] sm:$0xff]
    %v3918 = vld [vmem:[#allocation11 + $0x50] sm:$0xff]
    %v3919 = vld [vmem:[#allocation11 + $0x58] sm:$0xff]
    %v3920 = vld [vmem:[#allocation11 + $0x60] sm:$0xff]
    %v3921 = vld [vmem:[#allocation11 + $0x68] sm:$0xff]
    %v3922 = vld [vmem:[#allocation11 + $0x70] sm:$0xff]
    %v3923 = vld [vmem:[#allocation11 + $0x78] sm:$0xff]
    %v3924 = vld [vmem:[#allocation11 + $0x80] sm:$0xff]
    %v3925 = vld [vmem:[#allocation11 + $0x88] sm:$0xff]
    %v3926 = vld [vmem:[#allocation11 + $0x90] sm:$0xff]
    %v3927 = vld [vmem:[#allocation11 + $0x98] sm:$0xff]
    %v3928 = vld [vmem:[#allocation11 + $0xa0] sm:$0xff]
    %v3929 = vld [vmem:[#allocation11 + $0xa8] sm:$0xff]
    %v3930 = vld [vmem:[#allocation11 + $0xb0] sm:$0xff]
    %v3931 = vld [vmem:[#allocation11 + $0xb8] sm:$0xff]
    %v3932 = vld [vmem:[#allocation11 + $0xc0] sm:$0xff]
    %v3933 = vld [vmem:[#allocation11 + $0xc8] sm:$0xff]
    %v3934 = vld [vmem:[#allocation11 + $0xd0] sm:$0xff]
    %v3935 = vld [vmem:[#allocation11 + $0xd8] sm:$0xff]
    %v3936 = vld [vmem:[#allocation11 + $0xe0] sm:$0xff]
    %v3937 = vld [vmem:[#allocation11 + $0xe8] sm:$0xff]
    %v3938 = vld [vmem:[#allocation11 + $0xf0] sm:$0xff]
    %v3939 = vld [vmem:[#allocation11 + $0xf8] sm:$0xff]
    %v3940 = vld [vmem:[#allocation11 + $0x100] sm:$0xff]
    %v3941 = vld [vmem:[#allocation11 + $0x108] sm:$0xff]
    %v3942 = vld [vmem:[#allocation11 + $0x110] sm:$0xff]
    %v3943 = vld [vmem:[#allocation11 + $0x118] sm:$0xff]
    %v3944 = vld [vmem:[#allocation11 + $0x120] sm:$0xff]
    %v3945 = vld [vmem:[#allocation11 + $0x128] sm:$0xff]
    %v3946 = vld [vmem:[#allocation11 + $0x130] sm:$0xff]
    %v3947 = vld [vmem:[#allocation11 + $0x138] sm:$0xff]
    %v3948 = vld [vmem:[#allocation11 + $0x140] sm:$0xff]
    %v3949 = vld [vmem:[#allocation11 + $0x148] sm:$0xff]
    %v3950 = vld [vmem:[#allocation11 + $0x150] sm:$0xff]
    %v3951 = vld [vmem:[#allocation11 + $0x158] sm:$0xff]
    %v3952 = vld [vmem:[#allocation11 + $0x160] sm:$0xff]
    %v3953 = vld [vmem:[#allocation11 + $0x168] sm:$0xff]
    %v3954 = vld [vmem:[#allocation11 + $0x170] sm:$0xff]
    %v3955 = vld [vmem:[#allocation11 + $0x178] sm:$0xff]
    %v3956 = vld [vmem:[#allocation11 + $0x180] sm:$0xff]
    %v3957 = vld [vmem:[#allocation11 + $0x188] sm:$0xff]
    %v3958 = vld [vmem:[#allocation11 + $0x190] sm:$0xff]
    %v3959 = vld [vmem:[#allocation11 + $0x198] sm:$0xff]
    %v3960 = vld [vmem:[#allocation11 + $0x1a0] sm:$0xff]
    %v3961 = vld [vmem:[#allocation11 + $0x1a8] sm:$0xff]
    %v3962 = vld [vmem:[#allocation11 + $0x1b0] sm:$0xff]
    %v3963 = vld [vmem:[#allocation11 + $0x1b8] sm:$0xff]
    %v3964 = vld [vmem:[#allocation11 + $0x1c0] sm:$0xff]
    %v3965 = vld [vmem:[#allocation11 + $0x1c8] sm:$0xff]
    %v3966 = vld [vmem:[#allocation11 + $0x1d0] sm:$0xff]
    %v3967 = vld [vmem:[#allocation11 + $0x1d8] sm:$0xff]
    %v3968 = vld [vmem:[#allocation11 + $0x1e0] sm:$0xff]
    %v3969 = vld [vmem:[#allocation11 + $0x1e8] sm:$0xff]
    %v3970 = vld [vmem:[#allocation11 + $0x1f0] sm:$0xff]
    %v3971 = vld [vmem:[#allocation11 + $0x1f8] sm:$0xff]
    %v3972 = vld [vmem:[#allocation11 + $0x200] sm:$0xff]
    %v3973 = vld [vmem:[#allocation11 + $0x208] sm:$0xff]
    %v3974 = vld [vmem:[#allocation11 + $0x210] sm:$0xff]
    %v3975 = vld [vmem:[#allocation11 + $0x218] sm:$0xff]
    %v3976 = vld [vmem:[#allocation11 + $0x220] sm:$0xff]
    %v3977 = vld [vmem:[#allocation11 + $0x228] sm:$0xff]
    %v3978 = vld [vmem:[#allocation11 + $0x230] sm:$0xff]
    %v3979 = vld [vmem:[#allocation11 + $0x238] sm:$0xff]
    %v3980 = vld [vmem:[#allocation11 + $0x240] sm:$0xff]
    %v3981 = vld [vmem:[#allocation11 + $0x248] sm:$0xff]
    %v3982 = vld [vmem:[#allocation11 + $0x250] sm:$0xff]
    %v3983 = vld [vmem:[#allocation11 + $0x258] sm:$0xff]
    %v3984 = vld [vmem:[#allocation11 + $0x260] sm:$0xff]
    %v3985 = vld [vmem:[#allocation11 + $0x268] sm:$0xff]
    %v3986 = vld [vmem:[#allocation11 + $0x270] sm:$0xff]
    %v3987 = vld [vmem:[#allocation11 + $0x278] sm:$0xff]
    %v3988 = vld [vmem:[#allocation11 + $0x280] sm:$0xff]
    %v3989 = vld [vmem:[#allocation11 + $0x288] sm:$0xff]
    %v3990 = vld [vmem:[#allocation11 + $0x290] sm:$0xff]
    %v3991 = vld [vmem:[#allocation11 + $0x298] sm:$0xff]
    %v3992 = vld [vmem:[#allocation11 + $0x2a0] sm:$0xff]
    %v3993 = vld [vmem:[#allocation11 + $0x2a8] sm:$0xff]
    %v3994 = vld [vmem:[#allocation11 + $0x2b0] sm:$0xff]
    %v3995 = vld [vmem:[#allocation11 + $0x2b8] sm:$0xff]
    %v3996 = vld [vmem:[#allocation11 + $0x2c0] sm:$0xff]
    %v3997 = vld [vmem:[#allocation11 + $0x2c8] sm:$0xff]
    %v3998 = vld [vmem:[#allocation11 + $0x2d0] sm:$0xff]
    %v3999 = vld [vmem:[#allocation11 + $0x2d8] sm:$0xff]
    %v4000 = vld [vmem:[#allocation11 + $0x2e0] sm:$0xff]
    %v4001 = vld [vmem:[#allocation11 + $0x2e8] sm:$0xff]
    %v4002 = vld [vmem:[#allocation11 + $0x2f0] sm:$0xff]
    %v4003 = vld [vmem:[#allocation11 + $0x2f8] sm:$0xff]
    %v4004 = vld [vmem:[#allocation11 + $0x300] sm:$0xff]
    %v4005 = vld [vmem:[#allocation11 + $0x308] sm:$0xff]
    %v4006 = vld [vmem:[#allocation11 + $0x310] sm:$0xff]
    %v4007 = vld [vmem:[#allocation11 + $0x318] sm:$0xff]
    %v4008 = vld [vmem:[#allocation11 + $0x320] sm:$0xff]
    %v4009 = vld [vmem:[#allocation11 + $0x328] sm:$0xff]
    %v4010 = vld [vmem:[#allocation11 + $0x330] sm:$0xff]
    %v4011 = vld [vmem:[#allocation11 + $0x338] sm:$0xff]
    %v4012 = vld [vmem:[#allocation11 + $0x340] sm:$0xff]
    %v4013 = vld [vmem:[#allocation11 + $0x348] sm:$0xff]
    %v4014 = vld [vmem:[#allocation11 + $0x350] sm:$0xff]
    %v4015 = vld [vmem:[#allocation11 + $0x358] sm:$0xff]
    %v4016 = vld [vmem:[#allocation11 + $0x360] sm:$0xff]
    %v4017 = vld [vmem:[#allocation11 + $0x368] sm:$0xff]
    %v4018 = vld [vmem:[#allocation11 + $0x370] sm:$0xff]
    %v4019 = vld [vmem:[#allocation11 + $0x378] sm:$0xff]
    %v4020 = vld [vmem:[#allocation11 + $0x380] sm:$0xff]
    %v4021 = vld [vmem:[#allocation11 + $0x388] sm:$0xff]
    %v4022 = vld [vmem:[#allocation11 + $0x390] sm:$0xff]
    %v4023 = vld [vmem:[#allocation11 + $0x398] sm:$0xff]
    %v4024 = vld [vmem:[#allocation11 + $0x3a0] sm:$0xff]
    %v4025 = vld [vmem:[#allocation11 + $0x3a8] sm:$0xff]
    %v4026 = vld [vmem:[#allocation11 + $0x3b0] sm:$0xff]
    %v4027 = vld [vmem:[#allocation11 + $0x3b8] sm:$0xff]
    %v4028 = vld [vmem:[#allocation11 + $0x3c0] sm:$0xff]
    %v4029 = vld [vmem:[#allocation11 + $0x3c8] sm:$0xff]
    %v4030 = vld [vmem:[#allocation11 + $0x3d0] sm:$0xff]
    %v4031 = vld [vmem:[#allocation11 + $0x3d8] sm:$0xff]
    %v4032 = vld [vmem:[#allocation11 + $0x3e0] sm:$0xff]
    %v4033 = vld [vmem:[#allocation11 + $0x3e8] sm:$0xff]
    %v4034 = vld [vmem:[#allocation11 + $0x3f0] sm:$0xff]
    %v4035 = vld [vmem:[#allocation11 + $0x3f8] sm:$0xff]
    %v4164 = vunpack.c.l.b16 %v3908
    %v4165 = vunpack.c.h.b16 %v3908
    %v4166 = vunpack.c.l.b16 %v3909
    %v4167 = vunpack.c.h.b16 %v3909
    %v4168 = vunpack.c.l.b16 %v3910
    %v4169 = vunpack.c.h.b16 %v3910
    %v4170 = vunpack.c.l.b16 %v3911
    %v4171 = vunpack.c.h.b16 %v3911
    %v4172 = vunpack.c.l.b16 %v3912
    %v4173 = vunpack.c.h.b16 %v3912
    %v4174 = vunpack.c.l.b16 %v3913
    %v4175 = vunpack.c.h.b16 %v3913
    %v4176 = vunpack.c.l.b16 %v3914
    %v4177 = vunpack.c.h.b16 %v3914
    %v4178 = vunpack.c.l.b16 %v3915
    %v4179 = vunpack.c.h.b16 %v3915
    %v4180 = vunpack.c.l.b16 %v3916
    %v4181 = vunpack.c.h.b16 %v3916
    %v4182 = vunpack.c.l.b16 %v3917
    %v4183 = vunpack.c.h.b16 %v3917
    %v4184 = vunpack.c.l.b16 %v3918
    %v4185 = vunpack.c.h.b16 %v3918
    %v4186 = vunpack.c.l.b16 %v3919
    %v4187 = vunpack.c.h.b16 %v3919
    %v4188 = vunpack.c.l.b16 %v3920
    %v4189 = vunpack.c.h.b16 %v3920
    %v4190 = vunpack.c.l.b16 %v3921
    %v4191 = vunpack.c.h.b16 %v3921
    %v4192 = vunpack.c.l.b16 %v3922
    %v4193 = vunpack.c.h.b16 %v3922
    %v4194 = vunpack.c.l.b16 %v3923
    %v4195 = vunpack.c.h.b16 %v3923
    %v4196 = vunpack.c.l.b16 %v3924
    %v4197 = vunpack.c.h.b16 %v3924
    %v4198 = vunpack.c.l.b16 %v3925
    %v4199 = vunpack.c.h.b16 %v3925
    %v4200 = vunpack.c.l.b16 %v3926
    %v4201 = vunpack.c.h.b16 %v3926
    %v4202 = vunpack.c.l.b16 %v3927
    %v4203 = vunpack.c.h.b16 %v3927
    %v4204 = vunpack.c.l.b16 %v3928
    %v4205 = vunpack.c.h.b16 %v3928
    %v4206 = vunpack.c.l.b16 %v3929
    %v4207 = vunpack.c.h.b16 %v3929
    %v4208 = vunpack.c.l.b16 %v3930
    %v4209 = vunpack.c.h.b16 %v3930
    %v4210 = vunpack.c.l.b16 %v3931
    %v4211 = vunpack.c.h.b16 %v3931
    %v4212 = vunpack.c.l.b16 %v3932
    %v4213 = vunpack.c.h.b16 %v3932
    %v4214 = vunpack.c.l.b16 %v3933
    %v4215 = vunpack.c.h.b16 %v3933
    %v4216 = vunpack.c.l.b16 %v3934
    %v4217 = vunpack.c.h.b16 %v3934
    %v4218 = vunpack.c.l.b16 %v3935
    %v4219 = vunpack.c.h.b16 %v3935
    %v4220 = vunpack.c.l.b16 %v3936
    %v4221 = vunpack.c.h.b16 %v3936
    %v4222 = vunpack.c.l.b16 %v3937
    %v4223 = vunpack.c.h.b16 %v3937
    %v4224 = vunpack.c.l.b16 %v3938
    %v4225 = vunpack.c.h.b16 %v3938
    %v4226 = vunpack.c.l.b16 %v3939
    %v4227 = vunpack.c.h.b16 %v3939
    %v4228 = vunpack.c.l.b16 %v3940
    %v4229 = vunpack.c.h.b16 %v3940
    %v4230 = vunpack.c.l.b16 %v3941
    %v4231 = vunpack.c.h.b16 %v3941
    %v4232 = vunpack.c.l.b16 %v3942
    %v4233 = vunpack.c.h.b16 %v3942
    %v4234 = vunpack.c.l.b16 %v3943
    %v4235 = vunpack.c.h.b16 %v3943
    %v4236 = vunpack.c.l.b16 %v3944
    %v4237 = vunpack.c.h.b16 %v3944
    %v4238 = vunpack.c.l.b16 %v3945
    %v4239 = vunpack.c.h.b16 %v3945
    %v4240 = vunpack.c.l.b16 %v3946
    %v4241 = vunpack.c.h.b16 %v3946
    %v4242 = vunpack.c.l.b16 %v3947
    %v4243 = vunpack.c.h.b16 %v3947
    %v4244 = vunpack.c.l.b16 %v3948
    %v4245 = vunpack.c.h.b16 %v3948
    %v4246 = vunpack.c.l.b16 %v3949
    %v4247 = vunpack.c.h.b16 %v3949
    %v4248 = vunpack.c.l.b16 %v3950
    %v4249 = vunpack.c.h.b16 %v3950
    %v4250 = vunpack.c.l.b16 %v3951
    %v4251 = vunpack.c.h.b16 %v3951
    %v4252 = vunpack.c.l.b16 %v3952
    %v4253 = vunpack.c.h.b16 %v3952
    %v4254 = vunpack.c.l.b16 %v3953
    %v4255 = vunpack.c.h.b16 %v3953
    %v4256 = vunpack.c.l.b16 %v3954
    %v4257 = vunpack.c.h.b16 %v3954
    %v4258 = vunpack.c.l.b16 %v3955
    %v4259 = vunpack.c.h.b16 %v3955
    %v4260 = vunpack.c.l.b16 %v3956
    %v4261 = vunpack.c.h.b16 %v3956
    %v4262 = vunpack.c.l.b16 %v3957
    %v4263 = vunpack.c.h.b16 %v3957
    %v4264 = vunpack.c.l.b16 %v3958
    %v4265 = vunpack.c.h.b16 %v3958
    %v4266 = vunpack.c.l.b16 %v3959
    %v4267 = vunpack.c.h.b16 %v3959
    %v4268 = vunpack.c.l.b16 %v3960
    %v4269 = vunpack.c.h.b16 %v3960
    %v4270 = vunpack.c.l.b16 %v3961
    %v4271 = vunpack.c.h.b16 %v3961
    %v4272 = vunpack.c.l.b16 %v3962
    %v4273 = vunpack.c.h.b16 %v3962
    %v4274 = vunpack.c.l.b16 %v3963
    %v4275 = vunpack.c.h.b16 %v3963
    %v4276 = vunpack.c.l.b16 %v3964
    %v4277 = vunpack.c.h.b16 %v3964
    %v4278 = vunpack.c.l.b16 %v3965
    %v4279 = vunpack.c.h.b16 %v3965
    %v4280 = vunpack.c.l.b16 %v3966
    %v4281 = vunpack.c.h.b16 %v3966
    %v4282 = vunpack.c.l.b16 %v3967
    %v4283 = vunpack.c.h.b16 %v3967
    %v4284 = vunpack.c.l.b16 %v3968
    %v4285 = vunpack.c.h.b16 %v3968
    %v4286 = vunpack.c.l.b16 %v3969
    %v4287 = vunpack.c.h.b16 %v3969
    %v4288 = vunpack.c.l.b16 %v3970
    %v4289 = vunpack.c.h.b16 %v3970
    %v4290 = vunpack.c.l.b16 %v3971
    %v4291 = vunpack.c.h.b16 %v3971
    %v4292 = vunpack.c.l.b16 %v3972
    %v4293 = vunpack.c.h.b16 %v3972
    %v4294 = vunpack.c.l.b16 %v3973
    %v4295 = vunpack.c.h.b16 %v3973
    %v4296 = vunpack.c.l.b16 %v3974
    %v4297 = vunpack.c.h.b16 %v3974
    %v4298 = vunpack.c.l.b16 %v3975
    %v4299 = vunpack.c.h.b16 %v3975
    %v4300 = vunpack.c.l.b16 %v3976
    %v4301 = vunpack.c.h.b16 %v3976
    %v4302 = vunpack.c.l.b16 %v3977
    %v4303 = vunpack.c.h.b16 %v3977
    %v4304 = vunpack.c.l.b16 %v3978
    %v4305 = vunpack.c.h.b16 %v3978
    %v4306 = vunpack.c.l.b16 %v3979
    %v4307 = vunpack.c.h.b16 %v3979
    %v4308 = vunpack.c.l.b16 %v3980
    %v4309 = vunpack.c.h.b16 %v3980
    %v4310 = vunpack.c.l.b16 %v3981
    %v4311 = vunpack.c.h.b16 %v3981
    %v4312 = vunpack.c.l.b16 %v3982
    %v4313 = vunpack.c.h.b16 %v3982
    %v4314 = vunpack.c.l.b16 %v3983
    %v4315 = vunpack.c.h.b16 %v3983
    %v4316 = vunpack.c.l.b16 %v3984
    %v4317 = vunpack.c.h.b16 %v3984
    %v4318 = vunpack.c.l.b16 %v3985
    %v4319 = vunpack.c.h.b16 %v3985
    %v4320 = vunpack.c.l.b16 %v3986
    %v4321 = vunpack.c.h.b16 %v3986
    %v4322 = vunpack.c.l.b16 %v3987
    %v4323 = vunpack.c.h.b16 %v3987
    %v4324 = vunpack.c.l.b16 %v3988
    %v4325 = vunpack.c.h.b16 %v3988
    %v4326 = vunpack.c.l.b16 %v3989
    %v4327 = vunpack.c.h.b16 %v3989
    %v4328 = vunpack.c.l.b16 %v3990
    %v4329 = vunpack.c.h.b16 %v3990
    %v4330 = vunpack.c.l.b16 %v3991
    %v4331 = vunpack.c.h.b16 %v3991
    %v4332 = vunpack.c.l.b16 %v3992
    %v4333 = vunpack.c.h.b16 %v3992
    %v4334 = vunpack.c.l.b16 %v3993
    %v4335 = vunpack.c.h.b16 %v3993
    %v4336 = vunpack.c.l.b16 %v3994
    %v4337 = vunpack.c.h.b16 %v3994
    %v4338 = vunpack.c.l.b16 %v3995
    %v4339 = vunpack.c.h.b16 %v3995
    %v4340 = vunpack.c.l.b16 %v3996
    %v4341 = vunpack.c.h.b16 %v3996
    %v4342 = vunpack.c.l.b16 %v3997
    %v4343 = vunpack.c.h.b16 %v3997
    %v4344 = vunpack.c.l.b16 %v3998
    %v4345 = vunpack.c.h.b16 %v3998
    %v4346 = vunpack.c.l.b16 %v3999
    %v4347 = vunpack.c.h.b16 %v3999
    %v4348 = vunpack.c.l.b16 %v4000
    %v4349 = vunpack.c.h.b16 %v4000
    %v4350 = vunpack.c.l.b16 %v4001
    %v4351 = vunpack.c.h.b16 %v4001
    %v4352 = vunpack.c.l.b16 %v4002
    %v4353 = vunpack.c.h.b16 %v4002
    %v4354 = vunpack.c.l.b16 %v4003
    %v4355 = vunpack.c.h.b16 %v4003
    %v4356 = vunpack.c.l.b16 %v4004
    %v4357 = vunpack.c.h.b16 %v4004
    %v4358 = vunpack.c.l.b16 %v4005
    %v4359 = vunpack.c.h.b16 %v4005
    %v4360 = vunpack.c.l.b16 %v4006
    %v4361 = vunpack.c.h.b16 %v4006
    %v4362 = vunpack.c.l.b16 %v4007
    %v4363 = vunpack.c.h.b16 %v4007
    %v4364 = vunpack.c.l.b16 %v4008
    %v4365 = vunpack.c.h.b16 %v4008
    %v4366 = vunpack.c.l.b16 %v4009
    %v4367 = vunpack.c.h.b16 %v4009
    %v4368 = vunpack.c.l.b16 %v4010
    %v4369 = vunpack.c.h.b16 %v4010
    %v4370 = vunpack.c.l.b16 %v4011
    %v4371 = vunpack.c.h.b16 %v4011
    %v4372 = vunpack.c.l.b16 %v4012
    %v4373 = vunpack.c.h.b16 %v4012
    %v4374 = vunpack.c.l.b16 %v4013
    %v4375 = vunpack.c.h.b16 %v4013
    %v4376 = vunpack.c.l.b16 %v4014
    %v4377 = vunpack.c.h.b16 %v4014
    %v4378 = vunpack.c.l.b16 %v4015
    %v4379 = vunpack.c.h.b16 %v4015
    %v4380 = vunpack.c.l.b16 %v4016
    %v4381 = vunpack.c.h.b16 %v4016
    %v4382 = vunpack.c.l.b16 %v4017
    %v4383 = vunpack.c.h.b16 %v4017
    %v4384 = vunpack.c.l.b16 %v4018
    %v4385 = vunpack.c.h.b16 %v4018
    %v4386 = vunpack.c.l.b16 %v4019
    %v4387 = vunpack.c.h.b16 %v4019
    %v4388 = vunpack.c.l.b16 %v4020
    %v4389 = vunpack.c.h.b16 %v4020
    %v4390 = vunpack.c.l.b16 %v4021
    %v4391 = vunpack.c.h.b16 %v4021
    %v4392 = vunpack.c.l.b16 %v4022
    %v4393 = vunpack.c.h.b16 %v4022
    %v4394 = vunpack.c.l.b16 %v4023
    %v4395 = vunpack.c.h.b16 %v4023
    %v4396 = vunpack.c.l.b16 %v4024
    %v4397 = vunpack.c.h.b16 %v4024
    %v4398 = vunpack.c.l.b16 %v4025
    %v4399 = vunpack.c.h.b16 %v4025
    %v4400 = vunpack.c.l.b16 %v4026
    %v4401 = vunpack.c.h.b16 %v4026
    %v4402 = vunpack.c.l.b16 %v4027
    %v4403 = vunpack.c.h.b16 %v4027
    %v4404 = vunpack.c.l.b16 %v4028
    %v4405 = vunpack.c.h.b16 %v4028
    %v4406 = vunpack.c.l.b16 %v4029
    %v4407 = vunpack.c.h.b16 %v4029
    %v4408 = vunpack.c.l.b16 %v4030
    %v4409 = vunpack.c.h.b16 %v4030
    %v4410 = vunpack.c.l.b16 %v4031
    %v4411 = vunpack.c.h.b16 %v4031
    %v4412 = vunpack.c.l.b16 %v4032
    %v4413 = vunpack.c.h.b16 %v4032
    %v4414 = vunpack.c.l.b16 %v4033
    %v4415 = vunpack.c.h.b16 %v4033
    %v4416 = vunpack.c.l.b16 %v4034
    %v4417 = vunpack.c.h.b16 %v4034
    %v4418 = vunpack.c.l.b16 %v4035
    %v4419 = vunpack.c.h.b16 %v4035
    %v4420 = vpack.c.b16 %v4172, %v4164
    %v4421 = vpack.c.b16 %v4173, %v4165
    %v4422 = vpack.c.b16 %v4174, %v4166
    %v4423 = vpack.c.b16 %v4175, %v4167
    %v4424 = vpack.c.b16 %v4176, %v4168
    %v4425 = vpack.c.b16 %v4177, %v4169
    %v4426 = vpack.c.b16 %v4178, %v4170
    %v4427 = vpack.c.b16 %v4179, %v4171
    %v4428 = vpack.c.b16 %v4188, %v4180
    %v4429 = vpack.c.b16 %v4189, %v4181
    %v4430 = vpack.c.b16 %v4190, %v4182
    %v4431 = vpack.c.b16 %v4191, %v4183
    %v4432 = vpack.c.b16 %v4192, %v4184
    %v4433 = vpack.c.b16 %v4193, %v4185
    %v4434 = vpack.c.b16 %v4194, %v4186
    %v4435 = vpack.c.b16 %v4195, %v4187
    %v4436 = vpack.c.b16 %v4204, %v4196
    %v4437 = vpack.c.b16 %v4205, %v4197
    %v4438 = vpack.c.b16 %v4206, %v4198
    %v4439 = vpack.c.b16 %v4207, %v4199
    %v4440 = vpack.c.b16 %v4208, %v4200
    %v4441 = vpack.c.b16 %v4209, %v4201
    %v4442 = vpack.c.b16 %v4210, %v4202
    %v4443 = vpack.c.b16 %v4211, %v4203
    %v4444 = vpack.c.b16 %v4220, %v4212
    %v4445 = vpack.c.b16 %v4221, %v4213
    %v4446 = vpack.c.b16 %v4222, %v4214
    %v4447 = vpack.c.b16 %v4223, %v4215
    %v4448 = vpack.c.b16 %v4224, %v4216
    %v4449 = vpack.c.b16 %v4225, %v4217
    %v4450 = vpack.c.b16 %v4226, %v4218
    %v4451 = vpack.c.b16 %v4227, %v4219
    %v4452 = vpack.c.b16 %v4236, %v4228
    %v4453 = vpack.c.b16 %v4237, %v4229
    %v4454 = vpack.c.b16 %v4238, %v4230
    %v4455 = vpack.c.b16 %v4239, %v4231
    %v4456 = vpack.c.b16 %v4240, %v4232
    %v4457 = vpack.c.b16 %v4241, %v4233
    %v4458 = vpack.c.b16 %v4242, %v4234
    %v4459 = vpack.c.b16 %v4243, %v4235
    %v4460 = vpack.c.b16 %v4252, %v4244
    %v4461 = vpack.c.b16 %v4253, %v4245
    %v4462 = vpack.c.b16 %v4254, %v4246
    %v4463 = vpack.c.b16 %v4255, %v4247
    %v4464 = vpack.c.b16 %v4256, %v4248
    %v4465 = vpack.c.b16 %v4257, %v4249
    %v4466 = vpack.c.b16 %v4258, %v4250
    %v4467 = vpack.c.b16 %v4259, %v4251
    %v4468 = vpack.c.b16 %v4268, %v4260
    %v4469 = vpack.c.b16 %v4269, %v4261
    %v4470 = vpack.c.b16 %v4270, %v4262
    %v4471 = vpack.c.b16 %v4271, %v4263
    %v4472 = vpack.c.b16 %v4272, %v4264
    %v4473 = vpack.c.b16 %v4273, %v4265
    %v4474 = vpack.c.b16 %v4274, %v4266
    %v4475 = vpack.c.b16 %v4275, %v4267
    %v4476 = vpack.c.b16 %v4284, %v4276
    %v4477 = vpack.c.b16 %v4285, %v4277
    %v4478 = vpack.c.b16 %v4286, %v4278
    %v4479 = vpack.c.b16 %v4287, %v4279
    %v4480 = vpack.c.b16 %v4288, %v4280
    %v4481 = vpack.c.b16 %v4289, %v4281
    %v4482 = vpack.c.b16 %v4290, %v4282
    %v4483 = vpack.c.b16 %v4291, %v4283
    %v4484 = vpack.c.b16 %v4300, %v4292
    %v4485 = vpack.c.b16 %v4301, %v4293
    %v4486 = vpack.c.b16 %v4302, %v4294
    %v4487 = vpack.c.b16 %v4303, %v4295
    %v4488 = vpack.c.b16 %v4304, %v4296
    %v4489 = vpack.c.b16 %v4305, %v4297
    %v4490 = vpack.c.b16 %v4306, %v4298
    %v4491 = vpack.c.b16 %v4307, %v4299
    %v4492 = vpack.c.b16 %v4316, %v4308
    %v4493 = vpack.c.b16 %v4317, %v4309
    %v4494 = vpack.c.b16 %v4318, %v4310
    %v4495 = vpack.c.b16 %v4319, %v4311
    %v4496 = vpack.c.b16 %v4320, %v4312
    %v4497 = vpack.c.b16 %v4321, %v4313
    %v4498 = vpack.c.b16 %v4322, %v4314
    %v4499 = vpack.c.b16 %v4323, %v4315
    %v4500 = vpack.c.b16 %v4332, %v4324
    %v4501 = vpack.c.b16 %v4333, %v4325
    %v4502 = vpack.c.b16 %v4334, %v4326
    %v4503 = vpack.c.b16 %v4335, %v4327
    %v4504 = vpack.c.b16 %v4336, %v4328
    %v4505 = vpack.c.b16 %v4337, %v4329
    %v4506 = vpack.c.b16 %v4338, %v4330
    %v4507 = vpack.c.b16 %v4339, %v4331
    %v4508 = vpack.c.b16 %v4348, %v4340
    %v4509 = vpack.c.b16 %v4349, %v4341
    %v4510 = vpack.c.b16 %v4350, %v4342
    %v4511 = vpack.c.b16 %v4351, %v4343
    %v4512 = vpack.c.b16 %v4352, %v4344
    %v4513 = vpack.c.b16 %v4353, %v4345
    %v4514 = vpack.c.b16 %v4354, %v4346
    %v4515 = vpack.c.b16 %v4355, %v4347
    %v4516 = vpack.c.b16 %v4364, %v4356
    %v4517 = vpack.c.b16 %v4365, %v4357
    %v4518 = vpack.c.b16 %v4366, %v4358
    %v4519 = vpack.c.b16 %v4367, %v4359
    %v4520 = vpack.c.b16 %v4368, %v4360
    %v4521 = vpack.c.b16 %v4369, %v4361
    %v4522 = vpack.c.b16 %v4370, %v4362
    %v4523 = vpack.c.b16 %v4371, %v4363
    %v4524 = vpack.c.b16 %v4380, %v4372
    %v4525 = vpack.c.b16 %v4381, %v4373
    %v4526 = vpack.c.b16 %v4382, %v4374
    %v4527 = vpack.c.b16 %v4383, %v4375
    %v4528 = vpack.c.b16 %v4384, %v4376
    %v4529 = vpack.c.b16 %v4385, %v4377
    %v4530 = vpack.c.b16 %v4386, %v4378
    %v4531 = vpack.c.b16 %v4387, %v4379
    %v4532 = vpack.c.b16 %v4396, %v4388
    %v4533 = vpack.c.b16 %v4397, %v4389
    %v4534 = vpack.c.b16 %v4398, %v4390
    %v4535 = vpack.c.b16 %v4399, %v4391
    %v4536 = vpack.c.b16 %v4400, %v4392
    %v4537 = vpack.c.b16 %v4401, %v4393
    %v4538 = vpack.c.b16 %v4402, %v4394
    %v4539 = vpack.c.b16 %v4403, %v4395
    %v4540 = vpack.c.b16 %v4412, %v4404
    %v4541 = vpack.c.b16 %v4413, %v4405
    %v4542 = vpack.c.b16 %v4414, %v4406
    %v4543 = vpack.c.b16 %v4415, %v4407
    %v4544 = vpack.c.b16 %v4416, %v4408
    %v4545 = vpack.c.b16 %v4417, %v4409
    %v4546 = vpack.c.b16 %v4418, %v4410
    %v4547 = vpack.c.b16 %v4419, %v4411
    %4676 = vmatprep.subr.bf16.mxu0 %v4477
    %4677 = vmatpush1.bf16.msra.mxu0 %v4476
    %4678 = vmatprep.subr.bf16.mxu0 %v4469
    %4679 = vmatpush1.bf16.msra.mxu0 %v4468
    %4680 = vmatprep.subr.bf16.mxu0 %v4461
    %4681 = vmatpush1.bf16.msra.mxu0 %v4460
    %4682 = vmatprep.subr.bf16.mxu0 %v4453
    %4683 = vmatpush1.bf16.msra.mxu0 %v4452
    %4684 = vmatprep.subr.bf16.mxu0 %v4445
    %4685 = vmatpush1.bf16.msra.mxu0 %v4444
    %4686 = vmatprep.subr.bf16.mxu0 %v4437
    %4687 = vmatpush1.bf16.msra.mxu0 %v4436
    %4688 = vmatprep.subr.bf16.mxu0 %v4429
    %4689 = vmatpush1.bf16.msra.mxu0 %v4428
    %4690 = vmatprep.subr.bf16.mxu0 %v4421
    %4691 = vmatpush1.bf16.msra.mxu0 %v4420
    %4692 = vmatprep.subr.bf16.mxu0 %v4541
    %4693 = vmatpush2.bf16.msra.mxu0 %v4540
    %4694 = vmatprep.subr.bf16.mxu0 %v4533
    %4695 = vmatpush2.bf16.msra.mxu0 %v4532
    %4696 = vmatprep.subr.bf16.mxu0 %v4525
    %4697 = vmatpush2.bf16.msra.mxu0 %v4524
    %4698 = vmatprep.subr.bf16.mxu0 %v4517
    %4699 = vmatpush2.bf16.msra.mxu0 %v4516
    %4700 = vmatprep.subr.bf16.mxu0 %v4509
    %4701 = vmatpush2.bf16.msra.mxu0 %v4508
    %4702 = vmatprep.subr.bf16.mxu0 %v4501
    %4703 = vmatpush2.bf16.msra.mxu0 %v4500
    %4704 = vmatprep.subr.bf16.mxu0 %v4493
    %4705 = vmatpush2.bf16.msra.mxu0 %v4492
    %4706 = vmatprep.subr.bf16.mxu0 %v4485
    %4707 = vmatpush2.bf16.msra.mxu0 %v4484
    %4708 = vmatprep.mubr.bf16.mxu0 %v3907
    %4709 = vmatmul.mubr.bf16.gmra.mxu0 %v3906
    %v4710 = vpop.f32.mrf.mxu0
    %v4711 = vadd.f32 0.0, %v4710
    %v4712 = vpop.f32.mrf.mxu0
    %v4713 = vadd.f32 0.0, %v4712
    %v4714 = vpop.f32.mrf.mxu0
    %v4715 = vpop.f32.mrf.mxu0
    %4716 = vdwg.mxu0
    %4717 = vmatprep.subr.bf16.mxu0 %v4479
    %4718 = vmatpush1.bf16.msra.mxu0 %v4478
    %4719 = vmatprep.subr.bf16.mxu0 %v4471
    %4720 = vmatpush1.bf16.msra.mxu0 %v4470
    %4721 = vmatprep.subr.bf16.mxu0 %v4463
    %4722 = vmatpush1.bf16.msra.mxu0 %v4462
    %4723 = vmatprep.subr.bf16.mxu0 %v4455
    %4724 = vmatpush1.bf16.msra.mxu0 %v4454
    %4725 = vmatprep.subr.bf16.mxu0 %v4447
    %4726 = vmatpush1.bf16.msra.mxu0 %v4446
    %4727 = vmatprep.subr.bf16.mxu0 %v4439
    %4728 = vmatpush1.bf16.msra.mxu0 %v4438
    %4729 = vmatprep.subr.bf16.mxu0 %v4431
    %4730 = vmatpush1.bf16.msra.mxu0 %v4430
    %4731 = vmatprep.subr.bf16.mxu0 %v4423
    %4732 = vmatpush1.bf16.msra.mxu0 %v4422
    %4733 = vmatprep.subr.bf16.mxu0 %v4543
    %4734 = vmatpush2.bf16.msra.mxu0 %v4542
    %4735 = vmatprep.subr.bf16.mxu0 %v4535
    %4736 = vmatpush2.bf16.msra.mxu0 %v4534
    %4737 = vmatprep.subr.bf16.mxu0 %v4527
    %4738 = vmatpush2.bf16.msra.mxu0 %v4526
    %4739 = vmatprep.subr.bf16.mxu0 %v4519
    %4740 = vmatpush2.bf16.msra.mxu0 %v4518
    %4741 = vmatprep.subr.bf16.mxu0 %v4511
    %4742 = vmatpush2.bf16.msra.mxu0 %v4510
    %4743 = vmatprep.subr.bf16.mxu0 %v4503
    %4744 = vmatpush2.bf16.msra.mxu0 %v4502
    %4745 = vmatprep.subr.bf16.mxu0 %v4495
    %4746 = vmatpush2.bf16.msra.mxu0 %v4494
    %4747 = vmatprep.subr.bf16.mxu0 %v4487
    %4748 = vmatpush2.bf16.msra.mxu0 %v4486
    %4749 = vmatprep.mubr.bf16.mxu0 %v3907
    %4750 = vmatmul.mubr.bf16.gmra.mxu0 %v3906
    %v4751 = vpop.f32.mrf.mxu0
    %v4752 = vadd.f32 0.0, %v4751
    %v4753 = vpop.f32.mrf.mxu0
    %v4754 = vadd.f32 0.0, %v4753
    %v4755 = vpop.f32.mrf.mxu0
    %v4756 = vpop.f32.mrf.mxu0
    %4757 = vdwg.mxu0
    %4758 = vmatprep.subr.bf16.mxu0 %v4481
    %4759 = vmatpush1.bf16.msra.mxu0 %v4480
    %4760 = vmatprep.subr.bf16.mxu0 %v4473
    %4761 = vmatpush1.bf16.msra.mxu0 %v4472
    %4762 = vmatprep.subr.bf16.mxu0 %v4465
    %4763 = vmatpush1.bf16.msra.mxu0 %v4464
    %4764 = vmatprep.subr.bf16.mxu0 %v4457
    %4765 = vmatpush1.bf16.msra.mxu0 %v4456
    %4766 = vmatprep.subr.bf16.mxu0 %v4449
    %4767 = vmatpush1.bf16.msra.mxu0 %v4448
    %4768 = vmatprep.subr.bf16.mxu0 %v4441
    %4769 = vmatpush1.bf16.msra.mxu0 %v4440
    %4770 = vmatprep.subr.bf16.mxu0 %v4433
    %4771 = vmatpush1.bf16.msra.mxu0 %v4432
    %4772 = vmatprep.subr.bf16.mxu0 %v4425
    %4773 = vmatpush1.bf16.msra.mxu0 %v4424
    %4774 = vmatprep.subr.bf16.mxu0 %v4545
    %4775 = vmatpush2.bf16.msra.mxu0 %v4544
    %4776 = vmatprep.subr.bf16.mxu0 %v4537
    %4777 = vmatpush2.bf16.msra.mxu0 %v4536
    %4778 = vmatprep.subr.bf16.mxu0 %v4529
    %4779 = vmatpush2.bf16.msra.mxu0 %v4528
    %4780 = vmatprep.subr.bf16.mxu0 %v4521
    %4781 = vmatpush2.bf16.msra.mxu0 %v4520
    %4782 = vmatprep.subr.bf16.mxu0 %v4513
    %4783 = vmatpush2.bf16.msra.mxu0 %v4512
    %4784 = vmatprep.subr.bf16.mxu0 %v4505
    %4785 = vmatpush2.bf16.msra.mxu0 %v4504
    %4786 = vmatprep.subr.bf16.mxu0 %v4497
    %4787 = vmatpush2.bf16.msra.mxu0 %v4496
    %4788 = vmatprep.subr.bf16.mxu0 %v4489
    %4789 = vmatpush2.bf16.msra.mxu0 %v4488
    %4790 = vmatprep.mubr.bf16.mxu0 %v3907
    %4791 = vmatmul.mubr.bf16.gmra.mxu0 %v3906
    %v4792 = vpop.f32.mrf.mxu0
    %v4793 = vadd.f32 0.0, %v4792
    %v4794 = vpop.f32.mrf.mxu0
    %v4795 = vadd.f32 0.0, %v4794
    %v4796 = vpop.f32.mrf.mxu0
    %v4797 = vpop.f32.mrf.mxu0
    %4798 = vdwg.mxu0
    %4799 = vmatprep.subr.bf16.mxu0 %v4483
    %4800 = vmatpush1.bf16.msra.mxu0 %v4482
    %4801 = vmatprep.subr.bf16.mxu0 %v4475
    %4802 = vmatpush1.bf16.msra.mxu0 %v4474
    %4803 = vmatprep.subr.bf16.mxu0 %v4467
    %4804 = vmatpush1.bf16.msra.mxu0 %v4466
    %4805 = vmatprep.subr.bf16.mxu0 %v4459
    %4806 = vmatpush1.bf16.msra.mxu0 %v4458
    %4807 = vmatprep.subr.bf16.mxu0 %v4451
    %4808 = vmatpush1.bf16.msra.mxu0 %v4450
    %4809 = vmatprep.subr.bf16.mxu0 %v4443
    %4810 = vmatpush1.bf16.msra.mxu0 %v4442
    %4811 = vmatprep.subr.bf16.mxu0 %v4435
    %4812 = vmatpush1.bf16.msra.mxu0 %v4434
    %4813 = vmatprep.subr.bf16.mxu0 %v4427
    %4814 = vmatpush1.bf16.msra.mxu0 %v4426
    %4815 = vmatprep.subr.bf16.mxu0 %v4547
    %4816 = vmatpush2.bf16.msra.mxu0 %v4546
    %4817 = vmatprep.subr.bf16.mxu0 %v4539
    %4818 = vmatpush2.bf16.msra.mxu0 %v4538
    %4819 = vmatprep.subr.bf16.mxu0 %v4531
    %4820 = vmatpush2.bf16.msra.mxu0 %v4530
    %4821 = vmatprep.subr.bf16.mxu0 %v4523
    %4822 = vmatpush2.bf16.msra.mxu0 %v4522
    %4823 = vmatprep.subr.bf16.mxu0 %v4515
    %4824 = vmatpush2.bf16.msra.mxu0 %v4514
    %4825 = vmatprep.subr.bf16.mxu0 %v4507
    %4826 = vmatpush2.bf16.msra.mxu0 %v4506
    %4827 = vmatprep.subr.bf16.mxu0 %v4499
    %4828 = vmatpush2.bf16.msra.mxu0 %v4498
    %4829 = vmatprep.subr.bf16.mxu0 %v4491
    %4830 = vmatpush2.bf16.msra.mxu0 %v4490
    %4831 = vmatprep.mubr.bf16.mxu0 %v3907
    %4832 = vmatmul.mubr.bf16.gmra.mxu0 %v3906
    %v4833 = vpop.f32.mrf.mxu0
    %v4834 = vadd.f32 0.0, %v4833
    %v4835 = vpop.f32.mrf.mxu0
    %v4836 = vadd.f32 0.0, %v4835
    %v4837 = vpop.f32.mrf.mxu0
    %v4838 = vpop.f32.mrf.mxu0
    %4839 = vdwg.mxu0
    %s4840 = scalar_lea.vmem [#allocation3], 3
    %v4841 = vld [vmem:[%s4840] ss:$8 sm:$0xf]
    %v4846 = vcombine.low %v4711, %v4713
    %v4847 = vcombine.low %v4752, %v4754
    %v4849 = vunpack.c.l.s4 1966171168
    %v4850 = vunpack.c.0.s8 %v4849
    %v4851 = vlaneseq
    %v4852 = vshrl.u32 %v4851, 7
    %v4853 = vsub.s32 %v4850, %v4852
    %v4854 = vrot.slane %v4846, %v4853
    %v4856 = vunpack.c.l.s4 1966171168
    %v4857 = vunpack.c.0.s8 %v4856
    %v4858 = vlaneseq
    %v4859 = vshrl.u32 %v4858, 7
    %v4860 = vsub.s32 %v4857, %v4859
    %v4861 = vrot.slane %v4847, %v4860
    %v4862 = vcombine.low %v4854, %v4861
    %v4864 = vunpack.c.l.s4 1966171168
    %v4865 = vunpack.c.0.s8 %v4864
    %v4866 = vlaneseq
    %v4867 = vshrl.u32 %v4866, 7
    %v4868 = vsub.s32 %v4865, %v4867
    %v4869 = vrot.slane %v4862, %v4868
    %v4871 = vadd.f32 %v4841, %v4869
    %s4872 = scalar_lea.vmem [#allocation3], 36
    %v4873 = vld [vmem:[%s4872] ss:$8 sm:$0xf]
    %v4878 = vcombine.low %v4793, %v4795
    %v4879 = vcombine.low %v4834, %v4836
    %v4881 = vunpack.c.l.s4 1966171168
    %v4882 = vunpack.c.0.s8 %v4881
    %v4883 = vlaneseq
    %v4884 = vshrl.u32 %v4883, 7
    %v4885 = vsub.s32 %v4882, %v4884
    %v4886 = vrot.slane %v4878, %v4885
    %v4888 = vunpack.c.l.s4 1966171168
    %v4889 = vunpack.c.0.s8 %v4888
    %v4890 = vlaneseq
    %v4891 = vshrl.u32 %v4890, 7
    %v4892 = vsub.s32 %v4889, %v4891
    %v4893 = vrot.slane %v4879, %v4892
    %v4894 = vcombine.low %v4886, %v4893
    %v4896 = vunpack.c.l.s4 1966171168
    %v4897 = vunpack.c.0.s8 %v4896
    %v4898 = vlaneseq
    %v4899 = vshrl.u32 %v4898, 7
    %v4900 = vsub.s32 %v4897, %v4899
    %v4901 = vrot.slane %v4894, %v4900
    %v4903 = vadd.f32 %v4873, %v4901
    %v4904 = vxor.u32 %v4871, 2147483648
    %v4905 = vmul.f32 %v4904, 1.442695
    %v4906 = vpow.pop %v4905
    %v4907 = vadd.f32 %v4906, 1.0
    %v4908 = vrcp.pop %v4907
    %v4909 = vmul.f32 1.0, %v4908
    %v4911 = vrot.slane %v4871, 1
    %v4913 = vxor.u32 %v4911, 2147483648
    %v4914 = vmul.f32 %v4913, 1.442695
    %v4915 = vpow.pop %v4914
    %v4916 = vadd.f32 %v4915, 1.0
    %v4917 = vrcp.pop %v4916
    %v4918 = vmul.f32 1.0, %v4917
    %v4919 = vrot.slane %v4871, 2
    %v4921 = vtanh.pop %v4919
    %v4922 = vrot.slane %v4871, 3
    %v4924 = vxor.u32 %v4922, 2147483648
    %v4925 = vmul.f32 %v4924, 1.442695
    %v4926 = vpow.pop %v4925
    %v4927 = vadd.f32 %v4926, 1.0
    %v4928 = vrcp.pop %v4927
    %v4929 = vmul.f32 1.0, %v4928
    %v4930 = vmul.f32 %v4918, %v3870
    %v4931 = vmul.f32 %v4909, %v4921
    %v4932 = vadd.f32 %v4930, %v4931
    %v4933 = vtanh.pop %v4932
    %v4934 = vmul.f32 %v4929, %v4933
    %v4935 = vxor.u32 %v4903, 2147483648
    %v4936 = vmul.f32 %v4935, 1.442695
    %v4937 = vpow.pop %v4936
    %v4938 = vadd.f32 %v4937, 1.0
    %v4939 = vrcp.pop %v4938
    %v4940 = vmul.f32 1.0, %v4939
    %v4942 = vrot.slane %v4903, 1
    %v4944 = vxor.u32 %v4942, 2147483648
    %v4945 = vmul.f32 %v4944, 1.442695
    %v4946 = vpow.pop %v4945
    %v4947 = vadd.f32 %v4946, 1.0
    %v4948 = vrcp.pop %v4947
    %v4949 = vmul.f32 1.0, %v4948
    %v4950 = vrot.slane %v4903, 2
    %v4952 = vtanh.pop %v4950
    %v4953 = vrot.slane %v4903, 3
    %v4955 = vxor.u32 %v4953, 2147483648
    %v4956 = vmul.f32 %v4955, 1.442695
    %v4957 = vpow.pop %v4956
    %v4958 = vadd.f32 %v4957, 1.0
    %v4959 = vrcp.pop %v4958
    %v4960 = vmul.f32 1.0, %v4959
    %v4961 = vmul.f32 %v4949, %v3901
    %v4962 = vmul.f32 %v4940, %v4952
    %v4963 = vadd.f32 %v4961, %v4962
    %v4964 = vtanh.pop %v4963
    %v4965 = vmul.f32 %v4960, %v4964
    %4966 = vst [vmem:[#allocation14 + $0x3] sm:$0x1] %v4934
    %4967 = vst [vmem:[#allocation14 + $0xc] sm:$0x1] %v4965
    %v4968 = vpack.c.bf16 %v4934, %v4934
    %v4969 = vpack.c.bf16 %v4965, %v4965
    %v4970 = vld [vmem:[#allocation11] sm:$0xff]
    %v4971 = vld [vmem:[#allocation11 + $0x8] sm:$0xff]
    %v4972 = vld [vmem:[#allocation11 + $0x10] sm:$0xff]
    %v4973 = vld [vmem:[#allocation11 + $0x18] sm:$0xff]
    %v4974 = vld [vmem:[#allocation11 + $0x20] sm:$0xff]
    %v4975 = vld [vmem:[#allocation11 + $0x28] sm:$0xff]
    %v4976 = vld [vmem:[#allocation11 + $0x30] sm:$0xff]
    %v4977 = vld [vmem:[#allocation11 + $0x38] sm:$0xff]
    %v4978 = vld [vmem:[#allocation11 + $0x40] sm:$0xff]
    %v4979 = vld [vmem:[#allocation11 + $0x48] sm:$0xff]
    %v4980 = vld [vmem:[#allocation11 + $0x50] sm:$0xff]
    %v4981 = vld [vmem:[#allocation11 + $0x58] sm:$0xff]
    %v4982 = vld [vmem:[#allocation11 + $0x60] sm:$0xff]
    %v4983 = vld [vmem:[#allocation11 + $0x68] sm:$0xff]
    %v4984 = vld [vmem:[#allocation11 + $0x70] sm:$0xff]
    %v4985 = vld [vmem:[#allocation11 + $0x78] sm:$0xff]
    %v4986 = vld [vmem:[#allocation11 + $0x80] sm:$0xff]
    %v4987 = vld [vmem:[#allocation11 + $0x88] sm:$0xff]
    %v4988 = vld [vmem:[#allocation11 + $0x90] sm:$0xff]
    %v4989 = vld [vmem:[#allocation11 + $0x98] sm:$0xff]
    %v4990 = vld [vmem:[#allocation11 + $0xa0] sm:$0xff]
    %v4991 = vld [vmem:[#allocation11 + $0xa8] sm:$0xff]
    %v4992 = vld [vmem:[#allocation11 + $0xb0] sm:$0xff]
    %v4993 = vld [vmem:[#allocation11 + $0xb8] sm:$0xff]
    %v4994 = vld [vmem:[#allocation11 + $0xc0] sm:$0xff]
    %v4995 = vld [vmem:[#allocation11 + $0xc8] sm:$0xff]
    %v4996 = vld [vmem:[#allocation11 + $0xd0] sm:$0xff]
    %v4997 = vld [vmem:[#allocation11 + $0xd8] sm:$0xff]
    %v4998 = vld [vmem:[#allocation11 + $0xe0] sm:$0xff]
    %v4999 = vld [vmem:[#allocation11 + $0xe8] sm:$0xff]
    %v5000 = vld [vmem:[#allocation11 + $0xf0] sm:$0xff]
    %v5001 = vld [vmem:[#allocation11 + $0xf8] sm:$0xff]
    %v5002 = vld [vmem:[#allocation11 + $0x100] sm:$0xff]
    %v5003 = vld [vmem:[#allocation11 + $0x108] sm:$0xff]
    %v5004 = vld [vmem:[#allocation11 + $0x110] sm:$0xff]
    %v5005 = vld [vmem:[#allocation11 + $0x118] sm:$0xff]
    %v5006 = vld [vmem:[#allocation11 + $0x120] sm:$0xff]
    %v5007 = vld [vmem:[#allocation11 + $0x128] sm:$0xff]
    %v5008 = vld [vmem:[#allocation11 + $0x130] sm:$0xff]
    %v5009 = vld [vmem:[#allocation11 + $0x138] sm:$0xff]
    %v5010 = vld [vmem:[#allocation11 + $0x140] sm:$0xff]
    %v5011 = vld [vmem:[#allocation11 + $0x148] sm:$0xff]
    %v5012 = vld [vmem:[#allocation11 + $0x150] sm:$0xff]
    %v5013 = vld [vmem:[#allocation11 + $0x158] sm:$0xff]
    %v5014 = vld [vmem:[#allocation11 + $0x160] sm:$0xff]
    %v5015 = vld [vmem:[#allocation11 + $0x168] sm:$0xff]
    %v5016 = vld [vmem:[#allocation11 + $0x170] sm:$0xff]
    %v5017 = vld [vmem:[#allocation11 + $0x178] sm:$0xff]
    %v5018 = vld [vmem:[#allocation11 + $0x180] sm:$0xff]
    %v5019 = vld [vmem:[#allocation11 + $0x188] sm:$0xff]
    %v5020 = vld [vmem:[#allocation11 + $0x190] sm:$0xff]
    %v5021 = vld [vmem:[#allocation11 + $0x198] sm:$0xff]
    %v5022 = vld [vmem:[#allocation11 + $0x1a0] sm:$0xff]
    %v5023 = vld [vmem:[#allocation11 + $0x1a8] sm:$0xff]
    %v5024 = vld [vmem:[#allocation11 + $0x1b0] sm:$0xff]
    %v5025 = vld [vmem:[#allocation11 + $0x1b8] sm:$0xff]
    %v5026 = vld [vmem:[#allocation11 + $0x1c0] sm:$0xff]
    %v5027 = vld [vmem:[#allocation11 + $0x1c8] sm:$0xff]
    %v5028 = vld [vmem:[#allocation11 + $0x1d0] sm:$0xff]
    %v5029 = vld [vmem:[#allocation11 + $0x1d8] sm:$0xff]
    %v5030 = vld [vmem:[#allocation11 + $0x1e0] sm:$0xff]
    %v5031 = vld [vmem:[#allocation11 + $0x1e8] sm:$0xff]
    %v5032 = vld [vmem:[#allocation11 + $0x1f0] sm:$0xff]
    %v5033 = vld [vmem:[#allocation11 + $0x1f8] sm:$0xff]
    %v5034 = vld [vmem:[#allocation11 + $0x200] sm:$0xff]
    %v5035 = vld [vmem:[#allocation11 + $0x208] sm:$0xff]
    %v5036 = vld [vmem:[#allocation11 + $0x210] sm:$0xff]
    %v5037 = vld [vmem:[#allocation11 + $0x218] sm:$0xff]
    %v5038 = vld [vmem:[#allocation11 + $0x220] sm:$0xff]
    %v5039 = vld [vmem:[#allocation11 + $0x228] sm:$0xff]
    %v5040 = vld [vmem:[#allocation11 + $0x230] sm:$0xff]
    %v5041 = vld [vmem:[#allocation11 + $0x238] sm:$0xff]
    %v5042 = vld [vmem:[#allocation11 + $0x240] sm:$0xff]
    %v5043 = vld [vmem:[#allocation11 + $0x248] sm:$0xff]
    %v5044 = vld [vmem:[#allocation11 + $0x250] sm:$0xff]
    %v5045 = vld [vmem:[#allocation11 + $0x258] sm:$0xff]
    %v5046 = vld [vmem:[#allocation11 + $0x260] sm:$0xff]
    %v5047 = vld [vmem:[#allocation11 + $0x268] sm:$0xff]
    %v5048 = vld [vmem:[#allocation11 + $0x270] sm:$0xff]
    %v5049 = vld [vmem:[#allocation11 + $0x278] sm:$0xff]
    %v5050 = vld [vmem:[#allocation11 + $0x280] sm:$0xff]
    %v5051 = vld [vmem:[#allocation11 + $0x288] sm:$0xff]
    %v5052 = vld [vmem:[#allocation11 + $0x290] sm:$0xff]
    %v5053 = vld [vmem:[#allocation11 + $0x298] sm:$0xff]
    %v5054 = vld [vmem:[#allocation11 + $0x2a0] sm:$0xff]
    %v5055 = vld [vmem:[#allocation11 + $0x2a8] sm:$0xff]
    %v5056 = vld [vmem:[#allocation11 + $0x2b0] sm:$0xff]
    %v5057 = vld [vmem:[#allocation11 + $0x2b8] sm:$0xff]
    %v5058 = vld [vmem:[#allocation11 + $0x2c0] sm:$0xff]
    %v5059 = vld [vmem:[#allocation11 + $0x2c8] sm:$0xff]
    %v5060 = vld [vmem:[#allocation11 + $0x2d0] sm:$0xff]
    %v5061 = vld [vmem:[#allocation11 + $0x2d8] sm:$0xff]
    %v5062 = vld [vmem:[#allocation11 + $0x2e0] sm:$0xff]
    %v5063 = vld [vmem:[#allocation11 + $0x2e8] sm:$0xff]
    %v5064 = vld [vmem:[#allocation11 + $0x2f0] sm:$0xff]
    %v5065 = vld [vmem:[#allocation11 + $0x2f8] sm:$0xff]
    %v5066 = vld [vmem:[#allocation11 + $0x300] sm:$0xff]
    %v5067 = vld [vmem:[#allocation11 + $0x308] sm:$0xff]
    %v5068 = vld [vmem:[#allocation11 + $0x310] sm:$0xff]
    %v5069 = vld [vmem:[#allocation11 + $0x318] sm:$0xff]
    %v5070 = vld [vmem:[#allocation11 + $0x320] sm:$0xff]
    %v5071 = vld [vmem:[#allocation11 + $0x328] sm:$0xff]
    %v5072 = vld [vmem:[#allocation11 + $0x330] sm:$0xff]
    %v5073 = vld [vmem:[#allocation11 + $0x338] sm:$0xff]
    %v5074 = vld [vmem:[#allocation11 + $0x340] sm:$0xff]
    %v5075 = vld [vmem:[#allocation11 + $0x348] sm:$0xff]
    %v5076 = vld [vmem:[#allocation11 + $0x350] sm:$0xff]
    %v5077 = vld [vmem:[#allocation11 + $0x358] sm:$0xff]
    %v5078 = vld [vmem:[#allocation11 + $0x360] sm:$0xff]
    %v5079 = vld [vmem:[#allocation11 + $0x368] sm:$0xff]
    %v5080 = vld [vmem:[#allocation11 + $0x370] sm:$0xff]
    %v5081 = vld [vmem:[#allocation11 + $0x378] sm:$0xff]
    %v5082 = vld [vmem:[#allocation11 + $0x380] sm:$0xff]
    %v5083 = vld [vmem:[#allocation11 + $0x388] sm:$0xff]
    %v5084 = vld [vmem:[#allocation11 + $0x390] sm:$0xff]
    %v5085 = vld [vmem:[#allocation11 + $0x398] sm:$0xff]
    %v5086 = vld [vmem:[#allocation11 + $0x3a0] sm:$0xff]
    %v5087 = vld [vmem:[#allocation11 + $0x3a8] sm:$0xff]
    %v5088 = vld [vmem:[#allocation11 + $0x3b0] sm:$0xff]
    %v5089 = vld [vmem:[#allocation11 + $0x3b8] sm:$0xff]
    %v5090 = vld [vmem:[#allocation11 + $0x3c0] sm:$0xff]
    %v5091 = vld [vmem:[#allocation11 + $0x3c8] sm:$0xff]
    %v5092 = vld [vmem:[#allocation11 + $0x3d0] sm:$0xff]
    %v5093 = vld [vmem:[#allocation11 + $0x3d8] sm:$0xff]
    %v5094 = vld [vmem:[#allocation11 + $0x3e0] sm:$0xff]
    %v5095 = vld [vmem:[#allocation11 + $0x3e8] sm:$0xff]
    %v5096 = vld [vmem:[#allocation11 + $0x3f0] sm:$0xff]
    %v5097 = vld [vmem:[#allocation11 + $0x3f8] sm:$0xff]
    %v5226 = vunpack.c.l.b16 %v4970
    %v5227 = vunpack.c.h.b16 %v4970
    %v5228 = vunpack.c.l.b16 %v4971
    %v5229 = vunpack.c.h.b16 %v4971
    %v5230 = vunpack.c.l.b16 %v4972
    %v5231 = vunpack.c.h.b16 %v4972
    %v5232 = vunpack.c.l.b16 %v4973
    %v5233 = vunpack.c.h.b16 %v4973
    %v5234 = vunpack.c.l.b16 %v4974
    %v5235 = vunpack.c.h.b16 %v4974
    %v5236 = vunpack.c.l.b16 %v4975
    %v5237 = vunpack.c.h.b16 %v4975
    %v5238 = vunpack.c.l.b16 %v4976
    %v5239 = vunpack.c.h.b16 %v4976
    %v5240 = vunpack.c.l.b16 %v4977
    %v5241 = vunpack.c.h.b16 %v4977
    %v5242 = vunpack.c.l.b16 %v4978
    %v5243 = vunpack.c.h.b16 %v4978
    %v5244 = vunpack.c.l.b16 %v4979
    %v5245 = vunpack.c.h.b16 %v4979
    %v5246 = vunpack.c.l.b16 %v4980
    %v5247 = vunpack.c.h.b16 %v4980
    %v5248 = vunpack.c.l.b16 %v4981
    %v5249 = vunpack.c.h.b16 %v4981
    %v5250 = vunpack.c.l.b16 %v4982
    %v5251 = vunpack.c.h.b16 %v4982
    %v5252 = vunpack.c.l.b16 %v4983
    %v5253 = vunpack.c.h.b16 %v4983
    %v5254 = vunpack.c.l.b16 %v4984
    %v5255 = vunpack.c.h.b16 %v4984
    %v5256 = vunpack.c.l.b16 %v4985
    %v5257 = vunpack.c.h.b16 %v4985
    %v5258 = vunpack.c.l.b16 %v4986
    %v5259 = vunpack.c.h.b16 %v4986
    %v5260 = vunpack.c.l.b16 %v4987
    %v5261 = vunpack.c.h.b16 %v4987
    %v5262 = vunpack.c.l.b16 %v4988
    %v5263 = vunpack.c.h.b16 %v4988
    %v5264 = vunpack.c.l.b16 %v4989
    %v5265 = vunpack.c.h.b16 %v4989
    %v5266 = vunpack.c.l.b16 %v4990
    %v5267 = vunpack.c.h.b16 %v4990
    %v5268 = vunpack.c.l.b16 %v4991
    %v5269 = vunpack.c.h.b16 %v4991
    %v5270 = vunpack.c.l.b16 %v4992
    %v5271 = vunpack.c.h.b16 %v4992
    %v5272 = vunpack.c.l.b16 %v4993
    %v5273 = vunpack.c.h.b16 %v4993
    %v5274 = vunpack.c.l.b16 %v4994
    %v5275 = vunpack.c.h.b16 %v4994
    %v5276 = vunpack.c.l.b16 %v4995
    %v5277 = vunpack.c.h.b16 %v4995
    %v5278 = vunpack.c.l.b16 %v4996
    %v5279 = vunpack.c.h.b16 %v4996
    %v5280 = vunpack.c.l.b16 %v4997
    %v5281 = vunpack.c.h.b16 %v4997
    %v5282 = vunpack.c.l.b16 %v4998
    %v5283 = vunpack.c.h.b16 %v4998
    %v5284 = vunpack.c.l.b16 %v4999
    %v5285 = vunpack.c.h.b16 %v4999
    %v5286 = vunpack.c.l.b16 %v5000
    %v5287 = vunpack.c.h.b16 %v5000
    %v5288 = vunpack.c.l.b16 %v5001
    %v5289 = vunpack.c.h.b16 %v5001
    %v5290 = vunpack.c.l.b16 %v5002
    %v5291 = vunpack.c.h.b16 %v5002
    %v5292 = vunpack.c.l.b16 %v5003
    %v5293 = vunpack.c.h.b16 %v5003
    %v5294 = vunpack.c.l.b16 %v5004
    %v5295 = vunpack.c.h.b16 %v5004
    %v5296 = vunpack.c.l.b16 %v5005
    %v5297 = vunpack.c.h.b16 %v5005
    %v5298 = vunpack.c.l.b16 %v5006
    %v5299 = vunpack.c.h.b16 %v5006
    %v5300 = vunpack.c.l.b16 %v5007
    %v5301 = vunpack.c.h.b16 %v5007
    %v5302 = vunpack.c.l.b16 %v5008
    %v5303 = vunpack.c.h.b16 %v5008
    %v5304 = vunpack.c.l.b16 %v5009
    %v5305 = vunpack.c.h.b16 %v5009
    %v5306 = vunpack.c.l.b16 %v5010
    %v5307 = vunpack.c.h.b16 %v5010
    %v5308 = vunpack.c.l.b16 %v5011
    %v5309 = vunpack.c.h.b16 %v5011
    %v5310 = vunpack.c.l.b16 %v5012
    %v5311 = vunpack.c.h.b16 %v5012
    %v5312 = vunpack.c.l.b16 %v5013
    %v5313 = vunpack.c.h.b16 %v5013
    %v5314 = vunpack.c.l.b16 %v5014
    %v5315 = vunpack.c.h.b16 %v5014
    %v5316 = vunpack.c.l.b16 %v5015
    %v5317 = vunpack.c.h.b16 %v5015
    %v5318 = vunpack.c.l.b16 %v5016
    %v5319 = vunpack.c.h.b16 %v5016
    %v5320 = vunpack.c.l.b16 %v5017
    %v5321 = vunpack.c.h.b16 %v5017
    %v5322 = vunpack.c.l.b16 %v5018
    %v5323 = vunpack.c.h.b16 %v5018
    %v5324 = vunpack.c.l.b16 %v5019
    %v5325 = vunpack.c.h.b16 %v5019
    %v5326 = vunpack.c.l.b16 %v5020
    %v5327 = vunpack.c.h.b16 %v5020
    %v5328 = vunpack.c.l.b16 %v5021
    %v5329 = vunpack.c.h.b16 %v5021
    %v5330 = vunpack.c.l.b16 %v5022
    %v5331 = vunpack.c.h.b16 %v5022
    %v5332 = vunpack.c.l.b16 %v5023
    %v5333 = vunpack.c.h.b16 %v5023
    %v5334 = vunpack.c.l.b16 %v5024
    %v5335 = vunpack.c.h.b16 %v5024
    %v5336 = vunpack.c.l.b16 %v5025
    %v5337 = vunpack.c.h.b16 %v5025
    %v5338 = vunpack.c.l.b16 %v5026
    %v5339 = vunpack.c.h.b16 %v5026
    %v5340 = vunpack.c.l.b16 %v5027
    %v5341 = vunpack.c.h.b16 %v5027
    %v5342 = vunpack.c.l.b16 %v5028
    %v5343 = vunpack.c.h.b16 %v5028
    %v5344 = vunpack.c.l.b16 %v5029
    %v5345 = vunpack.c.h.b16 %v5029
    %v5346 = vunpack.c.l.b16 %v5030
    %v5347 = vunpack.c.h.b16 %v5030
    %v5348 = vunpack.c.l.b16 %v5031
    %v5349 = vunpack.c.h.b16 %v5031
    %v5350 = vunpack.c.l.b16 %v5032
    %v5351 = vunpack.c.h.b16 %v5032
    %v5352 = vunpack.c.l.b16 %v5033
    %v5353 = vunpack.c.h.b16 %v5033
    %v5354 = vunpack.c.l.b16 %v5034
    %v5355 = vunpack.c.h.b16 %v5034
    %v5356 = vunpack.c.l.b16 %v5035
    %v5357 = vunpack.c.h.b16 %v5035
    %v5358 = vunpack.c.l.b16 %v5036
    %v5359 = vunpack.c.h.b16 %v5036
    %v5360 = vunpack.c.l.b16 %v5037
    %v5361 = vunpack.c.h.b16 %v5037
    %v5362 = vunpack.c.l.b16 %v5038
    %v5363 = vunpack.c.h.b16 %v5038
    %v5364 = vunpack.c.l.b16 %v5039
    %v5365 = vunpack.c.h.b16 %v5039
    %v5366 = vunpack.c.l.b16 %v5040
    %v5367 = vunpack.c.h.b16 %v5040
    %v5368 = vunpack.c.l.b16 %v5041
    %v5369 = vunpack.c.h.b16 %v5041
    %v5370 = vunpack.c.l.b16 %v5042
    %v5371 = vunpack.c.h.b16 %v5042
    %v5372 = vunpack.c.l.b16 %v5043
    %v5373 = vunpack.c.h.b16 %v5043
    %v5374 = vunpack.c.l.b16 %v5044
    %v5375 = vunpack.c.h.b16 %v5044
    %v5376 = vunpack.c.l.b16 %v5045
    %v5377 = vunpack.c.h.b16 %v5045
    %v5378 = vunpack.c.l.b16 %v5046
    %v5379 = vunpack.c.h.b16 %v5046
    %v5380 = vunpack.c.l.b16 %v5047
    %v5381 = vunpack.c.h.b16 %v5047
    %v5382 = vunpack.c.l.b16 %v5048
    %v5383 = vunpack.c.h.b16 %v5048
    %v5384 = vunpack.c.l.b16 %v5049
    %v5385 = vunpack.c.h.b16 %v5049
    %v5386 = vunpack.c.l.b16 %v5050
    %v5387 = vunpack.c.h.b16 %v5050
    %v5388 = vunpack.c.l.b16 %v5051
    %v5389 = vunpack.c.h.b16 %v5051
    %v5390 = vunpack.c.l.b16 %v5052
    %v5391 = vunpack.c.h.b16 %v5052
    %v5392 = vunpack.c.l.b16 %v5053
    %v5393 = vunpack.c.h.b16 %v5053
    %v5394 = vunpack.c.l.b16 %v5054
    %v5395 = vunpack.c.h.b16 %v5054
    %v5396 = vunpack.c.l.b16 %v5055
    %v5397 = vunpack.c.h.b16 %v5055
    %v5398 = vunpack.c.l.b16 %v5056
    %v5399 = vunpack.c.h.b16 %v5056
    %v5400 = vunpack.c.l.b16 %v5057
    %v5401 = vunpack.c.h.b16 %v5057
    %v5402 = vunpack.c.l.b16 %v5058
    %v5403 = vunpack.c.h.b16 %v5058
    %v5404 = vunpack.c.l.b16 %v5059
    %v5405 = vunpack.c.h.b16 %v5059
    %v5406 = vunpack.c.l.b16 %v5060
    %v5407 = vunpack.c.h.b16 %v5060
    %v5408 = vunpack.c.l.b16 %v5061
    %v5409 = vunpack.c.h.b16 %v5061
    %v5410 = vunpack.c.l.b16 %v5062
    %v5411 = vunpack.c.h.b16 %v5062
    %v5412 = vunpack.c.l.b16 %v5063
    %v5413 = vunpack.c.h.b16 %v5063
    %v5414 = vunpack.c.l.b16 %v5064
    %v5415 = vunpack.c.h.b16 %v5064
    %v5416 = vunpack.c.l.b16 %v5065
    %v5417 = vunpack.c.h.b16 %v5065
    %v5418 = vunpack.c.l.b16 %v5066
    %v5419 = vunpack.c.h.b16 %v5066
    %v5420 = vunpack.c.l.b16 %v5067
    %v5421 = vunpack.c.h.b16 %v5067
    %v5422 = vunpack.c.l.b16 %v5068
    %v5423 = vunpack.c.h.b16 %v5068
    %v5424 = vunpack.c.l.b16 %v5069
    %v5425 = vunpack.c.h.b16 %v5069
    %v5426 = vunpack.c.l.b16 %v5070
    %v5427 = vunpack.c.h.b16 %v5070
    %v5428 = vunpack.c.l.b16 %v5071
    %v5429 = vunpack.c.h.b16 %v5071
    %v5430 = vunpack.c.l.b16 %v5072
    %v5431 = vunpack.c.h.b16 %v5072
    %v5432 = vunpack.c.l.b16 %v5073
    %v5433 = vunpack.c.h.b16 %v5073
    %v5434 = vunpack.c.l.b16 %v5074
    %v5435 = vunpack.c.h.b16 %v5074
    %v5436 = vunpack.c.l.b16 %v5075
    %v5437 = vunpack.c.h.b16 %v5075
    %v5438 = vunpack.c.l.b16 %v5076
    %v5439 = vunpack.c.h.b16 %v5076
    %v5440 = vunpack.c.l.b16 %v5077
    %v5441 = vunpack.c.h.b16 %v5077
    %v5442 = vunpack.c.l.b16 %v5078
    %v5443 = vunpack.c.h.b16 %v5078
    %v5444 = vunpack.c.l.b16 %v5079
    %v5445 = vunpack.c.h.b16 %v5079
    %v5446 = vunpack.c.l.b16 %v5080
    %v5447 = vunpack.c.h.b16 %v5080
    %v5448 = vunpack.c.l.b16 %v5081
    %v5449 = vunpack.c.h.b16 %v5081
    %v5450 = vunpack.c.l.b16 %v5082
    %v5451 = vunpack.c.h.b16 %v5082
    %v5452 = vunpack.c.l.b16 %v5083
    %v5453 = vunpack.c.h.b16 %v5083
    %v5454 = vunpack.c.l.b16 %v5084
    %v5455 = vunpack.c.h.b16 %v5084
    %v5456 = vunpack.c.l.b16 %v5085
    %v5457 = vunpack.c.h.b16 %v5085
    %v5458 = vunpack.c.l.b16 %v5086
    %v5459 = vunpack.c.h.b16 %v5086
    %v5460 = vunpack.c.l.b16 %v5087
    %v5461 = vunpack.c.h.b16 %v5087
    %v5462 = vunpack.c.l.b16 %v5088
    %v5463 = vunpack.c.h.b16 %v5088
    %v5464 = vunpack.c.l.b16 %v5089
    %v5465 = vunpack.c.h.b16 %v5089
    %v5466 = vunpack.c.l.b16 %v5090
    %v5467 = vunpack.c.h.b16 %v5090
    %v5468 = vunpack.c.l.b16 %v5091
    %v5469 = vunpack.c.h.b16 %v5091
    %v5470 = vunpack.c.l.b16 %v5092
    %v5471 = vunpack.c.h.b16 %v5092
    %v5472 = vunpack.c.l.b16 %v5093
    %v5473 = vunpack.c.h.b16 %v5093
    %v5474 = vunpack.c.l.b16 %v5094
    %v5475 = vunpack.c.h.b16 %v5094
    %v5476 = vunpack.c.l.b16 %v5095
    %v5477 = vunpack.c.h.b16 %v5095
    %v5478 = vunpack.c.l.b16 %v5096
    %v5479 = vunpack.c.h.b16 %v5096
    %v5480 = vunpack.c.l.b16 %v5097
    %v5481 = vunpack.c.h.b16 %v5097
    %v5482 = vpack.c.b16 %v5234, %v5226
    %v5483 = vpack.c.b16 %v5235, %v5227
    %v5484 = vpack.c.b16 %v5236, %v5228
    %v5485 = vpack.c.b16 %v5237, %v5229
    %v5486 = vpack.c.b16 %v5238, %v5230
    %v5487 = vpack.c.b16 %v5239, %v5231
    %v5488 = vpack.c.b16 %v5240, %v5232
    %v5489 = vpack.c.b16 %v5241, %v5233
    %v5490 = vpack.c.b16 %v5250, %v5242
    %v5491 = vpack.c.b16 %v5251, %v5243
    %v5492 = vpack.c.b16 %v5252, %v5244
    %v5493 = vpack.c.b16 %v5253, %v5245
    %v5494 = vpack.c.b16 %v5254, %v5246
    %v5495 = vpack.c.b16 %v5255, %v5247
    %v5496 = vpack.c.b16 %v5256, %v5248
    %v5497 = vpack.c.b16 %v5257, %v5249
    %v5498 = vpack.c.b16 %v5266, %v5258
    %v5499 = vpack.c.b16 %v5267, %v5259
    %v5500 = vpack.c.b16 %v5268, %v5260
    %v5501 = vpack.c.b16 %v5269, %v5261
    %v5502 = vpack.c.b16 %v5270, %v5262
    %v5503 = vpack.c.b16 %v5271, %v5263
    %v5504 = vpack.c.b16 %v5272, %v5264
    %v5505 = vpack.c.b16 %v5273, %v5265
    %v5506 = vpack.c.b16 %v5282, %v5274
    %v5507 = vpack.c.b16 %v5283, %v5275
    %v5508 = vpack.c.b16 %v5284, %v5276
    %v5509 = vpack.c.b16 %v5285, %v5277
    %v5510 = vpack.c.b16 %v5286, %v5278
    %v5511 = vpack.c.b16 %v5287, %v5279
    %v5512 = vpack.c.b16 %v5288, %v5280
    %v5513 = vpack.c.b16 %v5289, %v5281
    %v5514 = vpack.c.b16 %v5298, %v5290
    %v5515 = vpack.c.b16 %v5299, %v5291
    %v5516 = vpack.c.b16 %v5300, %v5292
    %v5517 = vpack.c.b16 %v5301, %v5293
    %v5518 = vpack.c.b16 %v5302, %v5294
    %v5519 = vpack.c.b16 %v5303, %v5295
    %v5520 = vpack.c.b16 %v5304, %v5296
    %v5521 = vpack.c.b16 %v5305, %v5297
    %v5522 = vpack.c.b16 %v5314, %v5306
    %v5523 = vpack.c.b16 %v5315, %v5307
    %v5524 = vpack.c.b16 %v5316, %v5308
    %v5525 = vpack.c.b16 %v5317, %v5309
    %v5526 = vpack.c.b16 %v5318, %v5310
    %v5527 = vpack.c.b16 %v5319, %v5311
    %v5528 = vpack.c.b16 %v5320, %v5312
    %v5529 = vpack.c.b16 %v5321, %v5313
    %v5530 = vpack.c.b16 %v5330, %v5322
    %v5531 = vpack.c.b16 %v5331, %v5323
    %v5532 = vpack.c.b16 %v5332, %v5324
    %v5533 = vpack.c.b16 %v5333, %v5325
    %v5534 = vpack.c.b16 %v5334, %v5326
    %v5535 = vpack.c.b16 %v5335, %v5327
    %v5536 = vpack.c.b16 %v5336, %v5328
    %v5537 = vpack.c.b16 %v5337, %v5329
    %v5538 = vpack.c.b16 %v5346, %v5338
    %v5539 = vpack.c.b16 %v5347, %v5339
    %v5540 = vpack.c.b16 %v5348, %v5340
    %v5541 = vpack.c.b16 %v5349, %v5341
    %v5542 = vpack.c.b16 %v5350, %v5342
    %v5543 = vpack.c.b16 %v5351, %v5343
    %v5544 = vpack.c.b16 %v5352, %v5344
    %v5545 = vpack.c.b16 %v5353, %v5345
    %v5546 = vpack.c.b16 %v5362, %v5354
    %v5547 = vpack.c.b16 %v5363, %v5355
    %v5548 = vpack.c.b16 %v5364, %v5356
    %v5549 = vpack.c.b16 %v5365, %v5357
    %v5550 = vpack.c.b16 %v5366, %v5358
    %v5551 = vpack.c.b16 %v5367, %v5359
    %v5552 = vpack.c.b16 %v5368, %v5360
    %v5553 = vpack.c.b16 %v5369, %v5361
    %v5554 = vpack.c.b16 %v5378, %v5370
    %v5555 = vpack.c.b16 %v5379, %v5371
    %v5556 = vpack.c.b16 %v5380, %v5372
    %v5557 = vpack.c.b16 %v5381, %v5373
    %v5558 = vpack.c.b16 %v5382, %v5374
    %v5559 = vpack.c.b16 %v5383, %v5375
    %v5560 = vpack.c.b16 %v5384, %v5376
    %v5561 = vpack.c.b16 %v5385, %v5377
    %v5562 = vpack.c.b16 %v5394, %v5386
    %v5563 = vpack.c.b16 %v5395, %v5387
    %v5564 = vpack.c.b16 %v5396, %v5388
    %v5565 = vpack.c.b16 %v5397, %v5389
    %v5566 = vpack.c.b16 %v5398, %v5390
    %v5567 = vpack.c.b16 %v5399, %v5391
    %v5568 = vpack.c.b16 %v5400, %v5392
    %v5569 = vpack.c.b16 %v5401, %v5393
    %v5570 = vpack.c.b16 %v5410, %v5402
    %v5571 = vpack.c.b16 %v5411, %v5403
    %v5572 = vpack.c.b16 %v5412, %v5404
    %v5573 = vpack.c.b16 %v5413, %v5405
    %v5574 = vpack.c.b16 %v5414, %v5406
    %v5575 = vpack.c.b16 %v5415, %v5407
    %v5576 = vpack.c.b16 %v5416, %v5408
    %v5577 = vpack.c.b16 %v5417, %v5409
    %v5578 = vpack.c.b16 %v5426, %v5418
    %v5579 = vpack.c.b16 %v5427, %v5419
    %v5580 = vpack.c.b16 %v5428, %v5420
    %v5581 = vpack.c.b16 %v5429, %v5421
    %v5582 = vpack.c.b16 %v5430, %v5422
    %v5583 = vpack.c.b16 %v5431, %v5423
    %v5584 = vpack.c.b16 %v5432, %v5424
    %v5585 = vpack.c.b16 %v5433, %v5425
    %v5586 = vpack.c.b16 %v5442, %v5434
    %v5587 = vpack.c.b16 %v5443, %v5435
    %v5588 = vpack.c.b16 %v5444, %v5436
    %v5589 = vpack.c.b16 %v5445, %v5437
    %v5590 = vpack.c.b16 %v5446, %v5438
    %v5591 = vpack.c.b16 %v5447, %v5439
    %v5592 = vpack.c.b16 %v5448, %v5440
    %v5593 = vpack.c.b16 %v5449, %v5441
    %v5594 = vpack.c.b16 %v5458, %v5450
    %v5595 = vpack.c.b16 %v5459, %v5451
    %v5596 = vpack.c.b16 %v5460, %v5452
    %v5597 = vpack.c.b16 %v5461, %v5453
    %v5598 = vpack.c.b16 %v5462, %v5454
    %v5599 = vpack.c.b16 %v5463, %v5455
    %v5600 = vpack.c.b16 %v5464, %v5456
    %v5601 = vpack.c.b16 %v5465, %v5457
    %v5602 = vpack.c.b16 %v5474, %v5466
    %v5603 = vpack.c.b16 %v5475, %v5467
    %v5604 = vpack.c.b16 %v5476, %v5468
    %v5605 = vpack.c.b16 %v5477, %v5469
    %v5606 = vpack.c.b16 %v5478, %v5470
    %v5607 = vpack.c.b16 %v5479, %v5471
    %v5608 = vpack.c.b16 %v5480, %v5472
    %v5609 = vpack.c.b16 %v5481, %v5473
    %5738 = vmatprep.subr.bf16.mxu0 %v5539
    %5739 = vmatpush1.bf16.msra.mxu0 %v5538
    %5740 = vmatprep.subr.bf16.mxu0 %v5531
    %5741 = vmatpush1.bf16.msra.mxu0 %v5530
    %5742 = vmatprep.subr.bf16.mxu0 %v5523
    %5743 = vmatpush1.bf16.msra.mxu0 %v5522
    %5744 = vmatprep.subr.bf16.mxu0 %v5515
    %5745 = vmatpush1.bf16.msra.mxu0 %v5514
    %5746 = vmatprep.subr.bf16.mxu0 %v5507
    %5747 = vmatpush1.bf16.msra.mxu0 %v5506
    %5748 = vmatprep.subr.bf16.mxu0 %v5499
    %5749 = vmatpush1.bf16.msra.mxu0 %v5498
    %5750 = vmatprep.subr.bf16.mxu0 %v5491
    %5751 = vmatpush1.bf16.msra.mxu0 %v5490
    %5752 = vmatprep.subr.bf16.mxu0 %v5483
    %5753 = vmatpush1.bf16.msra.mxu0 %v5482
    %5754 = vmatprep.subr.bf16.mxu0 %v5603
    %5755 = vmatpush2.bf16.msra.mxu0 %v5602
    %5756 = vmatprep.subr.bf16.mxu0 %v5595
    %5757 = vmatpush2.bf16.msra.mxu0 %v5594
    %5758 = vmatprep.subr.bf16.mxu0 %v5587
    %5759 = vmatpush2.bf16.msra.mxu0 %v5586
    %5760 = vmatprep.subr.bf16.mxu0 %v5579
    %5761 = vmatpush2.bf16.msra.mxu0 %v5578
    %5762 = vmatprep.subr.bf16.mxu0 %v5571
    %5763 = vmatpush2.bf16.msra.mxu0 %v5570
    %5764 = vmatprep.subr.bf16.mxu0 %v5563
    %5765 = vmatpush2.bf16.msra.mxu0 %v5562
    %5766 = vmatprep.subr.bf16.mxu0 %v5555
    %5767 = vmatpush2.bf16.msra.mxu0 %v5554
    %5768 = vmatprep.subr.bf16.mxu0 %v5547
    %5769 = vmatpush2.bf16.msra.mxu0 %v5546
    %5770 = vmatprep.mubr.bf16.mxu0 %v4969
    %5771 = vmatmul.mubr.bf16.gmra.mxu0 %v4968
    %v5772 = vpop.f32.mrf.mxu0
    %v5773 = vadd.f32 0.0, %v5772
    %v5774 = vpop.f32.mrf.mxu0
    %v5775 = vadd.f32 0.0, %v5774
    %v5776 = vpop.f32.mrf.mxu0
    %v5777 = vpop.f32.mrf.mxu0
    %5778 = vdwg.mxu0
    %5779 = vmatprep.subr.bf16.mxu0 %v5541
    %5780 = vmatpush1.bf16.msra.mxu0 %v5540
    %5781 = vmatprep.subr.bf16.mxu0 %v5533
    %5782 = vmatpush1.bf16.msra.mxu0 %v5532
    %5783 = vmatprep.subr.bf16.mxu0 %v5525
    %5784 = vmatpush1.bf16.msra.mxu0 %v5524
    %5785 = vmatprep.subr.bf16.mxu0 %v5517
    %5786 = vmatpush1.bf16.msra.mxu0 %v5516
    %5787 = vmatprep.subr.bf16.mxu0 %v5509
    %5788 = vmatpush1.bf16.msra.mxu0 %v5508
    %5789 = vmatprep.subr.bf16.mxu0 %v5501
    %5790 = vmatpush1.bf16.msra.mxu0 %v5500
    %5791 = vmatprep.subr.bf16.mxu0 %v5493
    %5792 = vmatpush1.bf16.msra.mxu0 %v5492
    %5793 = vmatprep.subr.bf16.mxu0 %v5485
    %5794 = vmatpush1.bf16.msra.mxu0 %v5484
    %5795 = vmatprep.subr.bf16.mxu0 %v5605
    %5796 = vmatpush2.bf16.msra.mxu0 %v5604
    %5797 = vmatprep.subr.bf16.mxu0 %v5597
    %5798 = vmatpush2.bf16.msra.mxu0 %v5596
    %5799 = vmatprep.subr.bf16.mxu0 %v5589
    %5800 = vmatpush2.bf16.msra.mxu0 %v5588
    %5801 = vmatprep.subr.bf16.mxu0 %v5581
    %5802 = vmatpush2.bf16.msra.mxu0 %v5580
    %5803 = vmatprep.subr.bf16.mxu0 %v5573
    %5804 = vmatpush2.bf16.msra.mxu0 %v5572
    %5805 = vmatprep.subr.bf16.mxu0 %v5565
    %5806 = vmatpush2.bf16.msra.mxu0 %v5564
    %5807 = vmatprep.subr.bf16.mxu0 %v5557
    %5808 = vmatpush2.bf16.msra.mxu0 %v5556
    %5809 = vmatprep.subr.bf16.mxu0 %v5549
    %5810 = vmatpush2.bf16.msra.mxu0 %v5548
    %5811 = vmatprep.mubr.bf16.mxu0 %v4969
    %5812 = vmatmul.mubr.bf16.gmra.mxu0 %v4968
    %v5813 = vpop.f32.mrf.mxu0
    %v5814 = vadd.f32 0.0, %v5813
    %v5815 = vpop.f32.mrf.mxu0
    %v5816 = vadd.f32 0.0, %v5815
    %v5817 = vpop.f32.mrf.mxu0
    %v5818 = vpop.f32.mrf.mxu0
    %5819 = vdwg.mxu0
    %5820 = vmatprep.subr.bf16.mxu0 %v5543
    %5821 = vmatpush1.bf16.msra.mxu0 %v5542
    %5822 = vmatprep.subr.bf16.mxu0 %v5535
    %5823 = vmatpush1.bf16.msra.mxu0 %v5534
    %5824 = vmatprep.subr.bf16.mxu0 %v5527
    %5825 = vmatpush1.bf16.msra.mxu0 %v5526
    %5826 = vmatprep.subr.bf16.mxu0 %v5519
    %5827 = vmatpush1.bf16.msra.mxu0 %v5518
    %5828 = vmatprep.subr.bf16.mxu0 %v5511
    %5829 = vmatpush1.bf16.msra.mxu0 %v5510
    %5830 = vmatprep.subr.bf16.mxu0 %v5503
    %5831 = vmatpush1.bf16.msra.mxu0 %v5502
    %5832 = vmatprep.subr.bf16.mxu0 %v5495
    %5833 = vmatpush1.bf16.msra.mxu0 %v5494
    %5834 = vmatprep.subr.bf16.mxu0 %v5487
    %5835 = vmatpush1.bf16.msra.mxu0 %v5486
    %5836 = vmatprep.subr.bf16.mxu0 %v5607
    %5837 = vmatpush2.bf16.msra.mxu0 %v5606
    %5838 = vmatprep.subr.bf16.mxu0 %v5599
    %5839 = vmatpush2.bf16.msra.mxu0 %v5598
    %5840 = vmatprep.subr.bf16.mxu0 %v5591
    %5841 = vmatpush2.bf16.msra.mxu0 %v5590
    %5842 = vmatprep.subr.bf16.mxu0 %v5583
    %5843 = vmatpush2.bf16.msra.mxu0 %v5582
    %5844 = vmatprep.subr.bf16.mxu0 %v5575
    %5845 = vmatpush2.bf16.msra.mxu0 %v5574
    %5846 = vmatprep.subr.bf16.mxu0 %v5567
    %5847 = vmatpush2.bf16.msra.mxu0 %v5566
    %5848 = vmatprep.subr.bf16.mxu0 %v5559
    %5849 = vmatpush2.bf16.msra.mxu0 %v5558
    %5850 = vmatprep.subr.bf16.mxu0 %v5551
    %5851 = vmatpush2.bf16.msra.mxu0 %v5550
    %5852 = vmatprep.mubr.bf16.mxu0 %v4969
    %5853 = vmatmul.mubr.bf16.gmra.mxu0 %v4968
    %v5854 = vpop.f32.mrf.mxu0
    %v5855 = vadd.f32 0.0, %v5854
    %v5856 = vpop.f32.mrf.mxu0
    %v5857 = vadd.f32 0.0, %v5856
    %v5858 = vpop.f32.mrf.mxu0
    %v5859 = vpop.f32.mrf.mxu0
    %5860 = vdwg.mxu0
    %5861 = vmatprep.subr.bf16.mxu0 %v5545
    %5862 = vmatpush1.bf16.msra.mxu0 %v5544
    %5863 = vmatprep.subr.bf16.mxu0 %v5537
    %5864 = vmatpush1.bf16.msra.mxu0 %v5536
    %5865 = vmatprep.subr.bf16.mxu0 %v5529
    %5866 = vmatpush1.bf16.msra.mxu0 %v5528
    %5867 = vmatprep.subr.bf16.mxu0 %v5521
    %5868 = vmatpush1.bf16.msra.mxu0 %v5520
    %5869 = vmatprep.subr.bf16.mxu0 %v5513
    %5870 = vmatpush1.bf16.msra.mxu0 %v5512
    %5871 = vmatprep.subr.bf16.mxu0 %v5505
    %5872 = vmatpush1.bf16.msra.mxu0 %v5504
    %5873 = vmatprep.subr.bf16.mxu0 %v5497
    %5874 = vmatpush1.bf16.msra.mxu0 %v5496
    %5875 = vmatprep.subr.bf16.mxu0 %v5489
    %5876 = vmatpush1.bf16.msra.mxu0 %v5488
    %5877 = vmatprep.subr.bf16.mxu0 %v5609
    %5878 = vmatpush2.bf16.msra.mxu0 %v5608
    %5879 = vmatprep.subr.bf16.mxu0 %v5601
    %5880 = vmatpush2.bf16.msra.mxu0 %v5600
    %5881 = vmatprep.subr.bf16.mxu0 %v5593
    %5882 = vmatpush2.bf16.msra.mxu0 %v5592
    %5883 = vmatprep.subr.bf16.mxu0 %v5585
    %5884 = vmatpush2.bf16.msra.mxu0 %v5584
    %5885 = vmatprep.subr.bf16.mxu0 %v5577
    %5886 = vmatpush2.bf16.msra.mxu0 %v5576
    %5887 = vmatprep.subr.bf16.mxu0 %v5569
    %5888 = vmatpush2.bf16.msra.mxu0 %v5568
    %5889 = vmatprep.subr.bf16.mxu0 %v5561
    %5890 = vmatpush2.bf16.msra.mxu0 %v5560
    %5891 = vmatprep.subr.bf16.mxu0 %v5553
    %5892 = vmatpush2.bf16.msra.mxu0 %v5552
    %5893 = vmatprep.mubr.bf16.mxu0 %v4969
    %5894 = vmatmul.mubr.bf16.gmra.mxu0 %v4968
    %v5895 = vpop.f32.mrf.mxu0
    %v5896 = vadd.f32 0.0, %v5895
    %v5897 = vpop.f32.mrf.mxu0
    %v5898 = vadd.f32 0.0, %v5897
    %v5899 = vpop.f32.mrf.mxu0
    %v5900 = vpop.f32.mrf.mxu0
    %5901 = vdwg.mxu0
    %s5902 = scalar_lea.vmem [#allocation3], 4
    %v5903 = vld [vmem:[%s5902] ss:$8 sm:$0xf]
    %v5908 = vcombine.low %v5773, %v5775
    %v5909 = vcombine.low %v5814, %v5816
    %v5911 = vunpack.c.l.s4 1966171168
    %v5912 = vunpack.c.0.s8 %v5911
    %v5913 = vlaneseq
    %v5914 = vshrl.u32 %v5913, 7
    %v5915 = vsub.s32 %v5912, %v5914
    %v5916 = vrot.slane %v5908, %v5915
    %v5918 = vunpack.c.l.s4 1966171168
    %v5919 = vunpack.c.0.s8 %v5918
    %v5920 = vlaneseq
    %v5921 = vshrl.u32 %v5920, 7
    %v5922 = vsub.s32 %v5919, %v5921
    %v5923 = vrot.slane %v5909, %v5922
    %v5924 = vcombine.low %v5916, %v5923
    %v5926 = vunpack.c.l.s4 1966171168
    %v5927 = vunpack.c.0.s8 %v5926
    %v5928 = vlaneseq
    %v5929 = vshrl.u32 %v5928, 7
    %v5930 = vsub.s32 %v5927, %v5929
    %v5931 = vrot.slane %v5924, %v5930
    %v5933 = vadd.f32 %v5903, %v5931
    %s5934 = scalar_lea.vmem [#allocation3], 35
    %v5935 = vld [vmem:[%s5934] ss:$8 sm:$0xf]
    %v5940 = vcombine.low %v5855, %v5857
    %v5941 = vcombine.low %v5896, %v5898
    %v5943 = vunpack.c.l.s4 1966171168
    %v5944 = vunpack.c.0.s8 %v5943
    %v5945 = vlaneseq
    %v5946 = vshrl.u32 %v5945, 7
    %v5947 = vsub.s32 %v5944, %v5946
    %v5948 = vrot.slane %v5940, %v5947
    %v5950 = vunpack.c.l.s4 1966171168
    %v5951 = vunpack.c.0.s8 %v5950
    %v5952 = vlaneseq
    %v5953 = vshrl.u32 %v5952, 7
    %v5954 = vsub.s32 %v5951, %v5953
    %v5955 = vrot.slane %v5941, %v5954
    %v5956 = vcombine.low %v5948, %v5955
    %v5958 = vunpack.c.l.s4 1966171168
    %v5959 = vunpack.c.0.s8 %v5958
    %v5960 = vlaneseq
    %v5961 = vshrl.u32 %v5960, 7
    %v5962 = vsub.s32 %v5959, %v5961
    %v5963 = vrot.slane %v5956, %v5962
    %v5965 = vadd.f32 %v5935, %v5963
    %v5966 = vxor.u32 %v5933, 2147483648
    %v5967 = vmul.f32 %v5966, 1.442695
    %v5968 = vpow.pop %v5967
    %v5969 = vadd.f32 %v5968, 1.0
    %v5970 = vrcp.pop %v5969
    %v5971 = vmul.f32 1.0, %v5970
    %v5973 = vrot.slane %v5933, 1
    %v5975 = vxor.u32 %v5973, 2147483648
    %v5976 = vmul.f32 %v5975, 1.442695
    %v5977 = vpow.pop %v5976
    %v5978 = vadd.f32 %v5977, 1.0
    %v5979 = vrcp.pop %v5978
    %v5980 = vmul.f32 1.0, %v5979
    %v5981 = vrot.slane %v5933, 2
    %v5983 = vtanh.pop %v5981
    %v5984 = vrot.slane %v5933, 3
    %v5986 = vxor.u32 %v5984, 2147483648
    %v5987 = vmul.f32 %v5986, 1.442695
    %v5988 = vpow.pop %v5987
    %v5989 = vadd.f32 %v5988, 1.0
    %v5990 = vrcp.pop %v5989
    %v5991 = vmul.f32 1.0, %v5990
    %v5992 = vmul.f32 %v5980, %v4932
    %v5993 = vmul.f32 %v5971, %v5983
    %v5994 = vadd.f32 %v5992, %v5993
    %v5995 = vtanh.pop %v5994
    %v5996 = vmul.f32 %v5991, %v5995
    %v5997 = vxor.u32 %v5965, 2147483648
    %v5998 = vmul.f32 %v5997, 1.442695
    %v5999 = vpow.pop %v5998
    %v6000 = vadd.f32 %v5999, 1.0
    %v6001 = vrcp.pop %v6000
    %v6002 = vmul.f32 1.0, %v6001
    %v6004 = vrot.slane %v5965, 1
    %v6006 = vxor.u32 %v6004, 2147483648
    %v6007 = vmul.f32 %v6006, 1.442695
    %v6008 = vpow.pop %v6007
    %v6009 = vadd.f32 %v6008, 1.0
    %v6010 = vrcp.pop %v6009
    %v6011 = vmul.f32 1.0, %v6010
    %v6012 = vrot.slane %v5965, 2
    %v6014 = vtanh.pop %v6012
    %v6015 = vrot.slane %v5965, 3
    %v6017 = vxor.u32 %v6015, 2147483648
    %v6018 = vmul.f32 %v6017, 1.442695
    %v6019 = vpow.pop %v6018
    %v6020 = vadd.f32 %v6019, 1.0
    %v6021 = vrcp.pop %v6020
    %v6022 = vmul.f32 1.0, %v6021
    %v6023 = vmul.f32 %v6011, %v4963
    %v6024 = vmul.f32 %v6002, %v6014
    %v6025 = vadd.f32 %v6023, %v6024
    %v6026 = vtanh.pop %v6025
    %v6027 = vmul.f32 %v6022, %v6026
    %6028 = vst [vmem:[#allocation14 + $0x4] sm:$0x1] %v5996
    %6029 = vst [vmem:[#allocation14 + $0xb] sm:$0x1] %v6027
    %v6030 = vpack.c.bf16 %v5996, %v5996
    %v6031 = vpack.c.bf16 %v6027, %v6027
    %v6032 = vld [vmem:[#allocation11] sm:$0xff]
    %v6033 = vld [vmem:[#allocation11 + $0x8] sm:$0xff]
    %v6034 = vld [vmem:[#allocation11 + $0x10] sm:$0xff]
    %v6035 = vld [vmem:[#allocation11 + $0x18] sm:$0xff]
    %v6036 = vld [vmem:[#allocation11 + $0x20] sm:$0xff]
    %v6037 = vld [vmem:[#allocation11 + $0x28] sm:$0xff]
    %v6038 = vld [vmem:[#allocation11 + $0x30] sm:$0xff]
    %v6039 = vld [vmem:[#allocation11 + $0x38] sm:$0xff]
    %v6040 = vld [vmem:[#allocation11 + $0x40] sm:$0xff]
    %v6041 = vld [vmem:[#allocation11 + $0x48] sm:$0xff]
    %v6042 = vld [vmem:[#allocation11 + $0x50] sm:$0xff]
    %v6043 = vld [vmem:[#allocation11 + $0x58] sm:$0xff]
    %v6044 = vld [vmem:[#allocation11 + $0x60] sm:$0xff]
    %v6045 = vld [vmem:[#allocation11 + $0x68] sm:$0xff]
    %v6046 = vld [vmem:[#allocation11 + $0x70] sm:$0xff]
    %v6047 = vld [vmem:[#allocation11 + $0x78] sm:$0xff]
    %v6048 = vld [vmem:[#allocation11 + $0x80] sm:$0xff]
    %v6049 = vld [vmem:[#allocation11 + $0x88] sm:$0xff]
    %v6050 = vld [vmem:[#allocation11 + $0x90] sm:$0xff]
    %v6051 = vld [vmem:[#allocation11 + $0x98] sm:$0xff]
    %v6052 = vld [vmem:[#allocation11 + $0xa0] sm:$0xff]
    %v6053 = vld [vmem:[#allocation11 + $0xa8] sm:$0xff]
    %v6054 = vld [vmem:[#allocation11 + $0xb0] sm:$0xff]
    %v6055 = vld [vmem:[#allocation11 + $0xb8] sm:$0xff]
    %v6056 = vld [vmem:[#allocation11 + $0xc0] sm:$0xff]
    %v6057 = vld [vmem:[#allocation11 + $0xc8] sm:$0xff]
    %v6058 = vld [vmem:[#allocation11 + $0xd0] sm:$0xff]
    %v6059 = vld [vmem:[#allocation11 + $0xd8] sm:$0xff]
    %v6060 = vld [vmem:[#allocation11 + $0xe0] sm:$0xff]
    %v6061 = vld [vmem:[#allocation11 + $0xe8] sm:$0xff]
    %v6062 = vld [vmem:[#allocation11 + $0xf0] sm:$0xff]
    %v6063 = vld [vmem:[#allocation11 + $0xf8] sm:$0xff]
    %v6064 = vld [vmem:[#allocation11 + $0x100] sm:$0xff]
    %v6065 = vld [vmem:[#allocation11 + $0x108] sm:$0xff]
    %v6066 = vld [vmem:[#allocation11 + $0x110] sm:$0xff]
    %v6067 = vld [vmem:[#allocation11 + $0x118] sm:$0xff]
    %v6068 = vld [vmem:[#allocation11 + $0x120] sm:$0xff]
    %v6069 = vld [vmem:[#allocation11 + $0x128] sm:$0xff]
    %v6070 = vld [vmem:[#allocation11 + $0x130] sm:$0xff]
    %v6071 = vld [vmem:[#allocation11 + $0x138] sm:$0xff]
    %v6072 = vld [vmem:[#allocation11 + $0x140] sm:$0xff]
    %v6073 = vld [vmem:[#allocation11 + $0x148] sm:$0xff]
    %v6074 = vld [vmem:[#allocation11 + $0x150] sm:$0xff]
    %v6075 = vld [vmem:[#allocation11 + $0x158] sm:$0xff]
    %v6076 = vld [vmem:[#allocation11 + $0x160] sm:$0xff]
    %v6077 = vld [vmem:[#allocation11 + $0x168] sm:$0xff]
    %v6078 = vld [vmem:[#allocation11 + $0x170] sm:$0xff]
    %v6079 = vld [vmem:[#allocation11 + $0x178] sm:$0xff]
    %v6080 = vld [vmem:[#allocation11 + $0x180] sm:$0xff]
    %v6081 = vld [vmem:[#allocation11 + $0x188] sm:$0xff]
    %v6082 = vld [vmem:[#allocation11 + $0x190] sm:$0xff]
    %v6083 = vld [vmem:[#allocation11 + $0x198] sm:$0xff]
    %v6084 = vld [vmem:[#allocation11 + $0x1a0] sm:$0xff]
    %v6085 = vld [vmem:[#allocation11 + $0x1a8] sm:$0xff]
    %v6086 = vld [vmem:[#allocation11 + $0x1b0] sm:$0xff]
    %v6087 = vld [vmem:[#allocation11 + $0x1b8] sm:$0xff]
    %v6088 = vld [vmem:[#allocation11 + $0x1c0] sm:$0xff]
    %v6089 = vld [vmem:[#allocation11 + $0x1c8] sm:$0xff]
    %v6090 = vld [vmem:[#allocation11 + $0x1d0] sm:$0xff]
    %v6091 = vld [vmem:[#allocation11 + $0x1d8] sm:$0xff]
    %v6092 = vld [vmem:[#allocation11 + $0x1e0] sm:$0xff]
    %v6093 = vld [vmem:[#allocation11 + $0x1e8] sm:$0xff]
    %v6094 = vld [vmem:[#allocation11 + $0x1f0] sm:$0xff]
    %v6095 = vld [vmem:[#allocation11 + $0x1f8] sm:$0xff]
    %v6096 = vld [vmem:[#allocation11 + $0x200] sm:$0xff]
    %v6097 = vld [vmem:[#allocation11 + $0x208] sm:$0xff]
    %v6098 = vld [vmem:[#allocation11 + $0x210] sm:$0xff]
    %v6099 = vld [vmem:[#allocation11 + $0x218] sm:$0xff]
    %v6100 = vld [vmem:[#allocation11 + $0x220] sm:$0xff]
    %v6101 = vld [vmem:[#allocation11 + $0x228] sm:$0xff]
    %v6102 = vld [vmem:[#allocation11 + $0x230] sm:$0xff]
    %v6103 = vld [vmem:[#allocation11 + $0x238] sm:$0xff]
    %v6104 = vld [vmem:[#allocation11 + $0x240] sm:$0xff]
    %v6105 = vld [vmem:[#allocation11 + $0x248] sm:$0xff]
    %v6106 = vld [vmem:[#allocation11 + $0x250] sm:$0xff]
    %v6107 = vld [vmem:[#allocation11 + $0x258] sm:$0xff]
    %v6108 = vld [vmem:[#allocation11 + $0x260] sm:$0xff]
    %v6109 = vld [vmem:[#allocation11 + $0x268] sm:$0xff]
    %v6110 = vld [vmem:[#allocation11 + $0x270] sm:$0xff]
    %v6111 = vld [vmem:[#allocation11 + $0x278] sm:$0xff]
    %v6112 = vld [vmem:[#allocation11 + $0x280] sm:$0xff]
    %v6113 = vld [vmem:[#allocation11 + $0x288] sm:$0xff]
    %v6114 = vld [vmem:[#allocation11 + $0x290] sm:$0xff]
    %v6115 = vld [vmem:[#allocation11 + $0x298] sm:$0xff]
    %v6116 = vld [vmem:[#allocation11 + $0x2a0] sm:$0xff]
    %v6117 = vld [vmem:[#allocation11 + $0x2a8] sm:$0xff]
    %v6118 = vld [vmem:[#allocation11 + $0x2b0] sm:$0xff]
    %v6119 = vld [vmem:[#allocation11 + $0x2b8] sm:$0xff]
    %v6120 = vld [vmem:[#allocation11 + $0x2c0] sm:$0xff]
    %v6121 = vld [vmem:[#allocation11 + $0x2c8] sm:$0xff]
    %v6122 = vld [vmem:[#allocation11 + $0x2d0] sm:$0xff]
    %v6123 = vld [vmem:[#allocation11 + $0x2d8] sm:$0xff]
    %v6124 = vld [vmem:[#allocation11 + $0x2e0] sm:$0xff]
    %v6125 = vld [vmem:[#allocation11 + $0x2e8] sm:$0xff]
    %v6126 = vld [vmem:[#allocation11 + $0x2f0] sm:$0xff]
    %v6127 = vld [vmem:[#allocation11 + $0x2f8] sm:$0xff]
    %v6128 = vld [vmem:[#allocation11 + $0x300] sm:$0xff]
    %v6129 = vld [vmem:[#allocation11 + $0x308] sm:$0xff]
    %v6130 = vld [vmem:[#allocation11 + $0x310] sm:$0xff]
    %v6131 = vld [vmem:[#allocation11 + $0x318] sm:$0xff]
    %v6132 = vld [vmem:[#allocation11 + $0x320] sm:$0xff]
    %v6133 = vld [vmem:[#allocation11 + $0x328] sm:$0xff]
    %v6134 = vld [vmem:[#allocation11 + $0x330] sm:$0xff]
    %v6135 = vld [vmem:[#allocation11 + $0x338] sm:$0xff]
    %v6136 = vld [vmem:[#allocation11 + $0x340] sm:$0xff]
    %v6137 = vld [vmem:[#allocation11 + $0x348] sm:$0xff]
    %v6138 = vld [vmem:[#allocation11 + $0x350] sm:$0xff]
    %v6139 = vld [vmem:[#allocation11 + $0x358] sm:$0xff]
    %v6140 = vld [vmem:[#allocation11 + $0x360] sm:$0xff]
    %v6141 = vld [vmem:[#allocation11 + $0x368] sm:$0xff]
    %v6142 = vld [vmem:[#allocation11 + $0x370] sm:$0xff]
    %v6143 = vld [vmem:[#allocation11 + $0x378] sm:$0xff]
    %v6144 = vld [vmem:[#allocation11 + $0x380] sm:$0xff]
    %v6145 = vld [vmem:[#allocation11 + $0x388] sm:$0xff]
    %v6146 = vld [vmem:[#allocation11 + $0x390] sm:$0xff]
    %v6147 = vld [vmem:[#allocation11 + $0x398] sm:$0xff]
    %v6148 = vld [vmem:[#allocation11 + $0x3a0] sm:$0xff]
    %v6149 = vld [vmem:[#allocation11 + $0x3a8] sm:$0xff]
    %v6150 = vld [vmem:[#allocation11 + $0x3b0] sm:$0xff]
    %v6151 = vld [vmem:[#allocation11 + $0x3b8] sm:$0xff]
    %v6152 = vld [vmem:[#allocation11 + $0x3c0] sm:$0xff]
    %v6153 = vld [vmem:[#allocation11 + $0x3c8] sm:$0xff]
    %v6154 = vld [vmem:[#allocation11 + $0x3d0] sm:$0xff]
    %v6155 = vld [vmem:[#allocation11 + $0x3d8] sm:$0xff]
    %v6156 = vld [vmem:[#allocation11 + $0x3e0] sm:$0xff]
    %v6157 = vld [vmem:[#allocation11 + $0x3e8] sm:$0xff]
    %v6158 = vld [vmem:[#allocation11 + $0x3f0] sm:$0xff]
    %v6159 = vld [vmem:[#allocation11 + $0x3f8] sm:$0xff]
    %v6288 = vunpack.c.l.b16 %v6032
    %v6289 = vunpack.c.h.b16 %v6032
    %v6290 = vunpack.c.l.b16 %v6033
    %v6291 = vunpack.c.h.b16 %v6033
    %v6292 = vunpack.c.l.b16 %v6034
    %v6293 = vunpack.c.h.b16 %v6034
    %v6294 = vunpack.c.l.b16 %v6035
    %v6295 = vunpack.c.h.b16 %v6035
    %v6296 = vunpack.c.l.b16 %v6036
    %v6297 = vunpack.c.h.b16 %v6036
    %v6298 = vunpack.c.l.b16 %v6037
    %v6299 = vunpack.c.h.b16 %v6037
    %v6300 = vunpack.c.l.b16 %v6038
    %v6301 = vunpack.c.h.b16 %v6038
    %v6302 = vunpack.c.l.b16 %v6039
    %v6303 = vunpack.c.h.b16 %v6039
    %v6304 = vunpack.c.l.b16 %v6040
    %v6305 = vunpack.c.h.b16 %v6040
    %v6306 = vunpack.c.l.b16 %v6041
    %v6307 = vunpack.c.h.b16 %v6041
    %v6308 = vunpack.c.l.b16 %v6042
    %v6309 = vunpack.c.h.b16 %v6042
    %v6310 = vunpack.c.l.b16 %v6043
    %v6311 = vunpack.c.h.b16 %v6043
    %v6312 = vunpack.c.l.b16 %v6044
    %v6313 = vunpack.c.h.b16 %v6044
    %v6314 = vunpack.c.l.b16 %v6045
    %v6315 = vunpack.c.h.b16 %v6045
    %v6316 = vunpack.c.l.b16 %v6046
    %v6317 = vunpack.c.h.b16 %v6046
    %v6318 = vunpack.c.l.b16 %v6047
    %v6319 = vunpack.c.h.b16 %v6047
    %v6320 = vunpack.c.l.b16 %v6048
    %v6321 = vunpack.c.h.b16 %v6048
    %v6322 = vunpack.c.l.b16 %v6049
    %v6323 = vunpack.c.h.b16 %v6049
    %v6324 = vunpack.c.l.b16 %v6050
    %v6325 = vunpack.c.h.b16 %v6050
    %v6326 = vunpack.c.l.b16 %v6051
    %v6327 = vunpack.c.h.b16 %v6051
    %v6328 = vunpack.c.l.b16 %v6052
    %v6329 = vunpack.c.h.b16 %v6052
    %v6330 = vunpack.c.l.b16 %v6053
    %v6331 = vunpack.c.h.b16 %v6053
    %v6332 = vunpack.c.l.b16 %v6054
    %v6333 = vunpack.c.h.b16 %v6054
    %v6334 = vunpack.c.l.b16 %v6055
    %v6335 = vunpack.c.h.b16 %v6055
    %v6336 = vunpack.c.l.b16 %v6056
    %v6337 = vunpack.c.h.b16 %v6056
    %v6338 = vunpack.c.l.b16 %v6057
    %v6339 = vunpack.c.h.b16 %v6057
    %v6340 = vunpack.c.l.b16 %v6058
    %v6341 = vunpack.c.h.b16 %v6058
    %v6342 = vunpack.c.l.b16 %v6059
    %v6343 = vunpack.c.h.b16 %v6059
    %v6344 = vunpack.c.l.b16 %v6060
    %v6345 = vunpack.c.h.b16 %v6060
    %v6346 = vunpack.c.l.b16 %v6061
    %v6347 = vunpack.c.h.b16 %v6061
    %v6348 = vunpack.c.l.b16 %v6062
    %v6349 = vunpack.c.h.b16 %v6062
    %v6350 = vunpack.c.l.b16 %v6063
    %v6351 = vunpack.c.h.b16 %v6063
    %v6352 = vunpack.c.l.b16 %v6064
    %v6353 = vunpack.c.h.b16 %v6064
    %v6354 = vunpack.c.l.b16 %v6065
    %v6355 = vunpack.c.h.b16 %v6065
    %v6356 = vunpack.c.l.b16 %v6066
    %v6357 = vunpack.c.h.b16 %v6066
    %v6358 = vunpack.c.l.b16 %v6067
    %v6359 = vunpack.c.h.b16 %v6067
    %v6360 = vunpack.c.l.b16 %v6068
    %v6361 = vunpack.c.h.b16 %v6068
    %v6362 = vunpack.c.l.b16 %v6069
    %v6363 = vunpack.c.h.b16 %v6069
    %v6364 = vunpack.c.l.b16 %v6070
    %v6365 = vunpack.c.h.b16 %v6070
    %v6366 = vunpack.c.l.b16 %v6071
    %v6367 = vunpack.c.h.b16 %v6071
    %v6368 = vunpack.c.l.b16 %v6072
    %v6369 = vunpack.c.h.b16 %v6072
    %v6370 = vunpack.c.l.b16 %v6073
    %v6371 = vunpack.c.h.b16 %v6073
    %v6372 = vunpack.c.l.b16 %v6074
    %v6373 = vunpack.c.h.b16 %v6074
    %v6374 = vunpack.c.l.b16 %v6075
    %v6375 = vunpack.c.h.b16 %v6075
    %v6376 = vunpack.c.l.b16 %v6076
    %v6377 = vunpack.c.h.b16 %v6076
    %v6378 = vunpack.c.l.b16 %v6077
    %v6379 = vunpack.c.h.b16 %v6077
    %v6380 = vunpack.c.l.b16 %v6078
    %v6381 = vunpack.c.h.b16 %v6078
    %v6382 = vunpack.c.l.b16 %v6079
    %v6383 = vunpack.c.h.b16 %v6079
    %v6384 = vunpack.c.l.b16 %v6080
    %v6385 = vunpack.c.h.b16 %v6080
    %v6386 = vunpack.c.l.b16 %v6081
    %v6387 = vunpack.c.h.b16 %v6081
    %v6388 = vunpack.c.l.b16 %v6082
    %v6389 = vunpack.c.h.b16 %v6082
    %v6390 = vunpack.c.l.b16 %v6083
    %v6391 = vunpack.c.h.b16 %v6083
    %v6392 = vunpack.c.l.b16 %v6084
    %v6393 = vunpack.c.h.b16 %v6084
    %v6394 = vunpack.c.l.b16 %v6085
    %v6395 = vunpack.c.h.b16 %v6085
    %v6396 = vunpack.c.l.b16 %v6086
    %v6397 = vunpack.c.h.b16 %v6086
    %v6398 = vunpack.c.l.b16 %v6087
    %v6399 = vunpack.c.h.b16 %v6087
    %v6400 = vunpack.c.l.b16 %v6088
    %v6401 = vunpack.c.h.b16 %v6088
    %v6402 = vunpack.c.l.b16 %v6089
    %v6403 = vunpack.c.h.b16 %v6089
    %v6404 = vunpack.c.l.b16 %v6090
    %v6405 = vunpack.c.h.b16 %v6090
    %v6406 = vunpack.c.l.b16 %v6091
    %v6407 = vunpack.c.h.b16 %v6091
    %v6408 = vunpack.c.l.b16 %v6092
    %v6409 = vunpack.c.h.b16 %v6092
    %v6410 = vunpack.c.l.b16 %v6093
    %v6411 = vunpack.c.h.b16 %v6093
    %v6412 = vunpack.c.l.b16 %v6094
    %v6413 = vunpack.c.h.b16 %v6094
    %v6414 = vunpack.c.l.b16 %v6095
    %v6415 = vunpack.c.h.b16 %v6095
    %v6416 = vunpack.c.l.b16 %v6096
    %v6417 = vunpack.c.h.b16 %v6096
    %v6418 = vunpack.c.l.b16 %v6097
    %v6419 = vunpack.c.h.b16 %v6097
    %v6420 = vunpack.c.l.b16 %v6098
    %v6421 = vunpack.c.h.b16 %v6098
    %v6422 = vunpack.c.l.b16 %v6099
    %v6423 = vunpack.c.h.b16 %v6099
    %v6424 = vunpack.c.l.b16 %v6100
    %v6425 = vunpack.c.h.b16 %v6100
    %v6426 = vunpack.c.l.b16 %v6101
    %v6427 = vunpack.c.h.b16 %v6101
    %v6428 = vunpack.c.l.b16 %v6102
    %v6429 = vunpack.c.h.b16 %v6102
    %v6430 = vunpack.c.l.b16 %v6103
    %v6431 = vunpack.c.h.b16 %v6103
    %v6432 = vunpack.c.l.b16 %v6104
    %v6433 = vunpack.c.h.b16 %v6104
    %v6434 = vunpack.c.l.b16 %v6105
    %v6435 = vunpack.c.h.b16 %v6105
    %v6436 = vunpack.c.l.b16 %v6106
    %v6437 = vunpack.c.h.b16 %v6106
    %v6438 = vunpack.c.l.b16 %v6107
    %v6439 = vunpack.c.h.b16 %v6107
    %v6440 = vunpack.c.l.b16 %v6108
    %v6441 = vunpack.c.h.b16 %v6108
    %v6442 = vunpack.c.l.b16 %v6109
    %v6443 = vunpack.c.h.b16 %v6109
    %v6444 = vunpack.c.l.b16 %v6110
    %v6445 = vunpack.c.h.b16 %v6110
    %v6446 = vunpack.c.l.b16 %v6111
    %v6447 = vunpack.c.h.b16 %v6111
    %v6448 = vunpack.c.l.b16 %v6112
    %v6449 = vunpack.c.h.b16 %v6112
    %v6450 = vunpack.c.l.b16 %v6113
    %v6451 = vunpack.c.h.b16 %v6113
    %v6452 = vunpack.c.l.b16 %v6114
    %v6453 = vunpack.c.h.b16 %v6114
    %v6454 = vunpack.c.l.b16 %v6115
    %v6455 = vunpack.c.h.b16 %v6115
    %v6456 = vunpack.c.l.b16 %v6116
    %v6457 = vunpack.c.h.b16 %v6116
    %v6458 = vunpack.c.l.b16 %v6117
    %v6459 = vunpack.c.h.b16 %v6117
    %v6460 = vunpack.c.l.b16 %v6118
    %v6461 = vunpack.c.h.b16 %v6118
    %v6462 = vunpack.c.l.b16 %v6119
    %v6463 = vunpack.c.h.b16 %v6119
    %v6464 = vunpack.c.l.b16 %v6120
    %v6465 = vunpack.c.h.b16 %v6120
    %v6466 = vunpack.c.l.b16 %v6121
    %v6467 = vunpack.c.h.b16 %v6121
    %v6468 = vunpack.c.l.b16 %v6122
    %v6469 = vunpack.c.h.b16 %v6122
    %v6470 = vunpack.c.l.b16 %v6123
    %v6471 = vunpack.c.h.b16 %v6123
    %v6472 = vunpack.c.l.b16 %v6124
    %v6473 = vunpack.c.h.b16 %v6124
    %v6474 = vunpack.c.l.b16 %v6125
    %v6475 = vunpack.c.h.b16 %v6125
    %v6476 = vunpack.c.l.b16 %v6126
    %v6477 = vunpack.c.h.b16 %v6126
    %v6478 = vunpack.c.l.b16 %v6127
    %v6479 = vunpack.c.h.b16 %v6127
    %v6480 = vunpack.c.l.b16 %v6128
    %v6481 = vunpack.c.h.b16 %v6128
    %v6482 = vunpack.c.l.b16 %v6129
    %v6483 = vunpack.c.h.b16 %v6129
    %v6484 = vunpack.c.l.b16 %v6130
    %v6485 = vunpack.c.h.b16 %v6130
    %v6486 = vunpack.c.l.b16 %v6131
    %v6487 = vunpack.c.h.b16 %v6131
    %v6488 = vunpack.c.l.b16 %v6132
    %v6489 = vunpack.c.h.b16 %v6132
    %v6490 = vunpack.c.l.b16 %v6133
    %v6491 = vunpack.c.h.b16 %v6133
    %v6492 = vunpack.c.l.b16 %v6134
    %v6493 = vunpack.c.h.b16 %v6134
    %v6494 = vunpack.c.l.b16 %v6135
    %v6495 = vunpack.c.h.b16 %v6135
    %v6496 = vunpack.c.l.b16 %v6136
    %v6497 = vunpack.c.h.b16 %v6136
    %v6498 = vunpack.c.l.b16 %v6137
    %v6499 = vunpack.c.h.b16 %v6137
    %v6500 = vunpack.c.l.b16 %v6138
    %v6501 = vunpack.c.h.b16 %v6138
    %v6502 = vunpack.c.l.b16 %v6139
    %v6503 = vunpack.c.h.b16 %v6139
    %v6504 = vunpack.c.l.b16 %v6140
    %v6505 = vunpack.c.h.b16 %v6140
    %v6506 = vunpack.c.l.b16 %v6141
    %v6507 = vunpack.c.h.b16 %v6141
    %v6508 = vunpack.c.l.b16 %v6142
    %v6509 = vunpack.c.h.b16 %v6142
    %v6510 = vunpack.c.l.b16 %v6143
    %v6511 = vunpack.c.h.b16 %v6143
    %v6512 = vunpack.c.l.b16 %v6144
    %v6513 = vunpack.c.h.b16 %v6144
    %v6514 = vunpack.c.l.b16 %v6145
    %v6515 = vunpack.c.h.b16 %v6145
    %v6516 = vunpack.c.l.b16 %v6146
    %v6517 = vunpack.c.h.b16 %v6146
    %v6518 = vunpack.c.l.b16 %v6147
    %v6519 = vunpack.c.h.b16 %v6147
    %v6520 = vunpack.c.l.b16 %v6148
    %v6521 = vunpack.c.h.b16 %v6148
    %v6522 = vunpack.c.l.b16 %v6149
    %v6523 = vunpack.c.h.b16 %v6149
    %v6524 = vunpack.c.l.b16 %v6150
    %v6525 = vunpack.c.h.b16 %v6150
    %v6526 = vunpack.c.l.b16 %v6151
    %v6527 = vunpack.c.h.b16 %v6151
    %v6528 = vunpack.c.l.b16 %v6152
    %v6529 = vunpack.c.h.b16 %v6152
    %v6530 = vunpack.c.l.b16 %v6153
    %v6531 = vunpack.c.h.b16 %v6153
    %v6532 = vunpack.c.l.b16 %v6154
    %v6533 = vunpack.c.h.b16 %v6154
    %v6534 = vunpack.c.l.b16 %v6155
    %v6535 = vunpack.c.h.b16 %v6155
    %v6536 = vunpack.c.l.b16 %v6156
    %v6537 = vunpack.c.h.b16 %v6156
    %v6538 = vunpack.c.l.b16 %v6157
    %v6539 = vunpack.c.h.b16 %v6157
    %v6540 = vunpack.c.l.b16 %v6158
    %v6541 = vunpack.c.h.b16 %v6158
    %v6542 = vunpack.c.l.b16 %v6159
    %v6543 = vunpack.c.h.b16 %v6159
    %v6544 = vpack.c.b16 %v6296, %v6288
    %v6545 = vpack.c.b16 %v6297, %v6289
    %v6546 = vpack.c.b16 %v6298, %v6290
    %v6547 = vpack.c.b16 %v6299, %v6291
    %v6548 = vpack.c.b16 %v6300, %v6292
    %v6549 = vpack.c.b16 %v6301, %v6293
    %v6550 = vpack.c.b16 %v6302, %v6294
    %v6551 = vpack.c.b16 %v6303, %v6295
    %v6552 = vpack.c.b16 %v6312, %v6304
    %v6553 = vpack.c.b16 %v6313, %v6305
    %v6554 = vpack.c.b16 %v6314, %v6306
    %v6555 = vpack.c.b16 %v6315, %v6307
    %v6556 = vpack.c.b16 %v6316, %v6308
    %v6557 = vpack.c.b16 %v6317, %v6309
    %v6558 = vpack.c.b16 %v6318, %v6310
    %v6559 = vpack.c.b16 %v6319, %v6311
    %v6560 = vpack.c.b16 %v6328, %v6320
    %v6561 = vpack.c.b16 %v6329, %v6321
    %v6562 = vpack.c.b16 %v6330, %v6322
    %v6563 = vpack.c.b16 %v6331, %v6323
    %v6564 = vpack.c.b16 %v6332, %v6324
    %v6565 = vpack.c.b16 %v6333, %v6325
    %v6566 = vpack.c.b16 %v6334, %v6326
    %v6567 = vpack.c.b16 %v6335, %v6327
    %v6568 = vpack.c.b16 %v6344, %v6336
    %v6569 = vpack.c.b16 %v6345, %v6337
    %v6570 = vpack.c.b16 %v6346, %v6338
    %v6571 = vpack.c.b16 %v6347, %v6339
    %v6572 = vpack.c.b16 %v6348, %v6340
    %v6573 = vpack.c.b16 %v6349, %v6341
    %v6574 = vpack.c.b16 %v6350, %v6342
    %v6575 = vpack.c.b16 %v6351, %v6343
    %v6576 = vpack.c.b16 %v6360, %v6352
    %v6577 = vpack.c.b16 %v6361, %v6353
    %v6578 = vpack.c.b16 %v6362, %v6354
    %v6579 = vpack.c.b16 %v6363, %v6355
    %v6580 = vpack.c.b16 %v6364, %v6356
    %v6581 = vpack.c.b16 %v6365, %v6357
    %v6582 = vpack.c.b16 %v6366, %v6358
    %v6583 = vpack.c.b16 %v6367, %v6359
    %v6584 = vpack.c.b16 %v6376, %v6368
    %v6585 = vpack.c.b16 %v6377, %v6369
    %v6586 = vpack.c.b16 %v6378, %v6370
    %v6587 = vpack.c.b16 %v6379, %v6371
    %v6588 = vpack.c.b16 %v6380, %v6372
    %v6589 = vpack.c.b16 %v6381, %v6373
    %v6590 = vpack.c.b16 %v6382, %v6374
    %v6591 = vpack.c.b16 %v6383, %v6375
    %v6592 = vpack.c.b16 %v6392, %v6384
    %v6593 = vpack.c.b16 %v6393, %v6385
    %v6594 = vpack.c.b16 %v6394, %v6386
    %v6595 = vpack.c.b16 %v6395, %v6387
    %v6596 = vpack.c.b16 %v6396, %v6388
    %v6597 = vpack.c.b16 %v6397, %v6389
    %v6598 = vpack.c.b16 %v6398, %v6390
    %v6599 = vpack.c.b16 %v6399, %v6391
    %v6600 = vpack.c.b16 %v6408, %v6400
    %v6601 = vpack.c.b16 %v6409, %v6401
    %v6602 = vpack.c.b16 %v6410, %v6402
    %v6603 = vpack.c.b16 %v6411, %v6403
    %v6604 = vpack.c.b16 %v6412, %v6404
    %v6605 = vpack.c.b16 %v6413, %v6405
    %v6606 = vpack.c.b16 %v6414, %v6406
    %v6607 = vpack.c.b16 %v6415, %v6407
    %v6608 = vpack.c.b16 %v6424, %v6416
    %v6609 = vpack.c.b16 %v6425, %v6417
    %v6610 = vpack.c.b16 %v6426, %v6418
    %v6611 = vpack.c.b16 %v6427, %v6419
    %v6612 = vpack.c.b16 %v6428, %v6420
    %v6613 = vpack.c.b16 %v6429, %v6421
    %v6614 = vpack.c.b16 %v6430, %v6422
    %v6615 = vpack.c.b16 %v6431, %v6423
    %v6616 = vpack.c.b16 %v6440, %v6432
    %v6617 = vpack.c.b16 %v6441, %v6433
    %v6618 = vpack.c.b16 %v6442, %v6434
    %v6619 = vpack.c.b16 %v6443, %v6435
    %v6620 = vpack.c.b16 %v6444, %v6436
    %v6621 = vpack.c.b16 %v6445, %v6437
    %v6622 = vpack.c.b16 %v6446, %v6438
    %v6623 = vpack.c.b16 %v6447, %v6439
    %v6624 = vpack.c.b16 %v6456, %v6448
    %v6625 = vpack.c.b16 %v6457, %v6449
    %v6626 = vpack.c.b16 %v6458, %v6450
    %v6627 = vpack.c.b16 %v6459, %v6451
    %v6628 = vpack.c.b16 %v6460, %v6452
    %v6629 = vpack.c.b16 %v6461, %v6453
    %v6630 = vpack.c.b16 %v6462, %v6454
    %v6631 = vpack.c.b16 %v6463, %v6455
    %v6632 = vpack.c.b16 %v6472, %v6464
    %v6633 = vpack.c.b16 %v6473, %v6465
    %v6634 = vpack.c.b16 %v6474, %v6466
    %v6635 = vpack.c.b16 %v6475, %v6467
    %v6636 = vpack.c.b16 %v6476, %v6468
    %v6637 = vpack.c.b16 %v6477, %v6469
    %v6638 = vpack.c.b16 %v6478, %v6470
    %v6639 = vpack.c.b16 %v6479, %v6471
    %v6640 = vpack.c.b16 %v6488, %v6480
    %v6641 = vpack.c.b16 %v6489, %v6481
    %v6642 = vpack.c.b16 %v6490, %v6482
    %v6643 = vpack.c.b16 %v6491, %v6483
    %v6644 = vpack.c.b16 %v6492, %v6484
    %v6645 = vpack.c.b16 %v6493, %v6485
    %v6646 = vpack.c.b16 %v6494, %v6486
    %v6647 = vpack.c.b16 %v6495, %v6487
    %v6648 = vpack.c.b16 %v6504, %v6496
    %v6649 = vpack.c.b16 %v6505, %v6497
    %v6650 = vpack.c.b16 %v6506, %v6498
    %v6651 = vpack.c.b16 %v6507, %v6499
    %v6652 = vpack.c.b16 %v6508, %v6500
    %v6653 = vpack.c.b16 %v6509, %v6501
    %v6654 = vpack.c.b16 %v6510, %v6502
    %v6655 = vpack.c.b16 %v6511, %v6503
    %v6656 = vpack.c.b16 %v6520, %v6512
    %v6657 = vpack.c.b16 %v6521, %v6513
    %v6658 = vpack.c.b16 %v6522, %v6514
    %v6659 = vpack.c.b16 %v6523, %v6515
    %v6660 = vpack.c.b16 %v6524, %v6516
    %v6661 = vpack.c.b16 %v6525, %v6517
    %v6662 = vpack.c.b16 %v6526, %v6518
    %v6663 = vpack.c.b16 %v6527, %v6519
    %v6664 = vpack.c.b16 %v6536, %v6528
    %v6665 = vpack.c.b16 %v6537, %v6529
    %v6666 = vpack.c.b16 %v6538, %v6530
    %v6667 = vpack.c.b16 %v6539, %v6531
    %v6668 = vpack.c.b16 %v6540, %v6532
    %v6669 = vpack.c.b16 %v6541, %v6533
    %v6670 = vpack.c.b16 %v6542, %v6534
    %v6671 = vpack.c.b16 %v6543, %v6535
    %6800 = vmatprep.subr.bf16.mxu0 %v6601
    %6801 = vmatpush1.bf16.msra.mxu0 %v6600
    %6802 = vmatprep.subr.bf16.mxu0 %v6593
    %6803 = vmatpush1.bf16.msra.mxu0 %v6592
    %6804 = vmatprep.subr.bf16.mxu0 %v6585
    %6805 = vmatpush1.bf16.msra.mxu0 %v6584
    %6806 = vmatprep.subr.bf16.mxu0 %v6577
    %6807 = vmatpush1.bf16.msra.mxu0 %v6576
    %6808 = vmatprep.subr.bf16.mxu0 %v6569
    %6809 = vmatpush1.bf16.msra.mxu0 %v6568
    %6810 = vmatprep.subr.bf16.mxu0 %v6561
    %6811 = vmatpush1.bf16.msra.mxu0 %v6560
    %6812 = vmatprep.subr.bf16.mxu0 %v6553
    %6813 = vmatpush1.bf16.msra.mxu0 %v6552
    %6814 = vmatprep.subr.bf16.mxu0 %v6545
    %6815 = vmatpush1.bf16.msra.mxu0 %v6544
    %6816 = vmatprep.subr.bf16.mxu0 %v6665
    %6817 = vmatpush2.bf16.msra.mxu0 %v6664
    %6818 = vmatprep.subr.bf16.mxu0 %v6657
    %6819 = vmatpush2.bf16.msra.mxu0 %v6656
    %6820 = vmatprep.subr.bf16.mxu0 %v6649
    %6821 = vmatpush2.bf16.msra.mxu0 %v6648
    %6822 = vmatprep.subr.bf16.mxu0 %v6641
    %6823 = vmatpush2.bf16.msra.mxu0 %v6640
    %6824 = vmatprep.subr.bf16.mxu0 %v6633
    %6825 = vmatpush2.bf16.msra.mxu0 %v6632
    %6826 = vmatprep.subr.bf16.mxu0 %v6625
    %6827 = vmatpush2.bf16.msra.mxu0 %v6624
    %6828 = vmatprep.subr.bf16.mxu0 %v6617
    %6829 = vmatpush2.bf16.msra.mxu0 %v6616
    %6830 = vmatprep.subr.bf16.mxu0 %v6609
    %6831 = vmatpush2.bf16.msra.mxu0 %v6608
    %6832 = vmatprep.mubr.bf16.mxu0 %v6031
    %6833 = vmatmul.mubr.bf16.gmra.mxu0 %v6030
    %v6834 = vpop.f32.mrf.mxu0
    %v6835 = vadd.f32 0.0, %v6834
    %v6836 = vpop.f32.mrf.mxu0
    %v6837 = vadd.f32 0.0, %v6836
    %v6838 = vpop.f32.mrf.mxu0
    %v6839 = vpop.f32.mrf.mxu0
    %6840 = vdwg.mxu0
    %6841 = vmatprep.subr.bf16.mxu0 %v6603
    %6842 = vmatpush1.bf16.msra.mxu0 %v6602
    %6843 = vmatprep.subr.bf16.mxu0 %v6595
    %6844 = vmatpush1.bf16.msra.mxu0 %v6594
    %6845 = vmatprep.subr.bf16.mxu0 %v6587
    %6846 = vmatpush1.bf16.msra.mxu0 %v6586
    %6847 = vmatprep.subr.bf16.mxu0 %v6579
    %6848 = vmatpush1.bf16.msra.mxu0 %v6578
    %6849 = vmatprep.subr.bf16.mxu0 %v6571
    %6850 = vmatpush1.bf16.msra.mxu0 %v6570
    %6851 = vmatprep.subr.bf16.mxu0 %v6563
    %6852 = vmatpush1.bf16.msra.mxu0 %v6562
    %6853 = vmatprep.subr.bf16.mxu0 %v6555
    %6854 = vmatpush1.bf16.msra.mxu0 %v6554
    %6855 = vmatprep.subr.bf16.mxu0 %v6547
    %6856 = vmatpush1.bf16.msra.mxu0 %v6546
    %6857 = vmatprep.subr.bf16.mxu0 %v6667
    %6858 = vmatpush2.bf16.msra.mxu0 %v6666
    %6859 = vmatprep.subr.bf16.mxu0 %v6659
    %6860 = vmatpush2.bf16.msra.mxu0 %v6658
    %6861 = vmatprep.subr.bf16.mxu0 %v6651
    %6862 = vmatpush2.bf16.msra.mxu0 %v6650
    %6863 = vmatprep.subr.bf16.mxu0 %v6643
    %6864 = vmatpush2.bf16.msra.mxu0 %v6642
    %6865 = vmatprep.subr.bf16.mxu0 %v6635
    %6866 = vmatpush2.bf16.msra.mxu0 %v6634
    %6867 = vmatprep.subr.bf16.mxu0 %v6627
    %6868 = vmatpush2.bf16.msra.mxu0 %v6626
    %6869 = vmatprep.subr.bf16.mxu0 %v6619
    %6870 = vmatpush2.bf16.msra.mxu0 %v6618
    %6871 = vmatprep.subr.bf16.mxu0 %v6611
    %6872 = vmatpush2.bf16.msra.mxu0 %v6610
    %6873 = vmatprep.mubr.bf16.mxu0 %v6031
    %6874 = vmatmul.mubr.bf16.gmra.mxu0 %v6030
    %v6875 = vpop.f32.mrf.mxu0
    %v6876 = vadd.f32 0.0, %v6875
    %v6877 = vpop.f32.mrf.mxu0
    %v6878 = vadd.f32 0.0, %v6877
    %v6879 = vpop.f32.mrf.mxu0
    %v6880 = vpop.f32.mrf.mxu0
    %6881 = vdwg.mxu0
    %6882 = vmatprep.subr.bf16.mxu0 %v6605
    %6883 = vmatpush1.bf16.msra.mxu0 %v6604
    %6884 = vmatprep.subr.bf16.mxu0 %v6597
    %6885 = vmatpush1.bf16.msra.mxu0 %v6596
    %6886 = vmatprep.subr.bf16.mxu0 %v6589
    %6887 = vmatpush1.bf16.msra.mxu0 %v6588
    %6888 = vmatprep.subr.bf16.mxu0 %v6581
    %6889 = vmatpush1.bf16.msra.mxu0 %v6580
    %6890 = vmatprep.subr.bf16.mxu0 %v6573
    %6891 = vmatpush1.bf16.msra.mxu0 %v6572
    %6892 = vmatprep.subr.bf16.mxu0 %v6565
    %6893 = vmatpush1.bf16.msra.mxu0 %v6564
    %6894 = vmatprep.subr.bf16.mxu0 %v6557
    %6895 = vmatpush1.bf16.msra.mxu0 %v6556
    %6896 = vmatprep.subr.bf16.mxu0 %v6549
    %6897 = vmatpush1.bf16.msra.mxu0 %v6548
    %6898 = vmatprep.subr.bf16.mxu0 %v6669
    %6899 = vmatpush2.bf16.msra.mxu0 %v6668
    %6900 = vmatprep.subr.bf16.mxu0 %v6661
    %6901 = vmatpush2.bf16.msra.mxu0 %v6660
    %6902 = vmatprep.subr.bf16.mxu0 %v6653
    %6903 = vmatpush2.bf16.msra.mxu0 %v6652
    %6904 = vmatprep.subr.bf16.mxu0 %v6645
    %6905 = vmatpush2.bf16.msra.mxu0 %v6644
    %6906 = vmatprep.subr.bf16.mxu0 %v6637
    %6907 = vmatpush2.bf16.msra.mxu0 %v6636
    %6908 = vmatprep.subr.bf16.mxu0 %v6629
    %6909 = vmatpush2.bf16.msra.mxu0 %v6628
    %6910 = vmatprep.subr.bf16.mxu0 %v6621
    %6911 = vmatpush2.bf16.msra.mxu0 %v6620
    %6912 = vmatprep.subr.bf16.mxu0 %v6613
    %6913 = vmatpush2.bf16.msra.mxu0 %v6612
    %6914 = vmatprep.mubr.bf16.mxu0 %v6031
    %6915 = vmatmul.mubr.bf16.gmra.mxu0 %v6030
    %v6916 = vpop.f32.mrf.mxu0
    %v6917 = vadd.f32 0.0, %v6916
    %v6918 = vpop.f32.mrf.mxu0
    %v6919 = vadd.f32 0.0, %v6918
    %v6920 = vpop.f32.mrf.mxu0
    %v6921 = vpop.f32.mrf.mxu0
    %6922 = vdwg.mxu0
    %6923 = vmatprep.subr.bf16.mxu0 %v6607
    %6924 = vmatpush1.bf16.msra.mxu0 %v6606
    %6925 = vmatprep.subr.bf16.mxu0 %v6599
    %6926 = vmatpush1.bf16.msra.mxu0 %v6598
    %6927 = vmatprep.subr.bf16.mxu0 %v6591
    %6928 = vmatpush1.bf16.msra.mxu0 %v6590
    %6929 = vmatprep.subr.bf16.mxu0 %v6583
    %6930 = vmatpush1.bf16.msra.mxu0 %v6582
    %6931 = vmatprep.subr.bf16.mxu0 %v6575
    %6932 = vmatpush1.bf16.msra.mxu0 %v6574
    %6933 = vmatprep.subr.bf16.mxu0 %v6567
    %6934 = vmatpush1.bf16.msra.mxu0 %v6566
    %6935 = vmatprep.subr.bf16.mxu0 %v6559
    %6936 = vmatpush1.bf16.msra.mxu0 %v6558
    %6937 = vmatprep.subr.bf16.mxu0 %v6551
    %6938 = vmatpush1.bf16.msra.mxu0 %v6550
    %6939 = vmatprep.subr.bf16.mxu0 %v6671
    %6940 = vmatpush2.bf16.msra.mxu0 %v6670
    %6941 = vmatprep.subr.bf16.mxu0 %v6663
    %6942 = vmatpush2.bf16.msra.mxu0 %v6662
    %6943 = vmatprep.subr.bf16.mxu0 %v6655
    %6944 = vmatpush2.bf16.msra.mxu0 %v6654
    %6945 = vmatprep.subr.bf16.mxu0 %v6647
    %6946 = vmatpush2.bf16.msra.mxu0 %v6646
    %6947 = vmatprep.subr.bf16.mxu0 %v6639
    %6948 = vmatpush2.bf16.msra.mxu0 %v6638
    %6949 = vmatprep.subr.bf16.mxu0 %v6631
    %6950 = vmatpush2.bf16.msra.mxu0 %v6630
    %6951 = vmatprep.subr.bf16.mxu0 %v6623
    %6952 = vmatpush2.bf16.msra.mxu0 %v6622
    %6953 = vmatprep.subr.bf16.mxu0 %v6615
    %6954 = vmatpush2.bf16.msra.mxu0 %v6614
    %6955 = vmatprep.mubr.bf16.mxu0 %v6031
    %6956 = vmatmul.mubr.bf16.gmra.mxu0 %v6030
    %v6957 = vpop.f32.mrf.mxu0
    %v6958 = vadd.f32 0.0, %v6957
    %v6959 = vpop.f32.mrf.mxu0
    %v6960 = vadd.f32 0.0, %v6959
    %v6961 = vpop.f32.mrf.mxu0
    %v6962 = vpop.f32.mrf.mxu0
    %6963 = vdwg.mxu0
    %s6964 = scalar_lea.vmem [#allocation3], 5
    %v6965 = vld [vmem:[%s6964] ss:$8 sm:$0xf]
    %v6970 = vcombine.low %v6835, %v6837
    %v6971 = vcombine.low %v6876, %v6878
    %v6973 = vunpack.c.l.s4 1966171168
    %v6974 = vunpack.c.0.s8 %v6973
    %v6975 = vlaneseq
    %v6976 = vshrl.u32 %v6975, 7
    %v6977 = vsub.s32 %v6974, %v6976
    %v6978 = vrot.slane %v6970, %v6977
    %v6980 = vunpack.c.l.s4 1966171168
    %v6981 = vunpack.c.0.s8 %v6980
    %v6982 = vlaneseq
    %v6983 = vshrl.u32 %v6982, 7
    %v6984 = vsub.s32 %v6981, %v6983
    %v6985 = vrot.slane %v6971, %v6984
    %v6986 = vcombine.low %v6978, %v6985
    %v6988 = vunpack.c.l.s4 1966171168
    %v6989 = vunpack.c.0.s8 %v6988
    %v6990 = vlaneseq
    %v6991 = vshrl.u32 %v6990, 7
    %v6992 = vsub.s32 %v6989, %v6991
    %v6993 = vrot.slane %v6986, %v6992
    %v6995 = vadd.f32 %v6965, %v6993
    %s6996 = scalar_lea.vmem [#allocation3], 34
    %v6997 = vld [vmem:[%s6996] ss:$8 sm:$0xf]
    %v7002 = vcombine.low %v6917, %v6919
    %v7003 = vcombine.low %v6958, %v6960
    %v7005 = vunpack.c.l.s4 1966171168
    %v7006 = vunpack.c.0.s8 %v7005
    %v7007 = vlaneseq
    %v7008 = vshrl.u32 %v7007, 7
    %v7009 = vsub.s32 %v7006, %v7008
    %v7010 = vrot.slane %v7002, %v7009
    %v7012 = vunpack.c.l.s4 1966171168
    %v7013 = vunpack.c.0.s8 %v7012
    %v7014 = vlaneseq
    %v7015 = vshrl.u32 %v7014, 7
    %v7016 = vsub.s32 %v7013, %v7015
    %v7017 = vrot.slane %v7003, %v7016
    %v7018 = vcombine.low %v7010, %v7017
    %v7020 = vunpack.c.l.s4 1966171168
    %v7021 = vunpack.c.0.s8 %v7020
    %v7022 = vlaneseq
    %v7023 = vshrl.u32 %v7022, 7
    %v7024 = vsub.s32 %v7021, %v7023
    %v7025 = vrot.slane %v7018, %v7024
    %v7027 = vadd.f32 %v6997, %v7025
    %v7028 = vxor.u32 %v6995, 2147483648
    %v7029 = vmul.f32 %v7028, 1.442695
    %v7030 = vpow.pop %v7029
    %v7031 = vadd.f32 %v7030, 1.0
    %v7032 = vrcp.pop %v7031
    %v7033 = vmul.f32 1.0, %v7032
    %v7035 = vrot.slane %v6995, 1
    %v7037 = vxor.u32 %v7035, 2147483648
    %v7038 = vmul.f32 %v7037, 1.442695
    %v7039 = vpow.pop %v7038
    %v7040 = vadd.f32 %v7039, 1.0
    %v7041 = vrcp.pop %v7040
    %v7042 = vmul.f32 1.0, %v7041
    %v7043 = vrot.slane %v6995, 2
    %v7045 = vtanh.pop %v7043
    %v7046 = vrot.slane %v6995, 3
    %v7048 = vxor.u32 %v7046, 2147483648
    %v7049 = vmul.f32 %v7048, 1.442695
    %v7050 = vpow.pop %v7049
    %v7051 = vadd.f32 %v7050, 1.0
    %v7052 = vrcp.pop %v7051
    %v7053 = vmul.f32 1.0, %v7052
    %v7054 = vmul.f32 %v7042, %v5994
    %v7055 = vmul.f32 %v7033, %v7045
    %v7056 = vadd.f32 %v7054, %v7055
    %v7057 = vtanh.pop %v7056
    %v7058 = vmul.f32 %v7053, %v7057
    %v7059 = vxor.u32 %v7027, 2147483648
    %v7060 = vmul.f32 %v7059, 1.442695
    %v7061 = vpow.pop %v7060
    %v7062 = vadd.f32 %v7061, 1.0
    %v7063 = vrcp.pop %v7062
    %v7064 = vmul.f32 1.0, %v7063
    %v7066 = vrot.slane %v7027, 1
    %v7068 = vxor.u32 %v7066, 2147483648
    %v7069 = vmul.f32 %v7068, 1.442695
    %v7070 = vpow.pop %v7069
    %v7071 = vadd.f32 %v7070, 1.0
    %v7072 = vrcp.pop %v7071
    %v7073 = vmul.f32 1.0, %v7072
    %v7074 = vrot.slane %v7027, 2
    %v7076 = vtanh.pop %v7074
    %v7077 = vrot.slane %v7027, 3
    %v7079 = vxor.u32 %v7077, 2147483648
    %v7080 = vmul.f32 %v7079, 1.442695
    %v7081 = vpow.pop %v7080
    %v7082 = vadd.f32 %v7081, 1.0
    %v7083 = vrcp.pop %v7082
    %v7084 = vmul.f32 1.0, %v7083
    %v7085 = vmul.f32 %v7073, %v6025
    %v7086 = vmul.f32 %v7064, %v7076
    %v7087 = vadd.f32 %v7085, %v7086
    %v7088 = vtanh.pop %v7087
    %v7089 = vmul.f32 %v7084, %v7088
    %7090 = vst [vmem:[#allocation14 + $0x5] sm:$0x1] %v7058
    %7091 = vst [vmem:[#allocation14 + $0xa] sm:$0x1] %v7089
    %v7092 = vpack.c.bf16 %v7058, %v7058
    %v7093 = vpack.c.bf16 %v7089, %v7089
    %v7094 = vld [vmem:[#allocation11] sm:$0xff]
    %v7095 = vld [vmem:[#allocation11 + $0x8] sm:$0xff]
    %v7096 = vld [vmem:[#allocation11 + $0x10] sm:$0xff]
    %v7097 = vld [vmem:[#allocation11 + $0x18] sm:$0xff]
    %v7098 = vld [vmem:[#allocation11 + $0x20] sm:$0xff]
    %v7099 = vld [vmem:[#allocation11 + $0x28] sm:$0xff]
    %v7100 = vld [vmem:[#allocation11 + $0x30] sm:$0xff]
    %v7101 = vld [vmem:[#allocation11 + $0x38] sm:$0xff]
    %v7102 = vld [vmem:[#allocation11 + $0x40] sm:$0xff]
    %v7103 = vld [vmem:[#allocation11 + $0x48] sm:$0xff]
    %v7104 = vld [vmem:[#allocation11 + $0x50] sm:$0xff]
    %v7105 = vld [vmem:[#allocation11 + $0x58] sm:$0xff]
    %v7106 = vld [vmem:[#allocation11 + $0x60] sm:$0xff]
    %v7107 = vld [vmem:[#allocation11 + $0x68] sm:$0xff]
    %v7108 = vld [vmem:[#allocation11 + $0x70] sm:$0xff]
    %v7109 = vld [vmem:[#allocation11 + $0x78] sm:$0xff]
    %v7110 = vld [vmem:[#allocation11 + $0x80] sm:$0xff]
    %v7111 = vld [vmem:[#allocation11 + $0x88] sm:$0xff]
    %v7112 = vld [vmem:[#allocation11 + $0x90] sm:$0xff]
    %v7113 = vld [vmem:[#allocation11 + $0x98] sm:$0xff]
    %v7114 = vld [vmem:[#allocation11 + $0xa0] sm:$0xff]
    %v7115 = vld [vmem:[#allocation11 + $0xa8] sm:$0xff]
    %v7116 = vld [vmem:[#allocation11 + $0xb0] sm:$0xff]
    %v7117 = vld [vmem:[#allocation11 + $0xb8] sm:$0xff]
    %v7118 = vld [vmem:[#allocation11 + $0xc0] sm:$0xff]
    %v7119 = vld [vmem:[#allocation11 + $0xc8] sm:$0xff]
    %v7120 = vld [vmem:[#allocation11 + $0xd0] sm:$0xff]
    %v7121 = vld [vmem:[#allocation11 + $0xd8] sm:$0xff]
    %v7122 = vld [vmem:[#allocation11 + $0xe0] sm:$0xff]
    %v7123 = vld [vmem:[#allocation11 + $0xe8] sm:$0xff]
    %v7124 = vld [vmem:[#allocation11 + $0xf0] sm:$0xff]
    %v7125 = vld [vmem:[#allocation11 + $0xf8] sm:$0xff]
    %v7126 = vld [vmem:[#allocation11 + $0x100] sm:$0xff]
    %v7127 = vld [vmem:[#allocation11 + $0x108] sm:$0xff]
    %v7128 = vld [vmem:[#allocation11 + $0x110] sm:$0xff]
    %v7129 = vld [vmem:[#allocation11 + $0x118] sm:$0xff]
    %v7130 = vld [vmem:[#allocation11 + $0x120] sm:$0xff]
    %v7131 = vld [vmem:[#allocation11 + $0x128] sm:$0xff]
    %v7132 = vld [vmem:[#allocation11 + $0x130] sm:$0xff]
    %v7133 = vld [vmem:[#allocation11 + $0x138] sm:$0xff]
    %v7134 = vld [vmem:[#allocation11 + $0x140] sm:$0xff]
    %v7135 = vld [vmem:[#allocation11 + $0x148] sm:$0xff]
    %v7136 = vld [vmem:[#allocation11 + $0x150] sm:$0xff]
    %v7137 = vld [vmem:[#allocation11 + $0x158] sm:$0xff]
    %v7138 = vld [vmem:[#allocation11 + $0x160] sm:$0xff]
    %v7139 = vld [vmem:[#allocation11 + $0x168] sm:$0xff]
    %v7140 = vld [vmem:[#allocation11 + $0x170] sm:$0xff]
    %v7141 = vld [vmem:[#allocation11 + $0x178] sm:$0xff]
    %v7142 = vld [vmem:[#allocation11 + $0x180] sm:$0xff]
    %v7143 = vld [vmem:[#allocation11 + $0x188] sm:$0xff]
    %v7144 = vld [vmem:[#allocation11 + $0x190] sm:$0xff]
    %v7145 = vld [vmem:[#allocation11 + $0x198] sm:$0xff]
    %v7146 = vld [vmem:[#allocation11 + $0x1a0] sm:$0xff]
    %v7147 = vld [vmem:[#allocation11 + $0x1a8] sm:$0xff]
    %v7148 = vld [vmem:[#allocation11 + $0x1b0] sm:$0xff]
    %v7149 = vld [vmem:[#allocation11 + $0x1b8] sm:$0xff]
    %v7150 = vld [vmem:[#allocation11 + $0x1c0] sm:$0xff]
    %v7151 = vld [vmem:[#allocation11 + $0x1c8] sm:$0xff]
    %v7152 = vld [vmem:[#allocation11 + $0x1d0] sm:$0xff]
    %v7153 = vld [vmem:[#allocation11 + $0x1d8] sm:$0xff]
    %v7154 = vld [vmem:[#allocation11 + $0x1e0] sm:$0xff]
    %v7155 = vld [vmem:[#allocation11 + $0x1e8] sm:$0xff]
    %v7156 = vld [vmem:[#allocation11 + $0x1f0] sm:$0xff]
    %v7157 = vld [vmem:[#allocation11 + $0x1f8] sm:$0xff]
    %v7158 = vld [vmem:[#allocation11 + $0x200] sm:$0xff]
    %v7159 = vld [vmem:[#allocation11 + $0x208] sm:$0xff]
    %v7160 = vld [vmem:[#allocation11 + $0x210] sm:$0xff]
    %v7161 = vld [vmem:[#allocation11 + $0x218] sm:$0xff]
    %v7162 = vld [vmem:[#allocation11 + $0x220] sm:$0xff]
    %v7163 = vld [vmem:[#allocation11 + $0x228] sm:$0xff]
    %v7164 = vld [vmem:[#allocation11 + $0x230] sm:$0xff]
    %v7165 = vld [vmem:[#allocation11 + $0x238] sm:$0xff]
    %v7166 = vld [vmem:[#allocation11 + $0x240] sm:$0xff]
    %v7167 = vld [vmem:[#allocation11 + $0x248] sm:$0xff]
    %v7168 = vld [vmem:[#allocation11 + $0x250] sm:$0xff]
    %v7169 = vld [vmem:[#allocation11 + $0x258] sm:$0xff]
    %v7170 = vld [vmem:[#allocation11 + $0x260] sm:$0xff]
    %v7171 = vld [vmem:[#allocation11 + $0x268] sm:$0xff]
    %v7172 = vld [vmem:[#allocation11 + $0x270] sm:$0xff]
    %v7173 = vld [vmem:[#allocation11 + $0x278] sm:$0xff]
    %v7174 = vld [vmem:[#allocation11 + $0x280] sm:$0xff]
    %v7175 = vld [vmem:[#allocation11 + $0x288] sm:$0xff]
    %v7176 = vld [vmem:[#allocation11 + $0x290] sm:$0xff]
    %v7177 = vld [vmem:[#allocation11 + $0x298] sm:$0xff]
    %v7178 = vld [vmem:[#allocation11 + $0x2a0] sm:$0xff]
    %v7179 = vld [vmem:[#allocation11 + $0x2a8] sm:$0xff]
    %v7180 = vld [vmem:[#allocation11 + $0x2b0] sm:$0xff]
    %v7181 = vld [vmem:[#allocation11 + $0x2b8] sm:$0xff]
    %v7182 = vld [vmem:[#allocation11 + $0x2c0] sm:$0xff]
    %v7183 = vld [vmem:[#allocation11 + $0x2c8] sm:$0xff]
    %v7184 = vld [vmem:[#allocation11 + $0x2d0] sm:$0xff]
    %v7185 = vld [vmem:[#allocation11 + $0x2d8] sm:$0xff]
    %v7186 = vld [vmem:[#allocation11 + $0x2e0] sm:$0xff]
    %v7187 = vld [vmem:[#allocation11 + $0x2e8] sm:$0xff]
    %v7188 = vld [vmem:[#allocation11 + $0x2f0] sm:$0xff]
    %v7189 = vld [vmem:[#allocation11 + $0x2f8] sm:$0xff]
    %v7190 = vld [vmem:[#allocation11 + $0x300] sm:$0xff]
    %v7191 = vld [vmem:[#allocation11 + $0x308] sm:$0xff]
    %v7192 = vld [vmem:[#allocation11 + $0x310] sm:$0xff]
    %v7193 = vld [vmem:[#allocation11 + $0x318] sm:$0xff]
    %v7194 = vld [vmem:[#allocation11 + $0x320] sm:$0xff]
    %v7195 = vld [vmem:[#allocation11 + $0x328] sm:$0xff]
    %v7196 = vld [vmem:[#allocation11 + $0x330] sm:$0xff]
    %v7197 = vld [vmem:[#allocation11 + $0x338] sm:$0xff]
    %v7198 = vld [vmem:[#allocation11 + $0x340] sm:$0xff]
    %v7199 = vld [vmem:[#allocation11 + $0x348] sm:$0xff]
    %v7200 = vld [vmem:[#allocation11 + $0x350] sm:$0xff]
    %v7201 = vld [vmem:[#allocation11 + $0x358] sm:$0xff]
    %v7202 = vld [vmem:[#allocation11 + $0x360] sm:$0xff]
    %v7203 = vld [vmem:[#allocation11 + $0x368] sm:$0xff]
    %v7204 = vld [vmem:[#allocation11 + $0x370] sm:$0xff]
    %v7205 = vld [vmem:[#allocation11 + $0x378] sm:$0xff]
    %v7206 = vld [vmem:[#allocation11 + $0x380] sm:$0xff]
    %v7207 = vld [vmem:[#allocation11 + $0x388] sm:$0xff]
    %v7208 = vld [vmem:[#allocation11 + $0x390] sm:$0xff]
    %v7209 = vld [vmem:[#allocation11 + $0x398] sm:$0xff]
    %v7210 = vld [vmem:[#allocation11 + $0x3a0] sm:$0xff]
    %v7211 = vld [vmem:[#allocation11 + $0x3a8] sm:$0xff]
    %v7212 = vld [vmem:[#allocation11 + $0x3b0] sm:$0xff]
    %v7213 = vld [vmem:[#allocation11 + $0x3b8] sm:$0xff]
    %v7214 = vld [vmem:[#allocation11 + $0x3c0] sm:$0xff]
    %v7215 = vld [vmem:[#allocation11 + $0x3c8] sm:$0xff]
    %v7216 = vld [vmem:[#allocation11 + $0x3d0] sm:$0xff]
    %v7217 = vld [vmem:[#allocation11 + $0x3d8] sm:$0xff]
    %v7218 = vld [vmem:[#allocation11 + $0x3e0] sm:$0xff]
    %v7219 = vld [vmem:[#allocation11 + $0x3e8] sm:$0xff]
    %v7220 = vld [vmem:[#allocation11 + $0x3f0] sm:$0xff]
    %v7221 = vld [vmem:[#allocation11 + $0x3f8] sm:$0xff]
    %v7350 = vunpack.c.l.b16 %v7094
    %v7351 = vunpack.c.h.b16 %v7094
    %v7352 = vunpack.c.l.b16 %v7095
    %v7353 = vunpack.c.h.b16 %v7095
    %v7354 = vunpack.c.l.b16 %v7096
    %v7355 = vunpack.c.h.b16 %v7096
    %v7356 = vunpack.c.l.b16 %v7097
    %v7357 = vunpack.c.h.b16 %v7097
    %v7358 = vunpack.c.l.b16 %v7098
    %v7359 = vunpack.c.h.b16 %v7098
    %v7360 = vunpack.c.l.b16 %v7099
    %v7361 = vunpack.c.h.b16 %v7099
    %v7362 = vunpack.c.l.b16 %v7100
    %v7363 = vunpack.c.h.b16 %v7100
    %v7364 = vunpack.c.l.b16 %v7101
    %v7365 = vunpack.c.h.b16 %v7101
    %v7366 = vunpack.c.l.b16 %v7102
    %v7367 = vunpack.c.h.b16 %v7102
    %v7368 = vunpack.c.l.b16 %v7103
    %v7369 = vunpack.c.h.b16 %v7103
    %v7370 = vunpack.c.l.b16 %v7104
    %v7371 = vunpack.c.h.b16 %v7104
    %v7372 = vunpack.c.l.b16 %v7105
    %v7373 = vunpack.c.h.b16 %v7105
    %v7374 = vunpack.c.l.b16 %v7106
    %v7375 = vunpack.c.h.b16 %v7106
    %v7376 = vunpack.c.l.b16 %v7107
    %v7377 = vunpack.c.h.b16 %v7107
    %v7378 = vunpack.c.l.b16 %v7108
    %v7379 = vunpack.c.h.b16 %v7108
    %v7380 = vunpack.c.l.b16 %v7109
    %v7381 = vunpack.c.h.b16 %v7109
    %v7382 = vunpack.c.l.b16 %v7110
    %v7383 = vunpack.c.h.b16 %v7110
    %v7384 = vunpack.c.l.b16 %v7111
    %v7385 = vunpack.c.h.b16 %v7111
    %v7386 = vunpack.c.l.b16 %v7112
    %v7387 = vunpack.c.h.b16 %v7112
    %v7388 = vunpack.c.l.b16 %v7113
    %v7389 = vunpack.c.h.b16 %v7113
    %v7390 = vunpack.c.l.b16 %v7114
    %v7391 = vunpack.c.h.b16 %v7114
    %v7392 = vunpack.c.l.b16 %v7115
    %v7393 = vunpack.c.h.b16 %v7115
    %v7394 = vunpack.c.l.b16 %v7116
    %v7395 = vunpack.c.h.b16 %v7116
    %v7396 = vunpack.c.l.b16 %v7117
    %v7397 = vunpack.c.h.b16 %v7117
    %v7398 = vunpack.c.l.b16 %v7118
    %v7399 = vunpack.c.h.b16 %v7118
    %v7400 = vunpack.c.l.b16 %v7119
    %v7401 = vunpack.c.h.b16 %v7119
    %v7402 = vunpack.c.l.b16 %v7120
    %v7403 = vunpack.c.h.b16 %v7120
    %v7404 = vunpack.c.l.b16 %v7121
    %v7405 = vunpack.c.h.b16 %v7121
    %v7406 = vunpack.c.l.b16 %v7122
    %v7407 = vunpack.c.h.b16 %v7122
    %v7408 = vunpack.c.l.b16 %v7123
    %v7409 = vunpack.c.h.b16 %v7123
    %v7410 = vunpack.c.l.b16 %v7124
    %v7411 = vunpack.c.h.b16 %v7124
    %v7412 = vunpack.c.l.b16 %v7125
    %v7413 = vunpack.c.h.b16 %v7125
    %v7414 = vunpack.c.l.b16 %v7126
    %v7415 = vunpack.c.h.b16 %v7126
    %v7416 = vunpack.c.l.b16 %v7127
    %v7417 = vunpack.c.h.b16 %v7127
    %v7418 = vunpack.c.l.b16 %v7128
    %v7419 = vunpack.c.h.b16 %v7128
    %v7420 = vunpack.c.l.b16 %v7129
    %v7421 = vunpack.c.h.b16 %v7129
    %v7422 = vunpack.c.l.b16 %v7130
    %v7423 = vunpack.c.h.b16 %v7130
    %v7424 = vunpack.c.l.b16 %v7131
    %v7425 = vunpack.c.h.b16 %v7131
    %v7426 = vunpack.c.l.b16 %v7132
    %v7427 = vunpack.c.h.b16 %v7132
    %v7428 = vunpack.c.l.b16 %v7133
    %v7429 = vunpack.c.h.b16 %v7133
    %v7430 = vunpack.c.l.b16 %v7134
    %v7431 = vunpack.c.h.b16 %v7134
    %v7432 = vunpack.c.l.b16 %v7135
    %v7433 = vunpack.c.h.b16 %v7135
    %v7434 = vunpack.c.l.b16 %v7136
    %v7435 = vunpack.c.h.b16 %v7136
    %v7436 = vunpack.c.l.b16 %v7137
    %v7437 = vunpack.c.h.b16 %v7137
    %v7438 = vunpack.c.l.b16 %v7138
    %v7439 = vunpack.c.h.b16 %v7138
    %v7440 = vunpack.c.l.b16 %v7139
    %v7441 = vunpack.c.h.b16 %v7139
    %v7442 = vunpack.c.l.b16 %v7140
    %v7443 = vunpack.c.h.b16 %v7140
    %v7444 = vunpack.c.l.b16 %v7141
    %v7445 = vunpack.c.h.b16 %v7141
    %v7446 = vunpack.c.l.b16 %v7142
    %v7447 = vunpack.c.h.b16 %v7142
    %v7448 = vunpack.c.l.b16 %v7143
    %v7449 = vunpack.c.h.b16 %v7143
    %v7450 = vunpack.c.l.b16 %v7144
    %v7451 = vunpack.c.h.b16 %v7144
    %v7452 = vunpack.c.l.b16 %v7145
    %v7453 = vunpack.c.h.b16 %v7145
    %v7454 = vunpack.c.l.b16 %v7146
    %v7455 = vunpack.c.h.b16 %v7146
    %v7456 = vunpack.c.l.b16 %v7147
    %v7457 = vunpack.c.h.b16 %v7147
    %v7458 = vunpack.c.l.b16 %v7148
    %v7459 = vunpack.c.h.b16 %v7148
    %v7460 = vunpack.c.l.b16 %v7149
    %v7461 = vunpack.c.h.b16 %v7149
    %v7462 = vunpack.c.l.b16 %v7150
    %v7463 = vunpack.c.h.b16 %v7150
    %v7464 = vunpack.c.l.b16 %v7151
    %v7465 = vunpack.c.h.b16 %v7151
    %v7466 = vunpack.c.l.b16 %v7152
    %v7467 = vunpack.c.h.b16 %v7152
    %v7468 = vunpack.c.l.b16 %v7153
    %v7469 = vunpack.c.h.b16 %v7153
    %v7470 = vunpack.c.l.b16 %v7154
    %v7471 = vunpack.c.h.b16 %v7154
    %v7472 = vunpack.c.l.b16 %v7155
    %v7473 = vunpack.c.h.b16 %v7155
    %v7474 = vunpack.c.l.b16 %v7156
    %v7475 = vunpack.c.h.b16 %v7156
    %v7476 = vunpack.c.l.b16 %v7157
    %v7477 = vunpack.c.h.b16 %v7157
    %v7478 = vunpack.c.l.b16 %v7158
    %v7479 = vunpack.c.h.b16 %v7158
    %v7480 = vunpack.c.l.b16 %v7159
    %v7481 = vunpack.c.h.b16 %v7159
    %v7482 = vunpack.c.l.b16 %v7160
    %v7483 = vunpack.c.h.b16 %v7160
    %v7484 = vunpack.c.l.b16 %v7161
    %v7485 = vunpack.c.h.b16 %v7161
    %v7486 = vunpack.c.l.b16 %v7162
    %v7487 = vunpack.c.h.b16 %v7162
    %v7488 = vunpack.c.l.b16 %v7163
    %v7489 = vunpack.c.h.b16 %v7163
    %v7490 = vunpack.c.l.b16 %v7164
    %v7491 = vunpack.c.h.b16 %v7164
    %v7492 = vunpack.c.l.b16 %v7165
    %v7493 = vunpack.c.h.b16 %v7165
    %v7494 = vunpack.c.l.b16 %v7166
    %v7495 = vunpack.c.h.b16 %v7166
    %v7496 = vunpack.c.l.b16 %v7167
    %v7497 = vunpack.c.h.b16 %v7167
    %v7498 = vunpack.c.l.b16 %v7168
    %v7499 = vunpack.c.h.b16 %v7168
    %v7500 = vunpack.c.l.b16 %v7169
    %v7501 = vunpack.c.h.b16 %v7169
    %v7502 = vunpack.c.l.b16 %v7170
    %v7503 = vunpack.c.h.b16 %v7170
    %v7504 = vunpack.c.l.b16 %v7171
    %v7505 = vunpack.c.h.b16 %v7171
    %v7506 = vunpack.c.l.b16 %v7172
    %v7507 = vunpack.c.h.b16 %v7172
    %v7508 = vunpack.c.l.b16 %v7173
    %v7509 = vunpack.c.h.b16 %v7173
    %v7510 = vunpack.c.l.b16 %v7174
    %v7511 = vunpack.c.h.b16 %v7174
    %v7512 = vunpack.c.l.b16 %v7175
    %v7513 = vunpack.c.h.b16 %v7175
    %v7514 = vunpack.c.l.b16 %v7176
    %v7515 = vunpack.c.h.b16 %v7176
    %v7516 = vunpack.c.l.b16 %v7177
    %v7517 = vunpack.c.h.b16 %v7177
    %v7518 = vunpack.c.l.b16 %v7178
    %v7519 = vunpack.c.h.b16 %v7178
    %v7520 = vunpack.c.l.b16 %v7179
    %v7521 = vunpack.c.h.b16 %v7179
    %v7522 = vunpack.c.l.b16 %v7180
    %v7523 = vunpack.c.h.b16 %v7180
    %v7524 = vunpack.c.l.b16 %v7181
    %v7525 = vunpack.c.h.b16 %v7181
    %v7526 = vunpack.c.l.b16 %v7182
    %v7527 = vunpack.c.h.b16 %v7182
    %v7528 = vunpack.c.l.b16 %v7183
    %v7529 = vunpack.c.h.b16 %v7183
    %v7530 = vunpack.c.l.b16 %v7184
    %v7531 = vunpack.c.h.b16 %v7184
    %v7532 = vunpack.c.l.b16 %v7185
    %v7533 = vunpack.c.h.b16 %v7185
    %v7534 = vunpack.c.l.b16 %v7186
    %v7535 = vunpack.c.h.b16 %v7186
    %v7536 = vunpack.c.l.b16 %v7187
    %v7537 = vunpack.c.h.b16 %v7187
    %v7538 = vunpack.c.l.b16 %v7188
    %v7539 = vunpack.c.h.b16 %v7188
    %v7540 = vunpack.c.l.b16 %v7189
    %v7541 = vunpack.c.h.b16 %v7189
    %v7542 = vunpack.c.l.b16 %v7190
    %v7543 = vunpack.c.h.b16 %v7190
    %v7544 = vunpack.c.l.b16 %v7191
    %v7545 = vunpack.c.h.b16 %v7191
    %v7546 = vunpack.c.l.b16 %v7192
    %v7547 = vunpack.c.h.b16 %v7192
    %v7548 = vunpack.c.l.b16 %v7193
    %v7549 = vunpack.c.h.b16 %v7193
    %v7550 = vunpack.c.l.b16 %v7194
    %v7551 = vunpack.c.h.b16 %v7194
    %v7552 = vunpack.c.l.b16 %v7195
    %v7553 = vunpack.c.h.b16 %v7195
    %v7554 = vunpack.c.l.b16 %v7196
    %v7555 = vunpack.c.h.b16 %v7196
    %v7556 = vunpack.c.l.b16 %v7197
    %v7557 = vunpack.c.h.b16 %v7197
    %v7558 = vunpack.c.l.b16 %v7198
    %v7559 = vunpack.c.h.b16 %v7198
    %v7560 = vunpack.c.l.b16 %v7199
    %v7561 = vunpack.c.h.b16 %v7199
    %v7562 = vunpack.c.l.b16 %v7200
    %v7563 = vunpack.c.h.b16 %v7200
    %v7564 = vunpack.c.l.b16 %v7201
    %v7565 = vunpack.c.h.b16 %v7201
    %v7566 = vunpack.c.l.b16 %v7202
    %v7567 = vunpack.c.h.b16 %v7202
    %v7568 = vunpack.c.l.b16 %v7203
    %v7569 = vunpack.c.h.b16 %v7203
    %v7570 = vunpack.c.l.b16 %v7204
    %v7571 = vunpack.c.h.b16 %v7204
    %v7572 = vunpack.c.l.b16 %v7205
    %v7573 = vunpack.c.h.b16 %v7205
    %v7574 = vunpack.c.l.b16 %v7206
    %v7575 = vunpack.c.h.b16 %v7206
    %v7576 = vunpack.c.l.b16 %v7207
    %v7577 = vunpack.c.h.b16 %v7207
    %v7578 = vunpack.c.l.b16 %v7208
    %v7579 = vunpack.c.h.b16 %v7208
    %v7580 = vunpack.c.l.b16 %v7209
    %v7581 = vunpack.c.h.b16 %v7209
    %v7582 = vunpack.c.l.b16 %v7210
    %v7583 = vunpack.c.h.b16 %v7210
    %v7584 = vunpack.c.l.b16 %v7211
    %v7585 = vunpack.c.h.b16 %v7211
    %v7586 = vunpack.c.l.b16 %v7212
    %v7587 = vunpack.c.h.b16 %v7212
    %v7588 = vunpack.c.l.b16 %v7213
    %v7589 = vunpack.c.h.b16 %v7213
    %v7590 = vunpack.c.l.b16 %v7214
    %v7591 = vunpack.c.h.b16 %v7214
    %v7592 = vunpack.c.l.b16 %v7215
    %v7593 = vunpack.c.h.b16 %v7215
    %v7594 = vunpack.c.l.b16 %v7216
    %v7595 = vunpack.c.h.b16 %v7216
    %v7596 = vunpack.c.l.b16 %v7217
    %v7597 = vunpack.c.h.b16 %v7217
    %v7598 = vunpack.c.l.b16 %v7218
    %v7599 = vunpack.c.h.b16 %v7218
    %v7600 = vunpack.c.l.b16 %v7219
    %v7601 = vunpack.c.h.b16 %v7219
    %v7602 = vunpack.c.l.b16 %v7220
    %v7603 = vunpack.c.h.b16 %v7220
    %v7604 = vunpack.c.l.b16 %v7221
    %v7605 = vunpack.c.h.b16 %v7221
    %v7606 = vpack.c.b16 %v7358, %v7350
    %v7607 = vpack.c.b16 %v7359, %v7351
    %v7608 = vpack.c.b16 %v7360, %v7352
    %v7609 = vpack.c.b16 %v7361, %v7353
    %v7610 = vpack.c.b16 %v7362, %v7354
    %v7611 = vpack.c.b16 %v7363, %v7355
    %v7612 = vpack.c.b16 %v7364, %v7356
    %v7613 = vpack.c.b16 %v7365, %v7357
    %v7614 = vpack.c.b16 %v7374, %v7366
    %v7615 = vpack.c.b16 %v7375, %v7367
    %v7616 = vpack.c.b16 %v7376, %v7368
    %v7617 = vpack.c.b16 %v7377, %v7369
    %v7618 = vpack.c.b16 %v7378, %v7370
    %v7619 = vpack.c.b16 %v7379, %v7371
    %v7620 = vpack.c.b16 %v7380, %v7372
    %v7621 = vpack.c.b16 %v7381, %v7373
    %v7622 = vpack.c.b16 %v7390, %v7382
    %v7623 = vpack.c.b16 %v7391, %v7383
    %v7624 = vpack.c.b16 %v7392, %v7384
    %v7625 = vpack.c.b16 %v7393, %v7385
    %v7626 = vpack.c.b16 %v7394, %v7386
    %v7627 = vpack.c.b16 %v7395, %v7387
    %v7628 = vpack.c.b16 %v7396, %v7388
    %v7629 = vpack.c.b16 %v7397, %v7389
    %v7630 = vpack.c.b16 %v7406, %v7398
    %v7631 = vpack.c.b16 %v7407, %v7399
    %v7632 = vpack.c.b16 %v7408, %v7400
    %v7633 = vpack.c.b16 %v7409, %v7401
    %v7634 = vpack.c.b16 %v7410, %v7402
    %v7635 = vpack.c.b16 %v7411, %v7403
    %v7636 = vpack.c.b16 %v7412, %v7404
    %v7637 = vpack.c.b16 %v7413, %v7405
    %v7638 = vpack.c.b16 %v7422, %v7414
    %v7639 = vpack.c.b16 %v7423, %v7415
    %v7640 = vpack.c.b16 %v7424, %v7416
    %v7641 = vpack.c.b16 %v7425, %v7417
    %v7642 = vpack.c.b16 %v7426, %v7418
    %v7643 = vpack.c.b16 %v7427, %v7419
    %v7644 = vpack.c.b16 %v7428, %v7420
    %v7645 = vpack.c.b16 %v7429, %v7421
    %v7646 = vpack.c.b16 %v7438, %v7430
    %v7647 = vpack.c.b16 %v7439, %v7431
    %v7648 = vpack.c.b16 %v7440, %v7432
    %v7649 = vpack.c.b16 %v7441, %v7433
    %v7650 = vpack.c.b16 %v7442, %v7434
    %v7651 = vpack.c.b16 %v7443, %v7435
    %v7652 = vpack.c.b16 %v7444, %v7436
    %v7653 = vpack.c.b16 %v7445, %v7437
    %v7654 = vpack.c.b16 %v7454, %v7446
    %v7655 = vpack.c.b16 %v7455, %v7447
    %v7656 = vpack.c.b16 %v7456, %v7448
    %v7657 = vpack.c.b16 %v7457, %v7449
    %v7658 = vpack.c.b16 %v7458, %v7450
    %v7659 = vpack.c.b16 %v7459, %v7451
    %v7660 = vpack.c.b16 %v7460, %v7452
    %v7661 = vpack.c.b16 %v7461, %v7453
    %v7662 = vpack.c.b16 %v7470, %v7462
    %v7663 = vpack.c.b16 %v7471, %v7463
    %v7664 = vpack.c.b16 %v7472, %v7464
    %v7665 = vpack.c.b16 %v7473, %v7465
    %v7666 = vpack.c.b16 %v7474, %v7466
    %v7667 = vpack.c.b16 %v7475, %v7467
    %v7668 = vpack.c.b16 %v7476, %v7468
    %v7669 = vpack.c.b16 %v7477, %v7469
    %v7670 = vpack.c.b16 %v7486, %v7478
    %v7671 = vpack.c.b16 %v7487, %v7479
    %v7672 = vpack.c.b16 %v7488, %v7480
    %v7673 = vpack.c.b16 %v7489, %v7481
    %v7674 = vpack.c.b16 %v7490, %v7482
    %v7675 = vpack.c.b16 %v7491, %v7483
    %v7676 = vpack.c.b16 %v7492, %v7484
    %v7677 = vpack.c.b16 %v7493, %v7485
    %v7678 = vpack.c.b16 %v7502, %v7494
    %v7679 = vpack.c.b16 %v7503, %v7495
    %v7680 = vpack.c.b16 %v7504, %v7496
    %v7681 = vpack.c.b16 %v7505, %v7497
    %v7682 = vpack.c.b16 %v7506, %v7498
    %v7683 = vpack.c.b16 %v7507, %v7499
    %v7684 = vpack.c.b16 %v7508, %v7500
    %v7685 = vpack.c.b16 %v7509, %v7501
    %v7686 = vpack.c.b16 %v7518, %v7510
    %v7687 = vpack.c.b16 %v7519, %v7511
    %v7688 = vpack.c.b16 %v7520, %v7512
    %v7689 = vpack.c.b16 %v7521, %v7513
    %v7690 = vpack.c.b16 %v7522, %v7514
    %v7691 = vpack.c.b16 %v7523, %v7515
    %v7692 = vpack.c.b16 %v7524, %v7516
    %v7693 = vpack.c.b16 %v7525, %v7517
    %v7694 = vpack.c.b16 %v7534, %v7526
    %v7695 = vpack.c.b16 %v7535, %v7527
    %v7696 = vpack.c.b16 %v7536, %v7528
    %v7697 = vpack.c.b16 %v7537, %v7529
    %v7698 = vpack.c.b16 %v7538, %v7530
    %v7699 = vpack.c.b16 %v7539, %v7531
    %v7700 = vpack.c.b16 %v7540, %v7532
    %v7701 = vpack.c.b16 %v7541, %v7533
    %v7702 = vpack.c.b16 %v7550, %v7542
    %v7703 = vpack.c.b16 %v7551, %v7543
    %v7704 = vpack.c.b16 %v7552, %v7544
    %v7705 = vpack.c.b16 %v7553, %v7545
    %v7706 = vpack.c.b16 %v7554, %v7546
    %v7707 = vpack.c.b16 %v7555, %v7547
    %v7708 = vpack.c.b16 %v7556, %v7548
    %v7709 = vpack.c.b16 %v7557, %v7549
    %v7710 = vpack.c.b16 %v7566, %v7558
    %v7711 = vpack.c.b16 %v7567, %v7559
    %v7712 = vpack.c.b16 %v7568, %v7560
    %v7713 = vpack.c.b16 %v7569, %v7561
    %v7714 = vpack.c.b16 %v7570, %v7562
    %v7715 = vpack.c.b16 %v7571, %v7563
    %v7716 = vpack.c.b16 %v7572, %v7564
    %v7717 = vpack.c.b16 %v7573, %v7565
    %v7718 = vpack.c.b16 %v7582, %v7574
    %v7719 = vpack.c.b16 %v7583, %v7575
    %v7720 = vpack.c.b16 %v7584, %v7576
    %v7721 = vpack.c.b16 %v7585, %v7577
    %v7722 = vpack.c.b16 %v7586, %v7578
    %v7723 = vpack.c.b16 %v7587, %v7579
    %v7724 = vpack.c.b16 %v7588, %v7580
    %v7725 = vpack.c.b16 %v7589, %v7581
    %v7726 = vpack.c.b16 %v7598, %v7590
    %v7727 = vpack.c.b16 %v7599, %v7591
    %v7728 = vpack.c.b16 %v7600, %v7592
    %v7729 = vpack.c.b16 %v7601, %v7593
    %v7730 = vpack.c.b16 %v7602, %v7594
    %v7731 = vpack.c.b16 %v7603, %v7595
    %v7732 = vpack.c.b16 %v7604, %v7596
    %v7733 = vpack.c.b16 %v7605, %v7597
    %7862 = vmatprep.subr.bf16.mxu0 %v7663
    %7863 = vmatpush1.bf16.msra.mxu0 %v7662
    %7864 = vmatprep.subr.bf16.mxu0 %v7655
    %7865 = vmatpush1.bf16.msra.mxu0 %v7654
    %7866 = vmatprep.subr.bf16.mxu0 %v7647
    %7867 = vmatpush1.bf16.msra.mxu0 %v7646
    %7868 = vmatprep.subr.bf16.mxu0 %v7639
    %7869 = vmatpush1.bf16.msra.mxu0 %v7638
    %7870 = vmatprep.subr.bf16.mxu0 %v7631
    %7871 = vmatpush1.bf16.msra.mxu0 %v7630
    %7872 = vmatprep.subr.bf16.mxu0 %v7623
    %7873 = vmatpush1.bf16.msra.mxu0 %v7622
    %7874 = vmatprep.subr.bf16.mxu0 %v7615
    %7875 = vmatpush1.bf16.msra.mxu0 %v7614
    %7876 = vmatprep.subr.bf16.mxu0 %v7607
    %7877 = vmatpush1.bf16.msra.mxu0 %v7606
    %7878 = vmatprep.subr.bf16.mxu0 %v7727
    %7879 = vmatpush2.bf16.msra.mxu0 %v7726
    %7880 = vmatprep.subr.bf16.mxu0 %v7719
    %7881 = vmatpush2.bf16.msra.mxu0 %v7718
    %7882 = vmatprep.subr.bf16.mxu0 %v7711
    %7883 = vmatpush2.bf16.msra.mxu0 %v7710
    %7884 = vmatprep.subr.bf16.mxu0 %v7703
    %7885 = vmatpush2.bf16.msra.mxu0 %v7702
    %7886 = vmatprep.subr.bf16.mxu0 %v7695
    %7887 = vmatpush2.bf16.msra.mxu0 %v7694
    %7888 = vmatprep.subr.bf16.mxu0 %v7687
    %7889 = vmatpush2.bf16.msra.mxu0 %v7686
    %7890 = vmatprep.subr.bf16.mxu0 %v7679
    %7891 = vmatpush2.bf16.msra.mxu0 %v7678
    %7892 = vmatprep.subr.bf16.mxu0 %v7671
    %7893 = vmatpush2.bf16.msra.mxu0 %v7670
    %7894 = vmatprep.mubr.bf16.mxu0 %v7093
    %7895 = vmatmul.mubr.bf16.gmra.mxu0 %v7092
    %v7896 = vpop.f32.mrf.mxu0
    %v7897 = vadd.f32 0.0, %v7896
    %v7898 = vpop.f32.mrf.mxu0
    %v7899 = vadd.f32 0.0, %v7898
    %v7900 = vpop.f32.mrf.mxu0
    %v7901 = vpop.f32.mrf.mxu0
    %7902 = vdwg.mxu0
    %7903 = vmatprep.subr.bf16.mxu0 %v7665
    %7904 = vmatpush1.bf16.msra.mxu0 %v7664
    %7905 = vmatprep.subr.bf16.mxu0 %v7657
    %7906 = vmatpush1.bf16.msra.mxu0 %v7656
    %7907 = vmatprep.subr.bf16.mxu0 %v7649
    %7908 = vmatpush1.bf16.msra.mxu0 %v7648
    %7909 = vmatprep.subr.bf16.mxu0 %v7641
    %7910 = vmatpush1.bf16.msra.mxu0 %v7640
    %7911 = vmatprep.subr.bf16.mxu0 %v7633
    %7912 = vmatpush1.bf16.msra.mxu0 %v7632
    %7913 = vmatprep.subr.bf16.mxu0 %v7625
    %7914 = vmatpush1.bf16.msra.mxu0 %v7624
    %7915 = vmatprep.subr.bf16.mxu0 %v7617
    %7916 = vmatpush1.bf16.msra.mxu0 %v7616
    %7917 = vmatprep.subr.bf16.mxu0 %v7609
    %7918 = vmatpush1.bf16.msra.mxu0 %v7608
    %7919 = vmatprep.subr.bf16.mxu0 %v7729
    %7920 = vmatpush2.bf16.msra.mxu0 %v7728
    %7921 = vmatprep.subr.bf16.mxu0 %v7721
    %7922 = vmatpush2.bf16.msra.mxu0 %v7720
    %7923 = vmatprep.subr.bf16.mxu0 %v7713
    %7924 = vmatpush2.bf16.msra.mxu0 %v7712
    %7925 = vmatprep.subr.bf16.mxu0 %v7705
    %7926 = vmatpush2.bf16.msra.mxu0 %v7704
    %7927 = vmatprep.subr.bf16.mxu0 %v7697
    %7928 = vmatpush2.bf16.msra.mxu0 %v7696
    %7929 = vmatprep.subr.bf16.mxu0 %v7689
    %7930 = vmatpush2.bf16.msra.mxu0 %v7688
    %7931 = vmatprep.subr.bf16.mxu0 %v7681
    %7932 = vmatpush2.bf16.msra.mxu0 %v7680
    %7933 = vmatprep.subr.bf16.mxu0 %v7673
    %7934 = vmatpush2.bf16.msra.mxu0 %v7672
    %7935 = vmatprep.mubr.bf16.mxu0 %v7093
    %7936 = vmatmul.mubr.bf16.gmra.mxu0 %v7092
    %v7937 = vpop.f32.mrf.mxu0
    %v7938 = vadd.f32 0.0, %v7937
    %v7939 = vpop.f32.mrf.mxu0
    %v7940 = vadd.f32 0.0, %v7939
    %v7941 = vpop.f32.mrf.mxu0
    %v7942 = vpop.f32.mrf.mxu0
    %7943 = vdwg.mxu0
    %7944 = vmatprep.subr.bf16.mxu0 %v7667
    %7945 = vmatpush1.bf16.msra.mxu0 %v7666
    %7946 = vmatprep.subr.bf16.mxu0 %v7659
    %7947 = vmatpush1.bf16.msra.mxu0 %v7658
    %7948 = vmatprep.subr.bf16.mxu0 %v7651
    %7949 = vmatpush1.bf16.msra.mxu0 %v7650
    %7950 = vmatprep.subr.bf16.mxu0 %v7643
    %7951 = vmatpush1.bf16.msra.mxu0 %v7642
    %7952 = vmatprep.subr.bf16.mxu0 %v7635
    %7953 = vmatpush1.bf16.msra.mxu0 %v7634
    %7954 = vmatprep.subr.bf16.mxu0 %v7627
    %7955 = vmatpush1.bf16.msra.mxu0 %v7626
    %7956 = vmatprep.subr.bf16.mxu0 %v7619
    %7957 = vmatpush1.bf16.msra.mxu0 %v7618
    %7958 = vmatprep.subr.bf16.mxu0 %v7611
    %7959 = vmatpush1.bf16.msra.mxu0 %v7610
    %7960 = vmatprep.subr.bf16.mxu0 %v7731
    %7961 = vmatpush2.bf16.msra.mxu0 %v7730
    %7962 = vmatprep.subr.bf16.mxu0 %v7723
    %7963 = vmatpush2.bf16.msra.mxu0 %v7722
    %7964 = vmatprep.subr.bf16.mxu0 %v7715
    %7965 = vmatpush2.bf16.msra.mxu0 %v7714
    %7966 = vmatprep.subr.bf16.mxu0 %v7707
    %7967 = vmatpush2.bf16.msra.mxu0 %v7706
    %7968 = vmatprep.subr.bf16.mxu0 %v7699
    %7969 = vmatpush2.bf16.msra.mxu0 %v7698
    %7970 = vmatprep.subr.bf16.mxu0 %v7691
    %7971 = vmatpush2.bf16.msra.mxu0 %v7690
    %7972 = vmatprep.subr.bf16.mxu0 %v7683
    %7973 = vmatpush2.bf16.msra.mxu0 %v7682
    %7974 = vmatprep.subr.bf16.mxu0 %v7675
    %7975 = vmatpush2.bf16.msra.mxu0 %v7674
    %7976 = vmatprep.mubr.bf16.mxu0 %v7093
    %7977 = vmatmul.mubr.bf16.gmra.mxu0 %v7092
    %v7978 = vpop.f32.mrf.mxu0
    %v7979 = vadd.f32 0.0, %v7978
    %v7980 = vpop.f32.mrf.mxu0
    %v7981 = vadd.f32 0.0, %v7980
    %v7982 = vpop.f32.mrf.mxu0
    %v7983 = vpop.f32.mrf.mxu0
    %7984 = vdwg.mxu0
    %7985 = vmatprep.subr.bf16.mxu0 %v7669
    %7986 = vmatpush1.bf16.msra.mxu0 %v7668
    %7987 = vmatprep.subr.bf16.mxu0 %v7661
    %7988 = vmatpush1.bf16.msra.mxu0 %v7660
    %7989 = vmatprep.subr.bf16.mxu0 %v7653
    %7990 = vmatpush1.bf16.msra.mxu0 %v7652
    %7991 = vmatprep.subr.bf16.mxu0 %v7645
    %7992 = vmatpush1.bf16.msra.mxu0 %v7644
    %7993 = vmatprep.subr.bf16.mxu0 %v7637
    %7994 = vmatpush1.bf16.msra.mxu0 %v7636
    %7995 = vmatprep.subr.bf16.mxu0 %v7629
    %7996 = vmatpush1.bf16.msra.mxu0 %v7628
    %7997 = vmatprep.subr.bf16.mxu0 %v7621
    %7998 = vmatpush1.bf16.msra.mxu0 %v7620
    %7999 = vmatprep.subr.bf16.mxu0 %v7613
    %8000 = vmatpush1.bf16.msra.mxu0 %v7612
    %8001 = vmatprep.subr.bf16.mxu0 %v7733
    %8002 = vmatpush2.bf16.msra.mxu0 %v7732
    %8003 = vmatprep.subr.bf16.mxu0 %v7725
    %8004 = vmatpush2.bf16.msra.mxu0 %v7724
    %8005 = vmatprep.subr.bf16.mxu0 %v7717
    %8006 = vmatpush2.bf16.msra.mxu0 %v7716
    %8007 = vmatprep.subr.bf16.mxu0 %v7709
    %8008 = vmatpush2.bf16.msra.mxu0 %v7708
    %8009 = vmatprep.subr.bf16.mxu0 %v7701
    %8010 = vmatpush2.bf16.msra.mxu0 %v7700
    %8011 = vmatprep.subr.bf16.mxu0 %v7693
    %8012 = vmatpush2.bf16.msra.mxu0 %v7692
    %8013 = vmatprep.subr.bf16.mxu0 %v7685
    %8014 = vmatpush2.bf16.msra.mxu0 %v7684
    %8015 = vmatprep.subr.bf16.mxu0 %v7677
    %8016 = vmatpush2.bf16.msra.mxu0 %v7676
    %8017 = vmatprep.mubr.bf16.mxu0 %v7093
    %8018 = vmatmul.mubr.bf16.gmra.mxu0 %v7092
    %v8019 = vpop.f32.mrf.mxu0
    %v8020 = vadd.f32 0.0, %v8019
    %v8021 = vpop.f32.mrf.mxu0
    %v8022 = vadd.f32 0.0, %v8021
    %v8023 = vpop.f32.mrf.mxu0
    %v8024 = vpop.f32.mrf.mxu0
    %8025 = vdwg.mxu0
    %s8026 = scalar_lea.vmem [#allocation3], 6
    %v8027 = vld [vmem:[%s8026] ss:$8 sm:$0xf]
    %v8032 = vcombine.low %v7897, %v7899
    %v8033 = vcombine.low %v7938, %v7940
    %v8035 = vunpack.c.l.s4 1966171168
    %v8036 = vunpack.c.0.s8 %v8035
    %v8037 = vlaneseq
    %v8038 = vshrl.u32 %v8037, 7
    %v8039 = vsub.s32 %v8036, %v8038
    %v8040 = vrot.slane %v8032, %v8039
    %v8042 = vunpack.c.l.s4 1966171168
    %v8043 = vunpack.c.0.s8 %v8042
    %v8044 = vlaneseq
    %v8045 = vshrl.u32 %v8044, 7
    %v8046 = vsub.s32 %v8043, %v8045
    %v8047 = vrot.slane %v8033, %v8046
    %v8048 = vcombine.low %v8040, %v8047
    %v8050 = vunpack.c.l.s4 1966171168
    %v8051 = vunpack.c.0.s8 %v8050
    %v8052 = vlaneseq
    %v8053 = vshrl.u32 %v8052, 7
    %v8054 = vsub.s32 %v8051, %v8053
    %v8055 = vrot.slane %v8048, %v8054
    %v8057 = vadd.f32 %v8027, %v8055
    %s8058 = scalar_lea.vmem [#allocation3], 33
    %v8059 = vld [vmem:[%s8058] ss:$8 sm:$0xf]
    %v8064 = vcombine.low %v7979, %v7981
    %v8065 = vcombine.low %v8020, %v8022
    %v8067 = vunpack.c.l.s4 1966171168
    %v8068 = vunpack.c.0.s8 %v8067
    %v8069 = vlaneseq
    %v8070 = vshrl.u32 %v8069, 7
    %v8071 = vsub.s32 %v8068, %v8070
    %v8072 = vrot.slane %v8064, %v8071
    %v8074 = vunpack.c.l.s4 1966171168
    %v8075 = vunpack.c.0.s8 %v8074
    %v8076 = vlaneseq
    %v8077 = vshrl.u32 %v8076, 7
    %v8078 = vsub.s32 %v8075, %v8077
    %v8079 = vrot.slane %v8065, %v8078
    %v8080 = vcombine.low %v8072, %v8079
    %v8082 = vunpack.c.l.s4 1966171168
    %v8083 = vunpack.c.0.s8 %v8082
    %v8084 = vlaneseq
    %v8085 = vshrl.u32 %v8084, 7
    %v8086 = vsub.s32 %v8083, %v8085
    %v8087 = vrot.slane %v8080, %v8086
    %v8089 = vadd.f32 %v8059, %v8087
    %v8090 = vxor.u32 %v8057, 2147483648
    %v8091 = vmul.f32 %v8090, 1.442695
    %v8092 = vpow.pop %v8091
    %v8093 = vadd.f32 %v8092, 1.0
    %v8094 = vrcp.pop %v8093
    %v8095 = vmul.f32 1.0, %v8094
    %v8097 = vrot.slane %v8057, 1
    %v8099 = vxor.u32 %v8097, 2147483648
    %v8100 = vmul.f32 %v8099, 1.442695
    %v8101 = vpow.pop %v8100
    %v8102 = vadd.f32 %v8101, 1.0
    %v8103 = vrcp.pop %v8102
    %v8104 = vmul.f32 1.0, %v8103
    %v8105 = vrot.slane %v8057, 2
    %v8107 = vtanh.pop %v8105
    %v8108 = vrot.slane %v8057, 3
    %v8110 = vxor.u32 %v8108, 2147483648
    %v8111 = vmul.f32 %v8110, 1.442695
    %v8112 = vpow.pop %v8111
    %v8113 = vadd.f32 %v8112, 1.0
    %v8114 = vrcp.pop %v8113
    %v8115 = vmul.f32 1.0, %v8114
    %v8116 = vmul.f32 %v8104, %v7056
    %v8117 = vmul.f32 %v8095, %v8107
    %v8118 = vadd.f32 %v8116, %v8117
    %v8119 = vtanh.pop %v8118
    %v8120 = vmul.f32 %v8115, %v8119
    %v8121 = vxor.u32 %v8089, 2147483648
    %v8122 = vmul.f32 %v8121, 1.442695
    %v8123 = vpow.pop %v8122
    %v8124 = vadd.f32 %v8123, 1.0
    %v8125 = vrcp.pop %v8124
    %v8126 = vmul.f32 1.0, %v8125
    %v8128 = vrot.slane %v8089, 1
    %v8130 = vxor.u32 %v8128, 2147483648
    %v8131 = vmul.f32 %v8130, 1.442695
    %v8132 = vpow.pop %v8131
    %v8133 = vadd.f32 %v8132, 1.0
    %v8134 = vrcp.pop %v8133
    %v8135 = vmul.f32 1.0, %v8134
    %v8136 = vrot.slane %v8089, 2
    %v8138 = vtanh.pop %v8136
    %v8139 = vrot.slane %v8089, 3
    %v8141 = vxor.u32 %v8139, 2147483648
    %v8142 = vmul.f32 %v8141, 1.442695
    %v8143 = vpow.pop %v8142
    %v8144 = vadd.f32 %v8143, 1.0
    %v8145 = vrcp.pop %v8144
    %v8146 = vmul.f32 1.0, %v8145
    %v8147 = vmul.f32 %v8135, %v7087
    %v8148 = vmul.f32 %v8126, %v8138
    %v8149 = vadd.f32 %v8147, %v8148
    %v8150 = vtanh.pop %v8149
    %v8151 = vmul.f32 %v8146, %v8150
    %8152 = vst [vmem:[#allocation14 + $0x6] sm:$0x1] %v8120
    %8153 = vst [vmem:[#allocation14 + $0x9] sm:$0x1] %v8151
    %v8154 = vpack.c.bf16 %v8120, %v8120
    %v8155 = vpack.c.bf16 %v8151, %v8151
    %v8156 = vld [vmem:[#allocation11] sm:$0xff]
    %v8157 = vld [vmem:[#allocation11 + $0x8] sm:$0xff]
    %v8158 = vld [vmem:[#allocation11 + $0x10] sm:$0xff]
    %v8159 = vld [vmem:[#allocation11 + $0x18] sm:$0xff]
    %v8160 = vld [vmem:[#allocation11 + $0x20] sm:$0xff]
    %v8161 = vld [vmem:[#allocation11 + $0x28] sm:$0xff]
    %v8162 = vld [vmem:[#allocation11 + $0x30] sm:$0xff]
    %v8163 = vld [vmem:[#allocation11 + $0x38] sm:$0xff]
    %v8164 = vld [vmem:[#allocation11 + $0x40] sm:$0xff]
    %v8165 = vld [vmem:[#allocation11 + $0x48] sm:$0xff]
    %v8166 = vld [vmem:[#allocation11 + $0x50] sm:$0xff]
    %v8167 = vld [vmem:[#allocation11 + $0x58] sm:$0xff]
    %v8168 = vld [vmem:[#allocation11 + $0x60] sm:$0xff]
    %v8169 = vld [vmem:[#allocation11 + $0x68] sm:$0xff]
    %v8170 = vld [vmem:[#allocation11 + $0x70] sm:$0xff]
    %v8171 = vld [vmem:[#allocation11 + $0x78] sm:$0xff]
    %v8172 = vld [vmem:[#allocation11 + $0x80] sm:$0xff]
    %v8173 = vld [vmem:[#allocation11 + $0x88] sm:$0xff]
    %v8174 = vld [vmem:[#allocation11 + $0x90] sm:$0xff]
    %v8175 = vld [vmem:[#allocation11 + $0x98] sm:$0xff]
    %v8176 = vld [vmem:[#allocation11 + $0xa0] sm:$0xff]
    %v8177 = vld [vmem:[#allocation11 + $0xa8] sm:$0xff]
    %v8178 = vld [vmem:[#allocation11 + $0xb0] sm:$0xff]
    %v8179 = vld [vmem:[#allocation11 + $0xb8] sm:$0xff]
    %v8180 = vld [vmem:[#allocation11 + $0xc0] sm:$0xff]
    %v8181 = vld [vmem:[#allocation11 + $0xc8] sm:$0xff]
    %v8182 = vld [vmem:[#allocation11 + $0xd0] sm:$0xff]
    %v8183 = vld [vmem:[#allocation11 + $0xd8] sm:$0xff]
    %v8184 = vld [vmem:[#allocation11 + $0xe0] sm:$0xff]
    %v8185 = vld [vmem:[#allocation11 + $0xe8] sm:$0xff]
    %v8186 = vld [vmem:[#allocation11 + $0xf0] sm:$0xff]
    %v8187 = vld [vmem:[#allocation11 + $0xf8] sm:$0xff]
    %v8188 = vld [vmem:[#allocation11 + $0x100] sm:$0xff]
    %v8189 = vld [vmem:[#allocation11 + $0x108] sm:$0xff]
    %v8190 = vld [vmem:[#allocation11 + $0x110] sm:$0xff]
    %v8191 = vld [vmem:[#allocation11 + $0x118] sm:$0xff]
    %v8192 = vld [vmem:[#allocation11 + $0x120] sm:$0xff]
    %v8193 = vld [vmem:[#allocation11 + $0x128] sm:$0xff]
    %v8194 = vld [vmem:[#allocation11 + $0x130] sm:$0xff]
    %v8195 = vld [vmem:[#allocation11 + $0x138] sm:$0xff]
    %v8196 = vld [vmem:[#allocation11 + $0x140] sm:$0xff]
    %v8197 = vld [vmem:[#allocation11 + $0x148] sm:$0xff]
    %v8198 = vld [vmem:[#allocation11 + $0x150] sm:$0xff]
    %v8199 = vld [vmem:[#allocation11 + $0x158] sm:$0xff]
    %v8200 = vld [vmem:[#allocation11 + $0x160] sm:$0xff]
    %v8201 = vld [vmem:[#allocation11 + $0x168] sm:$0xff]
    %v8202 = vld [vmem:[#allocation11 + $0x170] sm:$0xff]
    %v8203 = vld [vmem:[#allocation11 + $0x178] sm:$0xff]
    %v8204 = vld [vmem:[#allocation11 + $0x180] sm:$0xff]
    %v8205 = vld [vmem:[#allocation11 + $0x188] sm:$0xff]
    %v8206 = vld [vmem:[#allocation11 + $0x190] sm:$0xff]
    %v8207 = vld [vmem:[#allocation11 + $0x198] sm:$0xff]
    %v8208 = vld [vmem:[#allocation11 + $0x1a0] sm:$0xff]
    %v8209 = vld [vmem:[#allocation11 + $0x1a8] sm:$0xff]
    %v8210 = vld [vmem:[#allocation11 + $0x1b0] sm:$0xff]
    %v8211 = vld [vmem:[#allocation11 + $0x1b8] sm:$0xff]
    %v8212 = vld [vmem:[#allocation11 + $0x1c0] sm:$0xff]
    %v8213 = vld [vmem:[#allocation11 + $0x1c8] sm:$0xff]
    %v8214 = vld [vmem:[#allocation11 + $0x1d0] sm:$0xff]
    %v8215 = vld [vmem:[#allocation11 + $0x1d8] sm:$0xff]
    %v8216 = vld [vmem:[#allocation11 + $0x1e0] sm:$0xff]
    %v8217 = vld [vmem:[#allocation11 + $0x1e8] sm:$0xff]
    %v8218 = vld [vmem:[#allocation11 + $0x1f0] sm:$0xff]
    %v8219 = vld [vmem:[#allocation11 + $0x1f8] sm:$0xff]
    %v8220 = vld [vmem:[#allocation11 + $0x200] sm:$0xff]
    %v8221 = vld [vmem:[#allocation11 + $0x208] sm:$0xff]
    %v8222 = vld [vmem:[#allocation11 + $0x210] sm:$0xff]
    %v8223 = vld [vmem:[#allocation11 + $0x218] sm:$0xff]
    %v8224 = vld [vmem:[#allocation11 + $0x220] sm:$0xff]
    %v8225 = vld [vmem:[#allocation11 + $0x228] sm:$0xff]
    %v8226 = vld [vmem:[#allocation11 + $0x230] sm:$0xff]
    %v8227 = vld [vmem:[#allocation11 + $0x238] sm:$0xff]
    %v8228 = vld [vmem:[#allocation11 + $0x240] sm:$0xff]
    %v8229 = vld [vmem:[#allocation11 + $0x248] sm:$0xff]
    %v8230 = vld [vmem:[#allocation11 + $0x250] sm:$0xff]
    %v8231 = vld [vmem:[#allocation11 + $0x258] sm:$0xff]
    %v8232 = vld [vmem:[#allocation11 + $0x260] sm:$0xff]
    %v8233 = vld [vmem:[#allocation11 + $0x268] sm:$0xff]
    %v8234 = vld [vmem:[#allocation11 + $0x270] sm:$0xff]
    %v8235 = vld [vmem:[#allocation11 + $0x278] sm:$0xff]
    %v8236 = vld [vmem:[#allocation11 + $0x280] sm:$0xff]
    %v8237 = vld [vmem:[#allocation11 + $0x288] sm:$0xff]
    %v8238 = vld [vmem:[#allocation11 + $0x290] sm:$0xff]
    %v8239 = vld [vmem:[#allocation11 + $0x298] sm:$0xff]
    %v8240 = vld [vmem:[#allocation11 + $0x2a0] sm:$0xff]
    %v8241 = vld [vmem:[#allocation11 + $0x2a8] sm:$0xff]
    %v8242 = vld [vmem:[#allocation11 + $0x2b0] sm:$0xff]
    %v8243 = vld [vmem:[#allocation11 + $0x2b8] sm:$0xff]
    %v8244 = vld [vmem:[#allocation11 + $0x2c0] sm:$0xff]
    %v8245 = vld [vmem:[#allocation11 + $0x2c8] sm:$0xff]
    %v8246 = vld [vmem:[#allocation11 + $0x2d0] sm:$0xff]
    %v8247 = vld [vmem:[#allocation11 + $0x2d8] sm:$0xff]
    %v8248 = vld [vmem:[#allocation11 + $0x2e0] sm:$0xff]
    %v8249 = vld [vmem:[#allocation11 + $0x2e8] sm:$0xff]
    %v8250 = vld [vmem:[#allocation11 + $0x2f0] sm:$0xff]
    %v8251 = vld [vmem:[#allocation11 + $0x2f8] sm:$0xff]
    %v8252 = vld [vmem:[#allocation11 + $0x300] sm:$0xff]
    %v8253 = vld [vmem:[#allocation11 + $0x308] sm:$0xff]
    %v8254 = vld [vmem:[#allocation11 + $0x310] sm:$0xff]
    %v8255 = vld [vmem:[#allocation11 + $0x318] sm:$0xff]
    %v8256 = vld [vmem:[#allocation11 + $0x320] sm:$0xff]
    %v8257 = vld [vmem:[#allocation11 + $0x328] sm:$0xff]
    %v8258 = vld [vmem:[#allocation11 + $0x330] sm:$0xff]
    %v8259 = vld [vmem:[#allocation11 + $0x338] sm:$0xff]
    %v8260 = vld [vmem:[#allocation11 + $0x340] sm:$0xff]
    %v8261 = vld [vmem:[#allocation11 + $0x348] sm:$0xff]
    %v8262 = vld [vmem:[#allocation11 + $0x350] sm:$0xff]
    %v8263 = vld [vmem:[#allocation11 + $0x358] sm:$0xff]
    %v8264 = vld [vmem:[#allocation11 + $0x360] sm:$0xff]
    %v8265 = vld [vmem:[#allocation11 + $0x368] sm:$0xff]
    %v8266 = vld [vmem:[#allocation11 + $0x370] sm:$0xff]
    %v8267 = vld [vmem:[#allocation11 + $0x378] sm:$0xff]
    %v8268 = vld [vmem:[#allocation11 + $0x380] sm:$0xff]
    %v8269 = vld [vmem:[#allocation11 + $0x388] sm:$0xff]
    %v8270 = vld [vmem:[#allocation11 + $0x390] sm:$0xff]
    %v8271 = vld [vmem:[#allocation11 + $0x398] sm:$0xff]
    %v8272 = vld [vmem:[#allocation11 + $0x3a0] sm:$0xff]
    %v8273 = vld [vmem:[#allocation11 + $0x3a8] sm:$0xff]
    %v8274 = vld [vmem:[#allocation11 + $0x3b0] sm:$0xff]
    %v8275 = vld [vmem:[#allocation11 + $0x3b8] sm:$0xff]
    %v8276 = vld [vmem:[#allocation11 + $0x3c0] sm:$0xff]
    %v8277 = vld [vmem:[#allocation11 + $0x3c8] sm:$0xff]
    %v8278 = vld [vmem:[#allocation11 + $0x3d0] sm:$0xff]
    %v8279 = vld [vmem:[#allocation11 + $0x3d8] sm:$0xff]
    %v8280 = vld [vmem:[#allocation11 + $0x3e0] sm:$0xff]
    %v8281 = vld [vmem:[#allocation11 + $0x3e8] sm:$0xff]
    %v8282 = vld [vmem:[#allocation11 + $0x3f0] sm:$0xff]
    %v8283 = vld [vmem:[#allocation11 + $0x3f8] sm:$0xff]
    %v8412 = vunpack.c.l.b16 %v8156
    %v8413 = vunpack.c.h.b16 %v8156
    %v8414 = vunpack.c.l.b16 %v8157
    %v8415 = vunpack.c.h.b16 %v8157
    %v8416 = vunpack.c.l.b16 %v8158
    %v8417 = vunpack.c.h.b16 %v8158
    %v8418 = vunpack.c.l.b16 %v8159
    %v8419 = vunpack.c.h.b16 %v8159
    %v8420 = vunpack.c.l.b16 %v8160
    %v8421 = vunpack.c.h.b16 %v8160
    %v8422 = vunpack.c.l.b16 %v8161
    %v8423 = vunpack.c.h.b16 %v8161
    %v8424 = vunpack.c.l.b16 %v8162
    %v8425 = vunpack.c.h.b16 %v8162
    %v8426 = vunpack.c.l.b16 %v8163
    %v8427 = vunpack.c.h.b16 %v8163
    %v8428 = vunpack.c.l.b16 %v8164
    %v8429 = vunpack.c.h.b16 %v8164
    %v8430 = vunpack.c.l.b16 %v8165
    %v8431 = vunpack.c.h.b16 %v8165
    %v8432 = vunpack.c.l.b16 %v8166
    %v8433 = vunpack.c.h.b16 %v8166
    %v8434 = vunpack.c.l.b16 %v8167
    %v8435 = vunpack.c.h.b16 %v8167
    %v8436 = vunpack.c.l.b16 %v8168
    %v8437 = vunpack.c.h.b16 %v8168
    %v8438 = vunpack.c.l.b16 %v8169
    %v8439 = vunpack.c.h.b16 %v8169
    %v8440 = vunpack.c.l.b16 %v8170
    %v8441 = vunpack.c.h.b16 %v8170
    %v8442 = vunpack.c.l.b16 %v8171
    %v8443 = vunpack.c.h.b16 %v8171
    %v8444 = vunpack.c.l.b16 %v8172
    %v8445 = vunpack.c.h.b16 %v8172
    %v8446 = vunpack.c.l.b16 %v8173
    %v8447 = vunpack.c.h.b16 %v8173
    %v8448 = vunpack.c.l.b16 %v8174
    %v8449 = vunpack.c.h.b16 %v8174
    %v8450 = vunpack.c.l.b16 %v8175
    %v8451 = vunpack.c.h.b16 %v8175
    %v8452 = vunpack.c.l.b16 %v8176
    %v8453 = vunpack.c.h.b16 %v8176
    %v8454 = vunpack.c.l.b16 %v8177
    %v8455 = vunpack.c.h.b16 %v8177
    %v8456 = vunpack.c.l.b16 %v8178
    %v8457 = vunpack.c.h.b16 %v8178
    %v8458 = vunpack.c.l.b16 %v8179
    %v8459 = vunpack.c.h.b16 %v8179
    %v8460 = vunpack.c.l.b16 %v8180
    %v8461 = vunpack.c.h.b16 %v8180
    %v8462 = vunpack.c.l.b16 %v8181
    %v8463 = vunpack.c.h.b16 %v8181
    %v8464 = vunpack.c.l.b16 %v8182
    %v8465 = vunpack.c.h.b16 %v8182
    %v8466 = vunpack.c.l.b16 %v8183
    %v8467 = vunpack.c.h.b16 %v8183
    %v8468 = vunpack.c.l.b16 %v8184
    %v8469 = vunpack.c.h.b16 %v8184
    %v8470 = vunpack.c.l.b16 %v8185
    %v8471 = vunpack.c.h.b16 %v8185
    %v8472 = vunpack.c.l.b16 %v8186
    %v8473 = vunpack.c.h.b16 %v8186
    %v8474 = vunpack.c.l.b16 %v8187
    %v8475 = vunpack.c.h.b16 %v8187
    %v8476 = vunpack.c.l.b16 %v8188
    %v8477 = vunpack.c.h.b16 %v8188
    %v8478 = vunpack.c.l.b16 %v8189
    %v8479 = vunpack.c.h.b16 %v8189
    %v8480 = vunpack.c.l.b16 %v8190
    %v8481 = vunpack.c.h.b16 %v8190
    %v8482 = vunpack.c.l.b16 %v8191
    %v8483 = vunpack.c.h.b16 %v8191
    %v8484 = vunpack.c.l.b16 %v8192
    %v8485 = vunpack.c.h.b16 %v8192
    %v8486 = vunpack.c.l.b16 %v8193
    %v8487 = vunpack.c.h.b16 %v8193
    %v8488 = vunpack.c.l.b16 %v8194
    %v8489 = vunpack.c.h.b16 %v8194
    %v8490 = vunpack.c.l.b16 %v8195
    %v8491 = vunpack.c.h.b16 %v8195
    %v8492 = vunpack.c.l.b16 %v8196
    %v8493 = vunpack.c.h.b16 %v8196
    %v8494 = vunpack.c.l.b16 %v8197
    %v8495 = vunpack.c.h.b16 %v8197
    %v8496 = vunpack.c.l.b16 %v8198
    %v8497 = vunpack.c.h.b16 %v8198
    %v8498 = vunpack.c.l.b16 %v8199
    %v8499 = vunpack.c.h.b16 %v8199
    %v8500 = vunpack.c.l.b16 %v8200
    %v8501 = vunpack.c.h.b16 %v8200
    %v8502 = vunpack.c.l.b16 %v8201
    %v8503 = vunpack.c.h.b16 %v8201
    %v8504 = vunpack.c.l.b16 %v8202
    %v8505 = vunpack.c.h.b16 %v8202
    %v8506 = vunpack.c.l.b16 %v8203
    %v8507 = vunpack.c.h.b16 %v8203
    %v8508 = vunpack.c.l.b16 %v8204
    %v8509 = vunpack.c.h.b16 %v8204
    %v8510 = vunpack.c.l.b16 %v8205
    %v8511 = vunpack.c.h.b16 %v8205
    %v8512 = vunpack.c.l.b16 %v8206
    %v8513 = vunpack.c.h.b16 %v8206
    %v8514 = vunpack.c.l.b16 %v8207
    %v8515 = vunpack.c.h.b16 %v8207
    %v8516 = vunpack.c.l.b16 %v8208
    %v8517 = vunpack.c.h.b16 %v8208
    %v8518 = vunpack.c.l.b16 %v8209
    %v8519 = vunpack.c.h.b16 %v8209
    %v8520 = vunpack.c.l.b16 %v8210
    %v8521 = vunpack.c.h.b16 %v8210
    %v8522 = vunpack.c.l.b16 %v8211
    %v8523 = vunpack.c.h.b16 %v8211
    %v8524 = vunpack.c.l.b16 %v8212
    %v8525 = vunpack.c.h.b16 %v8212
    %v8526 = vunpack.c.l.b16 %v8213
    %v8527 = vunpack.c.h.b16 %v8213
    %v8528 = vunpack.c.l.b16 %v8214
    %v8529 = vunpack.c.h.b16 %v8214
    %v8530 = vunpack.c.l.b16 %v8215
    %v8531 = vunpack.c.h.b16 %v8215
    %v8532 = vunpack.c.l.b16 %v8216
    %v8533 = vunpack.c.h.b16 %v8216
    %v8534 = vunpack.c.l.b16 %v8217
    %v8535 = vunpack.c.h.b16 %v8217
    %v8536 = vunpack.c.l.b16 %v8218
    %v8537 = vunpack.c.h.b16 %v8218
    %v8538 = vunpack.c.l.b16 %v8219
    %v8539 = vunpack.c.h.b16 %v8219
    %v8540 = vunpack.c.l.b16 %v8220
    %v8541 = vunpack.c.h.b16 %v8220
    %v8542 = vunpack.c.l.b16 %v8221
    %v8543 = vunpack.c.h.b16 %v8221
    %v8544 = vunpack.c.l.b16 %v8222
    %v8545 = vunpack.c.h.b16 %v8222
    %v8546 = vunpack.c.l.b16 %v8223
    %v8547 = vunpack.c.h.b16 %v8223
    %v8548 = vunpack.c.l.b16 %v8224
    %v8549 = vunpack.c.h.b16 %v8224
    %v8550 = vunpack.c.l.b16 %v8225
    %v8551 = vunpack.c.h.b16 %v8225
    %v8552 = vunpack.c.l.b16 %v8226
    %v8553 = vunpack.c.h.b16 %v8226
    %v8554 = vunpack.c.l.b16 %v8227
    %v8555 = vunpack.c.h.b16 %v8227
    %v8556 = vunpack.c.l.b16 %v8228
    %v8557 = vunpack.c.h.b16 %v8228
    %v8558 = vunpack.c.l.b16 %v8229
    %v8559 = vunpack.c.h.b16 %v8229
    %v8560 = vunpack.c.l.b16 %v8230
    %v8561 = vunpack.c.h.b16 %v8230
    %v8562 = vunpack.c.l.b16 %v8231
    %v8563 = vunpack.c.h.b16 %v8231
    %v8564 = vunpack.c.l.b16 %v8232
    %v8565 = vunpack.c.h.b16 %v8232
    %v8566 = vunpack.c.l.b16 %v8233
    %v8567 = vunpack.c.h.b16 %v8233
    %v8568 = vunpack.c.l.b16 %v8234
    %v8569 = vunpack.c.h.b16 %v8234
    %v8570 = vunpack.c.l.b16 %v8235
    %v8571 = vunpack.c.h.b16 %v8235
    %v8572 = vunpack.c.l.b16 %v8236
    %v8573 = vunpack.c.h.b16 %v8236
    %v8574 = vunpack.c.l.b16 %v8237
    %v8575 = vunpack.c.h.b16 %v8237
    %v8576 = vunpack.c.l.b16 %v8238
    %v8577 = vunpack.c.h.b16 %v8238
    %v8578 = vunpack.c.l.b16 %v8239
    %v8579 = vunpack.c.h.b16 %v8239
    %v8580 = vunpack.c.l.b16 %v8240
    %v8581 = vunpack.c.h.b16 %v8240
    %v8582 = vunpack.c.l.b16 %v8241
    %v8583 = vunpack.c.h.b16 %v8241
    %v8584 = vunpack.c.l.b16 %v8242
    %v8585 = vunpack.c.h.b16 %v8242
    %v8586 = vunpack.c.l.b16 %v8243
    %v8587 = vunpack.c.h.b16 %v8243
    %v8588 = vunpack.c.l.b16 %v8244
    %v8589 = vunpack.c.h.b16 %v8244
    %v8590 = vunpack.c.l.b16 %v8245
    %v8591 = vunpack.c.h.b16 %v8245
    %v8592 = vunpack.c.l.b16 %v8246
    %v8593 = vunpack.c.h.b16 %v8246
    %v8594 = vunpack.c.l.b16 %v8247
    %v8595 = vunpack.c.h.b16 %v8247
    %v8596 = vunpack.c.l.b16 %v8248
    %v8597 = vunpack.c.h.b16 %v8248
    %v8598 = vunpack.c.l.b16 %v8249
    %v8599 = vunpack.c.h.b16 %v8249
    %v8600 = vunpack.c.l.b16 %v8250
    %v8601 = vunpack.c.h.b16 %v8250
    %v8602 = vunpack.c.l.b16 %v8251
    %v8603 = vunpack.c.h.b16 %v8251
    %v8604 = vunpack.c.l.b16 %v8252
    %v8605 = vunpack.c.h.b16 %v8252
    %v8606 = vunpack.c.l.b16 %v8253
    %v8607 = vunpack.c.h.b16 %v8253
    %v8608 = vunpack.c.l.b16 %v8254
    %v8609 = vunpack.c.h.b16 %v8254
    %v8610 = vunpack.c.l.b16 %v8255
    %v8611 = vunpack.c.h.b16 %v8255
    %v8612 = vunpack.c.l.b16 %v8256
    %v8613 = vunpack.c.h.b16 %v8256
    %v8614 = vunpack.c.l.b16 %v8257
    %v8615 = vunpack.c.h.b16 %v8257
    %v8616 = vunpack.c.l.b16 %v8258
    %v8617 = vunpack.c.h.b16 %v8258
    %v8618 = vunpack.c.l.b16 %v8259
    %v8619 = vunpack.c.h.b16 %v8259
    %v8620 = vunpack.c.l.b16 %v8260
    %v8621 = vunpack.c.h.b16 %v8260
    %v8622 = vunpack.c.l.b16 %v8261
    %v8623 = vunpack.c.h.b16 %v8261
    %v8624 = vunpack.c.l.b16 %v8262
    %v8625 = vunpack.c.h.b16 %v8262
    %v8626 = vunpack.c.l.b16 %v8263
    %v8627 = vunpack.c.h.b16 %v8263
    %v8628 = vunpack.c.l.b16 %v8264
    %v8629 = vunpack.c.h.b16 %v8264
    %v8630 = vunpack.c.l.b16 %v8265
    %v8631 = vunpack.c.h.b16 %v8265
    %v8632 = vunpack.c.l.b16 %v8266
    %v8633 = vunpack.c.h.b16 %v8266
    %v8634 = vunpack.c.l.b16 %v8267
    %v8635 = vunpack.c.h.b16 %v8267
    %v8636 = vunpack.c.l.b16 %v8268
    %v8637 = vunpack.c.h.b16 %v8268
    %v8638 = vunpack.c.l.b16 %v8269
    %v8639 = vunpack.c.h.b16 %v8269
    %v8640 = vunpack.c.l.b16 %v8270
    %v8641 = vunpack.c.h.b16 %v8270
    %v8642 = vunpack.c.l.b16 %v8271
    %v8643 = vunpack.c.h.b16 %v8271
    %v8644 = vunpack.c.l.b16 %v8272
    %v8645 = vunpack.c.h.b16 %v8272
    %v8646 = vunpack.c.l.b16 %v8273
    %v8647 = vunpack.c.h.b16 %v8273
    %v8648 = vunpack.c.l.b16 %v8274
    %v8649 = vunpack.c.h.b16 %v8274
    %v8650 = vunpack.c.l.b16 %v8275
    %v8651 = vunpack.c.h.b16 %v8275
    %v8652 = vunpack.c.l.b16 %v8276
    %v8653 = vunpack.c.h.b16 %v8276
    %v8654 = vunpack.c.l.b16 %v8277
    %v8655 = vunpack.c.h.b16 %v8277
    %v8656 = vunpack.c.l.b16 %v8278
    %v8657 = vunpack.c.h.b16 %v8278
    %v8658 = vunpack.c.l.b16 %v8279
    %v8659 = vunpack.c.h.b16 %v8279
    %v8660 = vunpack.c.l.b16 %v8280
    %v8661 = vunpack.c.h.b16 %v8280
    %v8662 = vunpack.c.l.b16 %v8281
    %v8663 = vunpack.c.h.b16 %v8281
    %v8664 = vunpack.c.l.b16 %v8282
    %v8665 = vunpack.c.h.b16 %v8282
    %v8666 = vunpack.c.l.b16 %v8283
    %v8667 = vunpack.c.h.b16 %v8283
    %v8668 = vpack.c.b16 %v8420, %v8412
    %v8669 = vpack.c.b16 %v8421, %v8413
    %v8670 = vpack.c.b16 %v8422, %v8414
    %v8671 = vpack.c.b16 %v8423, %v8415
    %v8672 = vpack.c.b16 %v8424, %v8416
    %v8673 = vpack.c.b16 %v8425, %v8417
    %v8674 = vpack.c.b16 %v8426, %v8418
    %v8675 = vpack.c.b16 %v8427, %v8419
    %v8676 = vpack.c.b16 %v8436, %v8428
    %v8677 = vpack.c.b16 %v8437, %v8429
    %v8678 = vpack.c.b16 %v8438, %v8430
    %v8679 = vpack.c.b16 %v8439, %v8431
    %v8680 = vpack.c.b16 %v8440, %v8432
    %v8681 = vpack.c.b16 %v8441, %v8433
    %v8682 = vpack.c.b16 %v8442, %v8434
    %v8683 = vpack.c.b16 %v8443, %v8435
    %v8684 = vpack.c.b16 %v8452, %v8444
    %v8685 = vpack.c.b16 %v8453, %v8445
    %v8686 = vpack.c.b16 %v8454, %v8446
    %v8687 = vpack.c.b16 %v8455, %v8447
    %v8688 = vpack.c.b16 %v8456, %v8448
    %v8689 = vpack.c.b16 %v8457, %v8449
    %v8690 = vpack.c.b16 %v8458, %v8450
    %v8691 = vpack.c.b16 %v8459, %v8451
    %v8692 = vpack.c.b16 %v8468, %v8460
    %v8693 = vpack.c.b16 %v8469, %v8461
    %v8694 = vpack.c.b16 %v8470, %v8462
    %v8695 = vpack.c.b16 %v8471, %v8463
    %v8696 = vpack.c.b16 %v8472, %v8464
    %v8697 = vpack.c.b16 %v8473, %v8465
    %v8698 = vpack.c.b16 %v8474, %v8466
    %v8699 = vpack.c.b16 %v8475, %v8467
    %v8700 = vpack.c.b16 %v8484, %v8476
    %v8701 = vpack.c.b16 %v8485, %v8477
    %v8702 = vpack.c.b16 %v8486, %v8478
    %v8703 = vpack.c.b16 %v8487, %v8479
    %v8704 = vpack.c.b16 %v8488, %v8480
    %v8705 = vpack.c.b16 %v8489, %v8481
    %v8706 = vpack.c.b16 %v8490, %v8482
    %v8707 = vpack.c.b16 %v8491, %v8483
    %v8708 = vpack.c.b16 %v8500, %v8492
    %v8709 = vpack.c.b16 %v8501, %v8493
    %v8710 = vpack.c.b16 %v8502, %v8494
    %v8711 = vpack.c.b16 %v8503, %v8495
    %v8712 = vpack.c.b16 %v8504, %v8496
    %v8713 = vpack.c.b16 %v8505, %v8497
    %v8714 = vpack.c.b16 %v8506, %v8498
    %v8715 = vpack.c.b16 %v8507, %v8499
    %v8716 = vpack.c.b16 %v8516, %v8508
    %v8717 = vpack.c.b16 %v8517, %v8509
    %v8718 = vpack.c.b16 %v8518, %v8510
    %v8719 = vpack.c.b16 %v8519, %v8511
    %v8720 = vpack.c.b16 %v8520, %v8512
    %v8721 = vpack.c.b16 %v8521, %v8513
    %v8722 = vpack.c.b16 %v8522, %v8514
    %v8723 = vpack.c.b16 %v8523, %v8515
    %v8724 = vpack.c.b16 %v8532, %v8524
    %v8725 = vpack.c.b16 %v8533, %v8525
    %v8726 = vpack.c.b16 %v8534, %v8526
    %v8727 = vpack.c.b16 %v8535, %v8527
    %v8728 = vpack.c.b16 %v8536, %v8528
    %v8729 = vpack.c.b16 %v8537, %v8529
    %v8730 = vpack.c.b16 %v8538, %v8530
    %v8731 = vpack.c.b16 %v8539, %v8531
    %v8732 = vpack.c.b16 %v8548, %v8540
    %v8733 = vpack.c.b16 %v8549, %v8541
    %v8734 = vpack.c.b16 %v8550, %v8542
    %v8735 = vpack.c.b16 %v8551, %v8543
    %v8736 = vpack.c.b16 %v8552, %v8544
    %v8737 = vpack.c.b16 %v8553, %v8545
    %v8738 = vpack.c.b16 %v8554, %v8546
    %v8739 = vpack.c.b16 %v8555, %v8547
    %v8740 = vpack.c.b16 %v8564, %v8556
    %v8741 = vpack.c.b16 %v8565, %v8557
    %v8742 = vpack.c.b16 %v8566, %v8558
    %v8743 = vpack.c.b16 %v8567, %v8559
    %v8744 = vpack.c.b16 %v8568, %v8560
    %v8745 = vpack.c.b16 %v8569, %v8561
    %v8746 = vpack.c.b16 %v8570, %v8562
    %v8747 = vpack.c.b16 %v8571, %v8563
    %v8748 = vpack.c.b16 %v8580, %v8572
    %v8749 = vpack.c.b16 %v8581, %v8573
    %v8750 = vpack.c.b16 %v8582, %v8574
    %v8751 = vpack.c.b16 %v8583, %v8575
    %v8752 = vpack.c.b16 %v8584, %v8576
    %v8753 = vpack.c.b16 %v8585, %v8577
    %v8754 = vpack.c.b16 %v8586, %v8578
    %v8755 = vpack.c.b16 %v8587, %v8579
    %v8756 = vpack.c.b16 %v8596, %v8588
    %v8757 = vpack.c.b16 %v8597, %v8589
    %v8758 = vpack.c.b16 %v8598, %v8590
    %v8759 = vpack.c.b16 %v8599, %v8591
    %v8760 = vpack.c.b16 %v8600, %v8592
    %v8761 = vpack.c.b16 %v8601, %v8593
    %v8762 = vpack.c.b16 %v8602, %v8594
    %v8763 = vpack.c.b16 %v8603, %v8595
    %v8764 = vpack.c.b16 %v8612, %v8604
    %v8765 = vpack.c.b16 %v8613, %v8605
    %v8766 = vpack.c.b16 %v8614, %v8606
    %v8767 = vpack.c.b16 %v8615, %v8607
    %v8768 = vpack.c.b16 %v8616, %v8608
    %v8769 = vpack.c.b16 %v8617, %v8609
    %v8770 = vpack.c.b16 %v8618, %v8610
    %v8771 = vpack.c.b16 %v8619, %v8611
    %v8772 = vpack.c.b16 %v8628, %v8620
    %v8773 = vpack.c.b16 %v8629, %v8621
    %v8774 = vpack.c.b16 %v8630, %v8622
    %v8775 = vpack.c.b16 %v8631, %v8623
    %v8776 = vpack.c.b16 %v8632, %v8624
    %v8777 = vpack.c.b16 %v8633, %v8625
    %v8778 = vpack.c.b16 %v8634, %v8626
    %v8779 = vpack.c.b16 %v8635, %v8627
    %v8780 = vpack.c.b16 %v8644, %v8636
    %v8781 = vpack.c.b16 %v8645, %v8637
    %v8782 = vpack.c.b16 %v8646, %v8638
    %v8783 = vpack.c.b16 %v8647, %v8639
    %v8784 = vpack.c.b16 %v8648, %v8640
    %v8785 = vpack.c.b16 %v8649, %v8641
    %v8786 = vpack.c.b16 %v8650, %v8642
    %v8787 = vpack.c.b16 %v8651, %v8643
    %v8788 = vpack.c.b16 %v8660, %v8652
    %v8789 = vpack.c.b16 %v8661, %v8653
    %v8790 = vpack.c.b16 %v8662, %v8654
    %v8791 = vpack.c.b16 %v8663, %v8655
    %v8792 = vpack.c.b16 %v8664, %v8656
    %v8793 = vpack.c.b16 %v8665, %v8657
    %v8794 = vpack.c.b16 %v8666, %v8658
    %v8795 = vpack.c.b16 %v8667, %v8659
    %8924 = vmatprep.subr.bf16.mxu0 %v8725
    %8925 = vmatpush1.bf16.msra.mxu0 %v8724
    %8926 = vmatprep.subr.bf16.mxu0 %v8717
    %8927 = vmatpush1.bf16.msra.mxu0 %v8716
    %8928 = vmatprep.subr.bf16.mxu0 %v8709
    %8929 = vmatpush1.bf16.msra.mxu0 %v8708
    %8930 = vmatprep.subr.bf16.mxu0 %v8701
    %8931 = vmatpush1.bf16.msra.mxu0 %v8700
    %8932 = vmatprep.subr.bf16.mxu0 %v8693
    %8933 = vmatpush1.bf16.msra.mxu0 %v8692
    %8934 = vmatprep.subr.bf16.mxu0 %v8685
    %8935 = vmatpush1.bf16.msra.mxu0 %v8684
    %8936 = vmatprep.subr.bf16.mxu0 %v8677
    %8937 = vmatpush1.bf16.msra.mxu0 %v8676
    %8938 = vmatprep.subr.bf16.mxu0 %v8669
    %8939 = vmatpush1.bf16.msra.mxu0 %v8668
    %8940 = vmatprep.subr.bf16.mxu0 %v8789
    %8941 = vmatpush2.bf16.msra.mxu0 %v8788
    %8942 = vmatprep.subr.bf16.mxu0 %v8781
    %8943 = vmatpush2.bf16.msra.mxu0 %v8780
    %8944 = vmatprep.subr.bf16.mxu0 %v8773
    %8945 = vmatpush2.bf16.msra.mxu0 %v8772
    %8946 = vmatprep.subr.bf16.mxu0 %v8765
    %8947 = vmatpush2.bf16.msra.mxu0 %v8764
    %8948 = vmatprep.subr.bf16.mxu0 %v8757
    %8949 = vmatpush2.bf16.msra.mxu0 %v8756
    %8950 = vmatprep.subr.bf16.mxu0 %v8749
    %8951 = vmatpush2.bf16.msra.mxu0 %v8748
    %8952 = vmatprep.subr.bf16.mxu0 %v8741
    %8953 = vmatpush2.bf16.msra.mxu0 %v8740
    %8954 = vmatprep.subr.bf16.mxu0 %v8733
    %8955 = vmatpush2.bf16.msra.mxu0 %v8732
    %8956 = vmatprep.mubr.bf16.mxu0 %v8155
    %8957 = vmatmul.mubr.bf16.gmra.mxu0 %v8154
    %v8958 = vpop.f32.mrf.mxu0
    %v8959 = vadd.f32 0.0, %v8958
    %v8960 = vpop.f32.mrf.mxu0
    %v8961 = vadd.f32 0.0, %v8960
    %v8962 = vpop.f32.mrf.mxu0
    %v8963 = vpop.f32.mrf.mxu0
    %8964 = vdwg.mxu0
    %8965 = vmatprep.subr.bf16.mxu0 %v8727
    %8966 = vmatpush1.bf16.msra.mxu0 %v8726
    %8967 = vmatprep.subr.bf16.mxu0 %v8719
    %8968 = vmatpush1.bf16.msra.mxu0 %v8718
    %8969 = vmatprep.subr.bf16.mxu0 %v8711
    %8970 = vmatpush1.bf16.msra.mxu0 %v8710
    %8971 = vmatprep.subr.bf16.mxu0 %v8703
    %8972 = vmatpush1.bf16.msra.mxu0 %v8702
    %8973 = vmatprep.subr.bf16.mxu0 %v8695
    %8974 = vmatpush1.bf16.msra.mxu0 %v8694
    %8975 = vmatprep.subr.bf16.mxu0 %v8687
    %8976 = vmatpush1.bf16.msra.mxu0 %v8686
    %8977 = vmatprep.subr.bf16.mxu0 %v8679
    %8978 = vmatpush1.bf16.msra.mxu0 %v8678
    %8979 = vmatprep.subr.bf16.mxu0 %v8671
    %8980 = vmatpush1.bf16.msra.mxu0 %v8670
    %8981 = vmatprep.subr.bf16.mxu0 %v8791
    %8982 = vmatpush2.bf16.msra.mxu0 %v8790
    %8983 = vmatprep.subr.bf16.mxu0 %v8783
    %8984 = vmatpush2.bf16.msra.mxu0 %v8782
    %8985 = vmatprep.subr.bf16.mxu0 %v8775
    %8986 = vmatpush2.bf16.msra.mxu0 %v8774
    %8987 = vmatprep.subr.bf16.mxu0 %v8767
    %8988 = vmatpush2.bf16.msra.mxu0 %v8766
    %8989 = vmatprep.subr.bf16.mxu0 %v8759
    %8990 = vmatpush2.bf16.msra.mxu0 %v8758
    %8991 = vmatprep.subr.bf16.mxu0 %v8751
    %8992 = vmatpush2.bf16.msra.mxu0 %v8750
    %8993 = vmatprep.subr.bf16.mxu0 %v8743
    %8994 = vmatpush2.bf16.msra.mxu0 %v8742
    %8995 = vmatprep.subr.bf16.mxu0 %v8735
    %8996 = vmatpush2.bf16.msra.mxu0 %v8734
    %8997 = vmatprep.mubr.bf16.mxu0 %v8155
    %8998 = vmatmul.mubr.bf16.gmra.mxu0 %v8154
    %v8999 = vpop.f32.mrf.mxu0
    %v9000 = vadd.f32 0.0, %v8999
    %v9001 = vpop.f32.mrf.mxu0
    %v9002 = vadd.f32 0.0, %v9001
    %v9003 = vpop.f32.mrf.mxu0
    %v9004 = vpop.f32.mrf.mxu0
    %9005 = vdwg.mxu0
    %9006 = vmatprep.subr.bf16.mxu0 %v8729
    %9007 = vmatpush1.bf16.msra.mxu0 %v8728
    %9008 = vmatprep.subr.bf16.mxu0 %v8721
    %9009 = vmatpush1.bf16.msra.mxu0 %v8720
    %9010 = vmatprep.subr.bf16.mxu0 %v8713
    %9011 = vmatpush1.bf16.msra.mxu0 %v8712
    %9012 = vmatprep.subr.bf16.mxu0 %v8705
    %9013 = vmatpush1.bf16.msra.mxu0 %v8704
    %9014 = vmatprep.subr.bf16.mxu0 %v8697
    %9015 = vmatpush1.bf16.msra.mxu0 %v8696
    %9016 = vmatprep.subr.bf16.mxu0 %v8689
    %9017 = vmatpush1.bf16.msra.mxu0 %v8688
    %9018 = vmatprep.subr.bf16.mxu0 %v8681
    %9019 = vmatpush1.bf16.msra.mxu0 %v8680
    %9020 = vmatprep.subr.bf16.mxu0 %v8673
    %9021 = vmatpush1.bf16.msra.mxu0 %v8672
    %9022 = vmatprep.subr.bf16.mxu0 %v8793
    %9023 = vmatpush2.bf16.msra.mxu0 %v8792
    %9024 = vmatprep.subr.bf16.mxu0 %v8785
    %9025 = vmatpush2.bf16.msra.mxu0 %v8784
    %9026 = vmatprep.subr.bf16.mxu0 %v8777
    %9027 = vmatpush2.bf16.msra.mxu0 %v8776
    %9028 = vmatprep.subr.bf16.mxu0 %v8769
    %9029 = vmatpush2.bf16.msra.mxu0 %v8768
    %9030 = vmatprep.subr.bf16.mxu0 %v8761
    %9031 = vmatpush2.bf16.msra.mxu0 %v8760
    %9032 = vmatprep.subr.bf16.mxu0 %v8753
    %9033 = vmatpush2.bf16.msra.mxu0 %v8752
    %9034 = vmatprep.subr.bf16.mxu0 %v8745
    %9035 = vmatpush2.bf16.msra.mxu0 %v8744
    %9036 = vmatprep.subr.bf16.mxu0 %v8737
    %9037 = vmatpush2.bf16.msra.mxu0 %v8736
    %9038 = vmatprep.mubr.bf16.mxu0 %v8155
    %9039 = vmatmul.mubr.bf16.gmra.mxu0 %v8154
    %v9040 = vpop.f32.mrf.mxu0
    %v9041 = vadd.f32 0.0, %v9040
    %v9042 = vpop.f32.mrf.mxu0
    %v9043 = vadd.f32 0.0, %v9042
    %v9044 = vpop.f32.mrf.mxu0
    %v9045 = vpop.f32.mrf.mxu0
    %9046 = vdwg.mxu0
    %9047 = vmatprep.subr.bf16.mxu0 %v8731
    %9048 = vmatpush1.bf16.msra.mxu0 %v8730
    %9049 = vmatprep.subr.bf16.mxu0 %v8723
    %9050 = vmatpush1.bf16.msra.mxu0 %v8722
    %9051 = vmatprep.subr.bf16.mxu0 %v8715
    %9052 = vmatpush1.bf16.msra.mxu0 %v8714
    %9053 = vmatprep.subr.bf16.mxu0 %v8707
    %9054 = vmatpush1.bf16.msra.mxu0 %v8706
    %9055 = vmatprep.subr.bf16.mxu0 %v8699
    %9056 = vmatpush1.bf16.msra.mxu0 %v8698
    %9057 = vmatprep.subr.bf16.mxu0 %v8691
    %9058 = vmatpush1.bf16.msra.mxu0 %v8690
    %9059 = vmatprep.subr.bf16.mxu0 %v8683
    %9060 = vmatpush1.bf16.msra.mxu0 %v8682
    %9061 = vmatprep.subr.bf16.mxu0 %v8675
    %9062 = vmatpush1.bf16.msra.mxu0 %v8674
    %9063 = vmatprep.subr.bf16.mxu0 %v8795
    %9064 = vmatpush2.bf16.msra.mxu0 %v8794
    %9065 = vmatprep.subr.bf16.mxu0 %v8787
    %9066 = vmatpush2.bf16.msra.mxu0 %v8786
    %9067 = vmatprep.subr.bf16.mxu0 %v8779
    %9068 = vmatpush2.bf16.msra.mxu0 %v8778
    %9069 = vmatprep.subr.bf16.mxu0 %v8771
    %9070 = vmatpush2.bf16.msra.mxu0 %v8770
    %9071 = vmatprep.subr.bf16.mxu0 %v8763
    %9072 = vmatpush2.bf16.msra.mxu0 %v8762
    %9073 = vmatprep.subr.bf16.mxu0 %v8755
    %9074 = vmatpush2.bf16.msra.mxu0 %v8754
    %9075 = vmatprep.subr.bf16.mxu0 %v8747
    %9076 = vmatpush2.bf16.msra.mxu0 %v8746
    %9077 = vmatprep.subr.bf16.mxu0 %v8739
    %9078 = vmatpush2.bf16.msra.mxu0 %v8738
    %9079 = vmatprep.mubr.bf16.mxu0 %v8155
    %9080 = vmatmul.mubr.bf16.gmra.mxu0 %v8154
    %v9081 = vpop.f32.mrf.mxu0
    %v9082 = vadd.f32 0.0, %v9081
    %v9083 = vpop.f32.mrf.mxu0
    %v9084 = vadd.f32 0.0, %v9083
    %v9085 = vpop.f32.mrf.mxu0
    %v9086 = vpop.f32.mrf.mxu0
    %9087 = vdwg.mxu0
    %s9088 = scalar_lea.vmem [#allocation3], 7
    %v9089 = vld [vmem:[%s9088] ss:$8 sm:$0xf]
    %v9094 = vcombine.low %v8959, %v8961
    %v9095 = vcombine.low %v9000, %v9002
    %v9097 = vunpack.c.l.s4 1966171168
    %v9098 = vunpack.c.0.s8 %v9097
    %v9099 = vlaneseq
    %v9100 = vshrl.u32 %v9099, 7
    %v9101 = vsub.s32 %v9098, %v9100
    %v9102 = vrot.slane %v9094, %v9101
    %v9104 = vunpack.c.l.s4 1966171168
    %v9105 = vunpack.c.0.s8 %v9104
    %v9106 = vlaneseq
    %v9107 = vshrl.u32 %v9106, 7
    %v9108 = vsub.s32 %v9105, %v9107
    %v9109 = vrot.slane %v9095, %v9108
    %v9110 = vcombine.low %v9102, %v9109
    %v9112 = vunpack.c.l.s4 1966171168
    %v9113 = vunpack.c.0.s8 %v9112
    %v9114 = vlaneseq
    %v9115 = vshrl.u32 %v9114, 7
    %v9116 = vsub.s32 %v9113, %v9115
    %v9117 = vrot.slane %v9110, %v9116
    %v9119 = vadd.f32 %v9089, %v9117
    %s9120 = scalar_lea.vmem [#allocation3], 32
    %v9121 = vld [vmem:[%s9120] ss:$8 sm:$0xf]
    %v9126 = vcombine.low %v9041, %v9043
    %v9127 = vcombine.low %v9082, %v9084
    %v9129 = vunpack.c.l.s4 1966171168
    %v9130 = vunpack.c.0.s8 %v9129
    %v9131 = vlaneseq
    %v9132 = vshrl.u32 %v9131, 7
    %v9133 = vsub.s32 %v9130, %v9132
    %v9134 = vrot.slane %v9126, %v9133
    %v9136 = vunpack.c.l.s4 1966171168
    %v9137 = vunpack.c.0.s8 %v9136
    %v9138 = vlaneseq
    %v9139 = vshrl.u32 %v9138, 7
    %v9140 = vsub.s32 %v9137, %v9139
    %v9141 = vrot.slane %v9127, %v9140
    %v9142 = vcombine.low %v9134, %v9141
    %v9144 = vunpack.c.l.s4 1966171168
    %v9145 = vunpack.c.0.s8 %v9144
    %v9146 = vlaneseq
    %v9147 = vshrl.u32 %v9146, 7
    %v9148 = vsub.s32 %v9145, %v9147
    %v9149 = vrot.slane %v9142, %v9148
    %v9151 = vadd.f32 %v9121, %v9149
    %v9152 = vxor.u32 %v9119, 2147483648
    %v9153 = vmul.f32 %v9152, 1.442695
    %v9154 = vpow.pop %v9153
    %v9155 = vadd.f32 %v9154, 1.0
    %v9156 = vrcp.pop %v9155
    %v9157 = vmul.f32 1.0, %v9156
    %v9159 = vrot.slane %v9119, 1
    %v9161 = vxor.u32 %v9159, 2147483648
    %v9162 = vmul.f32 %v9161, 1.442695
    %v9163 = vpow.pop %v9162
    %v9164 = vadd.f32 %v9163, 1.0
    %v9165 = vrcp.pop %v9164
    %v9166 = vmul.f32 1.0, %v9165
    %v9167 = vrot.slane %v9119, 2
    %v9169 = vtanh.pop %v9167
    %v9170 = vrot.slane %v9119, 3
    %v9172 = vxor.u32 %v9170, 2147483648
    %v9173 = vmul.f32 %v9172, 1.442695
    %v9174 = vpow.pop %v9173
    %v9175 = vadd.f32 %v9174, 1.0
    %v9176 = vrcp.pop %v9175
    %v9177 = vmul.f32 1.0, %v9176
    %v9178 = vmul.f32 %v9166, %v8118
    %v9179 = vmul.f32 %v9157, %v9169
    %v9180 = vadd.f32 %v9178, %v9179
    %v9181 = vtanh.pop %v9180
    %v9182 = vmul.f32 %v9177, %v9181
    %v9183 = vxor.u32 %v9151, 2147483648
    %v9184 = vmul.f32 %v9183, 1.442695
    %v9185 = vpow.pop %v9184
    %v9186 = vadd.f32 %v9185, 1.0
    %v9187 = vrcp.pop %v9186
    %v9188 = vmul.f32 1.0, %v9187
    %v9190 = vrot.slane %v9151, 1
    %v9192 = vxor.u32 %v9190, 2147483648
    %v9193 = vmul.f32 %v9192, 1.442695
    %v9194 = vpow.pop %v9193
    %v9195 = vadd.f32 %v9194, 1.0
    %v9196 = vrcp.pop %v9195
    %v9197 = vmul.f32 1.0, %v9196
    %v9198 = vrot.slane %v9151, 2
    %v9200 = vtanh.pop %v9198
    %v9201 = vrot.slane %v9151, 3
    %v9203 = vxor.u32 %v9201, 2147483648
    %v9204 = vmul.f32 %v9203, 1.442695
    %v9205 = vpow.pop %v9204
    %v9206 = vadd.f32 %v9205, 1.0
    %v9207 = vrcp.pop %v9206
    %v9208 = vmul.f32 1.0, %v9207
    %v9209 = vmul.f32 %v9197, %v8149
    %v9210 = vmul.f32 %v9188, %v9200
    %v9211 = vadd.f32 %v9209, %v9210
    %v9212 = vtanh.pop %v9211
    %v9213 = vmul.f32 %v9208, %v9212
    %9214 = vst [vmem:[#allocation14 + $0x7] sm:$0x1] %v9182
    %9215 = vst [vmem:[#allocation14 + $0x8] sm:$0x1] %v9213
    %9216 = vst [vmem:[#allocation15] sm:$0x1] %v9182
    %9217 = vst [vmem:[#allocation15 + $0x1] sm:$0x1] %v9213
    %9218 = vst [vmem:[#allocation17] sm:$0x1] %v9180
    %9219 = vst [vmem:[#allocation17 + $0x1] sm:$0x1] %v9211
    // Predicated region
    $region42: #{tpu_custom_call.1} parent=1 // pred_check
      _
    $region43: #{tpu_custom_call.1} parent=1 // pred_check_branch
      %9221 = sbr.rel (0) target = $region45
    $region44: #{tpu_custom_call.1} parent=1 // pred_region
      %s9223 = ssub.s32 256, 256
      %9224 = vsyncadd [#allocation6], %s9223
      %s9226 = sshll.u32 [#allocation14], 4
      %s9227 = int_to_ptr.vmem [resolvable:$true] %s9226
      %9229 = dma.vmem_to_hbm [thread:$0]  %s9227, 256, %s5, [#allocation6]
    $region45: #{tpu_custom_call.1} parent=1 // pred_fallthru
      _
    // Predicated region
    $region46: #{tpu_custom_call.1} parent=1 // pred_check
      _
    $region47: #{tpu_custom_call.1} parent=1 // pred_check_branch
      %9231 = sbr.rel (0) target = $region49
    $region48: #{tpu_custom_call.1} parent=1 // pred_region
      %s9233 = ssub.s32 32, 32
      %9234 = vsyncadd [#allocation16], %s9233
      %s9236 = sshll.u32 [#allocation15], 4
      %s9237 = int_to_ptr.vmem [resolvable:$true] %s9236
      %9239 = dma.vmem_to_hbm [thread:$0]  %s9237, 32, %s6, [#allocation16]
    $region49: #{tpu_custom_call.1} parent=1 // pred_fallthru
      _
    // Predicated region
    $region50: #{tpu_custom_call.1} parent=1 // pred_check
      _
    $region51: #{tpu_custom_call.1} parent=1 // pred_check_branch
      %9241 = sbr.rel (0) target = $region53
    $region52: #{tpu_custom_call.1} parent=1 // pred_region
      %s9243 = ssub.s32 32, 32
      %9244 = vsyncadd [#allocation16], %s9243
      %s9246 = sshll.u32 [#allocation17], 4
      %s9247 = int_to_ptr.vmem [resolvable:$true] %s9246
      %9249 = dma.vmem_to_hbm [thread:$0]  %s9247, 32, %s7, [#allocation16]
    $region53: #{tpu_custom_call.1} parent=1 // pred_fallthru
      _
    // Predicated region
    $region54: #{tpu_custom_call.1} parent=1 // pred_check
      _
    $region55: #{tpu_custom_call.1} parent=1 // pred_check_branch
      %9251 = sbr.rel (0) target = $region57
    $region56: #{tpu_custom_call.1} parent=1 // pred_region
      %9252 = dma.done [#allocation6], 256
    $region57: #{tpu_custom_call.1} parent=1 // pred_fallthru
      _
    // Predicated region
    $region58: #{tpu_custom_call.1} parent=1 // pred_check
      _
    $region59: #{tpu_custom_call.1} parent=1 // pred_check_branch
      %9254 = sbr.rel (0) target = $region61
    $region60: #{tpu_custom_call.1} parent=1 // pred_region
      %9255 = dma.done [#allocation16], 32
    $region61: #{tpu_custom_call.1} parent=1 // pred_fallthru
      _
    // Predicated region
    $region62: #{tpu_custom_call.1} parent=1 // pred_check
      _
    $region63: #{tpu_custom_call.1} parent=1 // pred_check_branch
      %9257 = sbr.rel (0) target = $region65
    $region64: #{tpu_custom_call.1} parent=1 // pred_region
      %9258 = dma.done [#allocation16], 32
    $region65: #{tpu_custom_call.1} parent=1 // pred_fallthru
      _
    %9259 = vsyncpa [#allocation5], 1
    %9260 = vsyncpa [#allocation10], 1
    %9261 = vsyncpa [#allocation13], 1
    %9262 = vsyncpa [#allocation6], 1
    %9263 = vsyncpa [#allocation16], 1
    %9264 = vsyncpa [#allocation7], 1

</llo_original>
